<compile_context>
chip_gen: v6e
topology: v6e:2x2x1
jax: 0.10.0
libtpu: 0.0.40
codegen_flags: <defaults>
</compile_context>

<pallas_src>
import functools

import jax
import jax.numpy as jnp
from jax.experimental import pallas as pl
from jax.experimental.pallas import tpu as pltpu


# ----------------------------------------------------------------------------
# In-kernel DenseNet: ReLU between layers, none after the last layer.
# Weights bf16, biases f32, f32 accumulation on the MXU.
# ----------------------------------------------------------------------------
def _mlp_forward(x, params):
    n_layers = len(params) // 2
    h = x
    for li in range(n_layers):
        w = params[2 * li][...]           # bf16 (K, Nout)
        b = params[2 * li + 1][...]       # f32  (1, Nout)
        h = jnp.dot(h.astype(jnp.bfloat16), w,
                    preferred_element_type=jnp.float32) + b
        if li != n_layers - 1:
            h = jnp.maximum(h, 0.0)
    return h


# ----------------------------------------------------------------------------
# Fused LNO block kernel (one grid step per batch element):
#   [block 0 only]   h  = lift(a)                      (Linear(2, W), MXU)
#   x1 = h @ Wc + bc                                   (pointwise Conv1d, MXU)
#   phi, psi = DenseNets(a)                            (in-VMEM MLPs, MXU)
#   t_r = sum_{n,w} psi[n,w,r] h[n,w] / N              (VPU mult + XLU reduce)
#   x2  = sum_r phi[:,:,r] * t_r                       (lane-dense VPU)
#   y   = LayerNorm(x1 + x2) ; optional ReLU           (f32 elementwise)
#   [last block only] y = q2(ReLU(q1(y)))              (projection, MXU)
# ----------------------------------------------------------------------------
def _lno_block_kernel(*refs, lift, project, apply_relu, n_mlp_layers,
                      width, rank, inv_n):
    idx = 0
    a = refs[idx][0]; idx += 1                               # (N, 2) f32

    if lift:
        pw = refs[idx][...]; pb = refs[idx + 1][...]; idx += 2
        h = jnp.dot(a.astype(jnp.bfloat16), pw,
                    preferred_element_type=jnp.float32) + pb
    else:
        h = refs[idx][0]; idx += 1                           # (N, W) f32

    phi_params = refs[idx:idx + 2 * n_mlp_layers]; idx += 2 * n_mlp_layers
    psi_params = refs[idx:idx + 2 * n_mlp_layers]; idx += 2 * n_mlp_layers
    wc = refs[idx][...]; bc = refs[idx + 1][...]; idx += 2
    g = refs[idx][...]; bta = refs[idx + 1][...]; idx += 2
    if project:
        q1w = refs[idx][...]; q1b = refs[idx + 1][...]
        q2w = refs[idx + 2][...]; q2b = refs[idx + 3][...]
        idx += 4
    o_ref = refs[idx]

    # local correction: pointwise Conv1d(width, width, 1) == channel matmul.
    x1 = jnp.dot(h.astype(jnp.bfloat16), wc,
                 preferred_element_type=jnp.float32) + bc

    # phi / psi DenseNets evaluated entirely in VMEM/vregs; last-layer columns
    # are pre-permuted to rank-major order -> contiguous (N, W) lane slices.
    phi = _mlp_forward(a, phi_params)                        # (N, R*W) f32
    psi = _mlp_forward(a, psi_params)                        # (N, R*W) f32

    # low-rank kernel integral (contraction + expansion), all f32.
    x2 = jnp.zeros_like(h)
    for r in range(rank):
        lo = r * width
        psi_r = psi[:, lo:lo + width]
        phi_r = phi[:, lo:lo + width]
        t_r = jnp.sum(jnp.sum(psi_r * h, axis=0, keepdims=True),
                      axis=1, keepdims=True) * inv_n          # (1, 1)
        x2 = x2 + phi_r * t_r

    # LayerNorm over channels (eps=1e-5, elementwise affine) + optional ReLU.
    y = x1 + x2
    mean = jnp.mean(y, axis=-1, keepdims=True)
    var = jnp.mean((y - mean) ** 2, axis=-1, keepdims=True)
    y = (y - mean) * jax.lax.rsqrt(var + 1e-5)
    y = y * g + bta
    if apply_relu:
        y = jnp.maximum(y, 0.0)

    if project:
        # projection q: Linear(W, 2W) + ReLU + Linear(2W, 1), fused.
        z = jnp.dot(y.astype(jnp.bfloat16), q1w,
                    preferred_element_type=jnp.float32) + q1b
        z = jnp.maximum(z, 0.0)
        y = jnp.dot(z.astype(jnp.bfloat16), q2w,
                    preferred_element_type=jnp.float32) + q2b

    o_ref[0] = y.astype(o_ref.dtype)


def lno_block(a3d, h3d, *, phi, psi, wc, bc, gamma, beta,
              lift_params, q_params, apply_relu, width, rank):
    """One fused LNO block.  phi/psi are lists of (w, b) in natural f32
    layout with the LAST layer already permuted to rank-major columns."""
    B, N, _ = a3d.shape
    lift = lift_params is not None
    project = q_params is not None

    inputs = [a3d]
    in_specs = [pl.BlockSpec((1, N, 2), lambda b: (b, 0, 0))]

    def add_weight(w, b):
        w16 = w.astype(jnp.bfloat16)
        b32 = b.reshape(1, -1).astype(jnp.float32)
        inputs.append(w16)
        in_specs.append(pl.BlockSpec(w16.shape, lambda i: (0, 0)))
        inputs.append(b32)
        in_specs.append(pl.BlockSpec(b32.shape, lambda i: (0, 0)))

    if lift:
        add_weight(*lift_params)
    else:
        inputs.append(h3d)
        in_specs.append(pl.BlockSpec((1, N, width), lambda b: (b, 0, 0)))

    for (w, b) in phi:
        add_weight(w, b)
    for (w, b) in psi:
        add_weight(w, b)
    add_weight(wc, bc)

    inputs.append(gamma.reshape(1, width).astype(jnp.float32))
    in_specs.append(pl.BlockSpec((1, width), lambda i: (0, 0)))
    inputs.append(beta.reshape(1, width).astype(jnp.float32))
    in_specs.append(pl.BlockSpec((1, width), lambda i: (0, 0)))

    if project:
        for (w, b) in q_params:
            add_weight(w, b)

    out_dim = 1 if project else width
    kernel = functools.partial(
        _lno_block_kernel, lift=lift, project=project, apply_relu=apply_relu,
        n_mlp_layers=len(phi), width=width, rank=rank, inv_n=1.0 / float(N))

    return pl.pallas_call(
        kernel,
        out_shape=jax.ShapeDtypeStruct((B, N, out_dim), jnp.float32),
        grid_spec=pltpu.PrefetchScalarGridSpec(
            num_scalar_prefetch=0,
            grid=(B,),
            in_specs=in_specs,
            out_specs=pl.BlockSpec((1, N, out_dim), lambda b: (b, 0, 0)),
        ),
        compiler_params=pltpu.CompilerParams(
            dimension_semantics=("parallel",)),
    )(*inputs)


# ----------------------------------------------------------------------------
# Parameter init (deterministic, synthetic, natural PyTorch-like layout).
# ----------------------------------------------------------------------------
def _lin_init(key, fan_in, fan_out):
    kw, kb = jax.random.split(key)
    scale = 1.0 / jnp.sqrt(float(fan_in))
    w = jax.random.uniform(kw, (fan_in, fan_out), jnp.float32, -scale, scale)
    b = jax.random.uniform(kb, (fan_out,), jnp.float32, -scale, scale)
    return w, b


def init_params(key, width, rank, nblocks):
    keys = jax.random.split(key, 4 + nblocks)
    params = {
        "p": _lin_init(keys[0], 2, width),
        "q1": _lin_init(keys[1], width, 2 * width),
        "q2": _lin_init(keys[2], 2 * width, 1),
    }
    mlp_dims = [2, 64, 128, 256, width * rank]
    nl = len(mlp_dims) - 1
    blocks = []
    for i in range(nblocks):
        bkeys = jax.random.split(keys[3 + i], 2 * nl + 2)
        phi = [_lin_init(bkeys[j], mlp_dims[j], mlp_dims[j + 1])
               for j in range(nl)]
        psi = [_lin_init(bkeys[nl + j], mlp_dims[j], mlp_dims[j + 1])
               for j in range(nl)]
        wc, bc = _lin_init(bkeys[-2], width, width)   # pointwise Conv1d
        blocks.append({
            "phi": phi, "psi": psi, "wc": wc, "bc": bc,
            "gamma": jnp.ones((width,), jnp.float32),
            "beta": jnp.zeros((width,), jnp.float32),
        })
    params["blocks"] = blocks
    return params


# ----------------------------------------------------------------------------
# Full forward.
# ----------------------------------------------------------------------------
def _permute_last_layer(layers, width, rank):
    """Reorder the last Linear's output columns from (w, r)-interleaved to
    rank-major (r, w) order so rank r's (N, W) plane is a contiguous lane
    slice.  Mathematically identical to the reference .view(B, N, W, R)."""
    w, b = layers[-1]
    k = w.shape[0]
    w_p = w.reshape(k, width, rank).transpose(0, 2, 1).reshape(k, rank * width)
    b_p = b.reshape(width, rank).T.reshape(rank * width)
    return list(layers[:-1]) + [(w_p, b_p)]


def lno1d_forward(params, x, a, width, rank, nblocks):
    B, N = x.shape
    xa = jnp.stack([a, x], axis=-1)            # (B, N, 2);  a == x.clone()
    h = None
    for i, blk in enumerate(params["blocks"]):
        h = lno_block(
            xa, h,
            phi=_permute_last_layer(blk["phi"], width, rank),
            psi=_permute_last_layer(blk["psi"], width, rank),
            wc=blk["wc"], bc=blk["bc"], gamma=blk["gamma"], beta=blk["beta"],
            lift_params=params["p"] if i == 0 else None,
            q_params=[params["q1"], params["q2"]] if i == nblocks - 1 else None,
            apply_relu=(i != nblocks - 1),
            width=width, rank=rank)
    return h                                    # (B, N, 1)


if __name__ == "__main__":
    B, N, WIDTH, RANK, NBLOCKS = 2, 16, 32, 4, 4
    key = jax.random.PRNGKey(0)
    kx, ka, kp = jax.random.split(key, 3)
    x = jax.random.normal(kx, (B, N), jnp.float32)
    a = jax.random.normal(ka, (B, N), jnp.float32)
    params = init_params(kp, WIDTH, RANK, NBLOCKS)

    fwd = jax.jit(lno1d_forward, static_argnums=(3, 4, 5))
    out = fwd(params, x, a, WIDTH, RANK, NBLOCKS)
    out = jax.block_until_ready(out)
    assert out.shape == (B, N, 1) and out.dtype == jnp.float32
    assert bool(jnp.all(jnp.isfinite(out)))
    print("KERNEL_OK")
</pallas_src>

<mosaic_0001>
module attributes {stable_mosaic.version = 11 : i64} {
  func.func @_lno_block_kernel(%arg0: i32, %arg1: memref<1x16x2xf32, #tpu.memory_space<vmem>>, %arg2: memref<2x32xbf16, #tpu.memory_space<vmem>>, %arg3: memref<1x32xf32, #tpu.memory_space<vmem>>, %arg4: memref<2x64xbf16, #tpu.memory_space<vmem>>, %arg5: memref<1x64xf32, #tpu.memory_space<vmem>>, %arg6: memref<64x128xbf16, #tpu.memory_space<vmem>>, %arg7: memref<1x128xf32, #tpu.memory_space<vmem>>, %arg8: memref<128x256xbf16, #tpu.memory_space<vmem>>, %arg9: memref<1x256xf32, #tpu.memory_space<vmem>>, %arg10: memref<256x128xbf16, #tpu.memory_space<vmem>>, %arg11: memref<1x128xf32, #tpu.memory_space<vmem>>, %arg12: memref<2x64xbf16, #tpu.memory_space<vmem>>, %arg13: memref<1x64xf32, #tpu.memory_space<vmem>>, %arg14: memref<64x128xbf16, #tpu.memory_space<vmem>>, %arg15: memref<1x128xf32, #tpu.memory_space<vmem>>, %arg16: memref<128x256xbf16, #tpu.memory_space<vmem>>, %arg17: memref<1x256xf32, #tpu.memory_space<vmem>>, %arg18: memref<256x128xbf16, #tpu.memory_space<vmem>>, %arg19: memref<1x128xf32, #tpu.memory_space<vmem>>, %arg20: memref<32x32xbf16, #tpu.memory_space<vmem>>, %arg21: memref<1x32xf32, #tpu.memory_space<vmem>>, %arg22: memref<1x32xf32, #tpu.memory_space<vmem>>, %arg23: memref<1x32xf32, #tpu.memory_space<vmem>>, %arg24: memref<1x16x32xf32, #tpu.memory_space<vmem>>) attributes {dimension_semantics = [#tpu.dimension_semantics<parallel>], iteration_bounds = array<i64: 2>, scalar_prefetch = 0 : i64, scratch_operands = 0 : i64, tpu.core_type = #tpu.core_type<tc>, window_params = [{transform_indices = @transform_0, window_bounds = array<i64: 1, 16, 2>}, {pipeline_mode = #tpu.pipeline_mode<synchronous>, transform_indices = @transform_1, window_bounds = array<i64: 2, 32>}, {pipeline_mode = #tpu.pipeline_mode<synchronous>, transform_indices = @transform_2, window_bounds = array<i64: 1, 32>}, {pipeline_mode = #tpu.pipeline_mode<synchronous>, transform_indices = @transform_3, window_bounds = array<i64: 2, 64>}, {pipeline_mode = #tpu.pipeline_mode<synchronous>, transform_indices = @transform_4, window_bounds = array<i64: 1, 64>}, {pipeline_mode = #tpu.pipeline_mode<synchronous>, transform_indices = @transform_5, window_bounds = array<i64: 64, 128>}, {pipeline_mode = #tpu.pipeline_mode<synchronous>, transform_indices = @transform_6, window_bounds = array<i64: 1, 128>}, {pipeline_mode = #tpu.pipeline_mode<synchronous>, transform_indices = @transform_7, window_bounds = array<i64: 128, 256>}, {pipeline_mode = #tpu.pipeline_mode<synchronous>, transform_indices = @transform_8, window_bounds = array<i64: 1, 256>}, {pipeline_mode = #tpu.pipeline_mode<synchronous>, transform_indices = @transform_9, window_bounds = array<i64: 256, 128>}, {pipeline_mode = #tpu.pipeline_mode<synchronous>, transform_indices = @transform_10, window_bounds = array<i64: 1, 128>}, {pipeline_mode = #tpu.pipeline_mode<synchronous>, transform_indices = @transform_11, window_bounds = array<i64: 2, 64>}, {pipeline_mode = #tpu.pipeline_mode<synchronous>, transform_indices = @transform_12, window_bounds = array<i64: 1, 64>}, {pipeline_mode = #tpu.pipeline_mode<synchronous>, transform_indices = @transform_13, window_bounds = array<i64: 64, 128>}, {pipeline_mode = #tpu.pipeline_mode<synchronous>, transform_indices = @transform_14, window_bounds = array<i64: 1, 128>}, {pipeline_mode = #tpu.pipeline_mode<synchronous>, transform_indices = @transform_15, window_bounds = array<i64: 128, 256>}, {pipeline_mode = #tpu.pipeline_mode<synchronous>, transform_indices = @transform_16, window_bounds = array<i64: 1, 256>}, {pipeline_mode = #tpu.pipeline_mode<synchronous>, transform_indices = @transform_17, window_bounds = array<i64: 256, 128>}, {pipeline_mode = #tpu.pipeline_mode<synchronous>, transform_indices = @transform_18, window_bounds = array<i64: 1, 128>}, {pipeline_mode = #tpu.pipeline_mode<synchronous>, transform_indices = @transform_19, window_bounds = array<i64: 32, 32>}, {pipeline_mode = #tpu.pipeline_mode<synchronous>, transform_indices = @transform_20, window_bounds = array<i64: 1, 32>}, {pipeline_mode = #tpu.pipeline_mode<synchronous>, transform_indices = @transform_21, window_bounds = array<i64: 1, 32>}, {pipeline_mode = #tpu.pipeline_mode<synchronous>, transform_indices = @transform_22, window_bounds = array<i64: 1, 32>}, {transform_indices = @transform_23, window_bounds = array<i64: 1, 16, 32>}]} {
    %c0 = arith.constant 0 : index
    %c0_0 = arith.constant 0 : index
    %c0_1 = arith.constant 0 : index
    %0 = vector.load %arg1[%c0, %c0_0, %c0_1] : memref<1x16x2xf32, #tpu.memory_space<vmem>>, vector<1x16x2xf32>
    %1 = vector.shape_cast %0 : vector<1x16x2xf32> to vector<16x2xf32>
    %c0_2 = arith.constant 0 : index
    %c0_3 = arith.constant 0 : index
    %2 = vector.load %arg2[%c0_2, %c0_3] : memref<2x32xbf16, #tpu.memory_space<vmem>>, vector<2x32xbf16>
    %c0_4 = arith.constant 0 : index
    %c0_5 = arith.constant 0 : index
    %3 = vector.load %arg3[%c0_4, %c0_5] : memref<1x32xf32, #tpu.memory_space<vmem>>, vector<1x32xf32>
    %4 = arith.truncf %1 : vector<16x2xf32> to vector<16x2xbf16>
    %cst = arith.constant dense<0.000000e+00> : vector<16x32xf32>
    %5 = tpu.matmul %4, %2, %cst {dimension_numbers = #tpu.dot_dimension_numbers<[1], [0], [0], [1], [0, 0, 1, 1], [], []>} : vector<16x2xbf16>, vector<2x32xbf16>, vector<16x32xf32> -> vector<16x32xf32>
    %6 = vector.broadcast %3 : vector<1x32xf32> to vector<16x32xf32>
    %7 = arith.addf %5, %6 : vector<16x32xf32>
    %c0_6 = arith.constant 0 : index
    %c0_7 = arith.constant 0 : index
    %8 = vector.load %arg20[%c0_6, %c0_7] : memref<32x32xbf16, #tpu.memory_space<vmem>>, vector<32x32xbf16>
    %c0_8 = arith.constant 0 : index
    %c0_9 = arith.constant 0 : index
    %9 = vector.load %arg21[%c0_8, %c0_9] : memref<1x32xf32, #tpu.memory_space<vmem>>, vector<1x32xf32>
    %c0_10 = arith.constant 0 : index
    %c0_11 = arith.constant 0 : index
    %10 = vector.load %arg22[%c0_10, %c0_11] : memref<1x32xf32, #tpu.memory_space<vmem>>, vector<1x32xf32>
    %c0_12 = arith.constant 0 : index
    %c0_13 = arith.constant 0 : index
    %11 = vector.load %arg23[%c0_12, %c0_13] : memref<1x32xf32, #tpu.memory_space<vmem>>, vector<1x32xf32>
    %12 = arith.truncf %7 : vector<16x32xf32> to vector<16x32xbf16>
    %cst_14 = arith.constant dense<0.000000e+00> : vector<16x32xf32>
    %13 = tpu.matmul %12, %8, %cst_14 {dimension_numbers = #tpu.dot_dimension_numbers<[1], [0], [0], [1], [0, 0, 1, 1], [], []>} : vector<16x32xbf16>, vector<32x32xbf16>, vector<16x32xf32> -> vector<16x32xf32>
    %14 = vector.broadcast %9 : vector<1x32xf32> to vector<16x32xf32>
    %15 = arith.addf %13, %14 : vector<16x32xf32>
    %c0_15 = arith.constant 0 : index
    %c0_16 = arith.constant 0 : index
    %16 = vector.load %arg4[%c0_15, %c0_16] : memref<2x64xbf16, #tpu.memory_space<vmem>>, vector<2x64xbf16>
    %c0_17 = arith.constant 0 : index
    %c0_18 = arith.constant 0 : index
    %17 = vector.load %arg5[%c0_17, %c0_18] : memref<1x64xf32, #tpu.memory_space<vmem>>, vector<1x64xf32>
    %18 = arith.truncf %1 : vector<16x2xf32> to vector<16x2xbf16>
    %cst_19 = arith.constant dense<0.000000e+00> : vector<16x64xf32>
    %19 = tpu.matmul %18, %16, %cst_19 {dimension_numbers = #tpu.dot_dimension_numbers<[1], [0], [0], [1], [0, 0, 1, 1], [], []>} : vector<16x2xbf16>, vector<2x64xbf16>, vector<16x64xf32> -> vector<16x64xf32>
    %20 = vector.broadcast %17 : vector<1x64xf32> to vector<16x64xf32>
    %21 = arith.addf %19, %20 : vector<16x64xf32>
    %cst_20 = arith.constant 0.000000e+00 : f32
    %22 = vector.broadcast %cst_20 : f32 to vector<16x64xf32>
    %23 = arith.maximumf %21, %22 : vector<16x64xf32>
    %c0_21 = arith.constant 0 : index
    %c0_22 = arith.constant 0 : index
    %24 = vector.load %arg6[%c0_21, %c0_22] : memref<64x128xbf16, #tpu.memory_space<vmem>>, vector<64x128xbf16>
    %c0_23 = arith.constant 0 : index
    %c0_24 = arith.constant 0 : index
    %25 = vector.load %arg7[%c0_23, %c0_24] : memref<1x128xf32, #tpu.memory_space<vmem>>, vector<1x128xf32>
    %26 = arith.truncf %23 : vector<16x64xf32> to vector<16x64xbf16>
    %cst_25 = arith.constant dense<0.000000e+00> : vector<16x128xf32>
    %27 = tpu.matmul %26, %24, %cst_25 {dimension_numbers = #tpu.dot_dimension_numbers<[1], [0], [0], [1], [0, 0, 1, 1], [], []>} : vector<16x64xbf16>, vector<64x128xbf16>, vector<16x128xf32> -> vector<16x128xf32>
    %28 = vector.broadcast %25 : vector<1x128xf32> to vector<16x128xf32>
    %29 = arith.addf %27, %28 : vector<16x128xf32>
    %cst_26 = arith.constant 0.000000e+00 : f32
    %30 = vector.broadcast %cst_26 : f32 to vector<16x128xf32>
    %31 = arith.maximumf %29, %30 : vector<16x128xf32>
    %c0_27 = arith.constant 0 : index
    %c0_28 = arith.constant 0 : index
    %32 = vector.load %arg8[%c0_27, %c0_28] : memref<128x256xbf16, #tpu.memory_space<vmem>>, vector<128x256xbf16>
    %c0_29 = arith.constant 0 : index
    %c0_30 = arith.constant 0 : index
    %33 = vector.load %arg9[%c0_29, %c0_30] : memref<1x256xf32, #tpu.memory_space<vmem>>, vector<1x256xf32>
    %34 = arith.truncf %31 : vector<16x128xf32> to vector<16x128xbf16>
    %cst_31 = arith.constant dense<0.000000e+00> : vector<16x256xf32>
    %35 = tpu.matmul %34, %32, %cst_31 {dimension_numbers = #tpu.dot_dimension_numbers<[1], [0], [0], [1], [0, 0, 1, 1], [], []>} : vector<16x128xbf16>, vector<128x256xbf16>, vector<16x256xf32> -> vector<16x256xf32>
    %36 = vector.broadcast %33 : vector<1x256xf32> to vector<16x256xf32>
    %37 = arith.addf %35, %36 : vector<16x256xf32>
    %cst_32 = arith.constant 0.000000e+00 : f32
    %38 = vector.broadcast %cst_32 : f32 to vector<16x256xf32>
    %39 = arith.maximumf %37, %38 : vector<16x256xf32>
    %c0_33 = arith.constant 0 : index
    %c0_34 = arith.constant 0 : index
    %40 = vector.load %arg10[%c0_33, %c0_34] : memref<256x128xbf16, #tpu.memory_space<vmem>>, vector<256x128xbf16>
    %c0_35 = arith.constant 0 : index
    %c0_36 = arith.constant 0 : index
    %41 = vector.load %arg11[%c0_35, %c0_36] : memref<1x128xf32, #tpu.memory_space<vmem>>, vector<1x128xf32>
    %42 = arith.truncf %39 : vector<16x256xf32> to vector<16x256xbf16>
    %cst_37 = arith.constant dense<0.000000e+00> : vector<16x128xf32>
    %43 = tpu.matmul %42, %40, %cst_37 {dimension_numbers = #tpu.dot_dimension_numbers<[1], [0], [0], [1], [0, 0, 1, 1], [], []>} : vector<16x256xbf16>, vector<256x128xbf16>, vector<16x128xf32> -> vector<16x128xf32>
    %44 = vector.broadcast %41 : vector<1x128xf32> to vector<16x128xf32>
    %45 = arith.addf %43, %44 : vector<16x128xf32>
    %c0_38 = arith.constant 0 : index
    %c0_39 = arith.constant 0 : index
    %46 = vector.load %arg12[%c0_38, %c0_39] : memref<2x64xbf16, #tpu.memory_space<vmem>>, vector<2x64xbf16>
    %c0_40 = arith.constant 0 : index
    %c0_41 = arith.constant 0 : index
    %47 = vector.load %arg13[%c0_40, %c0_41] : memref<1x64xf32, #tpu.memory_space<vmem>>, vector<1x64xf32>
    %48 = arith.truncf %1 : vector<16x2xf32> to vector<16x2xbf16>
    %cst_42 = arith.constant dense<0.000000e+00> : vector<16x64xf32>
    %49 = tpu.matmul %48, %46, %cst_42 {dimension_numbers = #tpu.dot_dimension_numbers<[1], [0], [0], [1], [0, 0, 1, 1], [], []>} : vector<16x2xbf16>, vector<2x64xbf16>, vector<16x64xf32> -> vector<16x64xf32>
    %50 = vector.broadcast %47 : vector<1x64xf32> to vector<16x64xf32>
    %51 = arith.addf %49, %50 : vector<16x64xf32>
    %cst_43 = arith.constant 0.000000e+00 : f32
    %52 = vector.broadcast %cst_43 : f32 to vector<16x64xf32>
    %53 = arith.maximumf %51, %52 : vector<16x64xf32>
    %c0_44 = arith.constant 0 : index
    %c0_45 = arith.constant 0 : index
    %54 = vector.load %arg14[%c0_44, %c0_45] : memref<64x128xbf16, #tpu.memory_space<vmem>>, vector<64x128xbf16>
    %c0_46 = arith.constant 0 : index
    %c0_47 = arith.constant 0 : index
    %55 = vector.load %arg15[%c0_46, %c0_47] : memref<1x128xf32, #tpu.memory_space<vmem>>, vector<1x128xf32>
    %56 = arith.truncf %53 : vector<16x64xf32> to vector<16x64xbf16>
    %cst_48 = arith.constant dense<0.000000e+00> : vector<16x128xf32>
    %57 = tpu.matmul %56, %54, %cst_48 {dimension_numbers = #tpu.dot_dimension_numbers<[1], [0], [0], [1], [0, 0, 1, 1], [], []>} : vector<16x64xbf16>, vector<64x128xbf16>, vector<16x128xf32> -> vector<16x128xf32>
    %58 = vector.broadcast %55 : vector<1x128xf32> to vector<16x128xf32>
    %59 = arith.addf %57, %58 : vector<16x128xf32>
    %cst_49 = arith.constant 0.000000e+00 : f32
    %60 = vector.broadcast %cst_49 : f32 to vector<16x128xf32>
    %61 = arith.maximumf %59, %60 : vector<16x128xf32>
    %c0_50 = arith.constant 0 : index
    %c0_51 = arith.constant 0 : index
    %62 = vector.load %arg16[%c0_50, %c0_51] : memref<128x256xbf16, #tpu.memory_space<vmem>>, vector<128x256xbf16>
    %c0_52 = arith.constant 0 : index
    %c0_53 = arith.constant 0 : index
    %63 = vector.load %arg17[%c0_52, %c0_53] : memref<1x256xf32, #tpu.memory_space<vmem>>, vector<1x256xf32>
    %64 = arith.truncf %61 : vector<16x128xf32> to vector<16x128xbf16>
    %cst_54 = arith.constant dense<0.000000e+00> : vector<16x256xf32>
    %65 = tpu.matmul %64, %62, %cst_54 {dimension_numbers = #tpu.dot_dimension_numbers<[1], [0], [0], [1], [0, 0, 1, 1], [], []>} : vector<16x128xbf16>, vector<128x256xbf16>, vector<16x256xf32> -> vector<16x256xf32>
    %66 = vector.broadcast %63 : vector<1x256xf32> to vector<16x256xf32>
    %67 = arith.addf %65, %66 : vector<16x256xf32>
    %cst_55 = arith.constant 0.000000e+00 : f32
    %68 = vector.broadcast %cst_55 : f32 to vector<16x256xf32>
    %69 = arith.maximumf %67, %68 : vector<16x256xf32>
    %c0_56 = arith.constant 0 : index
    %c0_57 = arith.constant 0 : index
    %70 = vector.load %arg18[%c0_56, %c0_57] : memref<256x128xbf16, #tpu.memory_space<vmem>>, vector<256x128xbf16>
    %c0_58 = arith.constant 0 : index
    %c0_59 = arith.constant 0 : index
    %71 = vector.load %arg19[%c0_58, %c0_59] : memref<1x128xf32, #tpu.memory_space<vmem>>, vector<1x128xf32>
    %72 = arith.truncf %69 : vector<16x256xf32> to vector<16x256xbf16>
    %cst_60 = arith.constant dense<0.000000e+00> : vector<16x128xf32>
    %73 = tpu.matmul %72, %70, %cst_60 {dimension_numbers = #tpu.dot_dimension_numbers<[1], [0], [0], [1], [0, 0, 1, 1], [], []>} : vector<16x256xbf16>, vector<256x128xbf16>, vector<16x128xf32> -> vector<16x128xf32>
    %74 = vector.broadcast %71 : vector<1x128xf32> to vector<16x128xf32>
    %75 = arith.addf %73, %74 : vector<16x128xf32>
    %cst_61 = arith.constant 0.000000e+00 : f32
    %76 = vector.broadcast %cst_61 : f32 to vector<16x32xf32>
    %77 = vector.extract_strided_slice %75 {offsets = [0, 0], sizes = [16, 32], strides = [1, 1]} : vector<16x128xf32> to vector<16x32xf32>
    %78 = vector.extract_strided_slice %45 {offsets = [0, 0], sizes = [16, 32], strides = [1, 1]} : vector<16x128xf32> to vector<16x32xf32>
    %79 = arith.mulf %77, %7 : vector<16x32xf32>
    %cst_62 = arith.constant dense<0.000000e+00> : vector<32xf32>
    %80 = vector.multi_reduction <add>, %79, %cst_62 [0] : vector<16x32xf32> to vector<32xf32>
    %81 = vector.shape_cast %80 : vector<32xf32> to vector<1x32xf32>
    %cst_63 = arith.constant dense<0.000000e+00> : vector<1xf32>
    %82 = vector.multi_reduction <add>, %81, %cst_63 [1] : vector<1x32xf32> to vector<1xf32>
    %83 = vector.shape_cast %82 : vector<1xf32> to vector<1x1xf32>
    %cst_64 = arith.constant 6.250000e-02 : f32
    %84 = vector.broadcast %cst_64 : f32 to vector<1x1xf32>
    %85 = arith.mulf %83, %84 : vector<1x1xf32>
    %86 = vector.broadcast %85 : vector<1x1xf32> to vector<16x32xf32>
    %87 = arith.mulf %78, %86 : vector<16x32xf32>
    %88 = arith.addf %76, %87 : vector<16x32xf32>
    %89 = vector.extract_strided_slice %75 {offsets = [0, 32], sizes = [16, 32], strides = [1, 1]} : vector<16x128xf32> to vector<16x32xf32>
    %90 = vector.extract_strided_slice %45 {offsets = [0, 32], sizes = [16, 32], strides = [1, 1]} : vector<16x128xf32> to vector<16x32xf32>
    %91 = arith.mulf %89, %7 : vector<16x32xf32>
    %cst_65 = arith.constant dense<0.000000e+00> : vector<32xf32>
    %92 = vector.multi_reduction <add>, %91, %cst_65 [0] : vector<16x32xf32> to vector<32xf32>
    %93 = vector.shape_cast %92 : vector<32xf32> to vector<1x32xf32>
    %cst_66 = arith.constant dense<0.000000e+00> : vector<1xf32>
    %94 = vector.multi_reduction <add>, %93, %cst_66 [1] : vector<1x32xf32> to vector<1xf32>
    %95 = vector.shape_cast %94 : vector<1xf32> to vector<1x1xf32>
    %cst_67 = arith.constant 6.250000e-02 : f32
    %96 = vector.broadcast %cst_67 : f32 to vector<1x1xf32>
    %97 = arith.mulf %95, %96 : vector<1x1xf32>
    %98 = vector.broadcast %97 : vector<1x1xf32> to vector<16x32xf32>
    %99 = arith.mulf %90, %98 : vector<16x32xf32>
    %100 = arith.addf %88, %99 : vector<16x32xf32>
    %101 = vector.extract_strided_slice %75 {offsets = [0, 64], sizes = [16, 32], strides = [1, 1]} : vector<16x128xf32> to vector<16x32xf32>
    %102 = vector.extract_strided_slice %45 {offsets = [0, 64], sizes = [16, 32], strides = [1, 1]} : vector<16x128xf32> to vector<16x32xf32>
    %103 = arith.mulf %101, %7 : vector<16x32xf32>
    %cst_68 = arith.constant dense<0.000000e+00> : vector<32xf32>
    %104 = vector.multi_reduction <add>, %103, %cst_68 [0] : vector<16x32xf32> to vector<32xf32>
    %105 = vector.shape_cast %104 : vector<32xf32> to vector<1x32xf32>
    %cst_69 = arith.constant dense<0.000000e+00> : vector<1xf32>
    %106 = vector.multi_reduction <add>, %105, %cst_69 [1] : vector<1x32xf32> to vector<1xf32>
    %107 = vector.shape_cast %106 : vector<1xf32> to vector<1x1xf32>
    %cst_70 = arith.constant 6.250000e-02 : f32
    %108 = vector.broadcast %cst_70 : f32 to vector<1x1xf32>
    %109 = arith.mulf %107, %108 : vector<1x1xf32>
    %110 = vector.broadcast %109 : vector<1x1xf32> to vector<16x32xf32>
    %111 = arith.mulf %102, %110 : vector<16x32xf32>
    %112 = arith.addf %100, %111 : vector<16x32xf32>
    %113 = vector.extract_strided_slice %75 {offsets = [0, 96], sizes = [16, 32], strides = [1, 1]} : vector<16x128xf32> to vector<16x32xf32>
    %114 = vector.extract_strided_slice %45 {offsets = [0, 96], sizes = [16, 32], strides = [1, 1]} : vector<16x128xf32> to vector<16x32xf32>
    %115 = arith.mulf %113, %7 : vector<16x32xf32>
    %cst_71 = arith.constant dense<0.000000e+00> : vector<32xf32>
    %116 = vector.multi_reduction <add>, %115, %cst_71 [0] : vector<16x32xf32> to vector<32xf32>
    %117 = vector.shape_cast %116 : vector<32xf32> to vector<1x32xf32>
    %cst_72 = arith.constant dense<0.000000e+00> : vector<1xf32>
    %118 = vector.multi_reduction <add>, %117, %cst_72 [1] : vector<1x32xf32> to vector<1xf32>
    %119 = vector.shape_cast %118 : vector<1xf32> to vector<1x1xf32>
    %cst_73 = arith.constant 6.250000e-02 : f32
    %120 = vector.broadcast %cst_73 : f32 to vector<1x1xf32>
    %121 = arith.mulf %119, %120 : vector<1x1xf32>
    %122 = vector.broadcast %121 : vector<1x1xf32> to vector<16x32xf32>
    %123 = arith.mulf %114, %122 : vector<16x32xf32>
    %124 = arith.addf %112, %123 : vector<16x32xf32>
    %125 = arith.addf %15, %124 : vector<16x32xf32>
    %cst_74 = arith.constant dense<0.000000e+00> : vector<16xf32>
    %126 = vector.multi_reduction <add>, %125, %cst_74 [1] : vector<16x32xf32> to vector<16xf32>
    %127 = vector.shape_cast %126 : vector<16xf32> to vector<16x1xf32>
    %cst_75 = arith.constant 3.200000e+01 : f32
    %128 = vector.broadcast %cst_75 : f32 to vector<16x1xf32>
    %129 = arith.divf %127, %128 : vector<16x1xf32>
    %130 = vector.broadcast %129 : vector<16x1xf32> to vector<16x32xf32>
    %131 = arith.subf %125, %130 : vector<16x32xf32>
    %132 = arith.mulf %131, %131 : vector<16x32xf32>
    %cst_76 = arith.constant dense<0.000000e+00> : vector<16xf32>
    %133 = vector.multi_reduction <add>, %132, %cst_76 [1] : vector<16x32xf32> to vector<16xf32>
    %134 = vector.shape_cast %133 : vector<16xf32> to vector<16x1xf32>
    %cst_77 = arith.constant 3.200000e+01 : f32
    %135 = vector.broadcast %cst_77 : f32 to vector<16x1xf32>
    %136 = arith.divf %134, %135 : vector<16x1xf32>
    %137 = vector.broadcast %129 : vector<16x1xf32> to vector<16x32xf32>
    %138 = arith.subf %125, %137 : vector<16x32xf32>
    %cst_78 = arith.constant 9.99999974E-6 : f32
    %139 = vector.broadcast %cst_78 : f32 to vector<16x1xf32>
    %140 = arith.addf %136, %139 : vector<16x1xf32>
    %141 = math.rsqrt %140 : vector<16x1xf32>
    %142 = vector.broadcast %141 : vector<16x1xf32> to vector<16x32xf32>
    %143 = arith.mulf %138, %142 : vector<16x32xf32>
    %144 = vector.broadcast %10 : vector<1x32xf32> to vector<16x32xf32>
    %145 = arith.mulf %143, %144 : vector<16x32xf32>
    %146 = vector.broadcast %11 : vector<1x32xf32> to vector<16x32xf32>
    %147 = arith.addf %145, %146 : vector<16x32xf32>
    %cst_79 = arith.constant 0.000000e+00 : f32
    %148 = vector.broadcast %cst_79 : f32 to vector<16x32xf32>
    %149 = arith.maximumf %147, %148 : vector<16x32xf32>
    %c0_80 = arith.constant 0 : index
    %c0_81 = arith.constant 0 : index
    %c0_82 = arith.constant 0 : index
    %150 = vector.load %arg24[%c0_80, %c0_81, %c0_82] : memref<1x16x32xf32, #tpu.memory_space<vmem>>, vector<1x16x32xf32>
    %151 = vector.shape_cast %150 : vector<1x16x32xf32> to vector<16x32xf32>
    %152 = vector.shape_cast %149 : vector<16x32xf32> to vector<1x16x32xf32>
    tpu.vector_store %arg24[%c0_80, %c0_81, %c0_82], %152 {strides = array<i32>} : memref<1x16x32xf32, #tpu.memory_space<vmem>>, vector<1x16x32xf32>,
    return
  }
  func.func @transform_0(%arg0: i32) -> (i32, i32, i32) {
    %c0_i32 = arith.constant 0 : i32
    %c0_i32_0 = arith.constant 0 : i32
    %c0_i32_1 = arith.constant 0 : i32
    return %arg0, %c0_i32, %c0_i32_0 : i32, i32, i32
  }
  func.func @transform_1(%arg0: i32) -> (i32, i32) {
    %c0_i32 = arith.constant 0 : i32
    %c0_i32_0 = arith.constant 0 : i32
    %c0_i32_1 = arith.constant 0 : i32
    return %c0_i32, %c0_i32_0 : i32, i32
  }
  func.func @transform_2(%arg0: i32) -> (i32, i32) {
    %c0_i32 = arith.constant 0 : i32
    %c0_i32_0 = arith.constant 0 : i32
    %c0_i32_1 = arith.constant 0 : i32
    return %c0_i32, %c0_i32_0 : i32, i32
  }
  func.func @transform_3(%arg0: i32) -> (i32, i32) {
    %c0_i32 = arith.constant 0 : i32
    %c0_i32_0 = arith.constant 0 : i32
    %c0_i32_1 = arith.constant 0 : i32
    return %c0_i32, %c0_i32_0 : i32, i32
  }
  func.func @transform_4(%arg0: i32) -> (i32, i32) {
    %c0_i32 = arith.constant 0 : i32
    %c0_i32_0 = arith.constant 0 : i32
    %c0_i32_1 = arith.constant 0 : i32
    return %c0_i32, %c0_i32_0 : i32, i32
  }
  func.func @transform_5(%arg0: i32) -> (i32, i32) {
    %c0_i32 = arith.constant 0 : i32
    %c0_i32_0 = arith.constant 0 : i32
    %c0_i32_1 = arith.constant 0 : i32
    return %c0_i32, %c0_i32_0 : i32, i32
  }
  func.func @transform_6(%arg0: i32) -> (i32, i32) {
    %c0_i32 = arith.constant 0 : i32
    %c0_i32_0 = arith.constant 0 : i32
    %c0_i32_1 = arith.constant 0 : i32
    return %c0_i32, %c0_i32_0 : i32, i32
  }
  func.func @transform_7(%arg0: i32) -> (i32, i32) {
    %c0_i32 = arith.constant 0 : i32
    %c0_i32_0 = arith.constant 0 : i32
    %c0_i32_1 = arith.constant 0 : i32
    return %c0_i32, %c0_i32_0 : i32, i32
  }
  func.func @transform_8(%arg0: i32) -> (i32, i32) {
    %c0_i32 = arith.constant 0 : i32
    %c0_i32_0 = arith.constant 0 : i32
    %c0_i32_1 = arith.constant 0 : i32
    return %c0_i32, %c0_i32_0 : i32, i32
  }
  func.func @transform_9(%arg0: i32) -> (i32, i32) {
    %c0_i32 = arith.constant 0 : i32
    %c0_i32_0 = arith.constant 0 : i32
    %c0_i32_1 = arith.constant 0 : i32
    return %c0_i32, %c0_i32_0 : i32, i32
  }
  func.func @transform_10(%arg0: i32) -> (i32, i32) {
    %c0_i32 = arith.constant 0 : i32
    %c0_i32_0 = arith.constant 0 : i32
    %c0_i32_1 = arith.constant 0 : i32
    return %c0_i32, %c0_i32_0 : i32, i32
  }
  func.func @transform_11(%arg0: i32) -> (i32, i32) {
    %c0_i32 = arith.constant 0 : i32
    %c0_i32_0 = arith.constant 0 : i32
    %c0_i32_1 = arith.constant 0 : i32
    return %c0_i32, %c0_i32_0 : i32, i32
  }
  func.func @transform_12(%arg0: i32) -> (i32, i32) {
    %c0_i32 = arith.constant 0 : i32
    %c0_i32_0 = arith.constant 0 : i32
    %c0_i32_1 = arith.constant 0 : i32
    return %c0_i32, %c0_i32_0 : i32, i32
  }
  func.func @transform_13(%arg0: i32) -> (i32, i32) {
    %c0_i32 = arith.constant 0 : i32
    %c0_i32_0 = arith.constant 0 : i32
    %c0_i32_1 = arith.constant 0 : i32
    return %c0_i32, %c0_i32_0 : i32, i32
  }
  func.func @transform_14(%arg0: i32) -> (i32, i32) {
    %c0_i32 = arith.constant 0 : i32
    %c0_i32_0 = arith.constant 0 : i32
    %c0_i32_1 = arith.constant 0 : i32
    return %c0_i32, %c0_i32_0 : i32, i32
  }
  func.func @transform_15(%arg0: i32) -> (i32, i32) {
    %c0_i32 = arith.constant 0 : i32
    %c0_i32_0 = arith.constant 0 : i32
    %c0_i32_1 = arith.constant 0 : i32
    return %c0_i32, %c0_i32_0 : i32, i32
  }
  func.func @transform_16(%arg0: i32) -> (i32, i32) {
    %c0_i32 = arith.constant 0 : i32
    %c0_i32_0 = arith.constant 0 : i32
    %c0_i32_1 = arith.constant 0 : i32
    return %c0_i32, %c0_i32_0 : i32, i32
  }
  func.func @transform_17(%arg0: i32) -> (i32, i32) {
    %c0_i32 = arith.constant 0 : i32
    %c0_i32_0 = arith.constant 0 : i32
    %c0_i32_1 = arith.constant 0 : i32
    return %c0_i32, %c0_i32_0 : i32, i32
  }
  func.func @transform_18(%arg0: i32) -> (i32, i32) {
    %c0_i32 = arith.constant 0 : i32
    %c0_i32_0 = arith.constant 0 : i32
    %c0_i32_1 = arith.constant 0 : i32
    return %c0_i32, %c0_i32_0 : i32, i32
  }
  func.func @transform_19(%arg0: i32) -> (i32, i32) {
    %c0_i32 = arith.constant 0 : i32
    %c0_i32_0 = arith.constant 0 : i32
    %c0_i32_1 = arith.constant 0 : i32
    return %c0_i32, %c0_i32_0 : i32, i32
  }
  func.func @transform_20(%arg0: i32) -> (i32, i32) {
    %c0_i32 = arith.constant 0 : i32
    %c0_i32_0 = arith.constant 0 : i32
    %c0_i32_1 = arith.constant 0 : i32
    return %c0_i32, %c0_i32_0 : i32, i32
  }
  func.func @transform_21(%arg0: i32) -> (i32, i32) {
    %c0_i32 = arith.constant 0 : i32
    %c0_i32_0 = arith.constant 0 : i32
    %c0_i32_1 = arith.constant 0 : i32
    return %c0_i32, %c0_i32_0 : i32, i32
  }
  func.func @transform_22(%arg0: i32) -> (i32, i32) {
    %c0_i32 = arith.constant 0 : i32
    %c0_i32_0 = arith.constant 0 : i32
    %c0_i32_1 = arith.constant 0 : i32
    return %c0_i32, %c0_i32_0 : i32, i32
  }
  func.func @transform_23(%arg0: i32) -> (i32, i32, i32) {
    %c0_i32 = arith.constant 0 : i32
    %c0_i32_0 = arith.constant 0 : i32
    %c0_i32_1 = arith.constant 0 : i32
    return %arg0, %c0_i32, %c0_i32_0 : i32, i32, i32
  }
}

module attributes {stable_mosaic.version = 11 : i64} {
  func.func @_lno_block_kernel(%arg0: i32, %arg1: memref<1x16x2xf32, #tpu.memory_space<vmem>>, %arg2: memref<1x16x32xf32, #tpu.memory_space<vmem>>, %arg3: memref<2x64xbf16, #tpu.memory_space<vmem>>, %arg4: memref<1x64xf32, #tpu.memory_space<vmem>>, %arg5: memref<64x128xbf16, #tpu.memory_space<vmem>>, %arg6: memref<1x128xf32, #tpu.memory_space<vmem>>, %arg7: memref<128x256xbf16, #tpu.memory_space<vmem>>, %arg8: memref<1x256xf32, #tpu.memory_space<vmem>>, %arg9: memref<256x128xbf16, #tpu.memory_space<vmem>>, %arg10: memref<1x128xf32, #tpu.memory_space<vmem>>, %arg11: memref<2x64xbf16, #tpu.memory_space<vmem>>, %arg12: memref<1x64xf32, #tpu.memory_space<vmem>>, %arg13: memref<64x128xbf16, #tpu.memory_space<vmem>>, %arg14: memref<1x128xf32, #tpu.memory_space<vmem>>, %arg15: memref<128x256xbf16, #tpu.memory_space<vmem>>, %arg16: memref<1x256xf32, #tpu.memory_space<vmem>>, %arg17: memref<256x128xbf16, #tpu.memory_space<vmem>>, %arg18: memref<1x128xf32, #tpu.memory_space<vmem>>, %arg19: memref<32x32xbf16, #tpu.memory_space<vmem>>, %arg20: memref<1x32xf32, #tpu.memory_space<vmem>>, %arg21: memref<1x32xf32, #tpu.memory_space<vmem>>, %arg22: memref<1x32xf32, #tpu.memory_space<vmem>>, %arg23: memref<1x16x32xf32, #tpu.memory_space<vmem>>) attributes {dimension_semantics = [#tpu.dimension_semantics<parallel>], iteration_bounds = array<i64: 2>, scalar_prefetch = 0 : i64, scratch_operands = 0 : i64, tpu.core_type = #tpu.core_type<tc>, window_params = [{transform_indices = @transform_0, window_bounds = array<i64: 1, 16, 2>}, {transform_indices = @transform_1, window_bounds = array<i64: 1, 16, 32>}, {pipeline_mode = #tpu.pipeline_mode<synchronous>, transform_indices = @transform_2, window_bounds = array<i64: 2, 64>}, {pipeline_mode = #tpu.pipeline_mode<synchronous>, transform_indices = @transform_3, window_bounds = array<i64: 1, 64>}, {pipeline_mode = #tpu.pipeline_mode<synchronous>, transform_indices = @transform_4, window_bounds = array<i64: 64, 128>}, {pipeline_mode = #tpu.pipeline_mode<synchronous>, transform_indices = @transform_5, window_bounds = array<i64: 1, 128>}, {pipeline_mode = #tpu.pipeline_mode<synchronous>, transform_indices = @transform_6, window_bounds = array<i64: 128, 256>}, {pipeline_mode = #tpu.pipeline_mode<synchronous>, transform_indices = @transform_7, window_bounds = array<i64: 1, 256>}, {pipeline_mode = #tpu.pipeline_mode<synchronous>, transform_indices = @transform_8, window_bounds = array<i64: 256, 128>}, {pipeline_mode = #tpu.pipeline_mode<synchronous>, transform_indices = @transform_9, window_bounds = array<i64: 1, 128>}, {pipeline_mode = #tpu.pipeline_mode<synchronous>, transform_indices = @transform_10, window_bounds = array<i64: 2, 64>}, {pipeline_mode = #tpu.pipeline_mode<synchronous>, transform_indices = @transform_11, window_bounds = array<i64: 1, 64>}, {pipeline_mode = #tpu.pipeline_mode<synchronous>, transform_indices = @transform_12, window_bounds = array<i64: 64, 128>}, {pipeline_mode = #tpu.pipeline_mode<synchronous>, transform_indices = @transform_13, window_bounds = array<i64: 1, 128>}, {pipeline_mode = #tpu.pipeline_mode<synchronous>, transform_indices = @transform_14, window_bounds = array<i64: 128, 256>}, {pipeline_mode = #tpu.pipeline_mode<synchronous>, transform_indices = @transform_15, window_bounds = array<i64: 1, 256>}, {pipeline_mode = #tpu.pipeline_mode<synchronous>, transform_indices = @transform_16, window_bounds = array<i64: 256, 128>}, {pipeline_mode = #tpu.pipeline_mode<synchronous>, transform_indices = @transform_17, window_bounds = array<i64: 1, 128>}, {pipeline_mode = #tpu.pipeline_mode<synchronous>, transform_indices = @transform_18, window_bounds = array<i64: 32, 32>}, {pipeline_mode = #tpu.pipeline_mode<synchronous>, transform_indices = @transform_19, window_bounds = array<i64: 1, 32>}, {pipeline_mode = #tpu.pipeline_mode<synchronous>, transform_indices = @transform_20, window_bounds = array<i64: 1, 32>}, {pipeline_mode = #tpu.pipeline_mode<synchronous>, transform_indices = @transform_21, window_bounds = array<i64: 1, 32>}, {transform_indices = @transform_22, window_bounds = array<i64: 1, 16, 32>}]} {
    %c0 = arith.constant 0 : index
    %c0_0 = arith.constant 0 : index
    %c0_1 = arith.constant 0 : index
    %0 = vector.load %arg1[%c0, %c0_0, %c0_1] : memref<1x16x2xf32, #tpu.memory_space<vmem>>, vector<1x16x2xf32>
    %1 = vector.shape_cast %0 : vector<1x16x2xf32> to vector<16x2xf32>
    %c0_2 = arith.constant 0 : index
    %c0_3 = arith.constant 0 : index
    %c0_4 = arith.constant 0 : index
    %2 = vector.load %arg2[%c0_2, %c0_3, %c0_4] : memref<1x16x32xf32, #tpu.memory_space<vmem>>, vector<1x16x32xf32>
    %3 = vector.shape_cast %2 : vector<1x16x32xf32> to vector<16x32xf32>
    %c0_5 = arith.constant 0 : index
    %c0_6 = arith.constant 0 : index
    %4 = vector.load %arg19[%c0_5, %c0_6] : memref<32x32xbf16, #tpu.memory_space<vmem>>, vector<32x32xbf16>
    %c0_7 = arith.constant 0 : index
    %c0_8 = arith.constant 0 : index
    %5 = vector.load %arg20[%c0_7, %c0_8] : memref<1x32xf32, #tpu.memory_space<vmem>>, vector<1x32xf32>
    %c0_9 = arith.constant 0 : index
    %c0_10 = arith.constant 0 : index
    %6 = vector.load %arg21[%c0_9, %c0_10] : memref<1x32xf32, #tpu.memory_space<vmem>>, vector<1x32xf32>
    %c0_11 = arith.constant 0 : index
    %c0_12 = arith.constant 0 : index
    %7 = vector.load %arg22[%c0_11, %c0_12] : memref<1x32xf32, #tpu.memory_space<vmem>>, vector<1x32xf32>
    %8 = arith.truncf %3 : vector<16x32xf32> to vector<16x32xbf16>
    %cst = arith.constant dense<0.000000e+00> : vector<16x32xf32>
    %9 = tpu.matmul %8, %4, %cst {dimension_numbers = #tpu.dot_dimension_numbers<[1], [0], [0], [1], [0, 0, 1, 1], [], []>} : vector<16x32xbf16>, vector<32x32xbf16>, vector<16x32xf32> -> vector<16x32xf32>
    %10 = vector.broadcast %5 : vector<1x32xf32> to vector<16x32xf32>
    %11 = arith.addf %9, %10 : vector<16x32xf32>
    %c0_13 = arith.constant 0 : index
    %c0_14 = arith.constant 0 : index
    %12 = vector.load %arg3[%c0_13, %c0_14] : memref<2x64xbf16, #tpu.memory_space<vmem>>, vector<2x64xbf16>
    %c0_15 = arith.constant 0 : index
    %c0_16 = arith.constant 0 : index
    %13 = vector.load %arg4[%c0_15, %c0_16] : memref<1x64xf32, #tpu.memory_space<vmem>>, vector<1x64xf32>
    %14 = arith.truncf %1 : vector<16x2xf32> to vector<16x2xbf16>
    %cst_17 = arith.constant dense<0.000000e+00> : vector<16x64xf32>
    %15 = tpu.matmul %14, %12, %cst_17 {dimension_numbers = #tpu.dot_dimension_numbers<[1], [0], [0], [1], [0, 0, 1, 1], [], []>} : vector<16x2xbf16>, vector<2x64xbf16>, vector<16x64xf32> -> vector<16x64xf32>
    %16 = vector.broadcast %13 : vector<1x64xf32> to vector<16x64xf32>
    %17 = arith.addf %15, %16 : vector<16x64xf32>
    %cst_18 = arith.constant 0.000000e+00 : f32
    %18 = vector.broadcast %cst_18 : f32 to vector<16x64xf32>
    %19 = arith.maximumf %17, %18 : vector<16x64xf32>
    %c0_19 = arith.constant 0 : index
    %c0_20 = arith.constant 0 : index
    %20 = vector.load %arg5[%c0_19, %c0_20] : memref<64x128xbf16, #tpu.memory_space<vmem>>, vector<64x128xbf16>
    %c0_21 = arith.constant 0 : index
    %c0_22 = arith.constant 0 : index
    %21 = vector.load %arg6[%c0_21, %c0_22] : memref<1x128xf32, #tpu.memory_space<vmem>>, vector<1x128xf32>
    %22 = arith.truncf %19 : vector<16x64xf32> to vector<16x64xbf16>
    %cst_23 = arith.constant dense<0.000000e+00> : vector<16x128xf32>
    %23 = tpu.matmul %22, %20, %cst_23 {dimension_numbers = #tpu.dot_dimension_numbers<[1], [0], [0], [1], [0, 0, 1, 1], [], []>} : vector<16x64xbf16>, vector<64x128xbf16>, vector<16x128xf32> -> vector<16x128xf32>
    %24 = vector.broadcast %21 : vector<1x128xf32> to vector<16x128xf32>
    %25 = arith.addf %23, %24 : vector<16x128xf32>
    %cst_24 = arith.constant 0.000000e+00 : f32
    %26 = vector.broadcast %cst_24 : f32 to vector<16x128xf32>
    %27 = arith.maximumf %25, %26 : vector<16x128xf32>
    %c0_25 = arith.constant 0 : index
    %c0_26 = arith.constant 0 : index
    %28 = vector.load %arg7[%c0_25, %c0_26] : memref<128x256xbf16, #tpu.memory_space<vmem>>, vector<128x256xbf16>
    %c0_27 = arith.constant 0 : index
    %c0_28 = arith.constant 0 : index
    %29 = vector.load %arg8[%c0_27, %c0_28] : memref<1x256xf32, #tpu.memory_space<vmem>>, vector<1x256xf32>
    %30 = arith.truncf %27 : vector<16x128xf32> to vector<16x128xbf16>
    %cst_29 = arith.constant dense<0.000000e+00> : vector<16x256xf32>
    %31 = tpu.matmul %30, %28, %cst_29 {dimension_numbers = #tpu.dot_dimension_numbers<[1], [0], [0], [1], [0, 0, 1, 1], [], []>} : vector<16x128xbf16>, vector<128x256xbf16>, vector<16x256xf32> -> vector<16x256xf32>
    %32 = vector.broadcast %29 : vector<1x256xf32> to vector<16x256xf32>
    %33 = arith.addf %31, %32 : vector<16x256xf32>
    %cst_30 = arith.constant 0.000000e+00 : f32
    %34 = vector.broadcast %cst_30 : f32 to vector<16x256xf32>
    %35 = arith.maximumf %33, %34 : vector<16x256xf32>
    %c0_31 = arith.constant 0 : index
    %c0_32 = arith.constant 0 : index
    %36 = vector.load %arg9[%c0_31, %c0_32] : memref<256x128xbf16, #tpu.memory_space<vmem>>, vector<256x128xbf16>
    %c0_33 = arith.constant 0 : index
    %c0_34 = arith.constant 0 : index
    %37 = vector.load %arg10[%c0_33, %c0_34] : memref<1x128xf32, #tpu.memory_space<vmem>>, vector<1x128xf32>
    %38 = arith.truncf %35 : vector<16x256xf32> to vector<16x256xbf16>
    %cst_35 = arith.constant dense<0.000000e+00> : vector<16x128xf32>
    %39 = tpu.matmul %38, %36, %cst_35 {dimension_numbers = #tpu.dot_dimension_numbers<[1], [0], [0], [1], [0, 0, 1, 1], [], []>} : vector<16x256xbf16>, vector<256x128xbf16>, vector<16x128xf32> -> vector<16x128xf32>
    %40 = vector.broadcast %37 : vector<1x128xf32> to vector<16x128xf32>
    %41 = arith.addf %39, %40 : vector<16x128xf32>
    %c0_36 = arith.constant 0 : index
    %c0_37 = arith.constant 0 : index
    %42 = vector.load %arg11[%c0_36, %c0_37] : memref<2x64xbf16, #tpu.memory_space<vmem>>, vector<2x64xbf16>
    %c0_38 = arith.constant 0 : index
    %c0_39 = arith.constant 0 : index
    %43 = vector.load %arg12[%c0_38, %c0_39] : memref<1x64xf32, #tpu.memory_space<vmem>>, vector<1x64xf32>
    %44 = arith.truncf %1 : vector<16x2xf32> to vector<16x2xbf16>
    %cst_40 = arith.constant dense<0.000000e+00> : vector<16x64xf32>
    %45 = tpu.matmul %44, %42, %cst_40 {dimension_numbers = #tpu.dot_dimension_numbers<[1], [0], [0], [1], [0, 0, 1, 1], [], []>} : vector<16x2xbf16>, vector<2x64xbf16>, vector<16x64xf32> -> vector<16x64xf32>
    %46 = vector.broadcast %43 : vector<1x64xf32> to vector<16x64xf32>
    %47 = arith.addf %45, %46 : vector<16x64xf32>
    %cst_41 = arith.constant 0.000000e+00 : f32
    %48 = vector.broadcast %cst_41 : f32 to vector<16x64xf32>
    %49 = arith.maximumf %47, %48 : vector<16x64xf32>
    %c0_42 = arith.constant 0 : index
    %c0_43 = arith.constant 0 : index
    %50 = vector.load %arg13[%c0_42, %c0_43] : memref<64x128xbf16, #tpu.memory_space<vmem>>, vector<64x128xbf16>
    %c0_44 = arith.constant 0 : index
    %c0_45 = arith.constant 0 : index
    %51 = vector.load %arg14[%c0_44, %c0_45] : memref<1x128xf32, #tpu.memory_space<vmem>>, vector<1x128xf32>
    %52 = arith.truncf %49 : vector<16x64xf32> to vector<16x64xbf16>
    %cst_46 = arith.constant dense<0.000000e+00> : vector<16x128xf32>
    %53 = tpu.matmul %52, %50, %cst_46 {dimension_numbers = #tpu.dot_dimension_numbers<[1], [0], [0], [1], [0, 0, 1, 1], [], []>} : vector<16x64xbf16>, vector<64x128xbf16>, vector<16x128xf32> -> vector<16x128xf32>
    %54 = vector.broadcast %51 : vector<1x128xf32> to vector<16x128xf32>
    %55 = arith.addf %53, %54 : vector<16x128xf32>
    %cst_47 = arith.constant 0.000000e+00 : f32
    %56 = vector.broadcast %cst_47 : f32 to vector<16x128xf32>
    %57 = arith.maximumf %55, %56 : vector<16x128xf32>
    %c0_48 = arith.constant 0 : index
    %c0_49 = arith.constant 0 : index
    %58 = vector.load %arg15[%c0_48, %c0_49] : memref<128x256xbf16, #tpu.memory_space<vmem>>, vector<128x256xbf16>
    %c0_50 = arith.constant 0 : index
    %c0_51 = arith.constant 0 : index
    %59 = vector.load %arg16[%c0_50, %c0_51] : memref<1x256xf32, #tpu.memory_space<vmem>>, vector<1x256xf32>
    %60 = arith.truncf %57 : vector<16x128xf32> to vector<16x128xbf16>
    %cst_52 = arith.constant dense<0.000000e+00> : vector<16x256xf32>
    %61 = tpu.matmul %60, %58, %cst_52 {dimension_numbers = #tpu.dot_dimension_numbers<[1], [0], [0], [1], [0, 0, 1, 1], [], []>} : vector<16x128xbf16>, vector<128x256xbf16>, vector<16x256xf32> -> vector<16x256xf32>
    %62 = vector.broadcast %59 : vector<1x256xf32> to vector<16x256xf32>
    %63 = arith.addf %61, %62 : vector<16x256xf32>
    %cst_53 = arith.constant 0.000000e+00 : f32
    %64 = vector.broadcast %cst_53 : f32 to vector<16x256xf32>
    %65 = arith.maximumf %63, %64 : vector<16x256xf32>
    %c0_54 = arith.constant 0 : index
    %c0_55 = arith.constant 0 : index
    %66 = vector.load %arg17[%c0_54, %c0_55] : memref<256x128xbf16, #tpu.memory_space<vmem>>, vector<256x128xbf16>
    %c0_56 = arith.constant 0 : index
    %c0_57 = arith.constant 0 : index
    %67 = vector.load %arg18[%c0_56, %c0_57] : memref<1x128xf32, #tpu.memory_space<vmem>>, vector<1x128xf32>
    %68 = arith.truncf %65 : vector<16x256xf32> to vector<16x256xbf16>
    %cst_58 = arith.constant dense<0.000000e+00> : vector<16x128xf32>
    %69 = tpu.matmul %68, %66, %cst_58 {dimension_numbers = #tpu.dot_dimension_numbers<[1], [0], [0], [1], [0, 0, 1, 1], [], []>} : vector<16x256xbf16>, vector<256x128xbf16>, vector<16x128xf32> -> vector<16x128xf32>
    %70 = vector.broadcast %67 : vector<1x128xf32> to vector<16x128xf32>
    %71 = arith.addf %69, %70 : vector<16x128xf32>
    %cst_59 = arith.constant 0.000000e+00 : f32
    %72 = vector.broadcast %cst_59 : f32 to vector<16x32xf32>
    %73 = vector.extract_strided_slice %71 {offsets = [0, 0], sizes = [16, 32], strides = [1, 1]} : vector<16x128xf32> to vector<16x32xf32>
    %74 = vector.extract_strided_slice %41 {offsets = [0, 0], sizes = [16, 32], strides = [1, 1]} : vector<16x128xf32> to vector<16x32xf32>
    %75 = arith.mulf %73, %3 : vector<16x32xf32>
    %cst_60 = arith.constant dense<0.000000e+00> : vector<32xf32>
    %76 = vector.multi_reduction <add>, %75, %cst_60 [0] : vector<16x32xf32> to vector<32xf32>
    %77 = vector.shape_cast %76 : vector<32xf32> to vector<1x32xf32>
    %cst_61 = arith.constant dense<0.000000e+00> : vector<1xf32>
    %78 = vector.multi_reduction <add>, %77, %cst_61 [1] : vector<1x32xf32> to vector<1xf32>
    %79 = vector.shape_cast %78 : vector<1xf32> to vector<1x1xf32>
    %cst_62 = arith.constant 6.250000e-02 : f32
    %80 = vector.broadcast %cst_62 : f32 to vector<1x1xf32>
    %81 = arith.mulf %79, %80 : vector<1x1xf32>
    %82 = vector.broadcast %81 : vector<1x1xf32> to vector<16x32xf32>
    %83 = arith.mulf %74, %82 : vector<16x32xf32>
    %84 = arith.addf %72, %83 : vector<16x32xf32>
    %85 = vector.extract_strided_slice %71 {offsets = [0, 32], sizes = [16, 32], strides = [1, 1]} : vector<16x128xf32> to vector<16x32xf32>
    %86 = vector.extract_strided_slice %41 {offsets = [0, 32], sizes = [16, 32], strides = [1, 1]} : vector<16x128xf32> to vector<16x32xf32>
    %87 = arith.mulf %85, %3 : vector<16x32xf32>
    %cst_63 = arith.constant dense<0.000000e+00> : vector<32xf32>
    %88 = vector.multi_reduction <add>, %87, %cst_63 [0] : vector<16x32xf32> to vector<32xf32>
    %89 = vector.shape_cast %88 : vector<32xf32> to vector<1x32xf32>
    %cst_64 = arith.constant dense<0.000000e+00> : vector<1xf32>
    %90 = vector.multi_reduction <add>, %89, %cst_64 [1] : vector<1x32xf32> to vector<1xf32>
    %91 = vector.shape_cast %90 : vector<1xf32> to vector<1x1xf32>
    %cst_65 = arith.constant 6.250000e-02 : f32
    %92 = vector.broadcast %cst_65 : f32 to vector<1x1xf32>
    %93 = arith.mulf %91, %92 : vector<1x1xf32>
    %94 = vector.broadcast %93 : vector<1x1xf32> to vector<16x32xf32>
    %95 = arith.mulf %86, %94 : vector<16x32xf32>
    %96 = arith.addf %84, %95 : vector<16x32xf32>
    %97 = vector.extract_strided_slice %71 {offsets = [0, 64], sizes = [16, 32], strides = [1, 1]} : vector<16x128xf32> to vector<16x32xf32>
    %98 = vector.extract_strided_slice %41 {offsets = [0, 64], sizes = [16, 32], strides = [1, 1]} : vector<16x128xf32> to vector<16x32xf32>
    %99 = arith.mulf %97, %3 : vector<16x32xf32>
    %cst_66 = arith.constant dense<0.000000e+00> : vector<32xf32>
    %100 = vector.multi_reduction <add>, %99, %cst_66 [0] : vector<16x32xf32> to vector<32xf32>
    %101 = vector.shape_cast %100 : vector<32xf32> to vector<1x32xf32>
    %cst_67 = arith.constant dense<0.000000e+00> : vector<1xf32>
    %102 = vector.multi_reduction <add>, %101, %cst_67 [1] : vector<1x32xf32> to vector<1xf32>
    %103 = vector.shape_cast %102 : vector<1xf32> to vector<1x1xf32>
    %cst_68 = arith.constant 6.250000e-02 : f32
    %104 = vector.broadcast %cst_68 : f32 to vector<1x1xf32>
    %105 = arith.mulf %103, %104 : vector<1x1xf32>
    %106 = vector.broadcast %105 : vector<1x1xf32> to vector<16x32xf32>
    %107 = arith.mulf %98, %106 : vector<16x32xf32>
    %108 = arith.addf %96, %107 : vector<16x32xf32>
    %109 = vector.extract_strided_slice %71 {offsets = [0, 96], sizes = [16, 32], strides = [1, 1]} : vector<16x128xf32> to vector<16x32xf32>
    %110 = vector.extract_strided_slice %41 {offsets = [0, 96], sizes = [16, 32], strides = [1, 1]} : vector<16x128xf32> to vector<16x32xf32>
    %111 = arith.mulf %109, %3 : vector<16x32xf32>
    %cst_69 = arith.constant dense<0.000000e+00> : vector<32xf32>
    %112 = vector.multi_reduction <add>, %111, %cst_69 [0] : vector<16x32xf32> to vector<32xf32>
    %113 = vector.shape_cast %112 : vector<32xf32> to vector<1x32xf32>
    %cst_70 = arith.constant dense<0.000000e+00> : vector<1xf32>
    %114 = vector.multi_reduction <add>, %113, %cst_70 [1] : vector<1x32xf32> to vector<1xf32>
    %115 = vector.shape_cast %114 : vector<1xf32> to vector<1x1xf32>
    %cst_71 = arith.constant 6.250000e-02 : f32
    %116 = vector.broadcast %cst_71 : f32 to vector<1x1xf32>
    %117 = arith.mulf %115, %116 : vector<1x1xf32>
    %118 = vector.broadcast %117 : vector<1x1xf32> to vector<16x32xf32>
    %119 = arith.mulf %110, %118 : vector<16x32xf32>
    %120 = arith.addf %108, %119 : vector<16x32xf32>
    %121 = arith.addf %11, %120 : vector<16x32xf32>
    %cst_72 = arith.constant dense<0.000000e+00> : vector<16xf32>
    %122 = vector.multi_reduction <add>, %121, %cst_72 [1] : vector<16x32xf32> to vector<16xf32>
    %123 = vector.shape_cast %122 : vector<16xf32> to vector<16x1xf32>
    %cst_73 = arith.constant 3.200000e+01 : f32
    %124 = vector.broadcast %cst_73 : f32 to vector<16x1xf32>
    %125 = arith.divf %123, %124 : vector<16x1xf32>
    %126 = vector.broadcast %125 : vector<16x1xf32> to vector<16x32xf32>
    %127 = arith.subf %121, %126 : vector<16x32xf32>
    %128 = arith.mulf %127, %127 : vector<16x32xf32>
    %cst_74 = arith.constant dense<0.000000e+00> : vector<16xf32>
    %129 = vector.multi_reduction <add>, %128, %cst_74 [1] : vector<16x32xf32> to vector<16xf32>
    %130 = vector.shape_cast %129 : vector<16xf32> to vector<16x1xf32>
    %cst_75 = arith.constant 3.200000e+01 : f32
    %131 = vector.broadcast %cst_75 : f32 to vector<16x1xf32>
    %132 = arith.divf %130, %131 : vector<16x1xf32>
    %133 = vector.broadcast %125 : vector<16x1xf32> to vector<16x32xf32>
    %134 = arith.subf %121, %133 : vector<16x32xf32>
    %cst_76 = arith.constant 9.99999974E-6 : f32
    %135 = vector.broadcast %cst_76 : f32 to vector<16x1xf32>
    %136 = arith.addf %132, %135 : vector<16x1xf32>
    %137 = math.rsqrt %136 : vector<16x1xf32>
    %138 = vector.broadcast %137 : vector<16x1xf32> to vector<16x32xf32>
    %139 = arith.mulf %134, %138 : vector<16x32xf32>
    %140 = vector.broadcast %6 : vector<1x32xf32> to vector<16x32xf32>
    %141 = arith.mulf %139, %140 : vector<16x32xf32>
    %142 = vector.broadcast %7 : vector<1x32xf32> to vector<16x32xf32>
    %143 = arith.addf %141, %142 : vector<16x32xf32>
    %cst_77 = arith.constant 0.000000e+00 : f32
    %144 = vector.broadcast %cst_77 : f32 to vector<16x32xf32>
    %145 = arith.maximumf %143, %144 : vector<16x32xf32>
    %c0_78 = arith.constant 0 : index
    %c0_79 = arith.constant 0 : index
    %c0_80 = arith.constant 0 : index
    %146 = vector.load %arg23[%c0_78, %c0_79, %c0_80] : memref<1x16x32xf32, #tpu.memory_space<vmem>>, vector<1x16x32xf32>
    %147 = vector.shape_cast %146 : vector<1x16x32xf32> to vector<16x32xf32>
    %148 = vector.shape_cast %145 : vector<16x32xf32> to vector<1x16x32xf32>
    tpu.vector_store %arg23[%c0_78, %c0_79, %c0_80], %148 {strides = array<i32>} : memref<1x16x32xf32, #tpu.memory_space<vmem>>, vector<1x16x32xf32>,
    return
  }
  func.func @transform_0(%arg0: i32) -> (i32, i32, i32) {
    %c0_i32 = arith.constant 0 : i32
    %c0_i32_0 = arith.constant 0 : i32
    %c0_i32_1 = arith.constant 0 : i32
    return %arg0, %c0_i32, %c0_i32_0 : i32, i32, i32
  }
  func.func @transform_1(%arg0: i32) -> (i32, i32, i32) {
    %c0_i32 = arith.constant 0 : i32
    %c0_i32_0 = arith.constant 0 : i32
    %c0_i32_1 = arith.constant 0 : i32
    return %arg0, %c0_i32, %c0_i32_0 : i32, i32, i32
  }
  func.func @transform_2(%arg0: i32) -> (i32, i32) {
    %c0_i32 = arith.constant 0 : i32
    %c0_i32_0 = arith.constant 0 : i32
    %c0_i32_1 = arith.constant 0 : i32
    return %c0_i32, %c0_i32_0 : i32, i32
  }
  func.func @transform_3(%arg0: i32) -> (i32, i32) {
    %c0_i32 = arith.constant 0 : i32
    %c0_i32_0 = arith.constant 0 : i32
    %c0_i32_1 = arith.constant 0 : i32
    return %c0_i32, %c0_i32_0 : i32, i32
  }
  func.func @transform_4(%arg0: i32) -> (i32, i32) {
    %c0_i32 = arith.constant 0 : i32
    %c0_i32_0 = arith.constant 0 : i32
    %c0_i32_1 = arith.constant 0 : i32
    return %c0_i32, %c0_i32_0 : i32, i32
  }
  func.func @transform_5(%arg0: i32) -> (i32, i32) {
    %c0_i32 = arith.constant 0 : i32
    %c0_i32_0 = arith.constant 0 : i32
    %c0_i32_1 = arith.constant 0 : i32
    return %c0_i32, %c0_i32_0 : i32, i32
  }
  func.func @transform_6(%arg0: i32) -> (i32, i32) {
    %c0_i32 = arith.constant 0 : i32
    %c0_i32_0 = arith.constant 0 : i32
    %c0_i32_1 = arith.constant 0 : i32
    return %c0_i32, %c0_i32_0 : i32, i32
  }
  func.func @transform_7(%arg0: i32) -> (i32, i32) {
    %c0_i32 = arith.constant 0 : i32
    %c0_i32_0 = arith.constant 0 : i32
    %c0_i32_1 = arith.constant 0 : i32
    return %c0_i32, %c0_i32_0 : i32, i32
  }
  func.func @transform_8(%arg0: i32) -> (i32, i32) {
    %c0_i32 = arith.constant 0 : i32
    %c0_i32_0 = arith.constant 0 : i32
    %c0_i32_1 = arith.constant 0 : i32
    return %c0_i32, %c0_i32_0 : i32, i32
  }
  func.func @transform_9(%arg0: i32) -> (i32, i32) {
    %c0_i32 = arith.constant 0 : i32
    %c0_i32_0 = arith.constant 0 : i32
    %c0_i32_1 = arith.constant 0 : i32
    return %c0_i32, %c0_i32_0 : i32, i32
  }
  func.func @transform_10(%arg0: i32) -> (i32, i32) {
    %c0_i32 = arith.constant 0 : i32
    %c0_i32_0 = arith.constant 0 : i32
    %c0_i32_1 = arith.constant 0 : i32
    return %c0_i32, %c0_i32_0 : i32, i32
  }
  func.func @transform_11(%arg0: i32) -> (i32, i32) {
    %c0_i32 = arith.constant 0 : i32
    %c0_i32_0 = arith.constant 0 : i32
    %c0_i32_1 = arith.constant 0 : i32
    return %c0_i32, %c0_i32_0 : i32, i32
  }
  func.func @transform_12(%arg0: i32) -> (i32, i32) {
    %c0_i32 = arith.constant 0 : i32
    %c0_i32_0 = arith.constant 0 : i32
    %c0_i32_1 = arith.constant 0 : i32
    return %c0_i32, %c0_i32_0 : i32, i32
  }
  func.func @transform_13(%arg0: i32) -> (i32, i32) {
    %c0_i32 = arith.constant 0 : i32
    %c0_i32_0 = arith.constant 0 : i32
    %c0_i32_1 = arith.constant 0 : i32
    return %c0_i32, %c0_i32_0 : i32, i32
  }
  func.func @transform_14(%arg0: i32) -> (i32, i32) {
    %c0_i32 = arith.constant 0 : i32
    %c0_i32_0 = arith.constant 0 : i32
    %c0_i32_1 = arith.constant 0 : i32
    return %c0_i32, %c0_i32_0 : i32, i32
  }
  func.func @transform_15(%arg0: i32) -> (i32, i32) {
    %c0_i32 = arith.constant 0 : i32
    %c0_i32_0 = arith.constant 0 : i32
    %c0_i32_1 = arith.constant 0 : i32
    return %c0_i32, %c0_i32_0 : i32, i32
  }
  func.func @transform_16(%arg0: i32) -> (i32, i32) {
    %c0_i32 = arith.constant 0 : i32
    %c0_i32_0 = arith.constant 0 : i32
    %c0_i32_1 = arith.constant 0 : i32
    return %c0_i32, %c0_i32_0 : i32, i32
  }
  func.func @transform_17(%arg0: i32) -> (i32, i32) {
    %c0_i32 = arith.constant 0 : i32
    %c0_i32_0 = arith.constant 0 : i32
    %c0_i32_1 = arith.constant 0 : i32
    return %c0_i32, %c0_i32_0 : i32, i32
  }
  func.func @transform_18(%arg0: i32) -> (i32, i32) {
    %c0_i32 = arith.constant 0 : i32
    %c0_i32_0 = arith.constant 0 : i32
    %c0_i32_1 = arith.constant 0 : i32
    return %c0_i32, %c0_i32_0 : i32, i32
  }
  func.func @transform_19(%arg0: i32) -> (i32, i32) {
    %c0_i32 = arith.constant 0 : i32
    %c0_i32_0 = arith.constant 0 : i32
    %c0_i32_1 = arith.constant 0 : i32
    return %c0_i32, %c0_i32_0 : i32, i32
  }
  func.func @transform_20(%arg0: i32) -> (i32, i32) {
    %c0_i32 = arith.constant 0 : i32
    %c0_i32_0 = arith.constant 0 : i32
    %c0_i32_1 = arith.constant 0 : i32
    return %c0_i32, %c0_i32_0 : i32, i32
  }
  func.func @transform_21(%arg0: i32) -> (i32, i32) {
    %c0_i32 = arith.constant 0 : i32
    %c0_i32_0 = arith.constant 0 : i32
    %c0_i32_1 = arith.constant 0 : i32
    return %c0_i32, %c0_i32_0 : i32, i32
  }
  func.func @transform_22(%arg0: i32) -> (i32, i32, i32) {
    %c0_i32 = arith.constant 0 : i32
    %c0_i32_0 = arith.constant 0 : i32
    %c0_i32_1 = arith.constant 0 : i32
    return %arg0, %c0_i32, %c0_i32_0 : i32, i32, i32
  }
}

module attributes {stable_mosaic.version = 11 : i64} {
  func.func @_lno_block_kernel(%arg0: i32, %arg1: memref<1x16x2xf32, #tpu.memory_space<vmem>>, %arg2: memref<1x16x32xf32, #tpu.memory_space<vmem>>, %arg3: memref<2x64xbf16, #tpu.memory_space<vmem>>, %arg4: memref<1x64xf32, #tpu.memory_space<vmem>>, %arg5: memref<64x128xbf16, #tpu.memory_space<vmem>>, %arg6: memref<1x128xf32, #tpu.memory_space<vmem>>, %arg7: memref<128x256xbf16, #tpu.memory_space<vmem>>, %arg8: memref<1x256xf32, #tpu.memory_space<vmem>>, %arg9: memref<256x128xbf16, #tpu.memory_space<vmem>>, %arg10: memref<1x128xf32, #tpu.memory_space<vmem>>, %arg11: memref<2x64xbf16, #tpu.memory_space<vmem>>, %arg12: memref<1x64xf32, #tpu.memory_space<vmem>>, %arg13: memref<64x128xbf16, #tpu.memory_space<vmem>>, %arg14: memref<1x128xf32, #tpu.memory_space<vmem>>, %arg15: memref<128x256xbf16, #tpu.memory_space<vmem>>, %arg16: memref<1x256xf32, #tpu.memory_space<vmem>>, %arg17: memref<256x128xbf16, #tpu.memory_space<vmem>>, %arg18: memref<1x128xf32, #tpu.memory_space<vmem>>, %arg19: memref<32x32xbf16, #tpu.memory_space<vmem>>, %arg20: memref<1x32xf32, #tpu.memory_space<vmem>>, %arg21: memref<1x32xf32, #tpu.memory_space<vmem>>, %arg22: memref<1x32xf32, #tpu.memory_space<vmem>>, %arg23: memref<32x64xbf16, #tpu.memory_space<vmem>>, %arg24: memref<1x64xf32, #tpu.memory_space<vmem>>, %arg25: memref<64x1xbf16, #tpu.memory_space<vmem>>, %arg26: memref<1x1xf32, #tpu.memory_space<vmem>>, %arg27: memref<1x16x1xf32, #tpu.memory_space<vmem>>) attributes {dimension_semantics = [#tpu.dimension_semantics<parallel>], iteration_bounds = array<i64: 2>, scalar_prefetch = 0 : i64, scratch_operands = 0 : i64, tpu.core_type = #tpu.core_type<tc>, window_params = [{transform_indices = @transform_0, window_bounds = array<i64: 1, 16, 2>}, {transform_indices = @transform_1, window_bounds = array<i64: 1, 16, 32>}, {pipeline_mode = #tpu.pipeline_mode<synchronous>, transform_indices = @transform_2, window_bounds = array<i64: 2, 64>}, {pipeline_mode = #tpu.pipeline_mode<synchronous>, transform_indices = @transform_3, window_bounds = array<i64: 1, 64>}, {pipeline_mode = #tpu.pipeline_mode<synchronous>, transform_indices = @transform_4, window_bounds = array<i64: 64, 128>}, {pipeline_mode = #tpu.pipeline_mode<synchronous>, transform_indices = @transform_5, window_bounds = array<i64: 1, 128>}, {pipeline_mode = #tpu.pipeline_mode<synchronous>, transform_indices = @transform_6, window_bounds = array<i64: 128, 256>}, {pipeline_mode = #tpu.pipeline_mode<synchronous>, transform_indices = @transform_7, window_bounds = array<i64: 1, 256>}, {pipeline_mode = #tpu.pipeline_mode<synchronous>, transform_indices = @transform_8, window_bounds = array<i64: 256, 128>}, {pipeline_mode = #tpu.pipeline_mode<synchronous>, transform_indices = @transform_9, window_bounds = array<i64: 1, 128>}, {pipeline_mode = #tpu.pipeline_mode<synchronous>, transform_indices = @transform_10, window_bounds = array<i64: 2, 64>}, {pipeline_mode = #tpu.pipeline_mode<synchronous>, transform_indices = @transform_11, window_bounds = array<i64: 1, 64>}, {pipeline_mode = #tpu.pipeline_mode<synchronous>, transform_indices = @transform_12, window_bounds = array<i64: 64, 128>}, {pipeline_mode = #tpu.pipeline_mode<synchronous>, transform_indices = @transform_13, window_bounds = array<i64: 1, 128>}, {pipeline_mode = #tpu.pipeline_mode<synchronous>, transform_indices = @transform_14, window_bounds = array<i64: 128, 256>}, {pipeline_mode = #tpu.pipeline_mode<synchronous>, transform_indices = @transform_15, window_bounds = array<i64: 1, 256>}, {pipeline_mode = #tpu.pipeline_mode<synchronous>, transform_indices = @transform_16, window_bounds = array<i64: 256, 128>}, {pipeline_mode = #tpu.pipeline_mode<synchronous>, transform_indices = @transform_17, window_bounds = array<i64: 1, 128>}, {pipeline_mode = #tpu.pipeline_mode<synchronous>, transform_indices = @transform_18, window_bounds = array<i64: 32, 32>}, {pipeline_mode = #tpu.pipeline_mode<synchronous>, transform_indices = @transform_19, window_bounds = array<i64: 1, 32>}, {pipeline_mode = #tpu.pipeline_mode<synchronous>, transform_indices = @transform_20, window_bounds = array<i64: 1, 32>}, {pipeline_mode = #tpu.pipeline_mode<synchronous>, transform_indices = @transform_21, window_bounds = array<i64: 1, 32>}, {pipeline_mode = #tpu.pipeline_mode<synchronous>, transform_indices = @transform_22, window_bounds = array<i64: 32, 64>}, {pipeline_mode = #tpu.pipeline_mode<synchronous>, transform_indices = @transform_23, window_bounds = array<i64: 1, 64>}, {pipeline_mode = #tpu.pipeline_mode<synchronous>, transform_indices = @transform_24, window_bounds = array<i64: 64, 1>}, {pipeline_mode = #tpu.pipeline_mode<synchronous>, transform_indices = @transform_25, window_bounds = array<i64: 1, 1>}, {transform_indices = @transform_26, window_bounds = array<i64: 1, 16, 1>}]} {
    %c0 = arith.constant 0 : index
    %c0_0 = arith.constant 0 : index
    %c0_1 = arith.constant 0 : index
    %0 = vector.load %arg1[%c0, %c0_0, %c0_1] : memref<1x16x2xf32, #tpu.memory_space<vmem>>, vector<1x16x2xf32>
    %1 = vector.shape_cast %0 : vector<1x16x2xf32> to vector<16x2xf32>
    %c0_2 = arith.constant 0 : index
    %c0_3 = arith.constant 0 : index
    %c0_4 = arith.constant 0 : index
    %2 = vector.load %arg2[%c0_2, %c0_3, %c0_4] : memref<1x16x32xf32, #tpu.memory_space<vmem>>, vector<1x16x32xf32>
    %3 = vector.shape_cast %2 : vector<1x16x32xf32> to vector<16x32xf32>
    %c0_5 = arith.constant 0 : index
    %c0_6 = arith.constant 0 : index
    %4 = vector.load %arg19[%c0_5, %c0_6] : memref<32x32xbf16, #tpu.memory_space<vmem>>, vector<32x32xbf16>
    %c0_7 = arith.constant 0 : index
    %c0_8 = arith.constant 0 : index
    %5 = vector.load %arg20[%c0_7, %c0_8] : memref<1x32xf32, #tpu.memory_space<vmem>>, vector<1x32xf32>
    %c0_9 = arith.constant 0 : index
    %c0_10 = arith.constant 0 : index
    %6 = vector.load %arg21[%c0_9, %c0_10] : memref<1x32xf32, #tpu.memory_space<vmem>>, vector<1x32xf32>
    %c0_11 = arith.constant 0 : index
    %c0_12 = arith.constant 0 : index
    %7 = vector.load %arg22[%c0_11, %c0_12] : memref<1x32xf32, #tpu.memory_space<vmem>>, vector<1x32xf32>
    %c0_13 = arith.constant 0 : index
    %c0_14 = arith.constant 0 : index
    %8 = vector.load %arg23[%c0_13, %c0_14] : memref<32x64xbf16, #tpu.memory_space<vmem>>, vector<32x64xbf16>
    %c0_15 = arith.constant 0 : index
    %c0_16 = arith.constant 0 : index
    %9 = vector.load %arg24[%c0_15, %c0_16] : memref<1x64xf32, #tpu.memory_space<vmem>>, vector<1x64xf32>
    %c0_17 = arith.constant 0 : index
    %c0_18 = arith.constant 0 : index
    %10 = vector.load %arg25[%c0_17, %c0_18] : memref<64x1xbf16, #tpu.memory_space<vmem>>, vector<64x1xbf16>
    %c0_19 = arith.constant 0 : index
    %c0_20 = arith.constant 0 : index
    %11 = vector.load %arg26[%c0_19, %c0_20] : memref<1x1xf32, #tpu.memory_space<vmem>>, vector<1x1xf32>
    %12 = arith.truncf %3 : vector<16x32xf32> to vector<16x32xbf16>
    %cst = arith.constant dense<0.000000e+00> : vector<16x32xf32>
    %13 = tpu.matmul %12, %4, %cst {dimension_numbers = #tpu.dot_dimension_numbers<[1], [0], [0], [1], [0, 0, 1, 1], [], []>} : vector<16x32xbf16>, vector<32x32xbf16>, vector<16x32xf32> -> vector<16x32xf32>
    %14 = vector.broadcast %5 : vector<1x32xf32> to vector<16x32xf32>
    %15 = arith.addf %13, %14 : vector<16x32xf32>
    %c0_21 = arith.constant 0 : index
    %c0_22 = arith.constant 0 : index
    %16 = vector.load %arg3[%c0_21, %c0_22] : memref<2x64xbf16, #tpu.memory_space<vmem>>, vector<2x64xbf16>
    %c0_23 = arith.constant 0 : index
    %c0_24 = arith.constant 0 : index
    %17 = vector.load %arg4[%c0_23, %c0_24] : memref<1x64xf32, #tpu.memory_space<vmem>>, vector<1x64xf32>
    %18 = arith.truncf %1 : vector<16x2xf32> to vector<16x2xbf16>
    %cst_25 = arith.constant dense<0.000000e+00> : vector<16x64xf32>
    %19 = tpu.matmul %18, %16, %cst_25 {dimension_numbers = #tpu.dot_dimension_numbers<[1], [0], [0], [1], [0, 0, 1, 1], [], []>} : vector<16x2xbf16>, vector<2x64xbf16>, vector<16x64xf32> -> vector<16x64xf32>
    %20 = vector.broadcast %17 : vector<1x64xf32> to vector<16x64xf32>
    %21 = arith.addf %19, %20 : vector<16x64xf32>
    %cst_26 = arith.constant 0.000000e+00 : f32
    %22 = vector.broadcast %cst_26 : f32 to vector<16x64xf32>
    %23 = arith.maximumf %21, %22 : vector<16x64xf32>
    %c0_27 = arith.constant 0 : index
    %c0_28 = arith.constant 0 : index
    %24 = vector.load %arg5[%c0_27, %c0_28] : memref<64x128xbf16, #tpu.memory_space<vmem>>, vector<64x128xbf16>
    %c0_29 = arith.constant 0 : index
    %c0_30 = arith.constant 0 : index
    %25 = vector.load %arg6[%c0_29, %c0_30] : memref<1x128xf32, #tpu.memory_space<vmem>>, vector<1x128xf32>
    %26 = arith.truncf %23 : vector<16x64xf32> to vector<16x64xbf16>
    %cst_31 = arith.constant dense<0.000000e+00> : vector<16x128xf32>
    %27 = tpu.matmul %26, %24, %cst_31 {dimension_numbers = #tpu.dot_dimension_numbers<[1], [0], [0], [1], [0, 0, 1, 1], [], []>} : vector<16x64xbf16>, vector<64x128xbf16>, vector<16x128xf32> -> vector<16x128xf32>
    %28 = vector.broadcast %25 : vector<1x128xf32> to vector<16x128xf32>
    %29 = arith.addf %27, %28 : vector<16x128xf32>
    %cst_32 = arith.constant 0.000000e+00 : f32
    %30 = vector.broadcast %cst_32 : f32 to vector<16x128xf32>
    %31 = arith.maximumf %29, %30 : vector<16x128xf32>
    %c0_33 = arith.constant 0 : index
    %c0_34 = arith.constant 0 : index
    %32 = vector.load %arg7[%c0_33, %c0_34] : memref<128x256xbf16, #tpu.memory_space<vmem>>, vector<128x256xbf16>
    %c0_35 = arith.constant 0 : index
    %c0_36 = arith.constant 0 : index
    %33 = vector.load %arg8[%c0_35, %c0_36] : memref<1x256xf32, #tpu.memory_space<vmem>>, vector<1x256xf32>
    %34 = arith.truncf %31 : vector<16x128xf32> to vector<16x128xbf16>
    %cst_37 = arith.constant dense<0.000000e+00> : vector<16x256xf32>
    %35 = tpu.matmul %34, %32, %cst_37 {dimension_numbers = #tpu.dot_dimension_numbers<[1], [0], [0], [1], [0, 0, 1, 1], [], []>} : vector<16x128xbf16>, vector<128x256xbf16>, vector<16x256xf32> -> vector<16x256xf32>
    %36 = vector.broadcast %33 : vector<1x256xf32> to vector<16x256xf32>
    %37 = arith.addf %35, %36 : vector<16x256xf32>
    %cst_38 = arith.constant 0.000000e+00 : f32
    %38 = vector.broadcast %cst_38 : f32 to vector<16x256xf32>
    %39 = arith.maximumf %37, %38 : vector<16x256xf32>
    %c0_39 = arith.constant 0 : index
    %c0_40 = arith.constant 0 : index
    %40 = vector.load %arg9[%c0_39, %c0_40] : memref<256x128xbf16, #tpu.memory_space<vmem>>, vector<256x128xbf16>
    %c0_41 = arith.constant 0 : index
    %c0_42 = arith.constant 0 : index
    %41 = vector.load %arg10[%c0_41, %c0_42] : memref<1x128xf32, #tpu.memory_space<vmem>>, vector<1x128xf32>
    %42 = arith.truncf %39 : vector<16x256xf32> to vector<16x256xbf16>
    %cst_43 = arith.constant dense<0.000000e+00> : vector<16x128xf32>
    %43 = tpu.matmul %42, %40, %cst_43 {dimension_numbers = #tpu.dot_dimension_numbers<[1], [0], [0], [1], [0, 0, 1, 1], [], []>} : vector<16x256xbf16>, vector<256x128xbf16>, vector<16x128xf32> -> vector<16x128xf32>
    %44 = vector.broadcast %41 : vector<1x128xf32> to vector<16x128xf32>
    %45 = arith.addf %43, %44 : vector<16x128xf32>
    %c0_44 = arith.constant 0 : index
    %c0_45 = arith.constant 0 : index
    %46 = vector.load %arg11[%c0_44, %c0_45] : memref<2x64xbf16, #tpu.memory_space<vmem>>, vector<2x64xbf16>
    %c0_46 = arith.constant 0 : index
    %c0_47 = arith.constant 0 : index
    %47 = vector.load %arg12[%c0_46, %c0_47] : memref<1x64xf32, #tpu.memory_space<vmem>>, vector<1x64xf32>
    %48 = arith.truncf %1 : vector<16x2xf32> to vector<16x2xbf16>
    %cst_48 = arith.constant dense<0.000000e+00> : vector<16x64xf32>
    %49 = tpu.matmul %48, %46, %cst_48 {dimension_numbers = #tpu.dot_dimension_numbers<[1], [0], [0], [1], [0, 0, 1, 1], [], []>} : vector<16x2xbf16>, vector<2x64xbf16>, vector<16x64xf32> -> vector<16x64xf32>
    %50 = vector.broadcast %47 : vector<1x64xf32> to vector<16x64xf32>
    %51 = arith.addf %49, %50 : vector<16x64xf32>
    %cst_49 = arith.constant 0.000000e+00 : f32
    %52 = vector.broadcast %cst_49 : f32 to vector<16x64xf32>
    %53 = arith.maximumf %51, %52 : vector<16x64xf32>
    %c0_50 = arith.constant 0 : index
    %c0_51 = arith.constant 0 : index
    %54 = vector.load %arg13[%c0_50, %c0_51] : memref<64x128xbf16, #tpu.memory_space<vmem>>, vector<64x128xbf16>
    %c0_52 = arith.constant 0 : index
    %c0_53 = arith.constant 0 : index
    %55 = vector.load %arg14[%c0_52, %c0_53] : memref<1x128xf32, #tpu.memory_space<vmem>>, vector<1x128xf32>
    %56 = arith.truncf %53 : vector<16x64xf32> to vector<16x64xbf16>
    %cst_54 = arith.constant dense<0.000000e+00> : vector<16x128xf32>
    %57 = tpu.matmul %56, %54, %cst_54 {dimension_numbers = #tpu.dot_dimension_numbers<[1], [0], [0], [1], [0, 0, 1, 1], [], []>} : vector<16x64xbf16>, vector<64x128xbf16>, vector<16x128xf32> -> vector<16x128xf32>
    %58 = vector.broadcast %55 : vector<1x128xf32> to vector<16x128xf32>
    %59 = arith.addf %57, %58 : vector<16x128xf32>
    %cst_55 = arith.constant 0.000000e+00 : f32
    %60 = vector.broadcast %cst_55 : f32 to vector<16x128xf32>
    %61 = arith.maximumf %59, %60 : vector<16x128xf32>
    %c0_56 = arith.constant 0 : index
    %c0_57 = arith.constant 0 : index
    %62 = vector.load %arg15[%c0_56, %c0_57] : memref<128x256xbf16, #tpu.memory_space<vmem>>, vector<128x256xbf16>
    %c0_58 = arith.constant 0 : index
    %c0_59 = arith.constant 0 : index
    %63 = vector.load %arg16[%c0_58, %c0_59] : memref<1x256xf32, #tpu.memory_space<vmem>>, vector<1x256xf32>
    %64 = arith.truncf %61 : vector<16x128xf32> to vector<16x128xbf16>
    %cst_60 = arith.constant dense<0.000000e+00> : vector<16x256xf32>
    %65 = tpu.matmul %64, %62, %cst_60 {dimension_numbers = #tpu.dot_dimension_numbers<[1], [0], [0], [1], [0, 0, 1, 1], [], []>} : vector<16x128xbf16>, vector<128x256xbf16>, vector<16x256xf32> -> vector<16x256xf32>
    %66 = vector.broadcast %63 : vector<1x256xf32> to vector<16x256xf32>
    %67 = arith.addf %65, %66 : vector<16x256xf32>
    %cst_61 = arith.constant 0.000000e+00 : f32
    %68 = vector.broadcast %cst_61 : f32 to vector<16x256xf32>
    %69 = arith.maximumf %67, %68 : vector<16x256xf32>
    %c0_62 = arith.constant 0 : index
    %c0_63 = arith.constant 0 : index
    %70 = vector.load %arg17[%c0_62, %c0_63] : memref<256x128xbf16, #tpu.memory_space<vmem>>, vector<256x128xbf16>
    %c0_64 = arith.constant 0 : index
    %c0_65 = arith.constant 0 : index
    %71 = vector.load %arg18[%c0_64, %c0_65] : memref<1x128xf32, #tpu.memory_space<vmem>>, vector<1x128xf32>
    %72 = arith.truncf %69 : vector<16x256xf32> to vector<16x256xbf16>
    %cst_66 = arith.constant dense<0.000000e+00> : vector<16x128xf32>
    %73 = tpu.matmul %72, %70, %cst_66 {dimension_numbers = #tpu.dot_dimension_numbers<[1], [0], [0], [1], [0, 0, 1, 1], [], []>} : vector<16x256xbf16>, vector<256x128xbf16>, vector<16x128xf32> -> vector<16x128xf32>
    %74 = vector.broadcast %71 : vector<1x128xf32> to vector<16x128xf32>
    %75 = arith.addf %73, %74 : vector<16x128xf32>
    %cst_67 = arith.constant 0.000000e+00 : f32
    %76 = vector.broadcast %cst_67 : f32 to vector<16x32xf32>
    %77 = vector.extract_strided_slice %75 {offsets = [0, 0], sizes = [16, 32], strides = [1, 1]} : vector<16x128xf32> to vector<16x32xf32>
    %78 = vector.extract_strided_slice %45 {offsets = [0, 0], sizes = [16, 32], strides = [1, 1]} : vector<16x128xf32> to vector<16x32xf32>
    %79 = arith.mulf %77, %3 : vector<16x32xf32>
    %cst_68 = arith.constant dense<0.000000e+00> : vector<32xf32>
    %80 = vector.multi_reduction <add>, %79, %cst_68 [0] : vector<16x32xf32> to vector<32xf32>
    %81 = vector.shape_cast %80 : vector<32xf32> to vector<1x32xf32>
    %cst_69 = arith.constant dense<0.000000e+00> : vector<1xf32>
    %82 = vector.multi_reduction <add>, %81, %cst_69 [1] : vector<1x32xf32> to vector<1xf32>
    %83 = vector.shape_cast %82 : vector<1xf32> to vector<1x1xf32>
    %cst_70 = arith.constant 6.250000e-02 : f32
    %84 = vector.broadcast %cst_70 : f32 to vector<1x1xf32>
    %85 = arith.mulf %83, %84 : vector<1x1xf32>
    %86 = vector.broadcast %85 : vector<1x1xf32> to vector<16x32xf32>
    %87 = arith.mulf %78, %86 : vector<16x32xf32>
    %88 = arith.addf %76, %87 : vector<16x32xf32>
    %89 = vector.extract_strided_slice %75 {offsets = [0, 32], sizes = [16, 32], strides = [1, 1]} : vector<16x128xf32> to vector<16x32xf32>
    %90 = vector.extract_strided_slice %45 {offsets = [0, 32], sizes = [16, 32], strides = [1, 1]} : vector<16x128xf32> to vector<16x32xf32>
    %91 = arith.mulf %89, %3 : vector<16x32xf32>
    %cst_71 = arith.constant dense<0.000000e+00> : vector<32xf32>
    %92 = vector.multi_reduction <add>, %91, %cst_71 [0] : vector<16x32xf32> to vector<32xf32>
    %93 = vector.shape_cast %92 : vector<32xf32> to vector<1x32xf32>
    %cst_72 = arith.constant dense<0.000000e+00> : vector<1xf32>
    %94 = vector.multi_reduction <add>, %93, %cst_72 [1] : vector<1x32xf32> to vector<1xf32>
    %95 = vector.shape_cast %94 : vector<1xf32> to vector<1x1xf32>
    %cst_73 = arith.constant 6.250000e-02 : f32
    %96 = vector.broadcast %cst_73 : f32 to vector<1x1xf32>
    %97 = arith.mulf %95, %96 : vector<1x1xf32>
    %98 = vector.broadcast %97 : vector<1x1xf32> to vector<16x32xf32>
    %99 = arith.mulf %90, %98 : vector<16x32xf32>
    %100 = arith.addf %88, %99 : vector<16x32xf32>
    %101 = vector.extract_strided_slice %75 {offsets = [0, 64], sizes = [16, 32], strides = [1, 1]} : vector<16x128xf32> to vector<16x32xf32>
    %102 = vector.extract_strided_slice %45 {offsets = [0, 64], sizes = [16, 32], strides = [1, 1]} : vector<16x128xf32> to vector<16x32xf32>
    %103 = arith.mulf %101, %3 : vector<16x32xf32>
    %cst_74 = arith.constant dense<0.000000e+00> : vector<32xf32>
    %104 = vector.multi_reduction <add>, %103, %cst_74 [0] : vector<16x32xf32> to vector<32xf32>
    %105 = vector.shape_cast %104 : vector<32xf32> to vector<1x32xf32>
    %cst_75 = arith.constant dense<0.000000e+00> : vector<1xf32>
    %106 = vector.multi_reduction <add>, %105, %cst_75 [1] : vector<1x32xf32> to vector<1xf32>
    %107 = vector.shape_cast %106 : vector<1xf32> to vector<1x1xf32>
    %cst_76 = arith.constant 6.250000e-02 : f32
    %108 = vector.broadcast %cst_76 : f32 to vector<1x1xf32>
    %109 = arith.mulf %107, %108 : vector<1x1xf32>
    %110 = vector.broadcast %109 : vector<1x1xf32> to vector<16x32xf32>
    %111 = arith.mulf %102, %110 : vector<16x32xf32>
    %112 = arith.addf %100, %111 : vector<16x32xf32>
    %113 = vector.extract_strided_slice %75 {offsets = [0, 96], sizes = [16, 32], strides = [1, 1]} : vector<16x128xf32> to vector<16x32xf32>
    %114 = vector.extract_strided_slice %45 {offsets = [0, 96], sizes = [16, 32], strides = [1, 1]} : vector<16x128xf32> to vector<16x32xf32>
    %115 = arith.mulf %113, %3 : vector<16x32xf32>
    %cst_77 = arith.constant dense<0.000000e+00> : vector<32xf32>
    %116 = vector.multi_reduction <add>, %115, %cst_77 [0] : vector<16x32xf32> to vector<32xf32>
    %117 = vector.shape_cast %116 : vector<32xf32> to vector<1x32xf32>
    %cst_78 = arith.constant dense<0.000000e+00> : vector<1xf32>
    %118 = vector.multi_reduction <add>, %117, %cst_78 [1] : vector<1x32xf32> to vector<1xf32>
    %119 = vector.shape_cast %118 : vector<1xf32> to vector<1x1xf32>
    %cst_79 = arith.constant 6.250000e-02 : f32
    %120 = vector.broadcast %cst_79 : f32 to vector<1x1xf32>
    %121 = arith.mulf %119, %120 : vector<1x1xf32>
    %122 = vector.broadcast %121 : vector<1x1xf32> to vector<16x32xf32>
    %123 = arith.mulf %114, %122 : vector<16x32xf32>
    %124 = arith.addf %112, %123 : vector<16x32xf32>
    %125 = arith.addf %15, %124 : vector<16x32xf32>
    %cst_80 = arith.constant dense<0.000000e+00> : vector<16xf32>
    %126 = vector.multi_reduction <add>, %125, %cst_80 [1] : vector<16x32xf32> to vector<16xf32>
    %127 = vector.shape_cast %126 : vector<16xf32> to vector<16x1xf32>
    %cst_81 = arith.constant 3.200000e+01 : f32
    %128 = vector.broadcast %cst_81 : f32 to vector<16x1xf32>
    %129 = arith.divf %127, %128 : vector<16x1xf32>
    %130 = vector.broadcast %129 : vector<16x1xf32> to vector<16x32xf32>
    %131 = arith.subf %125, %130 : vector<16x32xf32>
    %132 = arith.mulf %131, %131 : vector<16x32xf32>
    %cst_82 = arith.constant dense<0.000000e+00> : vector<16xf32>
    %133 = vector.multi_reduction <add>, %132, %cst_82 [1] : vector<16x32xf32> to vector<16xf32>
    %134 = vector.shape_cast %133 : vector<16xf32> to vector<16x1xf32>
    %cst_83 = arith.constant 3.200000e+01 : f32
    %135 = vector.broadcast %cst_83 : f32 to vector<16x1xf32>
    %136 = arith.divf %134, %135 : vector<16x1xf32>
    %137 = vector.broadcast %129 : vector<16x1xf32> to vector<16x32xf32>
    %138 = arith.subf %125, %137 : vector<16x32xf32>
    %cst_84 = arith.constant 9.99999974E-6 : f32
    %139 = vector.broadcast %cst_84 : f32 to vector<16x1xf32>
    %140 = arith.addf %136, %139 : vector<16x1xf32>
    %141 = math.rsqrt %140 : vector<16x1xf32>
    %142 = vector.broadcast %141 : vector<16x1xf32> to vector<16x32xf32>
    %143 = arith.mulf %138, %142 : vector<16x32xf32>
    %144 = vector.broadcast %6 : vector<1x32xf32> to vector<16x32xf32>
    %145 = arith.mulf %143, %144 : vector<16x32xf32>
    %146 = vector.broadcast %7 : vector<1x32xf32> to vector<16x32xf32>
    %147 = arith.addf %145, %146 : vector<16x32xf32>
    %148 = arith.truncf %147 : vector<16x32xf32> to vector<16x32xbf16>
    %cst_85 = arith.constant dense<0.000000e+00> : vector<16x64xf32>
    %149 = tpu.matmul %148, %8, %cst_85 {dimension_numbers = #tpu.dot_dimension_numbers<[1], [0], [0], [1], [0, 0, 1, 1], [], []>} : vector<16x32xbf16>, vector<32x64xbf16>, vector<16x64xf32> -> vector<16x64xf32>
    %150 = vector.broadcast %9 : vector<1x64xf32> to vector<16x64xf32>
    %151 = arith.addf %149, %150 : vector<16x64xf32>
    %cst_86 = arith.constant 0.000000e+00 : f32
    %152 = vector.broadcast %cst_86 : f32 to vector<16x64xf32>
    %153 = arith.maximumf %151, %152 : vector<16x64xf32>
    %154 = arith.truncf %153 : vector<16x64xf32> to vector<16x64xbf16>
    %cst_87 = arith.constant dense<0.000000e+00> : vector<16x1xf32>
    %155 = tpu.matmul %154, %10, %cst_87 {dimension_numbers = #tpu.dot_dimension_numbers<[1], [0], [0], [1], [0, 0, 1, 1], [], []>} : vector<16x64xbf16>, vector<64x1xbf16>, vector<16x1xf32> -> vector<16x1xf32>
    %156 = vector.broadcast %11 : vector<1x1xf32> to vector<16x1xf32>
    %157 = arith.addf %155, %156 : vector<16x1xf32>
    %c0_88 = arith.constant 0 : index
    %c0_89 = arith.constant 0 : index
    %c0_90 = arith.constant 0 : index
    %158 = vector.load %arg27[%c0_88, %c0_89, %c0_90] : memref<1x16x1xf32, #tpu.memory_space<vmem>>, vector<1x16x1xf32>
    %159 = vector.shape_cast %158 : vector<1x16x1xf32> to vector<16x1xf32>
    %160 = vector.shape_cast %157 : vector<16x1xf32> to vector<1x16x1xf32>
    tpu.vector_store %arg27[%c0_88, %c0_89, %c0_90], %160 {strides = array<i32>} : memref<1x16x1xf32, #tpu.memory_space<vmem>>, vector<1x16x1xf32>,
    return
  }
  func.func @transform_0(%arg0: i32) -> (i32, i32, i32) {
    %c0_i32 = arith.constant 0 : i32
    %c0_i32_0 = arith.constant 0 : i32
    %c0_i32_1 = arith.constant 0 : i32
    return %arg0, %c0_i32, %c0_i32_0 : i32, i32, i32
  }
  func.func @transform_1(%arg0: i32) -> (i32, i32, i32) {
    %c0_i32 = arith.constant 0 : i32
    %c0_i32_0 = arith.constant 0 : i32
    %c0_i32_1 = arith.constant 0 : i32
    return %arg0, %c0_i32, %c0_i32_0 : i32, i32, i32
  }
  func.func @transform_2(%arg0: i32) -> (i32, i32) {
    %c0_i32 = arith.constant 0 : i32
    %c0_i32_0 = arith.constant 0 : i32
    %c0_i32_1 = arith.constant 0 : i32
    return %c0_i32, %c0_i32_0 : i32, i32
  }
  func.func @transform_3(%arg0: i32) -> (i32, i32) {
    %c0_i32 = arith.constant 0 : i32
    %c0_i32_0 = arith.constant 0 : i32
    %c0_i32_1 = arith.constant 0 : i32
    return %c0_i32, %c0_i32_0 : i32, i32
  }
  func.func @transform_4(%arg0: i32) -> (i32, i32) {
    %c0_i32 = arith.constant 0 : i32
    %c0_i32_0 = arith.constant 0 : i32
    %c0_i32_1 = arith.constant 0 : i32
    return %c0_i32, %c0_i32_0 : i32, i32
  }
  func.func @transform_5(%arg0: i32) -> (i32, i32) {
    %c0_i32 = arith.constant 0 : i32
    %c0_i32_0 = arith.constant 0 : i32
    %c0_i32_1 = arith.constant 0 : i32
    return %c0_i32, %c0_i32_0 : i32, i32
  }
  func.func @transform_6(%arg0: i32) -> (i32, i32) {
    %c0_i32 = arith.constant 0 : i32
    %c0_i32_0 = arith.constant 0 : i32
    %c0_i32_1 = arith.constant 0 : i32
    return %c0_i32, %c0_i32_0 : i32, i32
  }
  func.func @transform_7(%arg0: i32) -> (i32, i32) {
    %c0_i32 = arith.constant 0 : i32
    %c0_i32_0 = arith.constant 0 : i32
    %c0_i32_1 = arith.constant 0 : i32
    return %c0_i32, %c0_i32_0 : i32, i32
  }
  func.func @transform_8(%arg0: i32) -> (i32, i32) {
    %c0_i32 = arith.constant 0 : i32
    %c0_i32_0 = arith.constant 0 : i32
    %c0_i32_1 = arith.constant 0 : i32
    return %c0_i32, %c0_i32_0 : i32, i32
  }
  func.func @transform_9(%arg0: i32) -> (i32, i32) {
    %c0_i32 = arith.constant 0 : i32
    %c0_i32_0 = arith.constant 0 : i32
    %c0_i32_1 = arith.constant 0 : i32
    return %c0_i32, %c0_i32_0 : i32, i32
  }
  func.func @transform_10(%arg0: i32) -> (i32, i32) {
    %c0_i32 = arith.constant 0 : i32
    %c0_i32_0 = arith.constant 0 : i32
    %c0_i32_1 = arith.constant 0 : i32
    return %c0_i32, %c0_i32_0 : i32, i32
  }
  func.func @transform_11(%arg0: i32) -> (i32, i32) {
    %c0_i32 = arith.constant 0 : i32
    %c0_i32_0 = arith.constant 0 : i32
    %c0_i32_1 = arith.constant 0 : i32
    return %c0_i32, %c0_i32_0 : i32, i32
  }
  func.func @transform_12(%arg0: i32) -> (i32, i32) {
    %c0_i32 = arith.constant 0 : i32
    %c0_i32_0 = arith.constant 0 : i32
    %c0_i32_1 = arith.constant 0 : i32
    return %c0_i32, %c0_i32_0 : i32, i32
  }
  func.func @transform_13(%arg0: i32) -> (i32, i32) {
    %c0_i32 = arith.constant 0 : i32
    %c0_i32_0 = arith.constant 0 : i32
    %c0_i32_1 = arith.constant 0 : i32
    return %c0_i32, %c0_i32_0 : i32, i32
  }
  func.func @transform_14(%arg0: i32) -> (i32, i32) {
    %c0_i32 = arith.constant 0 : i32
    %c0_i32_0 = arith.constant 0 : i32
    %c0_i32_1 = arith.constant 0 : i32
    return %c0_i32, %c0_i32_0 : i32, i32
  }
  func.func @transform_15(%arg0: i32) -> (i32, i32) {
    %c0_i32 = arith.constant 0 : i32
    %c0_i32_0 = arith.constant 0 : i32
    %c0_i32_1 = arith.constant 0 : i32
    return %c0_i32, %c0_i32_0 : i32, i32
  }
  func.func @transform_16(%arg0: i32) -> (i32, i32) {
    %c0_i32 = arith.constant 0 : i32
    %c0_i32_0 = arith.constant 0 : i32
    %c0_i32_1 = arith.constant 0 : i32
    return %c0_i32, %c0_i32_0 : i32, i32
  }
  func.func @transform_17(%arg0: i32) -> (i32, i32) {
    %c0_i32 = arith.constant 0 : i32
    %c0_i32_0 = arith.constant 0 : i32
    %c0_i32_1 = arith.constant 0 : i32
    return %c0_i32, %c0_i32_0 : i32, i32
  }
  func.func @transform_18(%arg0: i32) -> (i32, i32) {
    %c0_i32 = arith.constant 0 : i32
    %c0_i32_0 = arith.constant 0 : i32
    %c0_i32_1 = arith.constant 0 : i32
    return %c0_i32, %c0_i32_0 : i32, i32
  }
  func.func @transform_19(%arg0: i32) -> (i32, i32) {
    %c0_i32 = arith.constant 0 : i32
    %c0_i32_0 = arith.constant 0 : i32
    %c0_i32_1 = arith.constant 0 : i32
    return %c0_i32, %c0_i32_0 : i32, i32
  }
  func.func @transform_20(%arg0: i32) -> (i32, i32) {
    %c0_i32 = arith.constant 0 : i32
    %c0_i32_0 = arith.constant 0 : i32
    %c0_i32_1 = arith.constant 0 : i32
    return %c0_i32, %c0_i32_0 : i32, i32
  }
  func.func @transform_21(%arg0: i32) -> (i32, i32) {
    %c0_i32 = arith.constant 0 : i32
    %c0_i32_0 = arith.constant 0 : i32
    %c0_i32_1 = arith.constant 0 : i32
    return %c0_i32, %c0_i32_0 : i32, i32
  }
  func.func @transform_22(%arg0: i32) -> (i32, i32) {
    %c0_i32 = arith.constant 0 : i32
    %c0_i32_0 = arith.constant 0 : i32
    %c0_i32_1 = arith.constant 0 : i32
    return %c0_i32, %c0_i32_0 : i32, i32
  }
  func.func @transform_23(%arg0: i32) -> (i32, i32) {
    %c0_i32 = arith.constant 0 : i32
    %c0_i32_0 = arith.constant 0 : i32
    %c0_i32_1 = arith.constant 0 : i32
    return %c0_i32, %c0_i32_0 : i32, i32
  }
  func.func @transform_24(%arg0: i32) -> (i32, i32) {
    %c0_i32 = arith.constant 0 : i32
    %c0_i32_0 = arith.constant 0 : i32
    %c0_i32_1 = arith.constant 0 : i32
    return %c0_i32, %c0_i32_0 : i32, i32
  }
  func.func @transform_25(%arg0: i32) -> (i32, i32) {
    %c0_i32 = arith.constant 0 : i32
    %c0_i32_0 = arith.constant 0 : i32
    %c0_i32_1 = arith.constant 0 : i32
    return %c0_i32, %c0_i32_0 : i32, i32
  }
  func.func @transform_26(%arg0: i32) -> (i32, i32, i32) {
    %c0_i32 = arith.constant 0 : i32
    %c0_i32_0 = arith.constant 0 : i32
    %c0_i32_1 = arith.constant 0 : i32
    return %arg0, %c0_i32, %c0_i32_0 : i32, i32, i32
  }
}

</mosaic_0001>

<llo_original>
// kernel: lno1d_forward.4
$region0: #{lno1d_forward.4}
  #allocation0 [shape = 'u32[]', space=smem, size = 0x4, offset = 0x4, fixed_abs, tag = 'smem constant byte address 0x4 - core index']
  #allocation1 [shape = 'u32[144,128]{1,0:T(1,128)}', space=vmem, size = 0x12000, scoped, tag = 'internal scratch']
  %s0 = inlined_call_operand.vmem [shape: f32[2,16,2], index: 0, kind: input, shape index: {}]
  %s1 = inlined_call_operand.vmem [shape: bf16[2,32], index: 1, kind: input, shape index: {}]
  %s2 = inlined_call_operand.vmem [shape: f32[1,32], index: 2, kind: input, shape index: {}]
  %s3 = inlined_call_operand.vmem [shape: bf16[2,64], index: 3, kind: input, shape index: {}]
  %s4 = inlined_call_operand.vmem [shape: f32[1,64], index: 4, kind: input, shape index: {}]
  %s5 = inlined_call_operand.vmem [shape: bf16[64,128], index: 5, kind: input, shape index: {}]
  %s6 = inlined_call_operand.vmem [shape: f32[1,128], index: 6, kind: input, shape index: {}]
  %s7 = inlined_call_operand.vmem [shape: bf16[128,256], index: 7, kind: input, shape index: {}]
  %s8 = inlined_call_operand.vmem [shape: f32[1,256], index: 8, kind: input, shape index: {}]
  %s9 = inlined_call_operand.vmem [shape: bf16[256,128], index: 9, kind: input, shape index: {}]
  %s10 = inlined_call_operand.vmem [shape: f32[1,128], index: 10, kind: input, shape index: {}]
  %s11 = inlined_call_operand.vmem [shape: bf16[2,64], index: 11, kind: input, shape index: {}]
  %s12 = inlined_call_operand.vmem [shape: f32[1,64], index: 12, kind: input, shape index: {}]
  %s13 = inlined_call_operand.vmem [shape: bf16[64,128], index: 13, kind: input, shape index: {}]
  %s14 = inlined_call_operand.vmem [shape: f32[1,128], index: 14, kind: input, shape index: {}]
  %s15 = inlined_call_operand.vmem [shape: bf16[128,256], index: 15, kind: input, shape index: {}]
  %s16 = inlined_call_operand.vmem [shape: f32[1,256], index: 16, kind: input, shape index: {}]
  %s17 = inlined_call_operand.vmem [shape: bf16[256,128], index: 17, kind: input, shape index: {}]
  %s18 = inlined_call_operand.vmem [shape: f32[1,128], index: 18, kind: input, shape index: {}]
  %s19 = inlined_call_operand.vmem [shape: bf16[32,32], index: 19, kind: input, shape index: {}]
  %s20 = inlined_call_operand.vmem [shape: f32[1,32], index: 20, kind: input, shape index: {}]
  %s21 = inlined_call_operand.vmem [shape: f32[1,32], index: 21, kind: input, shape index: {}]
  %s22 = inlined_call_operand.vmem [shape: f32[1,32], index: 22, kind: input, shape index: {}]
  %s23 = inlined_call_operand.vmem [shape: f32[2,16,32], index: 23, kind: output, shape index: {}]
  %s24 = sld [smem:[#allocation0]]
  $region125: #{lno1d_forward.4} parent=0
    _
  %s26 = ssub.s32 1, %s24
  %s27 = scalar_select 0, %s26, %s24
  loop: start=0, step=1, limit=4
  $region2: #{lno1d_forward.4} parent=0 // loop_pre_header
    _
  $region3: #{lno1d_forward.4} parent=0 // loop_header
    %s29 = sphi 0, %s33
    %p30 = scmp.ge.s32.totalorder %s29, 4
    %s39 = sphi 0, %s41
    %s42 = sphi 0, %s39
    %s43 = sphi 0, %s42
    %s59 = sphi 0, %s43
    %s63 = sphi 0, %s63
    %s65 = sphi 0, %s63
    %s66 = sphi 0, %s65
    %s80 = sphi 0, %s66
    %s84 = sphi 0, %s84
    %s86 = sphi 0, %s84
    %s87 = sphi 0, %s86
    %s101 = sphi 0, %s87
    %s105 = sphi 0, %s105
    %s107 = sphi 0, %s105
    %s108 = sphi 0, %s107
    %s122 = sphi 0, %s108
    %s126 = sphi 0, %s126
    %s128 = sphi 0, %s126
    %s129 = sphi 0, %s128
    %s143 = sphi 0, %s129
    %s147 = sphi 0, %s147
    %s149 = sphi 0, %s147
    %s150 = sphi 0, %s149
    %s164 = sphi 0, %s150
    %s168 = sphi 0, %s168
    %s170 = sphi 0, %s168
    %s171 = sphi 0, %s170
    %s185 = sphi 0, %s171
    %s189 = sphi 0, %s189
    %s191 = sphi 0, %s189
    %s192 = sphi 0, %s191
    %s206 = sphi 0, %s192
    %s210 = sphi 0, %s210
    %s212 = sphi 0, %s210
    %s213 = sphi 0, %s212
    %s227 = sphi 0, %s213
    %s231 = sphi 0, %s231
    %s233 = sphi 0, %s231
    %s234 = sphi 0, %s233
    %s248 = sphi 0, %s234
    %s252 = sphi 0, %s252
    %s254 = sphi 0, %s252
    %s255 = sphi 0, %s254
    %s269 = sphi 0, %s255
    %s273 = sphi 0, %s273
    %s275 = sphi 0, %s273
    %s276 = sphi 0, %s275
    %s290 = sphi 0, %s276
    %s294 = sphi 0, %s294
    %s296 = sphi 0, %s294
    %s297 = sphi 0, %s296
    %s311 = sphi 0, %s297
    %s315 = sphi 0, %s315
    %s317 = sphi 0, %s315
    %s318 = sphi 0, %s317
    %s332 = sphi 0, %s318
    %s336 = sphi 0, %s336
    %s338 = sphi 0, %s336
    %s339 = sphi 0, %s338
    %s353 = sphi 0, %s339
    %s357 = sphi 0, %s357
    %s359 = sphi 0, %s357
    %s360 = sphi 0, %s359
    %s374 = sphi 0, %s360
    %s378 = sphi 0, %s378
    %s380 = sphi 0, %s378
    %s381 = sphi 0, %s380
    %s395 = sphi 0, %s381
    %s399 = sphi 0, %s399
    %s401 = sphi 0, %s399
    %s402 = sphi 0, %s401
    %s416 = sphi 0, %s402
    %s420 = sphi 0, %s420
    %s422 = sphi 0, %s420
    %s423 = sphi 0, %s422
    %s437 = sphi 0, %s423
    %s441 = sphi 0, %s441
    %s443 = sphi 0, %s441
    %s444 = sphi 0, %s443
    %s458 = sphi 0, %s444
    %s462 = sphi 0, %s462
    %s464 = sphi 0, %s462
    %s465 = sphi 0, %s464
    %s479 = sphi 0, %s465
    %s483 = sphi 0, %s483
    %s485 = sphi 0, %s483
    %s486 = sphi 0, %s485
    %s500 = sphi 0, %s486
    %s504 = sphi 0, %s504
    %s506 = sphi 0, %s504
    %s507 = sphi 0, %s506
    %s521 = sphi 0, %s507
    %s527 = sphi 0, %s529
    %s530 = sphi 0, %s527
    %s531 = sphi 0, %s530
    %s547 = sphi 0, %s531
  $region4: #{lno1d_forward.4} parent=0 // loop_header_branch
    %32 = sbr.rel (%p30) target = $region8
  $region5: #{lno1d_forward.4} parent=0 // loop_body
    %s34 = ssub.s32 %s29, 1
    %s35 = ssub.s32 %s29, 2
    %s36 = sadd.s32 %s29, 1
    %s37 = ssub.s32 %s29, %s36
    %p38 = scmp.eq.s32.totalorder %s37, 0
    %s40 = sadd.s32 %s39, 1
    %s41 = scalar_select %p38, %s39, %s40
    %p44 = pneg %p38
    %p45 = scmp.eq.s32.totalorder %s29, 1
    %p46 = por %p44, %p45
    %p47 = scmp.ne.s32.totalorder %s39, %s42
    %p48 = scmp.eq.s32.totalorder %s29, 0
    %p49 = por %p47, %p48
    %p50 = scmp.ne.s32.totalorder %s39, %s42
    %p51 = scmp.eq.s32.totalorder %s34, 1
    %p52 = por %p50, %p51
    %p53 = scmp.ne.s32.totalorder %s42, %s43
    %p54 = scmp.eq.s32.totalorder %s34, 0
    %p55 = por %p53, %p54
    %p56 = scmp.ne.s32.totalorder %s42, %s43
    %p57 = scmp.eq.s32.totalorder %s35, 1
    %p58 = por %p56, %p57
    %p60 = scmp.ne.s32.totalorder %s43, %s59
    %p61 = scmp.eq.s32.totalorder %s35, 0
    %p62 = por %p60, %p61
    %s64 = sadd.s32 %s63, 1
    %p67 = scmp.eq.s32.totalorder %s29, 1
    %p68 = scmp.ne.s32.totalorder %s63, %s65
    %p69 = scmp.eq.s32.totalorder %s29, 0
    %p70 = por %p68, %p69
    %p71 = scmp.ne.s32.totalorder %s63, %s65
    %p72 = scmp.eq.s32.totalorder %s34, 1
    %p73 = por %p71, %p72
    %p74 = scmp.ne.s32.totalorder %s65, %s66
    %p75 = scmp.eq.s32.totalorder %s34, 0
    %p76 = por %p74, %p75
    %p77 = scmp.ne.s32.totalorder %s65, %s66
    %p78 = scmp.eq.s32.totalorder %s35, 1
    %p79 = por %p77, %p78
    %p81 = scmp.ne.s32.totalorder %s66, %s80
    %p82 = scmp.eq.s32.totalorder %s35, 0
    %p83 = por %p81, %p82
    %s85 = sadd.s32 %s84, 1
    %p88 = scmp.eq.s32.totalorder %s29, 1
    %p89 = scmp.ne.s32.totalorder %s84, %s86
    %p90 = scmp.eq.s32.totalorder %s29, 0
    %p91 = por %p89, %p90
    %p92 = scmp.ne.s32.totalorder %s84, %s86
    %p93 = scmp.eq.s32.totalorder %s34, 1
    %p94 = por %p92, %p93
    %p95 = scmp.ne.s32.totalorder %s86, %s87
    %p96 = scmp.eq.s32.totalorder %s34, 0
    %p97 = por %p95, %p96
    %p98 = scmp.ne.s32.totalorder %s86, %s87
    %p99 = scmp.eq.s32.totalorder %s35, 1
    %p100 = por %p98, %p99
    %p102 = scmp.ne.s32.totalorder %s87, %s101
    %p103 = scmp.eq.s32.totalorder %s35, 0
    %p104 = por %p102, %p103
    %s106 = sadd.s32 %s105, 1
    %p109 = scmp.eq.s32.totalorder %s29, 1
    %p110 = scmp.ne.s32.totalorder %s105, %s107
    %p111 = scmp.eq.s32.totalorder %s29, 0
    %p112 = por %p110, %p111
    %p113 = scmp.ne.s32.totalorder %s105, %s107
    %p114 = scmp.eq.s32.totalorder %s34, 1
    %p115 = por %p113, %p114
    %p116 = scmp.ne.s32.totalorder %s107, %s108
    %p117 = scmp.eq.s32.totalorder %s34, 0
    %p118 = por %p116, %p117
    %p119 = scmp.ne.s32.totalorder %s107, %s108
    %p120 = scmp.eq.s32.totalorder %s35, 1
    %p121 = por %p119, %p120
    %p123 = scmp.ne.s32.totalorder %s108, %s122
    %p124 = scmp.eq.s32.totalorder %s35, 0
    %p125 = por %p123, %p124
    %s127 = sadd.s32 %s126, 1
    %p130 = scmp.eq.s32.totalorder %s29, 1
    %p131 = scmp.ne.s32.totalorder %s126, %s128
    %p132 = scmp.eq.s32.totalorder %s29, 0
    %p133 = por %p131, %p132
    %p134 = scmp.ne.s32.totalorder %s126, %s128
    %p135 = scmp.eq.s32.totalorder %s34, 1
    %p136 = por %p134, %p135
    %p137 = scmp.ne.s32.totalorder %s128, %s129
    %p138 = scmp.eq.s32.totalorder %s34, 0
    %p139 = por %p137, %p138
    %p140 = scmp.ne.s32.totalorder %s128, %s129
    %p141 = scmp.eq.s32.totalorder %s35, 1
    %p142 = por %p140, %p141
    %p144 = scmp.ne.s32.totalorder %s129, %s143
    %p145 = scmp.eq.s32.totalorder %s35, 0
    %p146 = por %p144, %p145
    %s148 = sadd.s32 %s147, 1
    %p151 = scmp.eq.s32.totalorder %s29, 1
    %p152 = scmp.ne.s32.totalorder %s147, %s149
    %p153 = scmp.eq.s32.totalorder %s29, 0
    %p154 = por %p152, %p153
    %p155 = scmp.ne.s32.totalorder %s147, %s149
    %p156 = scmp.eq.s32.totalorder %s34, 1
    %p157 = por %p155, %p156
    %p158 = scmp.ne.s32.totalorder %s149, %s150
    %p159 = scmp.eq.s32.totalorder %s34, 0
    %p160 = por %p158, %p159
    %p161 = scmp.ne.s32.totalorder %s149, %s150
    %p162 = scmp.eq.s32.totalorder %s35, 1
    %p163 = por %p161, %p162
    %p165 = scmp.ne.s32.totalorder %s150, %s164
    %p166 = scmp.eq.s32.totalorder %s35, 0
    %p167 = por %p165, %p166
    %s169 = sadd.s32 %s168, 1
    %p172 = scmp.eq.s32.totalorder %s29, 1
    %p173 = scmp.ne.s32.totalorder %s168, %s170
    %p174 = scmp.eq.s32.totalorder %s29, 0
    %p175 = por %p173, %p174
    %p176 = scmp.ne.s32.totalorder %s168, %s170
    %p177 = scmp.eq.s32.totalorder %s34, 1
    %p178 = por %p176, %p177
    %p179 = scmp.ne.s32.totalorder %s170, %s171
    %p180 = scmp.eq.s32.totalorder %s34, 0
    %p181 = por %p179, %p180
    %p182 = scmp.ne.s32.totalorder %s170, %s171
    %p183 = scmp.eq.s32.totalorder %s35, 1
    %p184 = por %p182, %p183
    %p186 = scmp.ne.s32.totalorder %s171, %s185
    %p187 = scmp.eq.s32.totalorder %s35, 0
    %p188 = por %p186, %p187
    %s190 = sadd.s32 %s189, 1
    %p193 = scmp.eq.s32.totalorder %s29, 1
    %p194 = scmp.ne.s32.totalorder %s189, %s191
    %p195 = scmp.eq.s32.totalorder %s29, 0
    %p196 = por %p194, %p195
    %p197 = scmp.ne.s32.totalorder %s189, %s191
    %p198 = scmp.eq.s32.totalorder %s34, 1
    %p199 = por %p197, %p198
    %p200 = scmp.ne.s32.totalorder %s191, %s192
    %p201 = scmp.eq.s32.totalorder %s34, 0
    %p202 = por %p200, %p201
    %p203 = scmp.ne.s32.totalorder %s191, %s192
    %p204 = scmp.eq.s32.totalorder %s35, 1
    %p205 = por %p203, %p204
    %p207 = scmp.ne.s32.totalorder %s192, %s206
    %p208 = scmp.eq.s32.totalorder %s35, 0
    %p209 = por %p207, %p208
    %s211 = sadd.s32 %s210, 1
    %p214 = scmp.eq.s32.totalorder %s29, 1
    %p215 = scmp.ne.s32.totalorder %s210, %s212
    %p216 = scmp.eq.s32.totalorder %s29, 0
    %p217 = por %p215, %p216
    %p218 = scmp.ne.s32.totalorder %s210, %s212
    %p219 = scmp.eq.s32.totalorder %s34, 1
    %p220 = por %p218, %p219
    %p221 = scmp.ne.s32.totalorder %s212, %s213
    %p222 = scmp.eq.s32.totalorder %s34, 0
    %p223 = por %p221, %p222
    %p224 = scmp.ne.s32.totalorder %s212, %s213
    %p225 = scmp.eq.s32.totalorder %s35, 1
    %p226 = por %p224, %p225
    %p228 = scmp.ne.s32.totalorder %s213, %s227
    %p229 = scmp.eq.s32.totalorder %s35, 0
    %p230 = por %p228, %p229
    %s232 = sadd.s32 %s231, 1
    %p235 = scmp.eq.s32.totalorder %s29, 1
    %p236 = scmp.ne.s32.totalorder %s231, %s233
    %p237 = scmp.eq.s32.totalorder %s29, 0
    %p238 = por %p236, %p237
    %p239 = scmp.ne.s32.totalorder %s231, %s233
    %p240 = scmp.eq.s32.totalorder %s34, 1
    %p241 = por %p239, %p240
    %p242 = scmp.ne.s32.totalorder %s233, %s234
    %p243 = scmp.eq.s32.totalorder %s34, 0
    %p244 = por %p242, %p243
    %p245 = scmp.ne.s32.totalorder %s233, %s234
    %p246 = scmp.eq.s32.totalorder %s35, 1
    %p247 = por %p245, %p246
    %p249 = scmp.ne.s32.totalorder %s234, %s248
    %p250 = scmp.eq.s32.totalorder %s35, 0
    %p251 = por %p249, %p250
    %s253 = sadd.s32 %s252, 1
    %p256 = scmp.eq.s32.totalorder %s29, 1
    %p257 = scmp.ne.s32.totalorder %s252, %s254
    %p258 = scmp.eq.s32.totalorder %s29, 0
    %p259 = por %p257, %p258
    %p260 = scmp.ne.s32.totalorder %s252, %s254
    %p261 = scmp.eq.s32.totalorder %s34, 1
    %p262 = por %p260, %p261
    %p263 = scmp.ne.s32.totalorder %s254, %s255
    %p264 = scmp.eq.s32.totalorder %s34, 0
    %p265 = por %p263, %p264
    %p266 = scmp.ne.s32.totalorder %s254, %s255
    %p267 = scmp.eq.s32.totalorder %s35, 1
    %p268 = por %p266, %p267
    %p270 = scmp.ne.s32.totalorder %s255, %s269
    %p271 = scmp.eq.s32.totalorder %s35, 0
    %p272 = por %p270, %p271
    %s274 = sadd.s32 %s273, 1
    %p277 = scmp.eq.s32.totalorder %s29, 1
    %p278 = scmp.ne.s32.totalorder %s273, %s275
    %p279 = scmp.eq.s32.totalorder %s29, 0
    %p280 = por %p278, %p279
    %p281 = scmp.ne.s32.totalorder %s273, %s275
    %p282 = scmp.eq.s32.totalorder %s34, 1
    %p283 = por %p281, %p282
    %p284 = scmp.ne.s32.totalorder %s275, %s276
    %p285 = scmp.eq.s32.totalorder %s34, 0
    %p286 = por %p284, %p285
    %p287 = scmp.ne.s32.totalorder %s275, %s276
    %p288 = scmp.eq.s32.totalorder %s35, 1
    %p289 = por %p287, %p288
    %p291 = scmp.ne.s32.totalorder %s276, %s290
    %p292 = scmp.eq.s32.totalorder %s35, 0
    %p293 = por %p291, %p292
    %s295 = sadd.s32 %s294, 1
    %p298 = scmp.eq.s32.totalorder %s29, 1
    %p299 = scmp.ne.s32.totalorder %s294, %s296
    %p300 = scmp.eq.s32.totalorder %s29, 0
    %p301 = por %p299, %p300
    %p302 = scmp.ne.s32.totalorder %s294, %s296
    %p303 = scmp.eq.s32.totalorder %s34, 1
    %p304 = por %p302, %p303
    %p305 = scmp.ne.s32.totalorder %s296, %s297
    %p306 = scmp.eq.s32.totalorder %s34, 0
    %p307 = por %p305, %p306
    %p308 = scmp.ne.s32.totalorder %s296, %s297
    %p309 = scmp.eq.s32.totalorder %s35, 1
    %p310 = por %p308, %p309
    %p312 = scmp.ne.s32.totalorder %s297, %s311
    %p313 = scmp.eq.s32.totalorder %s35, 0
    %p314 = por %p312, %p313
    %s316 = sadd.s32 %s315, 1
    %p319 = scmp.eq.s32.totalorder %s29, 1
    %p320 = scmp.ne.s32.totalorder %s315, %s317
    %p321 = scmp.eq.s32.totalorder %s29, 0
    %p322 = por %p320, %p321
    %p323 = scmp.ne.s32.totalorder %s315, %s317
    %p324 = scmp.eq.s32.totalorder %s34, 1
    %p325 = por %p323, %p324
    %p326 = scmp.ne.s32.totalorder %s317, %s318
    %p327 = scmp.eq.s32.totalorder %s34, 0
    %p328 = por %p326, %p327
    %p329 = scmp.ne.s32.totalorder %s317, %s318
    %p330 = scmp.eq.s32.totalorder %s35, 1
    %p331 = por %p329, %p330
    %p333 = scmp.ne.s32.totalorder %s318, %s332
    %p334 = scmp.eq.s32.totalorder %s35, 0
    %p335 = por %p333, %p334
    %s337 = sadd.s32 %s336, 1
    %p340 = scmp.eq.s32.totalorder %s29, 1
    %p341 = scmp.ne.s32.totalorder %s336, %s338
    %p342 = scmp.eq.s32.totalorder %s29, 0
    %p343 = por %p341, %p342
    %p344 = scmp.ne.s32.totalorder %s336, %s338
    %p345 = scmp.eq.s32.totalorder %s34, 1
    %p346 = por %p344, %p345
    %p347 = scmp.ne.s32.totalorder %s338, %s339
    %p348 = scmp.eq.s32.totalorder %s34, 0
    %p349 = por %p347, %p348
    %p350 = scmp.ne.s32.totalorder %s338, %s339
    %p351 = scmp.eq.s32.totalorder %s35, 1
    %p352 = por %p350, %p351
    %p354 = scmp.ne.s32.totalorder %s339, %s353
    %p355 = scmp.eq.s32.totalorder %s35, 0
    %p356 = por %p354, %p355
    %s358 = sadd.s32 %s357, 1
    %p361 = scmp.eq.s32.totalorder %s29, 1
    %p362 = scmp.ne.s32.totalorder %s357, %s359
    %p363 = scmp.eq.s32.totalorder %s29, 0
    %p364 = por %p362, %p363
    %p365 = scmp.ne.s32.totalorder %s357, %s359
    %p366 = scmp.eq.s32.totalorder %s34, 1
    %p367 = por %p365, %p366
    %p368 = scmp.ne.s32.totalorder %s359, %s360
    %p369 = scmp.eq.s32.totalorder %s34, 0
    %p370 = por %p368, %p369
    %p371 = scmp.ne.s32.totalorder %s359, %s360
    %p372 = scmp.eq.s32.totalorder %s35, 1
    %p373 = por %p371, %p372
    %p375 = scmp.ne.s32.totalorder %s360, %s374
    %p376 = scmp.eq.s32.totalorder %s35, 0
    %p377 = por %p375, %p376
    %s379 = sadd.s32 %s378, 1
    %p382 = scmp.eq.s32.totalorder %s29, 1
    %p383 = scmp.ne.s32.totalorder %s378, %s380
    %p384 = scmp.eq.s32.totalorder %s29, 0
    %p385 = por %p383, %p384
    %p386 = scmp.ne.s32.totalorder %s378, %s380
    %p387 = scmp.eq.s32.totalorder %s34, 1
    %p388 = por %p386, %p387
    %p389 = scmp.ne.s32.totalorder %s380, %s381
    %p390 = scmp.eq.s32.totalorder %s34, 0
    %p391 = por %p389, %p390
    %p392 = scmp.ne.s32.totalorder %s380, %s381
    %p393 = scmp.eq.s32.totalorder %s35, 1
    %p394 = por %p392, %p393
    %p396 = scmp.ne.s32.totalorder %s381, %s395
    %p397 = scmp.eq.s32.totalorder %s35, 0
    %p398 = por %p396, %p397
    %s400 = sadd.s32 %s399, 1
    %p403 = scmp.eq.s32.totalorder %s29, 1
    %p404 = scmp.ne.s32.totalorder %s399, %s401
    %p405 = scmp.eq.s32.totalorder %s29, 0
    %p406 = por %p404, %p405
    %p407 = scmp.ne.s32.totalorder %s399, %s401
    %p408 = scmp.eq.s32.totalorder %s34, 1
    %p409 = por %p407, %p408
    %p410 = scmp.ne.s32.totalorder %s401, %s402
    %p411 = scmp.eq.s32.totalorder %s34, 0
    %p412 = por %p410, %p411
    %p413 = scmp.ne.s32.totalorder %s401, %s402
    %p414 = scmp.eq.s32.totalorder %s35, 1
    %p415 = por %p413, %p414
    %p417 = scmp.ne.s32.totalorder %s402, %s416
    %p418 = scmp.eq.s32.totalorder %s35, 0
    %p419 = por %p417, %p418
    %s421 = sadd.s32 %s420, 1
    %p424 = scmp.eq.s32.totalorder %s29, 1
    %p425 = scmp.ne.s32.totalorder %s420, %s422
    %p426 = scmp.eq.s32.totalorder %s29, 0
    %p427 = por %p425, %p426
    %p428 = scmp.ne.s32.totalorder %s420, %s422
    %p429 = scmp.eq.s32.totalorder %s34, 1
    %p430 = por %p428, %p429
    %p431 = scmp.ne.s32.totalorder %s422, %s423
    %p432 = scmp.eq.s32.totalorder %s34, 0
    %p433 = por %p431, %p432
    %p434 = scmp.ne.s32.totalorder %s422, %s423
    %p435 = scmp.eq.s32.totalorder %s35, 1
    %p436 = por %p434, %p435
    %p438 = scmp.ne.s32.totalorder %s423, %s437
    %p439 = scmp.eq.s32.totalorder %s35, 0
    %p440 = por %p438, %p439
    %s442 = sadd.s32 %s441, 1
    %p445 = scmp.eq.s32.totalorder %s29, 1
    %p446 = scmp.ne.s32.totalorder %s441, %s443
    %p447 = scmp.eq.s32.totalorder %s29, 0
    %p448 = por %p446, %p447
    %p449 = scmp.ne.s32.totalorder %s441, %s443
    %p450 = scmp.eq.s32.totalorder %s34, 1
    %p451 = por %p449, %p450
    %p452 = scmp.ne.s32.totalorder %s443, %s444
    %p453 = scmp.eq.s32.totalorder %s34, 0
    %p454 = por %p452, %p453
    %p455 = scmp.ne.s32.totalorder %s443, %s444
    %p456 = scmp.eq.s32.totalorder %s35, 1
    %p457 = por %p455, %p456
    %p459 = scmp.ne.s32.totalorder %s444, %s458
    %p460 = scmp.eq.s32.totalorder %s35, 0
    %p461 = por %p459, %p460
    %s463 = sadd.s32 %s462, 1
    %p466 = scmp.eq.s32.totalorder %s29, 1
    %p467 = scmp.ne.s32.totalorder %s462, %s464
    %p468 = scmp.eq.s32.totalorder %s29, 0
    %p469 = por %p467, %p468
    %p470 = scmp.ne.s32.totalorder %s462, %s464
    %p471 = scmp.eq.s32.totalorder %s34, 1
    %p472 = por %p470, %p471
    %p473 = scmp.ne.s32.totalorder %s464, %s465
    %p474 = scmp.eq.s32.totalorder %s34, 0
    %p475 = por %p473, %p474
    %p476 = scmp.ne.s32.totalorder %s464, %s465
    %p477 = scmp.eq.s32.totalorder %s35, 1
    %p478 = por %p476, %p477
    %p480 = scmp.ne.s32.totalorder %s465, %s479
    %p481 = scmp.eq.s32.totalorder %s35, 0
    %p482 = por %p480, %p481
    %s484 = sadd.s32 %s483, 1
    %p487 = scmp.eq.s32.totalorder %s29, 1
    %p488 = scmp.ne.s32.totalorder %s483, %s485
    %p489 = scmp.eq.s32.totalorder %s29, 0
    %p490 = por %p488, %p489
    %p491 = scmp.ne.s32.totalorder %s483, %s485
    %p492 = scmp.eq.s32.totalorder %s34, 1
    %p493 = por %p491, %p492
    %p494 = scmp.ne.s32.totalorder %s485, %s486
    %p495 = scmp.eq.s32.totalorder %s34, 0
    %p496 = por %p494, %p495
    %p497 = scmp.ne.s32.totalorder %s485, %s486
    %p498 = scmp.eq.s32.totalorder %s35, 1
    %p499 = por %p497, %p498
    %p501 = scmp.ne.s32.totalorder %s486, %s500
    %p502 = scmp.eq.s32.totalorder %s35, 0
    %p503 = por %p501, %p502
    %s505 = sadd.s32 %s504, 1
    %p508 = scmp.eq.s32.totalorder %s29, 1
    %p509 = scmp.ne.s32.totalorder %s504, %s506
    %p510 = scmp.eq.s32.totalorder %s29, 0
    %p511 = por %p509, %p510
    %p512 = scmp.ne.s32.totalorder %s504, %s506
    %p513 = scmp.eq.s32.totalorder %s34, 1
    %p514 = por %p512, %p513
    %p515 = scmp.ne.s32.totalorder %s506, %s507
    %p516 = scmp.eq.s32.totalorder %s34, 0
    %p517 = por %p515, %p516
    %p518 = scmp.ne.s32.totalorder %s506, %s507
    %p519 = scmp.eq.s32.totalorder %s35, 1
    %p520 = por %p518, %p519
    %p522 = scmp.ne.s32.totalorder %s507, %s521
    %p523 = scmp.eq.s32.totalorder %s35, 0
    %p524 = por %p522, %p523
    %s525 = ssub.s32 %s29, %s36
    %p526 = scmp.eq.s32.totalorder %s525, 0
    %s528 = sadd.s32 %s527, 1
    %s529 = scalar_select %p526, %s527, %s528
    %p532 = pneg %p526
    %p533 = scmp.eq.s32.totalorder %s29, 1
    %p534 = por %p532, %p533
    %p535 = scmp.ne.s32.totalorder %s527, %s530
    %p536 = scmp.eq.s32.totalorder %s29, 0
    %p537 = por %p535, %p536
    %p538 = scmp.ne.s32.totalorder %s527, %s530
    %p539 = scmp.eq.s32.totalorder %s34, 1
    %p540 = por %p538, %p539
    %p541 = scmp.ne.s32.totalorder %s530, %s531
    %p542 = scmp.eq.s32.totalorder %s34, 0
    %p543 = por %p541, %p542
    %p544 = scmp.ne.s32.totalorder %s530, %s531
    %p545 = scmp.eq.s32.totalorder %s35, 1
    %p546 = por %p544, %p545
    %p548 = scmp.ne.s32.totalorder %s531, %s547
    %p549 = scmp.eq.s32.totalorder %s35, 0
    %p550 = por %p548, %p549
    %p551 = scmp.le.s32.totalorder 1, %s29
    %p552 = scmp.lt.s32.totalorder %s29, 3
    %p553 = pnand %p551, %p552
    %p554 = pneg %p553
    // Predicated region
    $region9: #{lno1d_forward.4} parent=5 // pred_check
      _
    $region10: #{lno1d_forward.4} parent=5 // pred_check_branch
      %556 = sbr.rel (%p553) target = $region12
    $region11: #{lno1d_forward.4} parent=5 // pred_region
      %s557 = ssub.s32 %s29, 1
      // Predicated region
      $region13: #{lno1d_forward.4} parent=11 // pred_check
        %p558 = pneg %p76
      $region14: #{lno1d_forward.4} parent=11 // pred_check_branch
        %560 = sbr.rel (%p558) target = $region16
      $region15: #{lno1d_forward.4} parent=11 // pred_region
        _
      $region16: #{lno1d_forward.4} parent=11 // pred_fallthru
        _
      // Predicated region
      $region17: #{lno1d_forward.4} parent=11 // pred_check
        %p561 = pneg %p97
      $region18: #{lno1d_forward.4} parent=11 // pred_check_branch
        %563 = sbr.rel (%p561) target = $region20
      $region19: #{lno1d_forward.4} parent=11 // pred_region
        _
      $region20: #{lno1d_forward.4} parent=11 // pred_fallthru
        _
      // Predicated region
      $region21: #{lno1d_forward.4} parent=11 // pred_check
        %p564 = pneg %p118
      $region22: #{lno1d_forward.4} parent=11 // pred_check_branch
        %566 = sbr.rel (%p564) target = $region24
      $region23: #{lno1d_forward.4} parent=11 // pred_region
        _
      $region24: #{lno1d_forward.4} parent=11 // pred_fallthru
        _
      // Predicated region
      $region25: #{lno1d_forward.4} parent=11 // pred_check
        %p567 = pneg %p139
      $region26: #{lno1d_forward.4} parent=11 // pred_check_branch
        %569 = sbr.rel (%p567) target = $region28
      $region27: #{lno1d_forward.4} parent=11 // pred_region
        _
      $region28: #{lno1d_forward.4} parent=11 // pred_fallthru
        _
      // Predicated region
      $region29: #{lno1d_forward.4} parent=11 // pred_check
        %p570 = pneg %p160
      $region30: #{lno1d_forward.4} parent=11 // pred_check_branch
        %572 = sbr.rel (%p570) target = $region32
      $region31: #{lno1d_forward.4} parent=11 // pred_region
        _
      $region32: #{lno1d_forward.4} parent=11 // pred_fallthru
        _
      // Predicated region
      $region33: #{lno1d_forward.4} parent=11 // pred_check
        %p573 = pneg %p181
      $region34: #{lno1d_forward.4} parent=11 // pred_check_branch
        %575 = sbr.rel (%p573) target = $region36
      $region35: #{lno1d_forward.4} parent=11 // pred_region
        _
      $region36: #{lno1d_forward.4} parent=11 // pred_fallthru
        _
      // Predicated region
      $region37: #{lno1d_forward.4} parent=11 // pred_check
        %p576 = pneg %p202
      $region38: #{lno1d_forward.4} parent=11 // pred_check_branch
        %578 = sbr.rel (%p576) target = $region40
      $region39: #{lno1d_forward.4} parent=11 // pred_region
        _
      $region40: #{lno1d_forward.4} parent=11 // pred_fallthru
        _
      // Predicated region
      $region41: #{lno1d_forward.4} parent=11 // pred_check
        %p579 = pneg %p223
      $region42: #{lno1d_forward.4} parent=11 // pred_check_branch
        %581 = sbr.rel (%p579) target = $region44
      $region43: #{lno1d_forward.4} parent=11 // pred_region
        _
      $region44: #{lno1d_forward.4} parent=11 // pred_fallthru
        _
      // Predicated region
      $region45: #{lno1d_forward.4} parent=11 // pred_check
        %p582 = pneg %p244
      $region46: #{lno1d_forward.4} parent=11 // pred_check_branch
        %584 = sbr.rel (%p582) target = $region48
      $region47: #{lno1d_forward.4} parent=11 // pred_region
        _
      $region48: #{lno1d_forward.4} parent=11 // pred_fallthru
        _
      // Predicated region
      $region49: #{lno1d_forward.4} parent=11 // pred_check
        %p585 = pneg %p265
      $region50: #{lno1d_forward.4} parent=11 // pred_check_branch
        %587 = sbr.rel (%p585) target = $region52
      $region51: #{lno1d_forward.4} parent=11 // pred_region
        _
      $region52: #{lno1d_forward.4} parent=11 // pred_fallthru
        _
      // Predicated region
      $region53: #{lno1d_forward.4} parent=11 // pred_check
        %p588 = pneg %p286
      $region54: #{lno1d_forward.4} parent=11 // pred_check_branch
        %590 = sbr.rel (%p588) target = $region56
      $region55: #{lno1d_forward.4} parent=11 // pred_region
        _
      $region56: #{lno1d_forward.4} parent=11 // pred_fallthru
        _
      // Predicated region
      $region57: #{lno1d_forward.4} parent=11 // pred_check
        %p591 = pneg %p307
      $region58: #{lno1d_forward.4} parent=11 // pred_check_branch
        %593 = sbr.rel (%p591) target = $region60
      $region59: #{lno1d_forward.4} parent=11 // pred_region
        _
      $region60: #{lno1d_forward.4} parent=11 // pred_fallthru
        _
      // Predicated region
      $region61: #{lno1d_forward.4} parent=11 // pred_check
        %p594 = pneg %p328
      $region62: #{lno1d_forward.4} parent=11 // pred_check_branch
        %596 = sbr.rel (%p594) target = $region64
      $region63: #{lno1d_forward.4} parent=11 // pred_region
        _
      $region64: #{lno1d_forward.4} parent=11 // pred_fallthru
        _
      // Predicated region
      $region65: #{lno1d_forward.4} parent=11 // pred_check
        %p597 = pneg %p349
      $region66: #{lno1d_forward.4} parent=11 // pred_check_branch
        %599 = sbr.rel (%p597) target = $region68
      $region67: #{lno1d_forward.4} parent=11 // pred_region
        _
      $region68: #{lno1d_forward.4} parent=11 // pred_fallthru
        _
      // Predicated region
      $region69: #{lno1d_forward.4} parent=11 // pred_check
        %p600 = pneg %p370
      $region70: #{lno1d_forward.4} parent=11 // pred_check_branch
        %602 = sbr.rel (%p600) target = $region72
      $region71: #{lno1d_forward.4} parent=11 // pred_region
        _
      $region72: #{lno1d_forward.4} parent=11 // pred_fallthru
        _
      // Predicated region
      $region73: #{lno1d_forward.4} parent=11 // pred_check
        %p603 = pneg %p391
      $region74: #{lno1d_forward.4} parent=11 // pred_check_branch
        %605 = sbr.rel (%p603) target = $region76
      $region75: #{lno1d_forward.4} parent=11 // pred_region
        _
      $region76: #{lno1d_forward.4} parent=11 // pred_fallthru
        _
      // Predicated region
      $region77: #{lno1d_forward.4} parent=11 // pred_check
        %p606 = pneg %p412
      $region78: #{lno1d_forward.4} parent=11 // pred_check_branch
        %608 = sbr.rel (%p606) target = $region80
      $region79: #{lno1d_forward.4} parent=11 // pred_region
        _
      $region80: #{lno1d_forward.4} parent=11 // pred_fallthru
        _
      // Predicated region
      $region81: #{lno1d_forward.4} parent=11 // pred_check
        %p609 = pneg %p433
      $region82: #{lno1d_forward.4} parent=11 // pred_check_branch
        %611 = sbr.rel (%p609) target = $region84
      $region83: #{lno1d_forward.4} parent=11 // pred_region
        _
      $region84: #{lno1d_forward.4} parent=11 // pred_fallthru
        _
      // Predicated region
      $region85: #{lno1d_forward.4} parent=11 // pred_check
        %p612 = pneg %p454
      $region86: #{lno1d_forward.4} parent=11 // pred_check_branch
        %614 = sbr.rel (%p612) target = $region88
      $region87: #{lno1d_forward.4} parent=11 // pred_region
        _
      $region88: #{lno1d_forward.4} parent=11 // pred_fallthru
        _
      // Predicated region
      $region89: #{lno1d_forward.4} parent=11 // pred_check
        %p615 = pneg %p475
      $region90: #{lno1d_forward.4} parent=11 // pred_check_branch
        %617 = sbr.rel (%p615) target = $region92
      $region91: #{lno1d_forward.4} parent=11 // pred_region
        _
      $region92: #{lno1d_forward.4} parent=11 // pred_fallthru
        _
      // Predicated region
      $region93: #{lno1d_forward.4} parent=11 // pred_check
        %p618 = pneg %p496
      $region94: #{lno1d_forward.4} parent=11 // pred_check_branch
        %620 = sbr.rel (%p618) target = $region96
      $region95: #{lno1d_forward.4} parent=11 // pred_region
        _
      $region96: #{lno1d_forward.4} parent=11 // pred_fallthru
        _
      // Predicated region
      $region97: #{lno1d_forward.4} parent=11 // pred_check
        %p621 = pneg %p517
      $region98: #{lno1d_forward.4} parent=11 // pred_check_branch
        %623 = sbr.rel (%p621) target = $region100
      $region99: #{lno1d_forward.4} parent=11 // pred_region
        _
      $region100: #{lno1d_forward.4} parent=11 // pred_fallthru
        _
    $region12: #{lno1d_forward.4} parent=5 // pred_fallthru
      _
    %p624 = scmp.lt.s32.totalorder %s29, 2
    // Predicated region
    $region101: #{lno1d_forward.4} parent=5 // pred_check
      %p625 = pneg %p624
    $region102: #{lno1d_forward.4} parent=5 // pred_check_branch
      %627 = sbr.rel (%p625) target = $region104
    $region103: #{lno1d_forward.4} parent=5 // pred_region
      // Predicated region
      $region105: #{lno1d_forward.4} parent=103 // pred_check
        %p628 = pneg %p49
      $region106: #{lno1d_forward.4} parent=103 // pred_check_branch
        %630 = sbr.rel (%p628) target = $region108
      $region107: #{lno1d_forward.4} parent=103 // pred_region
        %p631 = scmp.lt.s32.totalorder %s29, 1
        %s632 = scalar_select %p631, %s29, 1
        %s633 = smul.addr %s632, 2
        %s634 = smul.addr %s633, 8
        %s635 = scalar_lea.vmem %s0, %s634
      $region108: #{lno1d_forward.4} parent=103 // pred_fallthru
        _
    $region104: #{lno1d_forward.4} parent=5 // pred_fallthru
      _
    %p636 = scmp.le.s32.totalorder 1, %s29
    %p637 = scmp.lt.s32.totalorder %s29, 3
    %p638 = pnand %p636, %p637
    %p639 = pneg %p638
    // Predicated region
    $region109: #{lno1d_forward.4} parent=5 // pred_check
      _
    $region110: #{lno1d_forward.4} parent=5 // pred_check_branch
      %641 = sbr.rel (%p638) target = $region112
    $region111: #{lno1d_forward.4} parent=5 // pred_region
      %s642 = ssub.s32 %s29, 1
      %p643 = scmp.lt.s32.totalorder %s34, 1
      %s644 = scalar_select %p643, %s34, 1
      %s645 = smul.addr %s644, 2
      %s646 = smul.addr %s645, 8
      %s647 = scalar_lea.vmem %s0, %s646
      %p648 = pneg %p55
      %p649 = pneg %p52
      %p650 = pneg %p76
      %p651 = pneg %p73
      %p652 = pneg %p97
      %p653 = pneg %p94
      %p654 = pneg %p118
      %p655 = pneg %p115
      %p656 = pneg %p139
      %p657 = pneg %p136
      %p658 = pneg %p160
      %p659 = pneg %p157
      %p660 = pneg %p181
      %p661 = pneg %p178
      %p662 = pneg %p202
      %p663 = pneg %p199
      %p664 = pneg %p223
      %p665 = pneg %p220
      %p666 = pneg %p244
      %p667 = pneg %p241
      %p668 = pneg %p265
      %p669 = pneg %p262
      %p670 = pneg %p286
      %p671 = pneg %p283
      %p672 = pneg %p307
      %p673 = pneg %p304
      %p674 = pneg %p328
      %p675 = pneg %p325
      %p676 = pneg %p349
      %p677 = pneg %p346
      %p678 = pneg %p370
      %p679 = pneg %p367
      %p680 = pneg %p391
      %p681 = pneg %p388
      %p682 = pneg %p412
      %p683 = pneg %p409
      %p684 = pneg %p433
      %p685 = pneg %p430
      %p686 = pneg %p454
      %p687 = pneg %p451
      %p688 = pneg %p475
      %p689 = pneg %p472
      %p690 = pneg %p496
      %p691 = pneg %p493
      %p692 = pneg %p517
      %p693 = pneg %p514
      %p694 = pneg %p543
      %p695 = pneg %p540
      %p696 = scmp.lt.s32.totalorder %s34, 1
      %s697 = scalar_select %p696, %s34, 1
      %s698 = smul.addr %s697, 2
      %s699 = smul.addr %s698, 8
      %s700 = scalar_lea.vmem %s23, %s699
      %p701 = scmp.lt.s32.totalorder %s34, 1
      %s702 = scalar_select %p701, %s34, 1
      %s703 = smul.addr %s702, 2
      %s704 = smul.addr %s703, 8
      %s705 = scalar_lea.vmem %s0, %s704
      %p706 = scmp.lt.s32.totalorder %s34, 1
      %s707 = scalar_select %p706, %s34, 1
      %s708 = smul.addr %s707, 2
      %s709 = smul.addr %s708, 8
      %s710 = scalar_lea.vmem %s23, %s709
      %v712 = vld [vmem:[%s705] sm:$0xff]
      %v713 = vld [vmem:[%s705 + $0x8] sm:$0xff]
      %v714 = vld [vmem:[%s1] sm:$0x1]
      %v715 = vld [vmem:[%s2] sm:$0x1]
      %v716 = vpack.c.bf16 %v713, %v712
      %v718 = vlaneseq
      %v719 = vshrl.u32 %v718, 7
      %v720 = vsub.s32 0, %v719
      %v721 = vrot.slane %v715, %v720
      %vm723 = vcmask 15360
      %v725 = vsel %vm723, %v716, 0
      %vm727 = vcmask 1040384
      %v729 = vsel %vm727, %v714, 0
      %731 = vmatprep.subr.bf16.mxu0 0
      %732 = vmatpush1.bf16.msra.mxu0 0
      %733 = vmatprep.subr.bf16.mxu0 0
      %734 = vmatpush1.bf16.msra.mxu0 0
      %735 = vmatprep.subr.bf16.mxu0 0
      %736 = vmatpush1.bf16.msra.mxu0 0
      %737 = vmatprep.subr.bf16.mxu0 0
      %738 = vmatpush1.bf16.msra.mxu0 0
      %739 = vmatprep.subr.bf16.mxu0 0
      %740 = vmatpush1.bf16.msra.mxu0 0
      %741 = vmatprep.subr.bf16.mxu0 0
      %742 = vmatpush1.bf16.msra.mxu0 0
      %743 = vmatprep.subr.bf16.mxu0 0
      %744 = vmatpush1.bf16.msra.mxu0 0
      %745 = vmatprep.subr.bf16.mxu0 0
      %746 = vmatpush1.bf16.msra.mxu0 %v729
      %747 = vmatprep.subr.bf16.mxu0 0
      %748 = vmatpush2.bf16.msra.mxu0 0
      %749 = vmatprep.subr.bf16.mxu0 0
      %750 = vmatpush2.bf16.msra.mxu0 0
      %751 = vmatprep.subr.bf16.mxu0 0
      %752 = vmatpush2.bf16.msra.mxu0 0
      %753 = vmatprep.subr.bf16.mxu0 0
      %754 = vmatpush2.bf16.msra.mxu0 0
      %755 = vmatprep.subr.bf16.mxu0 0
      %756 = vmatpush2.bf16.msra.mxu0 0
      %757 = vmatprep.subr.bf16.mxu0 0
      %758 = vmatpush2.bf16.msra.mxu0 0
      %759 = vmatprep.subr.bf16.mxu0 0
      %760 = vmatpush2.bf16.msra.mxu0 0
      %761 = vmatprep.subr.bf16.mxu0 0
      %762 = vmatpush2.bf16.msra.mxu0 0
      %763 = vmatprep.mubr.bf16.mxu0 0
      %764 = vmatmul.mubr.bf16.gmra.mxu0 %v725
      %v765 = vpop.f32.mrf.mxu0
      %v766 = vadd.f32 %v721, %v765
      %v767 = vpop.f32.mrf.mxu0
      %v768 = vpop.f32.mrf.mxu0
      %v769 = vadd.f32 %v721, %v768
      %v770 = vpop.f32.mrf.mxu0
      %771 = vdwg.mxu0
      %v772 = vld [vmem:[%s19] sm:$0xf]
      %v773 = vld [vmem:[%s19 + $0x4] sm:$0xf]
      %v774 = vld [vmem:[%s19 + $0x8] sm:$0xf]
      %v775 = vld [vmem:[%s19 + $0xc] sm:$0xf]
      %v776 = vld [vmem:[%s20] sm:$0x1]
      %v777 = vld [vmem:[%s21] sm:$0x1]
      %v778 = vld [vmem:[%s22] sm:$0x1]
      %v779 = vpack.c.bf16 %v769, %v766
      %v781 = vlaneseq
      %v782 = vshrl.u32 %v781, 7
      %v783 = vsub.s32 0, %v782
      %v784 = vrot.slane %v776, %v783
      %v790 = vunpack.c.l.b16 %v772
      %v791 = vunpack.c.l.b16 %v773
      %v792 = vunpack.c.l.b16 %v774
      %v793 = vunpack.c.l.b16 %v775
      %v794 = vpack.c.b16 %v791, %v790
      %v795 = vpack.c.b16 %v793, %v792
      %vm798 = vcmask 261120
      %v800 = vsel %vm798, %v779, 0
      %802 = vmatprep.subr.bf16.mxu0 0
      %803 = vmatpush1.bf16.msra.mxu0 0
      %804 = vmatprep.subr.bf16.mxu0 0
      %805 = vmatpush1.bf16.msra.mxu0 0
      %806 = vmatprep.subr.bf16.mxu0 0
      %807 = vmatpush1.bf16.msra.mxu0 0
      %808 = vmatprep.subr.bf16.mxu0 0
      %809 = vmatpush1.bf16.msra.mxu0 0
      %810 = vmatprep.subr.bf16.mxu0 0
      %811 = vmatpush1.bf16.msra.mxu0 0
      %812 = vmatprep.subr.bf16.mxu0 0
      %813 = vmatpush1.bf16.msra.mxu0 0
      %814 = vmatprep.subr.bf16.mxu0 0
      %815 = vmatpush1.bf16.msra.mxu0 %v795
      %816 = vmatprep.subr.bf16.mxu0 0
      %817 = vmatpush1.bf16.msra.mxu0 %v794
      %818 = vmatprep.subr.bf16.mxu0 0
      %819 = vmatpush2.bf16.msra.mxu0 0
      %820 = vmatprep.subr.bf16.mxu0 0
      %821 = vmatpush2.bf16.msra.mxu0 0
      %822 = vmatprep.subr.bf16.mxu0 0
      %823 = vmatpush2.bf16.msra.mxu0 0
      %824 = vmatprep.subr.bf16.mxu0 0
      %825 = vmatpush2.bf16.msra.mxu0 0
      %826 = vmatprep.subr.bf16.mxu0 0
      %827 = vmatpush2.bf16.msra.mxu0 0
      %828 = vmatprep.subr.bf16.mxu0 0
      %829 = vmatpush2.bf16.msra.mxu0 0
      %830 = vmatprep.subr.bf16.mxu0 0
      %831 = vmatpush2.bf16.msra.mxu0 0
      %832 = vmatprep.subr.bf16.mxu0 0
      %833 = vmatpush2.bf16.msra.mxu0 0
      %834 = vmatprep.mubr.bf16.mxu0 0
      %835 = vmatmul.mubr.bf16.gmra.mxu0 %v800
      %v836 = vpop.f32.mrf.mxu0
      %v837 = vadd.f32 %v784, %v836
      %v838 = vpop.f32.mrf.mxu0
      %v839 = vpop.f32.mrf.mxu0
      %v840 = vadd.f32 %v784, %v839
      %v841 = vpop.f32.mrf.mxu0
      %842 = vdwg.mxu0
      %v843 = vld [vmem:[%s3] sm:$0x1]
      %v844 = vld [vmem:[%s4] sm:$0x1]
      %v846 = vlaneseq
      %v847 = vshrl.u32 %v846, 7
      %v848 = vsub.s32 0, %v847
      %v849 = vrot.slane %v844, %v848
      %v852 = vsel %vm727, %v843, 0
      %854 = vmatprep.subr.bf16.mxu0 0
      %855 = vmatpush1.bf16.msra.mxu0 0
      %856 = vmatprep.subr.bf16.mxu0 0
      %857 = vmatpush1.bf16.msra.mxu0 0
      %858 = vmatprep.subr.bf16.mxu0 0
      %859 = vmatpush1.bf16.msra.mxu0 0
      %860 = vmatprep.subr.bf16.mxu0 0
      %861 = vmatpush1.bf16.msra.mxu0 0
      %862 = vmatprep.subr.bf16.mxu0 0
      %863 = vmatpush1.bf16.msra.mxu0 0
      %864 = vmatprep.subr.bf16.mxu0 0
      %865 = vmatpush1.bf16.msra.mxu0 0
      %866 = vmatprep.subr.bf16.mxu0 0
      %867 = vmatpush1.bf16.msra.mxu0 0
      %868 = vmatprep.subr.bf16.mxu0 0
      %869 = vmatpush1.bf16.msra.mxu0 %v852
      %870 = vmatprep.subr.bf16.mxu0 0
      %871 = vmatpush2.bf16.msra.mxu0 0
      %872 = vmatprep.subr.bf16.mxu0 0
      %873 = vmatpush2.bf16.msra.mxu0 0
      %874 = vmatprep.subr.bf16.mxu0 0
      %875 = vmatpush2.bf16.msra.mxu0 0
      %876 = vmatprep.subr.bf16.mxu0 0
      %877 = vmatpush2.bf16.msra.mxu0 0
      %878 = vmatprep.subr.bf16.mxu0 0
      %879 = vmatpush2.bf16.msra.mxu0 0
      %880 = vmatprep.subr.bf16.mxu0 0
      %881 = vmatpush2.bf16.msra.mxu0 0
      %882 = vmatprep.subr.bf16.mxu0 0
      %883 = vmatpush2.bf16.msra.mxu0 0
      %884 = vmatprep.subr.bf16.mxu0 0
      %885 = vmatpush2.bf16.msra.mxu0 0
      %886 = vmatprep.mubr.bf16.mxu0 0
      %887 = vmatmul.mubr.bf16.gmra.mxu0 %v725
      %v888 = vpop.f32.mrf.mxu0
      %v889 = vadd.f32 %v849, %v888
      %v890 = vpop.f32.mrf.mxu0
      %v891 = vpop.f32.mrf.mxu0
      %v892 = vadd.f32 %v849, %v891
      %v893 = vpop.f32.mrf.mxu0
      %894 = vdwg.mxu0
      %v895 = vmax.f32 %v889, 0.0
      %v896 = vmax.f32 %v892, 0.0
      %v897 = vld [vmem:[%s5] sm:$0xf]
      %v898 = vld [vmem:[%s5 + $0x4] sm:$0xf]
      %v899 = vld [vmem:[%s5 + $0x8] sm:$0xf]
      %v900 = vld [vmem:[%s5 + $0xc] sm:$0xf]
      %v901 = vld [vmem:[%s5 + $0x10] sm:$0xf]
      %v902 = vld [vmem:[%s5 + $0x14] sm:$0xf]
      %v903 = vld [vmem:[%s5 + $0x18] sm:$0xf]
      %v904 = vld [vmem:[%s5 + $0x1c] sm:$0xf]
      %v905 = vld [vmem:[%s6] sm:$0x1]
      %v906 = vpack.c.bf16 %v896, %v895
      %v908 = vlaneseq
      %v909 = vshrl.u32 %v908, 7
      %v910 = vsub.s32 0, %v909
      %v911 = vrot.slane %v905, %v910
      %v921 = vunpack.c.l.b16 %v897
      %v922 = vunpack.c.l.b16 %v898
      %v923 = vunpack.c.l.b16 %v899
      %v924 = vunpack.c.l.b16 %v900
      %v925 = vunpack.c.l.b16 %v901
      %v926 = vunpack.c.l.b16 %v902
      %v927 = vunpack.c.l.b16 %v903
      %v928 = vunpack.c.l.b16 %v904
      %v929 = vpack.c.b16 %v922, %v921
      %v930 = vpack.c.b16 %v924, %v923
      %v931 = vpack.c.b16 %v926, %v925
      %v932 = vpack.c.b16 %v928, %v927
      %vm937 = vcmask 523264
      %v939 = vsel %vm937, %v906, 0
      %941 = vmatprep.subr.bf16.mxu0 0
      %942 = vmatpush1.bf16.msra.mxu0 0
      %943 = vmatprep.subr.bf16.mxu0 0
      %944 = vmatpush1.bf16.msra.mxu0 0
      %945 = vmatprep.subr.bf16.mxu0 0
      %946 = vmatpush1.bf16.msra.mxu0 0
      %947 = vmatprep.subr.bf16.mxu0 0
      %948 = vmatpush1.bf16.msra.mxu0 0
      %949 = vmatprep.subr.bf16.mxu0 0
      %950 = vmatpush1.bf16.msra.mxu0 %v932
      %951 = vmatprep.subr.bf16.mxu0 0
      %952 = vmatpush1.bf16.msra.mxu0 %v931
      %953 = vmatprep.subr.bf16.mxu0 0
      %954 = vmatpush1.bf16.msra.mxu0 %v930
      %955 = vmatprep.subr.bf16.mxu0 0
      %956 = vmatpush1.bf16.msra.mxu0 %v929
      %957 = vmatprep.subr.bf16.mxu0 0
      %958 = vmatpush2.bf16.msra.mxu0 0
      %959 = vmatprep.subr.bf16.mxu0 0
      %960 = vmatpush2.bf16.msra.mxu0 0
      %961 = vmatprep.subr.bf16.mxu0 0
      %962 = vmatpush2.bf16.msra.mxu0 0
      %963 = vmatprep.subr.bf16.mxu0 0
      %964 = vmatpush2.bf16.msra.mxu0 0
      %965 = vmatprep.subr.bf16.mxu0 0
      %966 = vmatpush2.bf16.msra.mxu0 0
      %967 = vmatprep.subr.bf16.mxu0 0
      %968 = vmatpush2.bf16.msra.mxu0 0
      %969 = vmatprep.subr.bf16.mxu0 0
      %970 = vmatpush2.bf16.msra.mxu0 0
      %971 = vmatprep.subr.bf16.mxu0 0
      %972 = vmatpush2.bf16.msra.mxu0 0
      %973 = vmatprep.mubr.bf16.mxu0 0
      %974 = vmatmul.mubr.bf16.gmra.mxu0 %v939
      %v975 = vpop.f32.mrf.mxu0
      %v976 = vadd.f32 %v911, %v975
      %v977 = vpop.f32.mrf.mxu0
      %v978 = vpop.f32.mrf.mxu0
      %v979 = vadd.f32 %v911, %v978
      %v980 = vpop.f32.mrf.mxu0
      %981 = vdwg.mxu0
      %v982 = vmax.f32 %v976, 0.0
      %v983 = vmax.f32 %v979, 0.0
      %v984 = vld [vmem:[%s7] sm:$0xff]
      %v985 = vld [vmem:[%s7 + $0x8] sm:$0xff]
      %v986 = vld [vmem:[%s7 + $0x10] sm:$0xff]
      %v987 = vld [vmem:[%s7 + $0x18] sm:$0xff]
      %v988 = vld [vmem:[%s7 + $0x20] sm:$0xff]
      %v989 = vld [vmem:[%s7 + $0x28] sm:$0xff]
      %v990 = vld [vmem:[%s7 + $0x30] sm:$0xff]
      %v991 = vld [vmem:[%s7 + $0x38] sm:$0xff]
      %v992 = vld [vmem:[%s7 + $0x40] sm:$0xff]
      %v993 = vld [vmem:[%s7 + $0x48] sm:$0xff]
      %v994 = vld [vmem:[%s7 + $0x50] sm:$0xff]
      %v995 = vld [vmem:[%s7 + $0x58] sm:$0xff]
      %v996 = vld [vmem:[%s7 + $0x60] sm:$0xff]
      %v997 = vld [vmem:[%s7 + $0x68] sm:$0xff]
      %v998 = vld [vmem:[%s7 + $0x70] sm:$0xff]
      %v999 = vld [vmem:[%s7 + $0x78] sm:$0xff]
      %v1000 = vld [vmem:[%s8] sm:$0x3]
      %v1001 = vpack.c.bf16 %v983, %v982
      %v1003 = vlaneseq
      %v1004 = vshrl.u32 %v1003, 7
      %v1005 = vsub.s32 0, %v1004
      %v1006 = vrot.slane %v1000, %v1005
      %v1007 = vlaneseq
      %v1008 = vshrl.u32 %v1007, 7
      %v1009 = vsub.s32 1, %v1008
      %v1010 = vrot.slane %v1000, %v1009
      %v1029 = vunpack.c.l.b16 %v984
      %v1030 = vunpack.c.h.b16 %v984
      %v1031 = vunpack.c.l.b16 %v985
      %v1032 = vunpack.c.h.b16 %v985
      %v1033 = vunpack.c.l.b16 %v986
      %v1034 = vunpack.c.h.b16 %v986
      %v1035 = vunpack.c.l.b16 %v987
      %v1036 = vunpack.c.h.b16 %v987
      %v1037 = vunpack.c.l.b16 %v988
      %v1038 = vunpack.c.h.b16 %v988
      %v1039 = vunpack.c.l.b16 %v989
      %v1040 = vunpack.c.h.b16 %v989
      %v1041 = vunpack.c.l.b16 %v990
      %v1042 = vunpack.c.h.b16 %v990
      %v1043 = vunpack.c.l.b16 %v991
      %v1044 = vunpack.c.h.b16 %v991
      %v1045 = vunpack.c.l.b16 %v992
      %v1046 = vunpack.c.h.b16 %v992
      %v1047 = vunpack.c.l.b16 %v993
      %v1048 = vunpack.c.h.b16 %v993
      %v1049 = vunpack.c.l.b16 %v994
      %v1050 = vunpack.c.h.b16 %v994
      %v1051 = vunpack.c.l.b16 %v995
      %v1052 = vunpack.c.h.b16 %v995
      %v1053 = vunpack.c.l.b16 %v996
      %v1054 = vunpack.c.h.b16 %v996
      %v1055 = vunpack.c.l.b16 %v997
      %v1056 = vunpack.c.h.b16 %v997
      %v1057 = vunpack.c.l.b16 %v998
      %v1058 = vunpack.c.h.b16 %v998
      %v1059 = vunpack.c.l.b16 %v999
      %v1060 = vunpack.c.h.b16 %v999
      %v1061 = vpack.c.b16 %v1031, %v1029
      %v1062 = vpack.c.b16 %v1032, %v1030
      %v1063 = vpack.c.b16 %v1035, %v1033
      %v1064 = vpack.c.b16 %v1036, %v1034
      %v1065 = vpack.c.b16 %v1039, %v1037
      %v1066 = vpack.c.b16 %v1040, %v1038
      %v1067 = vpack.c.b16 %v1043, %v1041
      %v1068 = vpack.c.b16 %v1044, %v1042
      %v1069 = vpack.c.b16 %v1047, %v1045
      %v1070 = vpack.c.b16 %v1048, %v1046
      %v1071 = vpack.c.b16 %v1051, %v1049
      %v1072 = vpack.c.b16 %v1052, %v1050
      %v1073 = vpack.c.b16 %v1055, %v1053
      %v1074 = vpack.c.b16 %v1056, %v1054
      %v1075 = vpack.c.b16 %v1059, %v1057
      %v1076 = vpack.c.b16 %v1060, %v1058
      %1093 = vmatprep.subr.bf16.mxu0 %v1076
      %1094 = vmatpush1.bf16.msra.mxu0 %v1075
      %1095 = vmatprep.subr.bf16.mxu0 %v1074
      %1096 = vmatpush1.bf16.msra.mxu0 %v1073
      %1097 = vmatprep.subr.bf16.mxu0 %v1072
      %1098 = vmatpush1.bf16.msra.mxu0 %v1071
      %1099 = vmatprep.subr.bf16.mxu0 %v1070
      %1100 = vmatpush1.bf16.msra.mxu0 %v1069
      %1101 = vmatprep.subr.bf16.mxu0 %v1068
      %1102 = vmatpush1.bf16.msra.mxu0 %v1067
      %1103 = vmatprep.subr.bf16.mxu0 %v1066
      %1104 = vmatpush1.bf16.msra.mxu0 %v1065
      %1105 = vmatprep.subr.bf16.mxu0 %v1064
      %1106 = vmatpush1.bf16.msra.mxu0 %v1063
      %1107 = vmatprep.subr.bf16.mxu0 %v1062
      %1108 = vmatpush1.bf16.msra.mxu0 %v1061
      %1109 = vmatprep.subr.bf16.mxu0 0
      %1110 = vmatpush2.bf16.msra.mxu0 0
      %1111 = vmatprep.subr.bf16.mxu0 0
      %1112 = vmatpush2.bf16.msra.mxu0 0
      %1113 = vmatprep.subr.bf16.mxu0 0
      %1114 = vmatpush2.bf16.msra.mxu0 0
      %1115 = vmatprep.subr.bf16.mxu0 0
      %1116 = vmatpush2.bf16.msra.mxu0 0
      %1117 = vmatprep.subr.bf16.mxu0 0
      %1118 = vmatpush2.bf16.msra.mxu0 0
      %1119 = vmatprep.subr.bf16.mxu0 0
      %1120 = vmatpush2.bf16.msra.mxu0 0
      %1121 = vmatprep.subr.bf16.mxu0 0
      %1122 = vmatpush2.bf16.msra.mxu0 0
      %1123 = vmatprep.subr.bf16.mxu0 0
      %1124 = vmatpush2.bf16.msra.mxu0 0
      %1125 = vmatprep.mubr.bf16.mxu0 0
      %1126 = vmatmul.mubr.bf16.gmra.mxu0 %v1001
      %v1127 = vpop.f32.mrf.mxu0
      %v1128 = vadd.f32 %v1006, %v1127
      %v1129 = vpop.f32.mrf.mxu0
      %v1130 = vadd.f32 %v1010, %v1129
      %v1131 = vpop.f32.mrf.mxu0
      %v1132 = vadd.f32 %v1006, %v1131
      %v1133 = vpop.f32.mrf.mxu0
      %v1134 = vadd.f32 %v1010, %v1133
      %1135 = vdwg.mxu0
      %v1136 = vmax.f32 %v1128, 0.0
      %v1137 = vmax.f32 %v1130, 0.0
      %v1138 = vmax.f32 %v1132, 0.0
      %v1139 = vmax.f32 %v1134, 0.0
      %v1140 = vld [vmem:[%s9] sm:$0xf]
      %v1141 = vld [vmem:[%s9 + $0x4] sm:$0xf]
      %v1142 = vld [vmem:[%s9 + $0x8] sm:$0xf]
      %v1143 = vld [vmem:[%s9 + $0xc] sm:$0xf]
      %v1144 = vld [vmem:[%s9 + $0x10] sm:$0xf]
      %v1145 = vld [vmem:[%s9 + $0x14] sm:$0xf]
      %v1146 = vld [vmem:[%s9 + $0x18] sm:$0xf]
      %v1147 = vld [vmem:[%s9 + $0x1c] sm:$0xf]
      %v1148 = vld [vmem:[%s9 + $0x20] sm:$0xf]
      %v1149 = vld [vmem:[%s9 + $0x24] sm:$0xf]
      %v1150 = vld [vmem:[%s9 + $0x28] sm:$0xf]
      %v1151 = vld [vmem:[%s9 + $0x2c] sm:$0xf]
      %v1152 = vld [vmem:[%s9 + $0x30] sm:$0xf]
      %v1153 = vld [vmem:[%s9 + $0x34] sm:$0xf]
      %v1154 = vld [vmem:[%s9 + $0x38] sm:$0xf]
      %v1155 = vld [vmem:[%s9 + $0x3c] sm:$0xf]
      %v1156 = vld [vmem:[%s9 + $0x40] sm:$0xf]
      %v1157 = vld [vmem:[%s9 + $0x44] sm:$0xf]
      %v1158 = vld [vmem:[%s9 + $0x48] sm:$0xf]
      %v1159 = vld [vmem:[%s9 + $0x4c] sm:$0xf]
      %v1160 = vld [vmem:[%s9 + $0x50] sm:$0xf]
      %v1161 = vld [vmem:[%s9 + $0x54] sm:$0xf]
      %v1162 = vld [vmem:[%s9 + $0x58] sm:$0xf]
      %v1163 = vld [vmem:[%s9 + $0x5c] sm:$0xf]
      %v1164 = vld [vmem:[%s9 + $0x60] sm:$0xf]
      %v1165 = vld [vmem:[%s9 + $0x64] sm:$0xf]
      %v1166 = vld [vmem:[%s9 + $0x68] sm:$0xf]
      %v1167 = vld [vmem:[%s9 + $0x6c] sm:$0xf]
      %v1168 = vld [vmem:[%s9 + $0x70] sm:$0xf]
      %v1169 = vld [vmem:[%s9 + $0x74] sm:$0xf]
      %v1170 = vld [vmem:[%s9 + $0x78] sm:$0xf]
      %v1171 = vld [vmem:[%s9 + $0x7c] sm:$0xf]
      %v1172 = vld [vmem:[%s10] sm:$0x1]
      %v1173 = vpack.c.bf16 %v1138, %v1136
      %v1174 = vpack.c.bf16 %v1139, %v1137
      %v1176 = vlaneseq
      %v1177 = vshrl.u32 %v1176, 7
      %v1178 = vsub.s32 0, %v1177
      %v1179 = vrot.slane %v1172, %v1178
      %v1213 = vunpack.c.l.b16 %v1140
      %v1214 = vunpack.c.l.b16 %v1141
      %v1215 = vunpack.c.l.b16 %v1142
      %v1216 = vunpack.c.l.b16 %v1143
      %v1217 = vunpack.c.l.b16 %v1144
      %v1218 = vunpack.c.l.b16 %v1145
      %v1219 = vunpack.c.l.b16 %v1146
      %v1220 = vunpack.c.l.b16 %v1147
      %v1221 = vunpack.c.l.b16 %v1148
      %v1222 = vunpack.c.l.b16 %v1149
      %v1223 = vunpack.c.l.b16 %v1150
      %v1224 = vunpack.c.l.b16 %v1151
      %v1225 = vunpack.c.l.b16 %v1152
      %v1226 = vunpack.c.l.b16 %v1153
      %v1227 = vunpack.c.l.b16 %v1154
      %v1228 = vunpack.c.l.b16 %v1155
      %v1229 = vunpack.c.l.b16 %v1156
      %v1230 = vunpack.c.l.b16 %v1157
      %v1231 = vunpack.c.l.b16 %v1158
      %v1232 = vunpack.c.l.b16 %v1159
      %v1233 = vunpack.c.l.b16 %v1160
      %v1234 = vunpack.c.l.b16 %v1161
      %v1235 = vunpack.c.l.b16 %v1162
      %v1236 = vunpack.c.l.b16 %v1163
      %v1237 = vunpack.c.l.b16 %v1164
      %v1238 = vunpack.c.l.b16 %v1165
      %v1239 = vunpack.c.l.b16 %v1166
      %v1240 = vunpack.c.l.b16 %v1167
      %v1241 = vunpack.c.l.b16 %v1168
      %v1242 = vunpack.c.l.b16 %v1169
      %v1243 = vunpack.c.l.b16 %v1170
      %v1244 = vunpack.c.l.b16 %v1171
      %v1245 = vpack.c.b16 %v1214, %v1213
      %v1246 = vpack.c.b16 %v1216, %v1215
      %v1247 = vpack.c.b16 %v1218, %v1217
      %v1248 = vpack.c.b16 %v1220, %v1219
      %v1249 = vpack.c.b16 %v1222, %v1221
      %v1250 = vpack.c.b16 %v1224, %v1223
      %v1251 = vpack.c.b16 %v1226, %v1225
      %v1252 = vpack.c.b16 %v1228, %v1227
      %v1253 = vpack.c.b16 %v1230, %v1229
      %v1254 = vpack.c.b16 %v1232, %v1231
      %v1255 = vpack.c.b16 %v1234, %v1233
      %v1256 = vpack.c.b16 %v1236, %v1235
      %v1257 = vpack.c.b16 %v1238, %v1237
      %v1258 = vpack.c.b16 %v1240, %v1239
      %v1259 = vpack.c.b16 %v1242, %v1241
      %v1260 = vpack.c.b16 %v1244, %v1243
      %1277 = vmatprep.subr.bf16.mxu0 0
      %1278 = vmatpush1.bf16.msra.mxu0 %v1252
      %1279 = vmatprep.subr.bf16.mxu0 0
      %1280 = vmatpush1.bf16.msra.mxu0 %v1251
      %1281 = vmatprep.subr.bf16.mxu0 0
      %1282 = vmatpush1.bf16.msra.mxu0 %v1250
      %1283 = vmatprep.subr.bf16.mxu0 0
      %1284 = vmatpush1.bf16.msra.mxu0 %v1249
      %1285 = vmatprep.subr.bf16.mxu0 0
      %1286 = vmatpush1.bf16.msra.mxu0 %v1248
      %1287 = vmatprep.subr.bf16.mxu0 0
      %1288 = vmatpush1.bf16.msra.mxu0 %v1247
      %1289 = vmatprep.subr.bf16.mxu0 0
      %1290 = vmatpush1.bf16.msra.mxu0 %v1246
      %1291 = vmatprep.subr.bf16.mxu0 0
      %1292 = vmatpush1.bf16.msra.mxu0 %v1245
      %1293 = vmatprep.subr.bf16.mxu0 0
      %1294 = vmatpush2.bf16.msra.mxu0 %v1260
      %1295 = vmatprep.subr.bf16.mxu0 0
      %1296 = vmatpush2.bf16.msra.mxu0 %v1259
      %1297 = vmatprep.subr.bf16.mxu0 0
      %1298 = vmatpush2.bf16.msra.mxu0 %v1258
      %1299 = vmatprep.subr.bf16.mxu0 0
      %1300 = vmatpush2.bf16.msra.mxu0 %v1257
      %1301 = vmatprep.subr.bf16.mxu0 0
      %1302 = vmatpush2.bf16.msra.mxu0 %v1256
      %1303 = vmatprep.subr.bf16.mxu0 0
      %1304 = vmatpush2.bf16.msra.mxu0 %v1255
      %1305 = vmatprep.subr.bf16.mxu0 0
      %1306 = vmatpush2.bf16.msra.mxu0 %v1254
      %1307 = vmatprep.subr.bf16.mxu0 0
      %1308 = vmatpush2.bf16.msra.mxu0 %v1253
      %1309 = vmatprep.mubr.bf16.mxu0 %v1174
      %1310 = vmatmul.mubr.bf16.gmra.mxu0 %v1173
      %v1311 = vpop.f32.mrf.mxu0
      %v1312 = vadd.f32 %v1179, %v1311
      %v1313 = vpop.f32.mrf.mxu0
      %v1314 = vpop.f32.mrf.mxu0
      %v1315 = vadd.f32 %v1179, %v1314
      %v1316 = vpop.f32.mrf.mxu0
      %1317 = vdwg.mxu0
      %v1318 = vld [vmem:[%s11] sm:$0x1]
      %v1319 = vld [vmem:[%s12] sm:$0x1]
      %v1321 = vlaneseq
      %v1322 = vshrl.u32 %v1321, 7
      %v1323 = vsub.s32 0, %v1322
      %v1324 = vrot.slane %v1319, %v1323
      %v1327 = vsel %vm727, %v1318, 0
      %1329 = vmatprep.subr.bf16.mxu0 0
      %1330 = vmatpush1.bf16.msra.mxu0 0
      %1331 = vmatprep.subr.bf16.mxu0 0
      %1332 = vmatpush1.bf16.msra.mxu0 0
      %1333 = vmatprep.subr.bf16.mxu0 0
      %1334 = vmatpush1.bf16.msra.mxu0 0
      %1335 = vmatprep.subr.bf16.mxu0 0
      %1336 = vmatpush1.bf16.msra.mxu0 0
      %1337 = vmatprep.subr.bf16.mxu0 0
      %1338 = vmatpush1.bf16.msra.mxu0 0
      %1339 = vmatprep.subr.bf16.mxu0 0
      %1340 = vmatpush1.bf16.msra.mxu0 0
      %1341 = vmatprep.subr.bf16.mxu0 0
      %1342 = vmatpush1.bf16.msra.mxu0 0
      %1343 = vmatprep.subr.bf16.mxu0 0
      %1344 = vmatpush1.bf16.msra.mxu0 %v1327
      %1345 = vmatprep.subr.bf16.mxu0 0
      %1346 = vmatpush2.bf16.msra.mxu0 0
      %1347 = vmatprep.subr.bf16.mxu0 0
      %1348 = vmatpush2.bf16.msra.mxu0 0
      %1349 = vmatprep.subr.bf16.mxu0 0
      %1350 = vmatpush2.bf16.msra.mxu0 0
      %1351 = vmatprep.subr.bf16.mxu0 0
      %1352 = vmatpush2.bf16.msra.mxu0 0
      %1353 = vmatprep.subr.bf16.mxu0 0
      %1354 = vmatpush2.bf16.msra.mxu0 0
      %1355 = vmatprep.subr.bf16.mxu0 0
      %1356 = vmatpush2.bf16.msra.mxu0 0
      %1357 = vmatprep.subr.bf16.mxu0 0
      %1358 = vmatpush2.bf16.msra.mxu0 0
      %1359 = vmatprep.subr.bf16.mxu0 0
      %1360 = vmatpush2.bf16.msra.mxu0 0
      %1361 = vmatprep.mubr.bf16.mxu0 0
      %1362 = vmatmul.mubr.bf16.gmra.mxu0 %v725
      %v1363 = vpop.f32.mrf.mxu0
      %v1364 = vadd.f32 %v1324, %v1363
      %v1365 = vpop.f32.mrf.mxu0
      %v1366 = vpop.f32.mrf.mxu0
      %v1367 = vadd.f32 %v1324, %v1366
      %v1368 = vpop.f32.mrf.mxu0
      %1369 = vdwg.mxu0
      %v1370 = vmax.f32 %v1364, 0.0
      %v1371 = vmax.f32 %v1367, 0.0
      %v1372 = vld [vmem:[%s13] sm:$0xf]
      %v1373 = vld [vmem:[%s13 + $0x4] sm:$0xf]
      %v1374 = vld [vmem:[%s13 + $0x8] sm:$0xf]
      %v1375 = vld [vmem:[%s13 + $0xc] sm:$0xf]
      %v1376 = vld [vmem:[%s13 + $0x10] sm:$0xf]
      %v1377 = vld [vmem:[%s13 + $0x14] sm:$0xf]
      %v1378 = vld [vmem:[%s13 + $0x18] sm:$0xf]
      %v1379 = vld [vmem:[%s13 + $0x1c] sm:$0xf]
      %v1380 = vld [vmem:[%s14] sm:$0x1]
      %v1381 = vpack.c.bf16 %v1371, %v1370
      %v1383 = vlaneseq
      %v1384 = vshrl.u32 %v1383, 7
      %v1385 = vsub.s32 0, %v1384
      %v1386 = vrot.slane %v1380, %v1385
      %v1396 = vunpack.c.l.b16 %v1372
      %v1397 = vunpack.c.l.b16 %v1373
      %v1398 = vunpack.c.l.b16 %v1374
      %v1399 = vunpack.c.l.b16 %v1375
      %v1400 = vunpack.c.l.b16 %v1376
      %v1401 = vunpack.c.l.b16 %v1377
      %v1402 = vunpack.c.l.b16 %v1378
      %v1403 = vunpack.c.l.b16 %v1379
      %v1404 = vpack.c.b16 %v1397, %v1396
      %v1405 = vpack.c.b16 %v1399, %v1398
      %v1406 = vpack.c.b16 %v1401, %v1400
      %v1407 = vpack.c.b16 %v1403, %v1402
      %v1413 = vsel %vm937, %v1381, 0
      %1415 = vmatprep.subr.bf16.mxu0 0
      %1416 = vmatpush1.bf16.msra.mxu0 0
      %1417 = vmatprep.subr.bf16.mxu0 0
      %1418 = vmatpush1.bf16.msra.mxu0 0
      %1419 = vmatprep.subr.bf16.mxu0 0
      %1420 = vmatpush1.bf16.msra.mxu0 0
      %1421 = vmatprep.subr.bf16.mxu0 0
      %1422 = vmatpush1.bf16.msra.mxu0 0
      %1423 = vmatprep.subr.bf16.mxu0 0
      %1424 = vmatpush1.bf16.msra.mxu0 %v1407
      %1425 = vmatprep.subr.bf16.mxu0 0
      %1426 = vmatpush1.bf16.msra.mxu0 %v1406
      %1427 = vmatprep.subr.bf16.mxu0 0
      %1428 = vmatpush1.bf16.msra.mxu0 %v1405
      %1429 = vmatprep.subr.bf16.mxu0 0
      %1430 = vmatpush1.bf16.msra.mxu0 %v1404
      %1431 = vmatprep.subr.bf16.mxu0 0
      %1432 = vmatpush2.bf16.msra.mxu0 0
      %1433 = vmatprep.subr.bf16.mxu0 0
      %1434 = vmatpush2.bf16.msra.mxu0 0
      %1435 = vmatprep.subr.bf16.mxu0 0
      %1436 = vmatpush2.bf16.msra.mxu0 0
      %1437 = vmatprep.subr.bf16.mxu0 0
      %1438 = vmatpush2.bf16.msra.mxu0 0
      %1439 = vmatprep.subr.bf16.mxu0 0
      %1440 = vmatpush2.bf16.msra.mxu0 0
      %1441 = vmatprep.subr.bf16.mxu0 0
      %1442 = vmatpush2.bf16.msra.mxu0 0
      %1443 = vmatprep.subr.bf16.mxu0 0
      %1444 = vmatpush2.bf16.msra.mxu0 0
      %1445 = vmatprep.subr.bf16.mxu0 0
      %1446 = vmatpush2.bf16.msra.mxu0 0
      %1447 = vmatprep.mubr.bf16.mxu0 0
      %1448 = vmatmul.mubr.bf16.gmra.mxu0 %v1413
      %v1449 = vpop.f32.mrf.mxu0
      %v1450 = vadd.f32 %v1386, %v1449
      %v1451 = vpop.f32.mrf.mxu0
      %v1452 = vpop.f32.mrf.mxu0
      %v1453 = vadd.f32 %v1386, %v1452
      %v1454 = vpop.f32.mrf.mxu0
      %1455 = vdwg.mxu0
      %v1456 = vmax.f32 %v1450, 0.0
      %v1457 = vmax.f32 %v1453, 0.0
      %v1458 = vld [vmem:[%s15] sm:$0xff]
      %v1459 = vld [vmem:[%s15 + $0x8] sm:$0xff]
      %v1460 = vld [vmem:[%s15 + $0x10] sm:$0xff]
      %v1461 = vld [vmem:[%s15 + $0x18] sm:$0xff]
      %v1462 = vld [vmem:[%s15 + $0x20] sm:$0xff]
      %v1463 = vld [vmem:[%s15 + $0x28] sm:$0xff]
      %v1464 = vld [vmem:[%s15 + $0x30] sm:$0xff]
      %v1465 = vld [vmem:[%s15 + $0x38] sm:$0xff]
      %v1466 = vld [vmem:[%s15 + $0x40] sm:$0xff]
      %v1467 = vld [vmem:[%s15 + $0x48] sm:$0xff]
      %v1468 = vld [vmem:[%s15 + $0x50] sm:$0xff]
      %v1469 = vld [vmem:[%s15 + $0x58] sm:$0xff]
      %v1470 = vld [vmem:[%s15 + $0x60] sm:$0xff]
      %v1471 = vld [vmem:[%s15 + $0x68] sm:$0xff]
      %v1472 = vld [vmem:[%s15 + $0x70] sm:$0xff]
      %v1473 = vld [vmem:[%s15 + $0x78] sm:$0xff]
      %v1474 = vld [vmem:[%s16] sm:$0x3]
      %v1475 = vpack.c.bf16 %v1457, %v1456
      %v1477 = vlaneseq
      %v1478 = vshrl.u32 %v1477, 7
      %v1479 = vsub.s32 0, %v1478
      %v1480 = vrot.slane %v1474, %v1479
      %v1481 = vlaneseq
      %v1482 = vshrl.u32 %v1481, 7
      %v1483 = vsub.s32 1, %v1482
      %v1484 = vrot.slane %v1474, %v1483
      %v1503 = vunpack.c.l.b16 %v1458
      %v1504 = vunpack.c.h.b16 %v1458
      %v1505 = vunpack.c.l.b16 %v1459
      %v1506 = vunpack.c.h.b16 %v1459
      %v1507 = vunpack.c.l.b16 %v1460
      %v1508 = vunpack.c.h.b16 %v1460
      %v1509 = vunpack.c.l.b16 %v1461
      %v1510 = vunpack.c.h.b16 %v1461
      %v1511 = vunpack.c.l.b16 %v1462
      %v1512 = vunpack.c.h.b16 %v1462
      %v1513 = vunpack.c.l.b16 %v1463
      %v1514 = vunpack.c.h.b16 %v1463
      %v1515 = vunpack.c.l.b16 %v1464
      %v1516 = vunpack.c.h.b16 %v1464
      %v1517 = vunpack.c.l.b16 %v1465
      %v1518 = vunpack.c.h.b16 %v1465
      %v1519 = vunpack.c.l.b16 %v1466
      %v1520 = vunpack.c.h.b16 %v1466
      %v1521 = vunpack.c.l.b16 %v1467
      %v1522 = vunpack.c.h.b16 %v1467
      %v1523 = vunpack.c.l.b16 %v1468
      %v1524 = vunpack.c.h.b16 %v1468
      %v1525 = vunpack.c.l.b16 %v1469
      %v1526 = vunpack.c.h.b16 %v1469
      %v1527 = vunpack.c.l.b16 %v1470
      %v1528 = vunpack.c.h.b16 %v1470
      %v1529 = vunpack.c.l.b16 %v1471
      %v1530 = vunpack.c.h.b16 %v1471
      %v1531 = vunpack.c.l.b16 %v1472
      %v1532 = vunpack.c.h.b16 %v1472
      %v1533 = vunpack.c.l.b16 %v1473
      %v1534 = vunpack.c.h.b16 %v1473
      %v1535 = vpack.c.b16 %v1505, %v1503
      %v1536 = vpack.c.b16 %v1506, %v1504
      %v1537 = vpack.c.b16 %v1509, %v1507
      %v1538 = vpack.c.b16 %v1510, %v1508
      %v1539 = vpack.c.b16 %v1513, %v1511
      %v1540 = vpack.c.b16 %v1514, %v1512
      %v1541 = vpack.c.b16 %v1517, %v1515
      %v1542 = vpack.c.b16 %v1518, %v1516
      %v1543 = vpack.c.b16 %v1521, %v1519
      %v1544 = vpack.c.b16 %v1522, %v1520
      %v1545 = vpack.c.b16 %v1525, %v1523
      %v1546 = vpack.c.b16 %v1526, %v1524
      %v1547 = vpack.c.b16 %v1529, %v1527
      %v1548 = vpack.c.b16 %v1530, %v1528
      %v1549 = vpack.c.b16 %v1533, %v1531
      %v1550 = vpack.c.b16 %v1534, %v1532
      %1567 = vmatprep.subr.bf16.mxu0 %v1550
      %1568 = vmatpush1.bf16.msra.mxu0 %v1549
      %1569 = vmatprep.subr.bf16.mxu0 %v1548
      %1570 = vmatpush1.bf16.msra.mxu0 %v1547
      %1571 = vmatprep.subr.bf16.mxu0 %v1546
      %1572 = vmatpush1.bf16.msra.mxu0 %v1545
      %1573 = vmatprep.subr.bf16.mxu0 %v1544
      %1574 = vmatpush1.bf16.msra.mxu0 %v1543
      %1575 = vmatprep.subr.bf16.mxu0 %v1542
      %1576 = vmatpush1.bf16.msra.mxu0 %v1541
      %1577 = vmatprep.subr.bf16.mxu0 %v1540
      %1578 = vmatpush1.bf16.msra.mxu0 %v1539
      %1579 = vmatprep.subr.bf16.mxu0 %v1538
      %1580 = vmatpush1.bf16.msra.mxu0 %v1537
      %1581 = vmatprep.subr.bf16.mxu0 %v1536
      %1582 = vmatpush1.bf16.msra.mxu0 %v1535
      %1583 = vmatprep.subr.bf16.mxu0 0
      %1584 = vmatpush2.bf16.msra.mxu0 0
      %1585 = vmatprep.subr.bf16.mxu0 0
      %1586 = vmatpush2.bf16.msra.mxu0 0
      %1587 = vmatprep.subr.bf16.mxu0 0
      %1588 = vmatpush2.bf16.msra.mxu0 0
      %1589 = vmatprep.subr.bf16.mxu0 0
      %1590 = vmatpush2.bf16.msra.mxu0 0
      %1591 = vmatprep.subr.bf16.mxu0 0
      %1592 = vmatpush2.bf16.msra.mxu0 0
      %1593 = vmatprep.subr.bf16.mxu0 0
      %1594 = vmatpush2.bf16.msra.mxu0 0
      %1595 = vmatprep.subr.bf16.mxu0 0
      %1596 = vmatpush2.bf16.msra.mxu0 0
      %1597 = vmatprep.subr.bf16.mxu0 0
      %1598 = vmatpush2.bf16.msra.mxu0 0
      %1599 = vmatprep.mubr.bf16.mxu0 0
      %1600 = vmatmul.mubr.bf16.gmra.mxu0 %v1475
      %v1601 = vpop.f32.mrf.mxu0
      %v1602 = vadd.f32 %v1480, %v1601
      %v1603 = vpop.f32.mrf.mxu0
      %v1604 = vadd.f32 %v1484, %v1603
      %v1605 = vpop.f32.mrf.mxu0
      %v1606 = vadd.f32 %v1480, %v1605
      %v1607 = vpop.f32.mrf.mxu0
      %v1608 = vadd.f32 %v1484, %v1607
      %1609 = vdwg.mxu0
      %v1610 = vmax.f32 %v1602, 0.0
      %v1611 = vmax.f32 %v1604, 0.0
      %v1612 = vmax.f32 %v1606, 0.0
      %v1613 = vmax.f32 %v1608, 0.0
      %v1614 = vld [vmem:[%s17] sm:$0xf]
      %v1615 = vld [vmem:[%s17 + $0x4] sm:$0xf]
      %v1616 = vld [vmem:[%s17 + $0x8] sm:$0xf]
      %v1617 = vld [vmem:[%s17 + $0xc] sm:$0xf]
      %v1618 = vld [vmem:[%s17 + $0x10] sm:$0xf]
      %v1619 = vld [vmem:[%s17 + $0x14] sm:$0xf]
      %v1620 = vld [vmem:[%s17 + $0x18] sm:$0xf]
      %v1621 = vld [vmem:[%s17 + $0x1c] sm:$0xf]
      %v1622 = vld [vmem:[%s17 + $0x20] sm:$0xf]
      %v1623 = vld [vmem:[%s17 + $0x24] sm:$0xf]
      %v1624 = vld [vmem:[%s17 + $0x28] sm:$0xf]
      %v1625 = vld [vmem:[%s17 + $0x2c] sm:$0xf]
      %v1626 = vld [vmem:[%s17 + $0x30] sm:$0xf]
      %v1627 = vld [vmem:[%s17 + $0x34] sm:$0xf]
      %v1628 = vld [vmem:[%s17 + $0x38] sm:$0xf]
      %v1629 = vld [vmem:[%s17 + $0x3c] sm:$0xf]
      %v1630 = vld [vmem:[%s17 + $0x40] sm:$0xf]
      %v1631 = vld [vmem:[%s17 + $0x44] sm:$0xf]
      %v1632 = vld [vmem:[%s17 + $0x48] sm:$0xf]
      %v1633 = vld [vmem:[%s17 + $0x4c] sm:$0xf]
      %v1634 = vld [vmem:[%s17 + $0x50] sm:$0xf]
      %v1635 = vld [vmem:[%s17 + $0x54] sm:$0xf]
      %v1636 = vld [vmem:[%s17 + $0x58] sm:$0xf]
      %v1637 = vld [vmem:[%s17 + $0x5c] sm:$0xf]
      %v1638 = vld [vmem:[%s17 + $0x60] sm:$0xf]
      %v1639 = vld [vmem:[%s17 + $0x64] sm:$0xf]
      %v1640 = vld [vmem:[%s17 + $0x68] sm:$0xf]
      %v1641 = vld [vmem:[%s17 + $0x6c] sm:$0xf]
      %v1642 = vld [vmem:[%s17 + $0x70] sm:$0xf]
      %v1643 = vld [vmem:[%s17 + $0x74] sm:$0xf]
      %v1644 = vld [vmem:[%s17 + $0x78] sm:$0xf]
      %v1645 = vld [vmem:[%s17 + $0x7c] sm:$0xf]
      %v1646 = vld [vmem:[%s18] sm:$0x1]
      %v1647 = vpack.c.bf16 %v1612, %v1610
      %v1648 = vpack.c.bf16 %v1613, %v1611
      %v1650 = vlaneseq
      %v1651 = vshrl.u32 %v1650, 7
      %v1652 = vsub.s32 0, %v1651
      %v1653 = vrot.slane %v1646, %v1652
      %v1687 = vunpack.c.l.b16 %v1614
      %v1688 = vunpack.c.l.b16 %v1615
      %v1689 = vunpack.c.l.b16 %v1616
      %v1690 = vunpack.c.l.b16 %v1617
      %v1691 = vunpack.c.l.b16 %v1618
      %v1692 = vunpack.c.l.b16 %v1619
      %v1693 = vunpack.c.l.b16 %v1620
      %v1694 = vunpack.c.l.b16 %v1621
      %v1695 = vunpack.c.l.b16 %v1622
      %v1696 = vunpack.c.l.b16 %v1623
      %v1697 = vunpack.c.l.b16 %v1624
      %v1698 = vunpack.c.l.b16 %v1625
      %v1699 = vunpack.c.l.b16 %v1626
      %v1700 = vunpack.c.l.b16 %v1627
      %v1701 = vunpack.c.l.b16 %v1628
      %v1702 = vunpack.c.l.b16 %v1629
      %v1703 = vunpack.c.l.b16 %v1630
      %v1704 = vunpack.c.l.b16 %v1631
      %v1705 = vunpack.c.l.b16 %v1632
      %v1706 = vunpack.c.l.b16 %v1633
      %v1707 = vunpack.c.l.b16 %v1634
      %v1708 = vunpack.c.l.b16 %v1635
      %v1709 = vunpack.c.l.b16 %v1636
      %v1710 = vunpack.c.l.b16 %v1637
      %v1711 = vunpack.c.l.b16 %v1638
      %v1712 = vunpack.c.l.b16 %v1639
      %v1713 = vunpack.c.l.b16 %v1640
      %v1714 = vunpack.c.l.b16 %v1641
      %v1715 = vunpack.c.l.b16 %v1642
      %v1716 = vunpack.c.l.b16 %v1643
      %v1717 = vunpack.c.l.b16 %v1644
      %v1718 = vunpack.c.l.b16 %v1645
      %v1719 = vpack.c.b16 %v1688, %v1687
      %v1720 = vpack.c.b16 %v1690, %v1689
      %v1721 = vpack.c.b16 %v1692, %v1691
      %v1722 = vpack.c.b16 %v1694, %v1693
      %v1723 = vpack.c.b16 %v1696, %v1695
      %v1724 = vpack.c.b16 %v1698, %v1697
      %v1725 = vpack.c.b16 %v1700, %v1699
      %v1726 = vpack.c.b16 %v1702, %v1701
      %v1727 = vpack.c.b16 %v1704, %v1703
      %v1728 = vpack.c.b16 %v1706, %v1705
      %v1729 = vpack.c.b16 %v1708, %v1707
      %v1730 = vpack.c.b16 %v1710, %v1709
      %v1731 = vpack.c.b16 %v1712, %v1711
      %v1732 = vpack.c.b16 %v1714, %v1713
      %v1733 = vpack.c.b16 %v1716, %v1715
      %v1734 = vpack.c.b16 %v1718, %v1717
      %1751 = vmatprep.subr.bf16.mxu0 0
      %1752 = vmatpush1.bf16.msra.mxu0 %v1726
      %1753 = vmatprep.subr.bf16.mxu0 0
      %1754 = vmatpush1.bf16.msra.mxu0 %v1725
      %1755 = vmatprep.subr.bf16.mxu0 0
      %1756 = vmatpush1.bf16.msra.mxu0 %v1724
      %1757 = vmatprep.subr.bf16.mxu0 0
      %1758 = vmatpush1.bf16.msra.mxu0 %v1723
      %1759 = vmatprep.subr.bf16.mxu0 0
      %1760 = vmatpush1.bf16.msra.mxu0 %v1722
      %1761 = vmatprep.subr.bf16.mxu0 0
      %1762 = vmatpush1.bf16.msra.mxu0 %v1721
      %1763 = vmatprep.subr.bf16.mxu0 0
      %1764 = vmatpush1.bf16.msra.mxu0 %v1720
      %1765 = vmatprep.subr.bf16.mxu0 0
      %1766 = vmatpush1.bf16.msra.mxu0 %v1719
      %1767 = vmatprep.subr.bf16.mxu0 0
      %1768 = vmatpush2.bf16.msra.mxu0 %v1734
      %1769 = vmatprep.subr.bf16.mxu0 0
      %1770 = vmatpush2.bf16.msra.mxu0 %v1733
      %1771 = vmatprep.subr.bf16.mxu0 0
      %1772 = vmatpush2.bf16.msra.mxu0 %v1732
      %1773 = vmatprep.subr.bf16.mxu0 0
      %1774 = vmatpush2.bf16.msra.mxu0 %v1731
      %1775 = vmatprep.subr.bf16.mxu0 0
      %1776 = vmatpush2.bf16.msra.mxu0 %v1730
      %1777 = vmatprep.subr.bf16.mxu0 0
      %1778 = vmatpush2.bf16.msra.mxu0 %v1729
      %1779 = vmatprep.subr.bf16.mxu0 0
      %1780 = vmatpush2.bf16.msra.mxu0 %v1728
      %1781 = vmatprep.subr.bf16.mxu0 0
      %1782 = vmatpush2.bf16.msra.mxu0 %v1727
      %1783 = vmatprep.mubr.bf16.mxu0 %v1648
      %1784 = vmatmul.mubr.bf16.gmra.mxu0 %v1647
      %v1785 = vpop.f32.mrf.mxu0
      %v1786 = vadd.f32 %v1653, %v1785
      %v1787 = vpop.f32.mrf.mxu0
      %v1788 = vpop.f32.mrf.mxu0
      %v1789 = vadd.f32 %v1653, %v1788
      %v1790 = vpop.f32.mrf.mxu0
      %1791 = vdwg.mxu0
      %v1792 = vmul.f32 %v1786, %v766
      %v1793 = vmul.f32 %v1789, %v769
      %v1794 = vsel %vm798, %v1792, 0.0
      %v1795 = vsel %vm798, %v1793, 0.0
      %v1796 = vadd.f32 %v1794, %v1795
      %v1797 = vrot.slane %v1796, 4
      %v1798 = vadd.f32 %v1796, %v1797
      %v1799 = vrot.slane %v1798, 2
      %v1800 = vadd.f32 %v1798, %v1799
      %v1801 = vrot.slane %v1800, 1
      %v1802 = vadd.f32 %v1800, %v1801
      %v1803 = vsel %vm798, %v1802, 0.0
      %1804 = vadd.xlane.f32.xlu0 %v1803
      %v1805 = vpop.xlane.xlu0 %1804
      %v1806 = vmul.f32 %v1805, 0.0625
      %v1807 = vmul.f32 %v1312, %v1806
      %v1808 = vmul.f32 %v1315, %v1806
      %v1809 = vadd.f32 %v1807, 0.0
      %v1810 = vadd.f32 %v1808, 0.0
      %1813 = vrot.lane.b32.xlu0 %v766, 32
      %v1814 = vpop.permute.xlu0 %1813
      %1815 = vrot.lane.b32.xlu0 %v769, 32
      %v1816 = vpop.permute.xlu0 %1815
      %v1819 = vmul.f32 %v1786, %v1814
      %v1820 = vmul.f32 %v1789, %v1816
      %vm1821 = vcmask 523520
      %v1822 = vsel %vm1821, %v1819, 0.0
      %v1823 = vsel %vm1821, %v1820, 0.0
      %v1824 = vadd.f32 %v1822, %v1823
      %v1825 = vrot.slane %v1824, 4
      %v1826 = vadd.f32 %v1824, %v1825
      %v1827 = vrot.slane %v1826, 2
      %v1828 = vadd.f32 %v1826, %v1827
      %v1829 = vrot.slane %v1828, 1
      %v1830 = vadd.f32 %v1828, %v1829
      %1832 = vrot.lane.b32.xlu0 %v1830, 96
      %v1833 = vpop.permute.xlu0 %1832
      %v1835 = vsel %vm798, %v1833, 0.0
      %1836 = vadd.xlane.f32.xlu0 %v1835
      %v1837 = vpop.xlane.xlu0 %1836
      %v1838 = vmul.f32 %v1837, 0.0625
      %v1839 = vmul.f32 %v1312, %v1838
      %v1840 = vmul.f32 %v1315, %v1838
      %1843 = vrot.lane.b32.xlu0 %v1839, 96
      %v1844 = vpop.permute.xlu0 %1843
      %1845 = vrot.lane.b32.xlu0 %v1840, 96
      %v1846 = vpop.permute.xlu0 %1845
      %v1849 = vadd.f32 %v1809, %v1844
      %v1850 = vadd.f32 %v1810, %v1846
      %1851 = vrot.lane.b32.xlu0 %v766, 64
      %v1852 = vpop.permute.xlu0 %1851
      %1853 = vrot.lane.b32.xlu0 %v769, 64
      %v1854 = vpop.permute.xlu0 %1853
      %v1857 = vmul.f32 %v1786, %v1852
      %v1858 = vmul.f32 %v1789, %v1854
      %vm1859 = vcmask 785920
      %v1860 = vsel %vm1859, %v1857, 0.0
      %v1861 = vsel %vm1859, %v1858, 0.0
      %v1862 = vadd.f32 %v1860, %v1861
      %v1863 = vrot.slane %v1862, 4
      %v1864 = vadd.f32 %v1862, %v1863
      %v1865 = vrot.slane %v1864, 2
      %v1866 = vadd.f32 %v1864, %v1865
      %v1867 = vrot.slane %v1866, 1
      %v1868 = vadd.f32 %v1866, %v1867
      %1870 = vrot.lane.b32.xlu0 %v1868, 64
      %v1871 = vpop.permute.xlu0 %1870
      %v1873 = vsel %vm798, %v1871, 0.0
      %1874 = vadd.xlane.f32.xlu0 %v1873
      %v1875 = vpop.xlane.xlu0 %1874
      %v1876 = vmul.f32 %v1875, 0.0625
      %v1877 = vmul.f32 %v1312, %v1876
      %v1878 = vmul.f32 %v1315, %v1876
      %1881 = vrot.lane.b32.xlu0 %v1877, 64
      %v1882 = vpop.permute.xlu0 %1881
      %1883 = vrot.lane.b32.xlu0 %v1878, 64
      %v1884 = vpop.permute.xlu0 %1883
      %v1887 = vadd.f32 %v1849, %v1882
      %v1888 = vadd.f32 %v1850, %v1884
      %1889 = vrot.lane.b32.xlu0 %v766, 96
      %v1890 = vpop.permute.xlu0 %1889
      %1891 = vrot.lane.b32.xlu0 %v769, 96
      %v1892 = vpop.permute.xlu0 %1891
      %v1895 = vmul.f32 %v1786, %v1890
      %v1896 = vmul.f32 %v1789, %v1892
      %vm1897 = vcmask 1048320
      %v1898 = vsel %vm1897, %v1895, 0.0
      %v1899 = vsel %vm1897, %v1896, 0.0
      %v1900 = vadd.f32 %v1898, %v1899
      %v1901 = vrot.slane %v1900, 4
      %v1902 = vadd.f32 %v1900, %v1901
      %v1903 = vrot.slane %v1902, 2
      %v1904 = vadd.f32 %v1902, %v1903
      %v1905 = vrot.slane %v1904, 1
      %v1906 = vadd.f32 %v1904, %v1905
      %1908 = vrot.lane.b32.xlu0 %v1906, 32
      %v1909 = vpop.permute.xlu0 %1908
      %v1911 = vsel %vm798, %v1909, 0.0
      %1912 = vadd.xlane.f32.xlu0 %v1911
      %v1913 = vpop.xlane.xlu0 %1912
      %v1914 = vmul.f32 %v1913, 0.0625
      %v1915 = vmul.f32 %v1312, %v1914
      %v1916 = vmul.f32 %v1315, %v1914
      %1919 = vrot.lane.b32.xlu0 %v1915, 32
      %v1920 = vpop.permute.xlu0 %1919
      %1921 = vrot.lane.b32.xlu0 %v1916, 32
      %v1922 = vpop.permute.xlu0 %1921
      %v1925 = vadd.f32 %v1887, %v1920
      %v1926 = vadd.f32 %v1888, %v1922
      %v1927 = vadd.f32 %v837, %v1925
      %v1928 = vadd.f32 %v840, %v1926
      %v1929 = vsel %vm798, %v1927, 0.0
      %1930 = vadd.xlane.f32.xlu0 %v1929
      %v1931 = vpop.xlane.xlu0 %1930
      %v1932 = vsel %vm798, %v1928, 0.0
      %1933 = vadd.xlane.f32.xlu0 %v1932
      %v1934 = vpop.xlane.xlu0 %1933
      %v1935 = vrcp.pop 32.0
      %v1936 = vmul.f32 %v1931, %v1935
      %v1937 = vmul.f32 %v1934, %v1935
      %v1938 = vsub.f32 %v1927, %v1936
      %v1939 = vsub.f32 %v1928, %v1937
      %v1940 = vmul.f32 %v1938, %v1938
      %v1941 = vmul.f32 %v1939, %v1939
      %v1942 = vsel %vm798, %v1940, 0.0
      %1943 = vadd.xlane.f32.xlu0 %v1942
      %v1944 = vpop.xlane.xlu0 %1943
      %v1945 = vsel %vm798, %v1941, 0.0
      %1946 = vadd.xlane.f32.xlu0 %v1945
      %v1947 = vpop.xlane.xlu0 %1946
      %v1948 = vmul.f32 %v1944, %v1935
      %v1949 = vmul.f32 %v1947, %v1935
      %v1950 = vadd.f32 %v1948, 1e-05
      %v1951 = vadd.f32 %v1949, 1e-05
      %v1952 = vrsqrt.pop %v1950
      %v1953 = vrsqrt.pop %v1951
      %v1954 = vmul.f32 %v1938, %v1952
      %v1955 = vmul.f32 %v1939, %v1953
      %v1957 = vlaneseq
      %v1958 = vshrl.u32 %v1957, 7
      %v1959 = vsub.s32 0, %v1958
      %v1960 = vrot.slane %v777, %v1959
      %v1962 = vmul.f32 %v1954, %v1960
      %v1963 = vmul.f32 %v1955, %v1960
      %v1965 = vlaneseq
      %v1966 = vshrl.u32 %v1965, 7
      %v1967 = vsub.s32 0, %v1966
      %v1968 = vrot.slane %v778, %v1967
      %v1970 = vadd.f32 %v1962, %v1968
      %v1971 = vadd.f32 %v1963, %v1968
      %v1972 = vmax.f32 %v1970, 0.0
      %v1973 = vmax.f32 %v1971, 0.0
      %1974 = vst.msk [vmem:[%s710] sm:$0xff] %vm798, %v1972
      %1975 = vst.msk [vmem:[%s710 + $0x8] sm:$0xff] %vm798, %v1973
      %p1976 = scmp.lt.s32.totalorder %s34, 1
      %s1977 = scalar_select %p1976, %s34, 1
      %s1978 = smul.addr %s1977, 2
      %s1979 = smul.addr %s1978, 8
      %s1980 = scalar_lea.vmem %s23, %s1979
      // Predicated region
      $region113: #{lno1d_forward.4} parent=111 // pred_check
        %p1981 = pneg %p540
      $region114: #{lno1d_forward.4} parent=111 // pred_check_branch
        %1983 = sbr.rel (%p1981) target = $region116
      $region115: #{lno1d_forward.4} parent=111 // pred_region
        _
      $region116: #{lno1d_forward.4} parent=111 // pred_fallthru
        _
    $region112: #{lno1d_forward.4} parent=5 // pred_fallthru
      _
    %p1984 = scmp.le.s32.totalorder 2, %s29
    // Predicated region
    $region117: #{lno1d_forward.4} parent=5 // pred_check
      %p1985 = pneg %p1984
    $region118: #{lno1d_forward.4} parent=5 // pred_check_branch
      %1987 = sbr.rel (%p1985) target = $region120
    $region119: #{lno1d_forward.4} parent=5 // pred_region
      %s1988 = ssub.s32 %s29, 2
      // Predicated region
      $region121: #{lno1d_forward.4} parent=119 // pred_check
        %p1989 = pneg %p546
      $region122: #{lno1d_forward.4} parent=119 // pred_check_branch
        %1991 = sbr.rel (%p1989) target = $region124
      $region123: #{lno1d_forward.4} parent=119 // pred_region
        %p1992 = scmp.lt.s32.totalorder %s35, 1
        %s1993 = scalar_select %p1992, %s35, 1
        %s1994 = smul.addr %s1993, 2
        %s1995 = smul.addr %s1994, 8
        %s1996 = scalar_lea.vmem %s23, %s1995
      $region124: #{lno1d_forward.4} parent=119 // pred_fallthru
        _
    $region120: #{lno1d_forward.4} parent=5 // pred_fallthru
      _
  $region6: #{lno1d_forward.4} parent=0 // loop_footer
    %s33 = sadd.s32 1, %s29
  $region7: #{lno1d_forward.4} parent=0 // loop_footer_branch
    %28 = sbr.rel target = $region3
  $region8: #{lno1d_forward.4} parent=0 // loop_exit
    _

// kernel: lno1d_forward.5
$region0: #{lno1d_forward.5}
  #allocation0 [shape = 'u32[]', space=smem, size = 0x4, offset = 0x4, fixed_abs, tag = 'smem constant byte address 0x4 - core index']
  #allocation1 [shape = 'u32[144,128]{1,0:T(1,128)}', space=vmem, size = 0x12000, scoped, tag = 'internal scratch']
  %s0 = inlined_call_operand.vmem [shape: f32[2,16,2], index: 0, kind: input, shape index: {}]
  %s1 = inlined_call_operand.vmem [shape: f32[2,16,32], index: 1, kind: input, shape index: {}]
  %s2 = inlined_call_operand.vmem [shape: bf16[2,64], index: 2, kind: input, shape index: {}]
  %s3 = inlined_call_operand.vmem [shape: f32[1,64], index: 3, kind: input, shape index: {}]
  %s4 = inlined_call_operand.vmem [shape: bf16[64,128], index: 4, kind: input, shape index: {}]
  %s5 = inlined_call_operand.vmem [shape: f32[1,128], index: 5, kind: input, shape index: {}]
  %s6 = inlined_call_operand.vmem [shape: bf16[128,256], index: 6, kind: input, shape index: {}]
  %s7 = inlined_call_operand.vmem [shape: f32[1,256], index: 7, kind: input, shape index: {}]
  %s8 = inlined_call_operand.vmem [shape: bf16[256,128], index: 8, kind: input, shape index: {}]
  %s9 = inlined_call_operand.vmem [shape: f32[1,128], index: 9, kind: input, shape index: {}]
  %s10 = inlined_call_operand.vmem [shape: bf16[2,64], index: 10, kind: input, shape index: {}]
  %s11 = inlined_call_operand.vmem [shape: f32[1,64], index: 11, kind: input, shape index: {}]
  %s12 = inlined_call_operand.vmem [shape: bf16[64,128], index: 12, kind: input, shape index: {}]
  %s13 = inlined_call_operand.vmem [shape: f32[1,128], index: 13, kind: input, shape index: {}]
  %s14 = inlined_call_operand.vmem [shape: bf16[128,256], index: 14, kind: input, shape index: {}]
  %s15 = inlined_call_operand.vmem [shape: f32[1,256], index: 15, kind: input, shape index: {}]
  %s16 = inlined_call_operand.vmem [shape: bf16[256,128], index: 16, kind: input, shape index: {}]
  %s17 = inlined_call_operand.vmem [shape: f32[1,128], index: 17, kind: input, shape index: {}]
  %s18 = inlined_call_operand.vmem [shape: bf16[32,32], index: 18, kind: input, shape index: {}]
  %s19 = inlined_call_operand.vmem [shape: f32[1,32], index: 19, kind: input, shape index: {}]
  %s20 = inlined_call_operand.vmem [shape: f32[1,32], index: 20, kind: input, shape index: {}]
  %s21 = inlined_call_operand.vmem [shape: f32[1,32], index: 21, kind: input, shape index: {}]
  %s22 = inlined_call_operand.vmem [shape: f32[2,16,32], index: 22, kind: output, shape index: {}]
  %s23 = sld [smem:[#allocation0]]
  $region121: #{lno1d_forward.5} parent=0
    _
  %s25 = ssub.s32 1, %s23
  %s26 = scalar_select 0, %s25, %s23
  loop: start=0, step=1, limit=4
  $region2: #{lno1d_forward.5} parent=0 // loop_pre_header
    _
  $region3: #{lno1d_forward.5} parent=0 // loop_header
    %s28 = sphi 0, %s32
    %p29 = scmp.ge.s32.totalorder %s28, 4
    %s38 = sphi 0, %s40
    %s41 = sphi 0, %s38
    %s42 = sphi 0, %s41
    %s58 = sphi 0, %s42
    %s64 = sphi 0, %s66
    %s67 = sphi 0, %s64
    %s68 = sphi 0, %s67
    %s84 = sphi 0, %s68
    %s88 = sphi 0, %s88
    %s90 = sphi 0, %s88
    %s91 = sphi 0, %s90
    %s105 = sphi 0, %s91
    %s109 = sphi 0, %s109
    %s111 = sphi 0, %s109
    %s112 = sphi 0, %s111
    %s126 = sphi 0, %s112
    %s130 = sphi 0, %s130
    %s132 = sphi 0, %s130
    %s133 = sphi 0, %s132
    %s147 = sphi 0, %s133
    %s151 = sphi 0, %s151
    %s153 = sphi 0, %s151
    %s154 = sphi 0, %s153
    %s168 = sphi 0, %s154
    %s172 = sphi 0, %s172
    %s174 = sphi 0, %s172
    %s175 = sphi 0, %s174
    %s189 = sphi 0, %s175
    %s193 = sphi 0, %s193
    %s195 = sphi 0, %s193
    %s196 = sphi 0, %s195
    %s210 = sphi 0, %s196
    %s214 = sphi 0, %s214
    %s216 = sphi 0, %s214
    %s217 = sphi 0, %s216
    %s231 = sphi 0, %s217
    %s235 = sphi 0, %s235
    %s237 = sphi 0, %s235
    %s238 = sphi 0, %s237
    %s252 = sphi 0, %s238
    %s256 = sphi 0, %s256
    %s258 = sphi 0, %s256
    %s259 = sphi 0, %s258
    %s273 = sphi 0, %s259
    %s277 = sphi 0, %s277
    %s279 = sphi 0, %s277
    %s280 = sphi 0, %s279
    %s294 = sphi 0, %s280
    %s298 = sphi 0, %s298
    %s300 = sphi 0, %s298
    %s301 = sphi 0, %s300
    %s315 = sphi 0, %s301
    %s319 = sphi 0, %s319
    %s321 = sphi 0, %s319
    %s322 = sphi 0, %s321
    %s336 = sphi 0, %s322
    %s340 = sphi 0, %s340
    %s342 = sphi 0, %s340
    %s343 = sphi 0, %s342
    %s357 = sphi 0, %s343
    %s361 = sphi 0, %s361
    %s363 = sphi 0, %s361
    %s364 = sphi 0, %s363
    %s378 = sphi 0, %s364
    %s382 = sphi 0, %s382
    %s384 = sphi 0, %s382
    %s385 = sphi 0, %s384
    %s399 = sphi 0, %s385
    %s403 = sphi 0, %s403
    %s405 = sphi 0, %s403
    %s406 = sphi 0, %s405
    %s420 = sphi 0, %s406
    %s424 = sphi 0, %s424
    %s426 = sphi 0, %s424
    %s427 = sphi 0, %s426
    %s441 = sphi 0, %s427
    %s445 = sphi 0, %s445
    %s447 = sphi 0, %s445
    %s448 = sphi 0, %s447
    %s462 = sphi 0, %s448
    %s466 = sphi 0, %s466
    %s468 = sphi 0, %s466
    %s469 = sphi 0, %s468
    %s483 = sphi 0, %s469
    %s487 = sphi 0, %s487
    %s489 = sphi 0, %s487
    %s490 = sphi 0, %s489
    %s504 = sphi 0, %s490
    %s510 = sphi 0, %s512
    %s513 = sphi 0, %s510
    %s514 = sphi 0, %s513
    %s530 = sphi 0, %s514
  $region4: #{lno1d_forward.5} parent=0 // loop_header_branch
    %31 = sbr.rel (%p29) target = $region8
  $region5: #{lno1d_forward.5} parent=0 // loop_body
    %s33 = ssub.s32 %s28, 1
    %s34 = ssub.s32 %s28, 2
    %s35 = sadd.s32 %s28, 1
    %s36 = ssub.s32 %s28, %s35
    %p37 = scmp.eq.s32.totalorder %s36, 0
    %s39 = sadd.s32 %s38, 1
    %s40 = scalar_select %p37, %s38, %s39
    %p43 = pneg %p37
    %p44 = scmp.eq.s32.totalorder %s28, 1
    %p45 = por %p43, %p44
    %p46 = scmp.ne.s32.totalorder %s38, %s41
    %p47 = scmp.eq.s32.totalorder %s28, 0
    %p48 = por %p46, %p47
    %p49 = scmp.ne.s32.totalorder %s38, %s41
    %p50 = scmp.eq.s32.totalorder %s33, 1
    %p51 = por %p49, %p50
    %p52 = scmp.ne.s32.totalorder %s41, %s42
    %p53 = scmp.eq.s32.totalorder %s33, 0
    %p54 = por %p52, %p53
    %p55 = scmp.ne.s32.totalorder %s41, %s42
    %p56 = scmp.eq.s32.totalorder %s34, 1
    %p57 = por %p55, %p56
    %p59 = scmp.ne.s32.totalorder %s42, %s58
    %p60 = scmp.eq.s32.totalorder %s34, 0
    %p61 = por %p59, %p60
    %s62 = ssub.s32 %s28, %s35
    %p63 = scmp.eq.s32.totalorder %s62, 0
    %s65 = sadd.s32 %s64, 1
    %s66 = scalar_select %p63, %s64, %s65
    %p69 = pneg %p63
    %p70 = scmp.eq.s32.totalorder %s28, 1
    %p71 = por %p69, %p70
    %p72 = scmp.ne.s32.totalorder %s64, %s67
    %p73 = scmp.eq.s32.totalorder %s28, 0
    %p74 = por %p72, %p73
    %p75 = scmp.ne.s32.totalorder %s64, %s67
    %p76 = scmp.eq.s32.totalorder %s33, 1
    %p77 = por %p75, %p76
    %p78 = scmp.ne.s32.totalorder %s67, %s68
    %p79 = scmp.eq.s32.totalorder %s33, 0
    %p80 = por %p78, %p79
    %p81 = scmp.ne.s32.totalorder %s67, %s68
    %p82 = scmp.eq.s32.totalorder %s34, 1
    %p83 = por %p81, %p82
    %p85 = scmp.ne.s32.totalorder %s68, %s84
    %p86 = scmp.eq.s32.totalorder %s34, 0
    %p87 = por %p85, %p86
    %s89 = sadd.s32 %s88, 1
    %p92 = scmp.eq.s32.totalorder %s28, 1
    %p93 = scmp.ne.s32.totalorder %s88, %s90
    %p94 = scmp.eq.s32.totalorder %s28, 0
    %p95 = por %p93, %p94
    %p96 = scmp.ne.s32.totalorder %s88, %s90
    %p97 = scmp.eq.s32.totalorder %s33, 1
    %p98 = por %p96, %p97
    %p99 = scmp.ne.s32.totalorder %s90, %s91
    %p100 = scmp.eq.s32.totalorder %s33, 0
    %p101 = por %p99, %p100
    %p102 = scmp.ne.s32.totalorder %s90, %s91
    %p103 = scmp.eq.s32.totalorder %s34, 1
    %p104 = por %p102, %p103
    %p106 = scmp.ne.s32.totalorder %s91, %s105
    %p107 = scmp.eq.s32.totalorder %s34, 0
    %p108 = por %p106, %p107
    %s110 = sadd.s32 %s109, 1
    %p113 = scmp.eq.s32.totalorder %s28, 1
    %p114 = scmp.ne.s32.totalorder %s109, %s111
    %p115 = scmp.eq.s32.totalorder %s28, 0
    %p116 = por %p114, %p115
    %p117 = scmp.ne.s32.totalorder %s109, %s111
    %p118 = scmp.eq.s32.totalorder %s33, 1
    %p119 = por %p117, %p118
    %p120 = scmp.ne.s32.totalorder %s111, %s112
    %p121 = scmp.eq.s32.totalorder %s33, 0
    %p122 = por %p120, %p121
    %p123 = scmp.ne.s32.totalorder %s111, %s112
    %p124 = scmp.eq.s32.totalorder %s34, 1
    %p125 = por %p123, %p124
    %p127 = scmp.ne.s32.totalorder %s112, %s126
    %p128 = scmp.eq.s32.totalorder %s34, 0
    %p129 = por %p127, %p128
    %s131 = sadd.s32 %s130, 1
    %p134 = scmp.eq.s32.totalorder %s28, 1
    %p135 = scmp.ne.s32.totalorder %s130, %s132
    %p136 = scmp.eq.s32.totalorder %s28, 0
    %p137 = por %p135, %p136
    %p138 = scmp.ne.s32.totalorder %s130, %s132
    %p139 = scmp.eq.s32.totalorder %s33, 1
    %p140 = por %p138, %p139
    %p141 = scmp.ne.s32.totalorder %s132, %s133
    %p142 = scmp.eq.s32.totalorder %s33, 0
    %p143 = por %p141, %p142
    %p144 = scmp.ne.s32.totalorder %s132, %s133
    %p145 = scmp.eq.s32.totalorder %s34, 1
    %p146 = por %p144, %p145
    %p148 = scmp.ne.s32.totalorder %s133, %s147
    %p149 = scmp.eq.s32.totalorder %s34, 0
    %p150 = por %p148, %p149
    %s152 = sadd.s32 %s151, 1
    %p155 = scmp.eq.s32.totalorder %s28, 1
    %p156 = scmp.ne.s32.totalorder %s151, %s153
    %p157 = scmp.eq.s32.totalorder %s28, 0
    %p158 = por %p156, %p157
    %p159 = scmp.ne.s32.totalorder %s151, %s153
    %p160 = scmp.eq.s32.totalorder %s33, 1
    %p161 = por %p159, %p160
    %p162 = scmp.ne.s32.totalorder %s153, %s154
    %p163 = scmp.eq.s32.totalorder %s33, 0
    %p164 = por %p162, %p163
    %p165 = scmp.ne.s32.totalorder %s153, %s154
    %p166 = scmp.eq.s32.totalorder %s34, 1
    %p167 = por %p165, %p166
    %p169 = scmp.ne.s32.totalorder %s154, %s168
    %p170 = scmp.eq.s32.totalorder %s34, 0
    %p171 = por %p169, %p170
    %s173 = sadd.s32 %s172, 1
    %p176 = scmp.eq.s32.totalorder %s28, 1
    %p177 = scmp.ne.s32.totalorder %s172, %s174
    %p178 = scmp.eq.s32.totalorder %s28, 0
    %p179 = por %p177, %p178
    %p180 = scmp.ne.s32.totalorder %s172, %s174
    %p181 = scmp.eq.s32.totalorder %s33, 1
    %p182 = por %p180, %p181
    %p183 = scmp.ne.s32.totalorder %s174, %s175
    %p184 = scmp.eq.s32.totalorder %s33, 0
    %p185 = por %p183, %p184
    %p186 = scmp.ne.s32.totalorder %s174, %s175
    %p187 = scmp.eq.s32.totalorder %s34, 1
    %p188 = por %p186, %p187
    %p190 = scmp.ne.s32.totalorder %s175, %s189
    %p191 = scmp.eq.s32.totalorder %s34, 0
    %p192 = por %p190, %p191
    %s194 = sadd.s32 %s193, 1
    %p197 = scmp.eq.s32.totalorder %s28, 1
    %p198 = scmp.ne.s32.totalorder %s193, %s195
    %p199 = scmp.eq.s32.totalorder %s28, 0
    %p200 = por %p198, %p199
    %p201 = scmp.ne.s32.totalorder %s193, %s195
    %p202 = scmp.eq.s32.totalorder %s33, 1
    %p203 = por %p201, %p202
    %p204 = scmp.ne.s32.totalorder %s195, %s196
    %p205 = scmp.eq.s32.totalorder %s33, 0
    %p206 = por %p204, %p205
    %p207 = scmp.ne.s32.totalorder %s195, %s196
    %p208 = scmp.eq.s32.totalorder %s34, 1
    %p209 = por %p207, %p208
    %p211 = scmp.ne.s32.totalorder %s196, %s210
    %p212 = scmp.eq.s32.totalorder %s34, 0
    %p213 = por %p211, %p212
    %s215 = sadd.s32 %s214, 1
    %p218 = scmp.eq.s32.totalorder %s28, 1
    %p219 = scmp.ne.s32.totalorder %s214, %s216
    %p220 = scmp.eq.s32.totalorder %s28, 0
    %p221 = por %p219, %p220
    %p222 = scmp.ne.s32.totalorder %s214, %s216
    %p223 = scmp.eq.s32.totalorder %s33, 1
    %p224 = por %p222, %p223
    %p225 = scmp.ne.s32.totalorder %s216, %s217
    %p226 = scmp.eq.s32.totalorder %s33, 0
    %p227 = por %p225, %p226
    %p228 = scmp.ne.s32.totalorder %s216, %s217
    %p229 = scmp.eq.s32.totalorder %s34, 1
    %p230 = por %p228, %p229
    %p232 = scmp.ne.s32.totalorder %s217, %s231
    %p233 = scmp.eq.s32.totalorder %s34, 0
    %p234 = por %p232, %p233
    %s236 = sadd.s32 %s235, 1
    %p239 = scmp.eq.s32.totalorder %s28, 1
    %p240 = scmp.ne.s32.totalorder %s235, %s237
    %p241 = scmp.eq.s32.totalorder %s28, 0
    %p242 = por %p240, %p241
    %p243 = scmp.ne.s32.totalorder %s235, %s237
    %p244 = scmp.eq.s32.totalorder %s33, 1
    %p245 = por %p243, %p244
    %p246 = scmp.ne.s32.totalorder %s237, %s238
    %p247 = scmp.eq.s32.totalorder %s33, 0
    %p248 = por %p246, %p247
    %p249 = scmp.ne.s32.totalorder %s237, %s238
    %p250 = scmp.eq.s32.totalorder %s34, 1
    %p251 = por %p249, %p250
    %p253 = scmp.ne.s32.totalorder %s238, %s252
    %p254 = scmp.eq.s32.totalorder %s34, 0
    %p255 = por %p253, %p254
    %s257 = sadd.s32 %s256, 1
    %p260 = scmp.eq.s32.totalorder %s28, 1
    %p261 = scmp.ne.s32.totalorder %s256, %s258
    %p262 = scmp.eq.s32.totalorder %s28, 0
    %p263 = por %p261, %p262
    %p264 = scmp.ne.s32.totalorder %s256, %s258
    %p265 = scmp.eq.s32.totalorder %s33, 1
    %p266 = por %p264, %p265
    %p267 = scmp.ne.s32.totalorder %s258, %s259
    %p268 = scmp.eq.s32.totalorder %s33, 0
    %p269 = por %p267, %p268
    %p270 = scmp.ne.s32.totalorder %s258, %s259
    %p271 = scmp.eq.s32.totalorder %s34, 1
    %p272 = por %p270, %p271
    %p274 = scmp.ne.s32.totalorder %s259, %s273
    %p275 = scmp.eq.s32.totalorder %s34, 0
    %p276 = por %p274, %p275
    %s278 = sadd.s32 %s277, 1
    %p281 = scmp.eq.s32.totalorder %s28, 1
    %p282 = scmp.ne.s32.totalorder %s277, %s279
    %p283 = scmp.eq.s32.totalorder %s28, 0
    %p284 = por %p282, %p283
    %p285 = scmp.ne.s32.totalorder %s277, %s279
    %p286 = scmp.eq.s32.totalorder %s33, 1
    %p287 = por %p285, %p286
    %p288 = scmp.ne.s32.totalorder %s279, %s280
    %p289 = scmp.eq.s32.totalorder %s33, 0
    %p290 = por %p288, %p289
    %p291 = scmp.ne.s32.totalorder %s279, %s280
    %p292 = scmp.eq.s32.totalorder %s34, 1
    %p293 = por %p291, %p292
    %p295 = scmp.ne.s32.totalorder %s280, %s294
    %p296 = scmp.eq.s32.totalorder %s34, 0
    %p297 = por %p295, %p296
    %s299 = sadd.s32 %s298, 1
    %p302 = scmp.eq.s32.totalorder %s28, 1
    %p303 = scmp.ne.s32.totalorder %s298, %s300
    %p304 = scmp.eq.s32.totalorder %s28, 0
    %p305 = por %p303, %p304
    %p306 = scmp.ne.s32.totalorder %s298, %s300
    %p307 = scmp.eq.s32.totalorder %s33, 1
    %p308 = por %p306, %p307
    %p309 = scmp.ne.s32.totalorder %s300, %s301
    %p310 = scmp.eq.s32.totalorder %s33, 0
    %p311 = por %p309, %p310
    %p312 = scmp.ne.s32.totalorder %s300, %s301
    %p313 = scmp.eq.s32.totalorder %s34, 1
    %p314 = por %p312, %p313
    %p316 = scmp.ne.s32.totalorder %s301, %s315
    %p317 = scmp.eq.s32.totalorder %s34, 0
    %p318 = por %p316, %p317
    %s320 = sadd.s32 %s319, 1
    %p323 = scmp.eq.s32.totalorder %s28, 1
    %p324 = scmp.ne.s32.totalorder %s319, %s321
    %p325 = scmp.eq.s32.totalorder %s28, 0
    %p326 = por %p324, %p325
    %p327 = scmp.ne.s32.totalorder %s319, %s321
    %p328 = scmp.eq.s32.totalorder %s33, 1
    %p329 = por %p327, %p328
    %p330 = scmp.ne.s32.totalorder %s321, %s322
    %p331 = scmp.eq.s32.totalorder %s33, 0
    %p332 = por %p330, %p331
    %p333 = scmp.ne.s32.totalorder %s321, %s322
    %p334 = scmp.eq.s32.totalorder %s34, 1
    %p335 = por %p333, %p334
    %p337 = scmp.ne.s32.totalorder %s322, %s336
    %p338 = scmp.eq.s32.totalorder %s34, 0
    %p339 = por %p337, %p338
    %s341 = sadd.s32 %s340, 1
    %p344 = scmp.eq.s32.totalorder %s28, 1
    %p345 = scmp.ne.s32.totalorder %s340, %s342
    %p346 = scmp.eq.s32.totalorder %s28, 0
    %p347 = por %p345, %p346
    %p348 = scmp.ne.s32.totalorder %s340, %s342
    %p349 = scmp.eq.s32.totalorder %s33, 1
    %p350 = por %p348, %p349
    %p351 = scmp.ne.s32.totalorder %s342, %s343
    %p352 = scmp.eq.s32.totalorder %s33, 0
    %p353 = por %p351, %p352
    %p354 = scmp.ne.s32.totalorder %s342, %s343
    %p355 = scmp.eq.s32.totalorder %s34, 1
    %p356 = por %p354, %p355
    %p358 = scmp.ne.s32.totalorder %s343, %s357
    %p359 = scmp.eq.s32.totalorder %s34, 0
    %p360 = por %p358, %p359
    %s362 = sadd.s32 %s361, 1
    %p365 = scmp.eq.s32.totalorder %s28, 1
    %p366 = scmp.ne.s32.totalorder %s361, %s363
    %p367 = scmp.eq.s32.totalorder %s28, 0
    %p368 = por %p366, %p367
    %p369 = scmp.ne.s32.totalorder %s361, %s363
    %p370 = scmp.eq.s32.totalorder %s33, 1
    %p371 = por %p369, %p370
    %p372 = scmp.ne.s32.totalorder %s363, %s364
    %p373 = scmp.eq.s32.totalorder %s33, 0
    %p374 = por %p372, %p373
    %p375 = scmp.ne.s32.totalorder %s363, %s364
    %p376 = scmp.eq.s32.totalorder %s34, 1
    %p377 = por %p375, %p376
    %p379 = scmp.ne.s32.totalorder %s364, %s378
    %p380 = scmp.eq.s32.totalorder %s34, 0
    %p381 = por %p379, %p380
    %s383 = sadd.s32 %s382, 1
    %p386 = scmp.eq.s32.totalorder %s28, 1
    %p387 = scmp.ne.s32.totalorder %s382, %s384
    %p388 = scmp.eq.s32.totalorder %s28, 0
    %p389 = por %p387, %p388
    %p390 = scmp.ne.s32.totalorder %s382, %s384
    %p391 = scmp.eq.s32.totalorder %s33, 1
    %p392 = por %p390, %p391
    %p393 = scmp.ne.s32.totalorder %s384, %s385
    %p394 = scmp.eq.s32.totalorder %s33, 0
    %p395 = por %p393, %p394
    %p396 = scmp.ne.s32.totalorder %s384, %s385
    %p397 = scmp.eq.s32.totalorder %s34, 1
    %p398 = por %p396, %p397
    %p400 = scmp.ne.s32.totalorder %s385, %s399
    %p401 = scmp.eq.s32.totalorder %s34, 0
    %p402 = por %p400, %p401
    %s404 = sadd.s32 %s403, 1
    %p407 = scmp.eq.s32.totalorder %s28, 1
    %p408 = scmp.ne.s32.totalorder %s403, %s405
    %p409 = scmp.eq.s32.totalorder %s28, 0
    %p410 = por %p408, %p409
    %p411 = scmp.ne.s32.totalorder %s403, %s405
    %p412 = scmp.eq.s32.totalorder %s33, 1
    %p413 = por %p411, %p412
    %p414 = scmp.ne.s32.totalorder %s405, %s406
    %p415 = scmp.eq.s32.totalorder %s33, 0
    %p416 = por %p414, %p415
    %p417 = scmp.ne.s32.totalorder %s405, %s406
    %p418 = scmp.eq.s32.totalorder %s34, 1
    %p419 = por %p417, %p418
    %p421 = scmp.ne.s32.totalorder %s406, %s420
    %p422 = scmp.eq.s32.totalorder %s34, 0
    %p423 = por %p421, %p422
    %s425 = sadd.s32 %s424, 1
    %p428 = scmp.eq.s32.totalorder %s28, 1
    %p429 = scmp.ne.s32.totalorder %s424, %s426
    %p430 = scmp.eq.s32.totalorder %s28, 0
    %p431 = por %p429, %p430
    %p432 = scmp.ne.s32.totalorder %s424, %s426
    %p433 = scmp.eq.s32.totalorder %s33, 1
    %p434 = por %p432, %p433
    %p435 = scmp.ne.s32.totalorder %s426, %s427
    %p436 = scmp.eq.s32.totalorder %s33, 0
    %p437 = por %p435, %p436
    %p438 = scmp.ne.s32.totalorder %s426, %s427
    %p439 = scmp.eq.s32.totalorder %s34, 1
    %p440 = por %p438, %p439
    %p442 = scmp.ne.s32.totalorder %s427, %s441
    %p443 = scmp.eq.s32.totalorder %s34, 0
    %p444 = por %p442, %p443
    %s446 = sadd.s32 %s445, 1
    %p449 = scmp.eq.s32.totalorder %s28, 1
    %p450 = scmp.ne.s32.totalorder %s445, %s447
    %p451 = scmp.eq.s32.totalorder %s28, 0
    %p452 = por %p450, %p451
    %p453 = scmp.ne.s32.totalorder %s445, %s447
    %p454 = scmp.eq.s32.totalorder %s33, 1
    %p455 = por %p453, %p454
    %p456 = scmp.ne.s32.totalorder %s447, %s448
    %p457 = scmp.eq.s32.totalorder %s33, 0
    %p458 = por %p456, %p457
    %p459 = scmp.ne.s32.totalorder %s447, %s448
    %p460 = scmp.eq.s32.totalorder %s34, 1
    %p461 = por %p459, %p460
    %p463 = scmp.ne.s32.totalorder %s448, %s462
    %p464 = scmp.eq.s32.totalorder %s34, 0
    %p465 = por %p463, %p464
    %s467 = sadd.s32 %s466, 1
    %p470 = scmp.eq.s32.totalorder %s28, 1
    %p471 = scmp.ne.s32.totalorder %s466, %s468
    %p472 = scmp.eq.s32.totalorder %s28, 0
    %p473 = por %p471, %p472
    %p474 = scmp.ne.s32.totalorder %s466, %s468
    %p475 = scmp.eq.s32.totalorder %s33, 1
    %p476 = por %p474, %p475
    %p477 = scmp.ne.s32.totalorder %s468, %s469
    %p478 = scmp.eq.s32.totalorder %s33, 0
    %p479 = por %p477, %p478
    %p480 = scmp.ne.s32.totalorder %s468, %s469
    %p481 = scmp.eq.s32.totalorder %s34, 1
    %p482 = por %p480, %p481
    %p484 = scmp.ne.s32.totalorder %s469, %s483
    %p485 = scmp.eq.s32.totalorder %s34, 0
    %p486 = por %p484, %p485
    %s488 = sadd.s32 %s487, 1
    %p491 = scmp.eq.s32.totalorder %s28, 1
    %p492 = scmp.ne.s32.totalorder %s487, %s489
    %p493 = scmp.eq.s32.totalorder %s28, 0
    %p494 = por %p492, %p493
    %p495 = scmp.ne.s32.totalorder %s487, %s489
    %p496 = scmp.eq.s32.totalorder %s33, 1
    %p497 = por %p495, %p496
    %p498 = scmp.ne.s32.totalorder %s489, %s490
    %p499 = scmp.eq.s32.totalorder %s33, 0
    %p500 = por %p498, %p499
    %p501 = scmp.ne.s32.totalorder %s489, %s490
    %p502 = scmp.eq.s32.totalorder %s34, 1
    %p503 = por %p501, %p502
    %p505 = scmp.ne.s32.totalorder %s490, %s504
    %p506 = scmp.eq.s32.totalorder %s34, 0
    %p507 = por %p505, %p506
    %s508 = ssub.s32 %s28, %s35
    %p509 = scmp.eq.s32.totalorder %s508, 0
    %s511 = sadd.s32 %s510, 1
    %s512 = scalar_select %p509, %s510, %s511
    %p515 = pneg %p509
    %p516 = scmp.eq.s32.totalorder %s28, 1
    %p517 = por %p515, %p516
    %p518 = scmp.ne.s32.totalorder %s510, %s513
    %p519 = scmp.eq.s32.totalorder %s28, 0
    %p520 = por %p518, %p519
    %p521 = scmp.ne.s32.totalorder %s510, %s513
    %p522 = scmp.eq.s32.totalorder %s33, 1
    %p523 = por %p521, %p522
    %p524 = scmp.ne.s32.totalorder %s513, %s514
    %p525 = scmp.eq.s32.totalorder %s33, 0
    %p526 = por %p524, %p525
    %p527 = scmp.ne.s32.totalorder %s513, %s514
    %p528 = scmp.eq.s32.totalorder %s34, 1
    %p529 = por %p527, %p528
    %p531 = scmp.ne.s32.totalorder %s514, %s530
    %p532 = scmp.eq.s32.totalorder %s34, 0
    %p533 = por %p531, %p532
    %p534 = scmp.le.s32.totalorder 1, %s28
    %p535 = scmp.lt.s32.totalorder %s28, 3
    %p536 = pnand %p534, %p535
    %p537 = pneg %p536
    // Predicated region
    $region9: #{lno1d_forward.5} parent=5 // pred_check
      _
    $region10: #{lno1d_forward.5} parent=5 // pred_check_branch
      %539 = sbr.rel (%p536) target = $region12
    $region11: #{lno1d_forward.5} parent=5 // pred_region
      %s540 = ssub.s32 %s28, 1
      // Predicated region
      $region13: #{lno1d_forward.5} parent=11 // pred_check
        %p541 = pneg %p101
      $region14: #{lno1d_forward.5} parent=11 // pred_check_branch
        %543 = sbr.rel (%p541) target = $region16
      $region15: #{lno1d_forward.5} parent=11 // pred_region
        _
      $region16: #{lno1d_forward.5} parent=11 // pred_fallthru
        _
      // Predicated region
      $region17: #{lno1d_forward.5} parent=11 // pred_check
        %p544 = pneg %p122
      $region18: #{lno1d_forward.5} parent=11 // pred_check_branch
        %546 = sbr.rel (%p544) target = $region20
      $region19: #{lno1d_forward.5} parent=11 // pred_region
        _
      $region20: #{lno1d_forward.5} parent=11 // pred_fallthru
        _
      // Predicated region
      $region21: #{lno1d_forward.5} parent=11 // pred_check
        %p547 = pneg %p143
      $region22: #{lno1d_forward.5} parent=11 // pred_check_branch
        %549 = sbr.rel (%p547) target = $region24
      $region23: #{lno1d_forward.5} parent=11 // pred_region
        _
      $region24: #{lno1d_forward.5} parent=11 // pred_fallthru
        _
      // Predicated region
      $region25: #{lno1d_forward.5} parent=11 // pred_check
        %p550 = pneg %p164
      $region26: #{lno1d_forward.5} parent=11 // pred_check_branch
        %552 = sbr.rel (%p550) target = $region28
      $region27: #{lno1d_forward.5} parent=11 // pred_region
        _
      $region28: #{lno1d_forward.5} parent=11 // pred_fallthru
        _
      // Predicated region
      $region29: #{lno1d_forward.5} parent=11 // pred_check
        %p553 = pneg %p185
      $region30: #{lno1d_forward.5} parent=11 // pred_check_branch
        %555 = sbr.rel (%p553) target = $region32
      $region31: #{lno1d_forward.5} parent=11 // pred_region
        _
      $region32: #{lno1d_forward.5} parent=11 // pred_fallthru
        _
      // Predicated region
      $region33: #{lno1d_forward.5} parent=11 // pred_check
        %p556 = pneg %p206
      $region34: #{lno1d_forward.5} parent=11 // pred_check_branch
        %558 = sbr.rel (%p556) target = $region36
      $region35: #{lno1d_forward.5} parent=11 // pred_region
        _
      $region36: #{lno1d_forward.5} parent=11 // pred_fallthru
        _
      // Predicated region
      $region37: #{lno1d_forward.5} parent=11 // pred_check
        %p559 = pneg %p227
      $region38: #{lno1d_forward.5} parent=11 // pred_check_branch
        %561 = sbr.rel (%p559) target = $region40
      $region39: #{lno1d_forward.5} parent=11 // pred_region
        _
      $region40: #{lno1d_forward.5} parent=11 // pred_fallthru
        _
      // Predicated region
      $region41: #{lno1d_forward.5} parent=11 // pred_check
        %p562 = pneg %p248
      $region42: #{lno1d_forward.5} parent=11 // pred_check_branch
        %564 = sbr.rel (%p562) target = $region44
      $region43: #{lno1d_forward.5} parent=11 // pred_region
        _
      $region44: #{lno1d_forward.5} parent=11 // pred_fallthru
        _
      // Predicated region
      $region45: #{lno1d_forward.5} parent=11 // pred_check
        %p565 = pneg %p269
      $region46: #{lno1d_forward.5} parent=11 // pred_check_branch
        %567 = sbr.rel (%p565) target = $region48
      $region47: #{lno1d_forward.5} parent=11 // pred_region
        _
      $region48: #{lno1d_forward.5} parent=11 // pred_fallthru
        _
      // Predicated region
      $region49: #{lno1d_forward.5} parent=11 // pred_check
        %p568 = pneg %p290
      $region50: #{lno1d_forward.5} parent=11 // pred_check_branch
        %570 = sbr.rel (%p568) target = $region52
      $region51: #{lno1d_forward.5} parent=11 // pred_region
        _
      $region52: #{lno1d_forward.5} parent=11 // pred_fallthru
        _
      // Predicated region
      $region53: #{lno1d_forward.5} parent=11 // pred_check
        %p571 = pneg %p311
      $region54: #{lno1d_forward.5} parent=11 // pred_check_branch
        %573 = sbr.rel (%p571) target = $region56
      $region55: #{lno1d_forward.5} parent=11 // pred_region
        _
      $region56: #{lno1d_forward.5} parent=11 // pred_fallthru
        _
      // Predicated region
      $region57: #{lno1d_forward.5} parent=11 // pred_check
        %p574 = pneg %p332
      $region58: #{lno1d_forward.5} parent=11 // pred_check_branch
        %576 = sbr.rel (%p574) target = $region60
      $region59: #{lno1d_forward.5} parent=11 // pred_region
        _
      $region60: #{lno1d_forward.5} parent=11 // pred_fallthru
        _
      // Predicated region
      $region61: #{lno1d_forward.5} parent=11 // pred_check
        %p577 = pneg %p353
      $region62: #{lno1d_forward.5} parent=11 // pred_check_branch
        %579 = sbr.rel (%p577) target = $region64
      $region63: #{lno1d_forward.5} parent=11 // pred_region
        _
      $region64: #{lno1d_forward.5} parent=11 // pred_fallthru
        _
      // Predicated region
      $region65: #{lno1d_forward.5} parent=11 // pred_check
        %p580 = pneg %p374
      $region66: #{lno1d_forward.5} parent=11 // pred_check_branch
        %582 = sbr.rel (%p580) target = $region68
      $region67: #{lno1d_forward.5} parent=11 // pred_region
        _
      $region68: #{lno1d_forward.5} parent=11 // pred_fallthru
        _
      // Predicated region
      $region69: #{lno1d_forward.5} parent=11 // pred_check
        %p583 = pneg %p395
      $region70: #{lno1d_forward.5} parent=11 // pred_check_branch
        %585 = sbr.rel (%p583) target = $region72
      $region71: #{lno1d_forward.5} parent=11 // pred_region
        _
      $region72: #{lno1d_forward.5} parent=11 // pred_fallthru
        _
      // Predicated region
      $region73: #{lno1d_forward.5} parent=11 // pred_check
        %p586 = pneg %p416
      $region74: #{lno1d_forward.5} parent=11 // pred_check_branch
        %588 = sbr.rel (%p586) target = $region76
      $region75: #{lno1d_forward.5} parent=11 // pred_region
        _
      $region76: #{lno1d_forward.5} parent=11 // pred_fallthru
        _
      // Predicated region
      $region77: #{lno1d_forward.5} parent=11 // pred_check
        %p589 = pneg %p437
      $region78: #{lno1d_forward.5} parent=11 // pred_check_branch
        %591 = sbr.rel (%p589) target = $region80
      $region79: #{lno1d_forward.5} parent=11 // pred_region
        _
      $region80: #{lno1d_forward.5} parent=11 // pred_fallthru
        _
      // Predicated region
      $region81: #{lno1d_forward.5} parent=11 // pred_check
        %p592 = pneg %p458
      $region82: #{lno1d_forward.5} parent=11 // pred_check_branch
        %594 = sbr.rel (%p592) target = $region84
      $region83: #{lno1d_forward.5} parent=11 // pred_region
        _
      $region84: #{lno1d_forward.5} parent=11 // pred_fallthru
        _
      // Predicated region
      $region85: #{lno1d_forward.5} parent=11 // pred_check
        %p595 = pneg %p479
      $region86: #{lno1d_forward.5} parent=11 // pred_check_branch
        %597 = sbr.rel (%p595) target = $region88
      $region87: #{lno1d_forward.5} parent=11 // pred_region
        _
      $region88: #{lno1d_forward.5} parent=11 // pred_fallthru
        _
      // Predicated region
      $region89: #{lno1d_forward.5} parent=11 // pred_check
        %p598 = pneg %p500
      $region90: #{lno1d_forward.5} parent=11 // pred_check_branch
        %600 = sbr.rel (%p598) target = $region92
      $region91: #{lno1d_forward.5} parent=11 // pred_region
        _
      $region92: #{lno1d_forward.5} parent=11 // pred_fallthru
        _
    $region12: #{lno1d_forward.5} parent=5 // pred_fallthru
      _
    %p601 = scmp.lt.s32.totalorder %s28, 2
    // Predicated region
    $region93: #{lno1d_forward.5} parent=5 // pred_check
      %p602 = pneg %p601
    $region94: #{lno1d_forward.5} parent=5 // pred_check_branch
      %604 = sbr.rel (%p602) target = $region96
    $region95: #{lno1d_forward.5} parent=5 // pred_region
      // Predicated region
      $region97: #{lno1d_forward.5} parent=95 // pred_check
        %p605 = pneg %p48
      $region98: #{lno1d_forward.5} parent=95 // pred_check_branch
        %607 = sbr.rel (%p605) target = $region100
      $region99: #{lno1d_forward.5} parent=95 // pred_region
        %p608 = scmp.lt.s32.totalorder %s28, 1
        %s609 = scalar_select %p608, %s28, 1
        %s610 = smul.addr %s609, 2
        %s611 = smul.addr %s610, 8
        %s612 = scalar_lea.vmem %s0, %s611
      $region100: #{lno1d_forward.5} parent=95 // pred_fallthru
        _
      // Predicated region
      $region101: #{lno1d_forward.5} parent=95 // pred_check
        %p613 = pneg %p74
      $region102: #{lno1d_forward.5} parent=95 // pred_check_branch
        %615 = sbr.rel (%p613) target = $region104
      $region103: #{lno1d_forward.5} parent=95 // pred_region
        %p616 = scmp.lt.s32.totalorder %s28, 1
        %s617 = scalar_select %p616, %s28, 1
        %s618 = smul.addr %s617, 2
        %s619 = smul.addr %s618, 8
        %s620 = scalar_lea.vmem %s1, %s619
      $region104: #{lno1d_forward.5} parent=95 // pred_fallthru
        _
    $region96: #{lno1d_forward.5} parent=5 // pred_fallthru
      _
    %p621 = scmp.le.s32.totalorder 1, %s28
    %p622 = scmp.lt.s32.totalorder %s28, 3
    %p623 = pnand %p621, %p622
    %p624 = pneg %p623
    // Predicated region
    $region105: #{lno1d_forward.5} parent=5 // pred_check
      _
    $region106: #{lno1d_forward.5} parent=5 // pred_check_branch
      %626 = sbr.rel (%p623) target = $region108
    $region107: #{lno1d_forward.5} parent=5 // pred_region
      %s627 = ssub.s32 %s28, 1
      %p628 = scmp.lt.s32.totalorder %s33, 1
      %s629 = scalar_select %p628, %s33, 1
      %s630 = smul.addr %s629, 2
      %s631 = smul.addr %s630, 8
      %s632 = scalar_lea.vmem %s0, %s631
      %p633 = pneg %p54
      %p634 = pneg %p51
      %p635 = scmp.lt.s32.totalorder %s33, 1
      %s636 = scalar_select %p635, %s33, 1
      %s637 = smul.addr %s636, 2
      %s638 = smul.addr %s637, 8
      %s639 = scalar_lea.vmem %s1, %s638
      %p640 = pneg %p80
      %p641 = pneg %p77
      %p642 = pneg %p101
      %p643 = pneg %p98
      %p644 = pneg %p122
      %p645 = pneg %p119
      %p646 = pneg %p143
      %p647 = pneg %p140
      %p648 = pneg %p164
      %p649 = pneg %p161
      %p650 = pneg %p185
      %p651 = pneg %p182
      %p652 = pneg %p206
      %p653 = pneg %p203
      %p654 = pneg %p227
      %p655 = pneg %p224
      %p656 = pneg %p248
      %p657 = pneg %p245
      %p658 = pneg %p269
      %p659 = pneg %p266
      %p660 = pneg %p290
      %p661 = pneg %p287
      %p662 = pneg %p311
      %p663 = pneg %p308
      %p664 = pneg %p332
      %p665 = pneg %p329
      %p666 = pneg %p353
      %p667 = pneg %p350
      %p668 = pneg %p374
      %p669 = pneg %p371
      %p670 = pneg %p395
      %p671 = pneg %p392
      %p672 = pneg %p416
      %p673 = pneg %p413
      %p674 = pneg %p437
      %p675 = pneg %p434
      %p676 = pneg %p458
      %p677 = pneg %p455
      %p678 = pneg %p479
      %p679 = pneg %p476
      %p680 = pneg %p500
      %p681 = pneg %p497
      %p682 = pneg %p526
      %p683 = pneg %p523
      %p684 = scmp.lt.s32.totalorder %s33, 1
      %s685 = scalar_select %p684, %s33, 1
      %s686 = smul.addr %s685, 2
      %s687 = smul.addr %s686, 8
      %s688 = scalar_lea.vmem %s22, %s687
      %p689 = scmp.lt.s32.totalorder %s33, 1
      %s690 = scalar_select %p689, %s33, 1
      %s691 = smul.addr %s690, 2
      %s692 = smul.addr %s691, 8
      %s693 = scalar_lea.vmem %s0, %s692
      %p694 = scmp.lt.s32.totalorder %s33, 1
      %s695 = scalar_select %p694, %s33, 1
      %s696 = smul.addr %s695, 2
      %s697 = smul.addr %s696, 8
      %s698 = scalar_lea.vmem %s1, %s697
      %p699 = scmp.lt.s32.totalorder %s33, 1
      %s700 = scalar_select %p699, %s33, 1
      %s701 = smul.addr %s700, 2
      %s702 = smul.addr %s701, 8
      %s703 = scalar_lea.vmem %s22, %s702
      %v705 = vld [vmem:[%s693] sm:$0xff]
      %v706 = vld [vmem:[%s693 + $0x8] sm:$0xff]
      %v707 = vld [vmem:[%s698] sm:$0xff]
      %v708 = vld [vmem:[%s698 + $0x8] sm:$0xff]
      %v709 = vld [vmem:[%s18] sm:$0xf]
      %v710 = vld [vmem:[%s18 + $0x4] sm:$0xf]
      %v711 = vld [vmem:[%s18 + $0x8] sm:$0xf]
      %v712 = vld [vmem:[%s18 + $0xc] sm:$0xf]
      %v713 = vld [vmem:[%s19] sm:$0x1]
      %v714 = vld [vmem:[%s20] sm:$0x1]
      %v715 = vld [vmem:[%s21] sm:$0x1]
      %v716 = vpack.c.bf16 %v708, %v707
      %v718 = vlaneseq
      %v719 = vshrl.u32 %v718, 7
      %v720 = vsub.s32 0, %v719
      %v721 = vrot.slane %v713, %v720
      %v727 = vunpack.c.l.b16 %v709
      %v728 = vunpack.c.l.b16 %v710
      %v729 = vunpack.c.l.b16 %v711
      %v730 = vunpack.c.l.b16 %v712
      %v731 = vpack.c.b16 %v728, %v727
      %v732 = vpack.c.b16 %v730, %v729
      %vm735 = vcmask 261120
      %v737 = vsel %vm735, %v716, 0
      %739 = vmatprep.subr.bf16.mxu0 0
      %740 = vmatpush1.bf16.msra.mxu0 0
      %741 = vmatprep.subr.bf16.mxu0 0
      %742 = vmatpush1.bf16.msra.mxu0 0
      %743 = vmatprep.subr.bf16.mxu0 0
      %744 = vmatpush1.bf16.msra.mxu0 0
      %745 = vmatprep.subr.bf16.mxu0 0
      %746 = vmatpush1.bf16.msra.mxu0 0
      %747 = vmatprep.subr.bf16.mxu0 0
      %748 = vmatpush1.bf16.msra.mxu0 0
      %749 = vmatprep.subr.bf16.mxu0 0
      %750 = vmatpush1.bf16.msra.mxu0 0
      %751 = vmatprep.subr.bf16.mxu0 0
      %752 = vmatpush1.bf16.msra.mxu0 %v732
      %753 = vmatprep.subr.bf16.mxu0 0
      %754 = vmatpush1.bf16.msra.mxu0 %v731
      %755 = vmatprep.subr.bf16.mxu0 0
      %756 = vmatpush2.bf16.msra.mxu0 0
      %757 = vmatprep.subr.bf16.mxu0 0
      %758 = vmatpush2.bf16.msra.mxu0 0
      %759 = vmatprep.subr.bf16.mxu0 0
      %760 = vmatpush2.bf16.msra.mxu0 0
      %761 = vmatprep.subr.bf16.mxu0 0
      %762 = vmatpush2.bf16.msra.mxu0 0
      %763 = vmatprep.subr.bf16.mxu0 0
      %764 = vmatpush2.bf16.msra.mxu0 0
      %765 = vmatprep.subr.bf16.mxu0 0
      %766 = vmatpush2.bf16.msra.mxu0 0
      %767 = vmatprep.subr.bf16.mxu0 0
      %768 = vmatpush2.bf16.msra.mxu0 0
      %769 = vmatprep.subr.bf16.mxu0 0
      %770 = vmatpush2.bf16.msra.mxu0 0
      %771 = vmatprep.mubr.bf16.mxu0 0
      %772 = vmatmul.mubr.bf16.gmra.mxu0 %v737
      %v773 = vpop.f32.mrf.mxu0
      %v774 = vadd.f32 %v721, %v773
      %v775 = vpop.f32.mrf.mxu0
      %v776 = vpop.f32.mrf.mxu0
      %v777 = vadd.f32 %v721, %v776
      %v778 = vpop.f32.mrf.mxu0
      %779 = vdwg.mxu0
      %v780 = vld [vmem:[%s2] sm:$0x1]
      %v781 = vld [vmem:[%s3] sm:$0x1]
      %v782 = vpack.c.bf16 %v706, %v705
      %v784 = vlaneseq
      %v785 = vshrl.u32 %v784, 7
      %v786 = vsub.s32 0, %v785
      %v787 = vrot.slane %v781, %v786
      %vm789 = vcmask 15360
      %v791 = vsel %vm789, %v782, 0
      %vm793 = vcmask 1040384
      %v795 = vsel %vm793, %v780, 0
      %797 = vmatprep.subr.bf16.mxu0 0
      %798 = vmatpush1.bf16.msra.mxu0 0
      %799 = vmatprep.subr.bf16.mxu0 0
      %800 = vmatpush1.bf16.msra.mxu0 0
      %801 = vmatprep.subr.bf16.mxu0 0
      %802 = vmatpush1.bf16.msra.mxu0 0
      %803 = vmatprep.subr.bf16.mxu0 0
      %804 = vmatpush1.bf16.msra.mxu0 0
      %805 = vmatprep.subr.bf16.mxu0 0
      %806 = vmatpush1.bf16.msra.mxu0 0
      %807 = vmatprep.subr.bf16.mxu0 0
      %808 = vmatpush1.bf16.msra.mxu0 0
      %809 = vmatprep.subr.bf16.mxu0 0
      %810 = vmatpush1.bf16.msra.mxu0 0
      %811 = vmatprep.subr.bf16.mxu0 0
      %812 = vmatpush1.bf16.msra.mxu0 %v795
      %813 = vmatprep.subr.bf16.mxu0 0
      %814 = vmatpush2.bf16.msra.mxu0 0
      %815 = vmatprep.subr.bf16.mxu0 0
      %816 = vmatpush2.bf16.msra.mxu0 0
      %817 = vmatprep.subr.bf16.mxu0 0
      %818 = vmatpush2.bf16.msra.mxu0 0
      %819 = vmatprep.subr.bf16.mxu0 0
      %820 = vmatpush2.bf16.msra.mxu0 0
      %821 = vmatprep.subr.bf16.mxu0 0
      %822 = vmatpush2.bf16.msra.mxu0 0
      %823 = vmatprep.subr.bf16.mxu0 0
      %824 = vmatpush2.bf16.msra.mxu0 0
      %825 = vmatprep.subr.bf16.mxu0 0
      %826 = vmatpush2.bf16.msra.mxu0 0
      %827 = vmatprep.subr.bf16.mxu0 0
      %828 = vmatpush2.bf16.msra.mxu0 0
      %829 = vmatprep.mubr.bf16.mxu0 0
      %830 = vmatmul.mubr.bf16.gmra.mxu0 %v791
      %v831 = vpop.f32.mrf.mxu0
      %v832 = vadd.f32 %v787, %v831
      %v833 = vpop.f32.mrf.mxu0
      %v834 = vpop.f32.mrf.mxu0
      %v835 = vadd.f32 %v787, %v834
      %v836 = vpop.f32.mrf.mxu0
      %837 = vdwg.mxu0
      %v838 = vmax.f32 %v832, 0.0
      %v839 = vmax.f32 %v835, 0.0
      %v840 = vld [vmem:[%s4] sm:$0xf]
      %v841 = vld [vmem:[%s4 + $0x4] sm:$0xf]
      %v842 = vld [vmem:[%s4 + $0x8] sm:$0xf]
      %v843 = vld [vmem:[%s4 + $0xc] sm:$0xf]
      %v844 = vld [vmem:[%s4 + $0x10] sm:$0xf]
      %v845 = vld [vmem:[%s4 + $0x14] sm:$0xf]
      %v846 = vld [vmem:[%s4 + $0x18] sm:$0xf]
      %v847 = vld [vmem:[%s4 + $0x1c] sm:$0xf]
      %v848 = vld [vmem:[%s5] sm:$0x1]
      %v849 = vpack.c.bf16 %v839, %v838
      %v851 = vlaneseq
      %v852 = vshrl.u32 %v851, 7
      %v853 = vsub.s32 0, %v852
      %v854 = vrot.slane %v848, %v853
      %v864 = vunpack.c.l.b16 %v840
      %v865 = vunpack.c.l.b16 %v841
      %v866 = vunpack.c.l.b16 %v842
      %v867 = vunpack.c.l.b16 %v843
      %v868 = vunpack.c.l.b16 %v844
      %v869 = vunpack.c.l.b16 %v845
      %v870 = vunpack.c.l.b16 %v846
      %v871 = vunpack.c.l.b16 %v847
      %v872 = vpack.c.b16 %v865, %v864
      %v873 = vpack.c.b16 %v867, %v866
      %v874 = vpack.c.b16 %v869, %v868
      %v875 = vpack.c.b16 %v871, %v870
      %vm880 = vcmask 523264
      %v882 = vsel %vm880, %v849, 0
      %884 = vmatprep.subr.bf16.mxu0 0
      %885 = vmatpush1.bf16.msra.mxu0 0
      %886 = vmatprep.subr.bf16.mxu0 0
      %887 = vmatpush1.bf16.msra.mxu0 0
      %888 = vmatprep.subr.bf16.mxu0 0
      %889 = vmatpush1.bf16.msra.mxu0 0
      %890 = vmatprep.subr.bf16.mxu0 0
      %891 = vmatpush1.bf16.msra.mxu0 0
      %892 = vmatprep.subr.bf16.mxu0 0
      %893 = vmatpush1.bf16.msra.mxu0 %v875
      %894 = vmatprep.subr.bf16.mxu0 0
      %895 = vmatpush1.bf16.msra.mxu0 %v874
      %896 = vmatprep.subr.bf16.mxu0 0
      %897 = vmatpush1.bf16.msra.mxu0 %v873
      %898 = vmatprep.subr.bf16.mxu0 0
      %899 = vmatpush1.bf16.msra.mxu0 %v872
      %900 = vmatprep.subr.bf16.mxu0 0
      %901 = vmatpush2.bf16.msra.mxu0 0
      %902 = vmatprep.subr.bf16.mxu0 0
      %903 = vmatpush2.bf16.msra.mxu0 0
      %904 = vmatprep.subr.bf16.mxu0 0
      %905 = vmatpush2.bf16.msra.mxu0 0
      %906 = vmatprep.subr.bf16.mxu0 0
      %907 = vmatpush2.bf16.msra.mxu0 0
      %908 = vmatprep.subr.bf16.mxu0 0
      %909 = vmatpush2.bf16.msra.mxu0 0
      %910 = vmatprep.subr.bf16.mxu0 0
      %911 = vmatpush2.bf16.msra.mxu0 0
      %912 = vmatprep.subr.bf16.mxu0 0
      %913 = vmatpush2.bf16.msra.mxu0 0
      %914 = vmatprep.subr.bf16.mxu0 0
      %915 = vmatpush2.bf16.msra.mxu0 0
      %916 = vmatprep.mubr.bf16.mxu0 0
      %917 = vmatmul.mubr.bf16.gmra.mxu0 %v882
      %v918 = vpop.f32.mrf.mxu0
      %v919 = vadd.f32 %v854, %v918
      %v920 = vpop.f32.mrf.mxu0
      %v921 = vpop.f32.mrf.mxu0
      %v922 = vadd.f32 %v854, %v921
      %v923 = vpop.f32.mrf.mxu0
      %924 = vdwg.mxu0
      %v925 = vmax.f32 %v919, 0.0
      %v926 = vmax.f32 %v922, 0.0
      %v927 = vld [vmem:[%s6] sm:$0xff]
      %v928 = vld [vmem:[%s6 + $0x8] sm:$0xff]
      %v929 = vld [vmem:[%s6 + $0x10] sm:$0xff]
      %v930 = vld [vmem:[%s6 + $0x18] sm:$0xff]
      %v931 = vld [vmem:[%s6 + $0x20] sm:$0xff]
      %v932 = vld [vmem:[%s6 + $0x28] sm:$0xff]
      %v933 = vld [vmem:[%s6 + $0x30] sm:$0xff]
      %v934 = vld [vmem:[%s6 + $0x38] sm:$0xff]
      %v935 = vld [vmem:[%s6 + $0x40] sm:$0xff]
      %v936 = vld [vmem:[%s6 + $0x48] sm:$0xff]
      %v937 = vld [vmem:[%s6 + $0x50] sm:$0xff]
      %v938 = vld [vmem:[%s6 + $0x58] sm:$0xff]
      %v939 = vld [vmem:[%s6 + $0x60] sm:$0xff]
      %v940 = vld [vmem:[%s6 + $0x68] sm:$0xff]
      %v941 = vld [vmem:[%s6 + $0x70] sm:$0xff]
      %v942 = vld [vmem:[%s6 + $0x78] sm:$0xff]
      %v943 = vld [vmem:[%s7] sm:$0x3]
      %v944 = vpack.c.bf16 %v926, %v925
      %v946 = vlaneseq
      %v947 = vshrl.u32 %v946, 7
      %v948 = vsub.s32 0, %v947
      %v949 = vrot.slane %v943, %v948
      %v950 = vlaneseq
      %v951 = vshrl.u32 %v950, 7
      %v952 = vsub.s32 1, %v951
      %v953 = vrot.slane %v943, %v952
      %v972 = vunpack.c.l.b16 %v927
      %v973 = vunpack.c.h.b16 %v927
      %v974 = vunpack.c.l.b16 %v928
      %v975 = vunpack.c.h.b16 %v928
      %v976 = vunpack.c.l.b16 %v929
      %v977 = vunpack.c.h.b16 %v929
      %v978 = vunpack.c.l.b16 %v930
      %v979 = vunpack.c.h.b16 %v930
      %v980 = vunpack.c.l.b16 %v931
      %v981 = vunpack.c.h.b16 %v931
      %v982 = vunpack.c.l.b16 %v932
      %v983 = vunpack.c.h.b16 %v932
      %v984 = vunpack.c.l.b16 %v933
      %v985 = vunpack.c.h.b16 %v933
      %v986 = vunpack.c.l.b16 %v934
      %v987 = vunpack.c.h.b16 %v934
      %v988 = vunpack.c.l.b16 %v935
      %v989 = vunpack.c.h.b16 %v935
      %v990 = vunpack.c.l.b16 %v936
      %v991 = vunpack.c.h.b16 %v936
      %v992 = vunpack.c.l.b16 %v937
      %v993 = vunpack.c.h.b16 %v937
      %v994 = vunpack.c.l.b16 %v938
      %v995 = vunpack.c.h.b16 %v938
      %v996 = vunpack.c.l.b16 %v939
      %v997 = vunpack.c.h.b16 %v939
      %v998 = vunpack.c.l.b16 %v940
      %v999 = vunpack.c.h.b16 %v940
      %v1000 = vunpack.c.l.b16 %v941
      %v1001 = vunpack.c.h.b16 %v941
      %v1002 = vunpack.c.l.b16 %v942
      %v1003 = vunpack.c.h.b16 %v942
      %v1004 = vpack.c.b16 %v974, %v972
      %v1005 = vpack.c.b16 %v975, %v973
      %v1006 = vpack.c.b16 %v978, %v976
      %v1007 = vpack.c.b16 %v979, %v977
      %v1008 = vpack.c.b16 %v982, %v980
      %v1009 = vpack.c.b16 %v983, %v981
      %v1010 = vpack.c.b16 %v986, %v984
      %v1011 = vpack.c.b16 %v987, %v985
      %v1012 = vpack.c.b16 %v990, %v988
      %v1013 = vpack.c.b16 %v991, %v989
      %v1014 = vpack.c.b16 %v994, %v992
      %v1015 = vpack.c.b16 %v995, %v993
      %v1016 = vpack.c.b16 %v998, %v996
      %v1017 = vpack.c.b16 %v999, %v997
      %v1018 = vpack.c.b16 %v1002, %v1000
      %v1019 = vpack.c.b16 %v1003, %v1001
      %1036 = vmatprep.subr.bf16.mxu0 %v1019
      %1037 = vmatpush1.bf16.msra.mxu0 %v1018
      %1038 = vmatprep.subr.bf16.mxu0 %v1017
      %1039 = vmatpush1.bf16.msra.mxu0 %v1016
      %1040 = vmatprep.subr.bf16.mxu0 %v1015
      %1041 = vmatpush1.bf16.msra.mxu0 %v1014
      %1042 = vmatprep.subr.bf16.mxu0 %v1013
      %1043 = vmatpush1.bf16.msra.mxu0 %v1012
      %1044 = vmatprep.subr.bf16.mxu0 %v1011
      %1045 = vmatpush1.bf16.msra.mxu0 %v1010
      %1046 = vmatprep.subr.bf16.mxu0 %v1009
      %1047 = vmatpush1.bf16.msra.mxu0 %v1008
      %1048 = vmatprep.subr.bf16.mxu0 %v1007
      %1049 = vmatpush1.bf16.msra.mxu0 %v1006
      %1050 = vmatprep.subr.bf16.mxu0 %v1005
      %1051 = vmatpush1.bf16.msra.mxu0 %v1004
      %1052 = vmatprep.subr.bf16.mxu0 0
      %1053 = vmatpush2.bf16.msra.mxu0 0
      %1054 = vmatprep.subr.bf16.mxu0 0
      %1055 = vmatpush2.bf16.msra.mxu0 0
      %1056 = vmatprep.subr.bf16.mxu0 0
      %1057 = vmatpush2.bf16.msra.mxu0 0
      %1058 = vmatprep.subr.bf16.mxu0 0
      %1059 = vmatpush2.bf16.msra.mxu0 0
      %1060 = vmatprep.subr.bf16.mxu0 0
      %1061 = vmatpush2.bf16.msra.mxu0 0
      %1062 = vmatprep.subr.bf16.mxu0 0
      %1063 = vmatpush2.bf16.msra.mxu0 0
      %1064 = vmatprep.subr.bf16.mxu0 0
      %1065 = vmatpush2.bf16.msra.mxu0 0
      %1066 = vmatprep.subr.bf16.mxu0 0
      %1067 = vmatpush2.bf16.msra.mxu0 0
      %1068 = vmatprep.mubr.bf16.mxu0 0
      %1069 = vmatmul.mubr.bf16.gmra.mxu0 %v944
      %v1070 = vpop.f32.mrf.mxu0
      %v1071 = vadd.f32 %v949, %v1070
      %v1072 = vpop.f32.mrf.mxu0
      %v1073 = vadd.f32 %v953, %v1072
      %v1074 = vpop.f32.mrf.mxu0
      %v1075 = vadd.f32 %v949, %v1074
      %v1076 = vpop.f32.mrf.mxu0
      %v1077 = vadd.f32 %v953, %v1076
      %1078 = vdwg.mxu0
      %v1079 = vmax.f32 %v1071, 0.0
      %v1080 = vmax.f32 %v1073, 0.0
      %v1081 = vmax.f32 %v1075, 0.0
      %v1082 = vmax.f32 %v1077, 0.0
      %v1083 = vld [vmem:[%s8] sm:$0xf]
      %v1084 = vld [vmem:[%s8 + $0x4] sm:$0xf]
      %v1085 = vld [vmem:[%s8 + $0x8] sm:$0xf]
      %v1086 = vld [vmem:[%s8 + $0xc] sm:$0xf]
      %v1087 = vld [vmem:[%s8 + $0x10] sm:$0xf]
      %v1088 = vld [vmem:[%s8 + $0x14] sm:$0xf]
      %v1089 = vld [vmem:[%s8 + $0x18] sm:$0xf]
      %v1090 = vld [vmem:[%s8 + $0x1c] sm:$0xf]
      %v1091 = vld [vmem:[%s8 + $0x20] sm:$0xf]
      %v1092 = vld [vmem:[%s8 + $0x24] sm:$0xf]
      %v1093 = vld [vmem:[%s8 + $0x28] sm:$0xf]
      %v1094 = vld [vmem:[%s8 + $0x2c] sm:$0xf]
      %v1095 = vld [vmem:[%s8 + $0x30] sm:$0xf]
      %v1096 = vld [vmem:[%s8 + $0x34] sm:$0xf]
      %v1097 = vld [vmem:[%s8 + $0x38] sm:$0xf]
      %v1098 = vld [vmem:[%s8 + $0x3c] sm:$0xf]
      %v1099 = vld [vmem:[%s8 + $0x40] sm:$0xf]
      %v1100 = vld [vmem:[%s8 + $0x44] sm:$0xf]
      %v1101 = vld [vmem:[%s8 + $0x48] sm:$0xf]
      %v1102 = vld [vmem:[%s8 + $0x4c] sm:$0xf]
      %v1103 = vld [vmem:[%s8 + $0x50] sm:$0xf]
      %v1104 = vld [vmem:[%s8 + $0x54] sm:$0xf]
      %v1105 = vld [vmem:[%s8 + $0x58] sm:$0xf]
      %v1106 = vld [vmem:[%s8 + $0x5c] sm:$0xf]
      %v1107 = vld [vmem:[%s8 + $0x60] sm:$0xf]
      %v1108 = vld [vmem:[%s8 + $0x64] sm:$0xf]
      %v1109 = vld [vmem:[%s8 + $0x68] sm:$0xf]
      %v1110 = vld [vmem:[%s8 + $0x6c] sm:$0xf]
      %v1111 = vld [vmem:[%s8 + $0x70] sm:$0xf]
      %v1112 = vld [vmem:[%s8 + $0x74] sm:$0xf]
      %v1113 = vld [vmem:[%s8 + $0x78] sm:$0xf]
      %v1114 = vld [vmem:[%s8 + $0x7c] sm:$0xf]
      %v1115 = vld [vmem:[%s9] sm:$0x1]
      %v1116 = vpack.c.bf16 %v1081, %v1079
      %v1117 = vpack.c.bf16 %v1082, %v1080
      %v1119 = vlaneseq
      %v1120 = vshrl.u32 %v1119, 7
      %v1121 = vsub.s32 0, %v1120
      %v1122 = vrot.slane %v1115, %v1121
      %v1156 = vunpack.c.l.b16 %v1083
      %v1157 = vunpack.c.l.b16 %v1084
      %v1158 = vunpack.c.l.b16 %v1085
      %v1159 = vunpack.c.l.b16 %v1086
      %v1160 = vunpack.c.l.b16 %v1087
      %v1161 = vunpack.c.l.b16 %v1088
      %v1162 = vunpack.c.l.b16 %v1089
      %v1163 = vunpack.c.l.b16 %v1090
      %v1164 = vunpack.c.l.b16 %v1091
      %v1165 = vunpack.c.l.b16 %v1092
      %v1166 = vunpack.c.l.b16 %v1093
      %v1167 = vunpack.c.l.b16 %v1094
      %v1168 = vunpack.c.l.b16 %v1095
      %v1169 = vunpack.c.l.b16 %v1096
      %v1170 = vunpack.c.l.b16 %v1097
      %v1171 = vunpack.c.l.b16 %v1098
      %v1172 = vunpack.c.l.b16 %v1099
      %v1173 = vunpack.c.l.b16 %v1100
      %v1174 = vunpack.c.l.b16 %v1101
      %v1175 = vunpack.c.l.b16 %v1102
      %v1176 = vunpack.c.l.b16 %v1103
      %v1177 = vunpack.c.l.b16 %v1104
      %v1178 = vunpack.c.l.b16 %v1105
      %v1179 = vunpack.c.l.b16 %v1106
      %v1180 = vunpack.c.l.b16 %v1107
      %v1181 = vunpack.c.l.b16 %v1108
      %v1182 = vunpack.c.l.b16 %v1109
      %v1183 = vunpack.c.l.b16 %v1110
      %v1184 = vunpack.c.l.b16 %v1111
      %v1185 = vunpack.c.l.b16 %v1112
      %v1186 = vunpack.c.l.b16 %v1113
      %v1187 = vunpack.c.l.b16 %v1114
      %v1188 = vpack.c.b16 %v1157, %v1156
      %v1189 = vpack.c.b16 %v1159, %v1158
      %v1190 = vpack.c.b16 %v1161, %v1160
      %v1191 = vpack.c.b16 %v1163, %v1162
      %v1192 = vpack.c.b16 %v1165, %v1164
      %v1193 = vpack.c.b16 %v1167, %v1166
      %v1194 = vpack.c.b16 %v1169, %v1168
      %v1195 = vpack.c.b16 %v1171, %v1170
      %v1196 = vpack.c.b16 %v1173, %v1172
      %v1197 = vpack.c.b16 %v1175, %v1174
      %v1198 = vpack.c.b16 %v1177, %v1176
      %v1199 = vpack.c.b16 %v1179, %v1178
      %v1200 = vpack.c.b16 %v1181, %v1180
      %v1201 = vpack.c.b16 %v1183, %v1182
      %v1202 = vpack.c.b16 %v1185, %v1184
      %v1203 = vpack.c.b16 %v1187, %v1186
      %1220 = vmatprep.subr.bf16.mxu0 0
      %1221 = vmatpush1.bf16.msra.mxu0 %v1195
      %1222 = vmatprep.subr.bf16.mxu0 0
      %1223 = vmatpush1.bf16.msra.mxu0 %v1194
      %1224 = vmatprep.subr.bf16.mxu0 0
      %1225 = vmatpush1.bf16.msra.mxu0 %v1193
      %1226 = vmatprep.subr.bf16.mxu0 0
      %1227 = vmatpush1.bf16.msra.mxu0 %v1192
      %1228 = vmatprep.subr.bf16.mxu0 0
      %1229 = vmatpush1.bf16.msra.mxu0 %v1191
      %1230 = vmatprep.subr.bf16.mxu0 0
      %1231 = vmatpush1.bf16.msra.mxu0 %v1190
      %1232 = vmatprep.subr.bf16.mxu0 0
      %1233 = vmatpush1.bf16.msra.mxu0 %v1189
      %1234 = vmatprep.subr.bf16.mxu0 0
      %1235 = vmatpush1.bf16.msra.mxu0 %v1188
      %1236 = vmatprep.subr.bf16.mxu0 0
      %1237 = vmatpush2.bf16.msra.mxu0 %v1203
      %1238 = vmatprep.subr.bf16.mxu0 0
      %1239 = vmatpush2.bf16.msra.mxu0 %v1202
      %1240 = vmatprep.subr.bf16.mxu0 0
      %1241 = vmatpush2.bf16.msra.mxu0 %v1201
      %1242 = vmatprep.subr.bf16.mxu0 0
      %1243 = vmatpush2.bf16.msra.mxu0 %v1200
      %1244 = vmatprep.subr.bf16.mxu0 0
      %1245 = vmatpush2.bf16.msra.mxu0 %v1199
      %1246 = vmatprep.subr.bf16.mxu0 0
      %1247 = vmatpush2.bf16.msra.mxu0 %v1198
      %1248 = vmatprep.subr.bf16.mxu0 0
      %1249 = vmatpush2.bf16.msra.mxu0 %v1197
      %1250 = vmatprep.subr.bf16.mxu0 0
      %1251 = vmatpush2.bf16.msra.mxu0 %v1196
      %1252 = vmatprep.mubr.bf16.mxu0 %v1117
      %1253 = vmatmul.mubr.bf16.gmra.mxu0 %v1116
      %v1254 = vpop.f32.mrf.mxu0
      %v1255 = vadd.f32 %v1122, %v1254
      %v1256 = vpop.f32.mrf.mxu0
      %v1257 = vpop.f32.mrf.mxu0
      %v1258 = vadd.f32 %v1122, %v1257
      %v1259 = vpop.f32.mrf.mxu0
      %1260 = vdwg.mxu0
      %v1261 = vld [vmem:[%s10] sm:$0x1]
      %v1262 = vld [vmem:[%s11] sm:$0x1]
      %v1264 = vlaneseq
      %v1265 = vshrl.u32 %v1264, 7
      %v1266 = vsub.s32 0, %v1265
      %v1267 = vrot.slane %v1262, %v1266
      %v1270 = vsel %vm793, %v1261, 0
      %1272 = vmatprep.subr.bf16.mxu0 0
      %1273 = vmatpush1.bf16.msra.mxu0 0
      %1274 = vmatprep.subr.bf16.mxu0 0
      %1275 = vmatpush1.bf16.msra.mxu0 0
      %1276 = vmatprep.subr.bf16.mxu0 0
      %1277 = vmatpush1.bf16.msra.mxu0 0
      %1278 = vmatprep.subr.bf16.mxu0 0
      %1279 = vmatpush1.bf16.msra.mxu0 0
      %1280 = vmatprep.subr.bf16.mxu0 0
      %1281 = vmatpush1.bf16.msra.mxu0 0
      %1282 = vmatprep.subr.bf16.mxu0 0
      %1283 = vmatpush1.bf16.msra.mxu0 0
      %1284 = vmatprep.subr.bf16.mxu0 0
      %1285 = vmatpush1.bf16.msra.mxu0 0
      %1286 = vmatprep.subr.bf16.mxu0 0
      %1287 = vmatpush1.bf16.msra.mxu0 %v1270
      %1288 = vmatprep.subr.bf16.mxu0 0
      %1289 = vmatpush2.bf16.msra.mxu0 0
      %1290 = vmatprep.subr.bf16.mxu0 0
      %1291 = vmatpush2.bf16.msra.mxu0 0
      %1292 = vmatprep.subr.bf16.mxu0 0
      %1293 = vmatpush2.bf16.msra.mxu0 0
      %1294 = vmatprep.subr.bf16.mxu0 0
      %1295 = vmatpush2.bf16.msra.mxu0 0
      %1296 = vmatprep.subr.bf16.mxu0 0
      %1297 = vmatpush2.bf16.msra.mxu0 0
      %1298 = vmatprep.subr.bf16.mxu0 0
      %1299 = vmatpush2.bf16.msra.mxu0 0
      %1300 = vmatprep.subr.bf16.mxu0 0
      %1301 = vmatpush2.bf16.msra.mxu0 0
      %1302 = vmatprep.subr.bf16.mxu0 0
      %1303 = vmatpush2.bf16.msra.mxu0 0
      %1304 = vmatprep.mubr.bf16.mxu0 0
      %1305 = vmatmul.mubr.bf16.gmra.mxu0 %v791
      %v1306 = vpop.f32.mrf.mxu0
      %v1307 = vadd.f32 %v1267, %v1306
      %v1308 = vpop.f32.mrf.mxu0
      %v1309 = vpop.f32.mrf.mxu0
      %v1310 = vadd.f32 %v1267, %v1309
      %v1311 = vpop.f32.mrf.mxu0
      %1312 = vdwg.mxu0
      %v1313 = vmax.f32 %v1307, 0.0
      %v1314 = vmax.f32 %v1310, 0.0
      %v1315 = vld [vmem:[%s12] sm:$0xf]
      %v1316 = vld [vmem:[%s12 + $0x4] sm:$0xf]
      %v1317 = vld [vmem:[%s12 + $0x8] sm:$0xf]
      %v1318 = vld [vmem:[%s12 + $0xc] sm:$0xf]
      %v1319 = vld [vmem:[%s12 + $0x10] sm:$0xf]
      %v1320 = vld [vmem:[%s12 + $0x14] sm:$0xf]
      %v1321 = vld [vmem:[%s12 + $0x18] sm:$0xf]
      %v1322 = vld [vmem:[%s12 + $0x1c] sm:$0xf]
      %v1323 = vld [vmem:[%s13] sm:$0x1]
      %v1324 = vpack.c.bf16 %v1314, %v1313
      %v1326 = vlaneseq
      %v1327 = vshrl.u32 %v1326, 7
      %v1328 = vsub.s32 0, %v1327
      %v1329 = vrot.slane %v1323, %v1328
      %v1339 = vunpack.c.l.b16 %v1315
      %v1340 = vunpack.c.l.b16 %v1316
      %v1341 = vunpack.c.l.b16 %v1317
      %v1342 = vunpack.c.l.b16 %v1318
      %v1343 = vunpack.c.l.b16 %v1319
      %v1344 = vunpack.c.l.b16 %v1320
      %v1345 = vunpack.c.l.b16 %v1321
      %v1346 = vunpack.c.l.b16 %v1322
      %v1347 = vpack.c.b16 %v1340, %v1339
      %v1348 = vpack.c.b16 %v1342, %v1341
      %v1349 = vpack.c.b16 %v1344, %v1343
      %v1350 = vpack.c.b16 %v1346, %v1345
      %v1356 = vsel %vm880, %v1324, 0
      %1358 = vmatprep.subr.bf16.mxu0 0
      %1359 = vmatpush1.bf16.msra.mxu0 0
      %1360 = vmatprep.subr.bf16.mxu0 0
      %1361 = vmatpush1.bf16.msra.mxu0 0
      %1362 = vmatprep.subr.bf16.mxu0 0
      %1363 = vmatpush1.bf16.msra.mxu0 0
      %1364 = vmatprep.subr.bf16.mxu0 0
      %1365 = vmatpush1.bf16.msra.mxu0 0
      %1366 = vmatprep.subr.bf16.mxu0 0
      %1367 = vmatpush1.bf16.msra.mxu0 %v1350
      %1368 = vmatprep.subr.bf16.mxu0 0
      %1369 = vmatpush1.bf16.msra.mxu0 %v1349
      %1370 = vmatprep.subr.bf16.mxu0 0
      %1371 = vmatpush1.bf16.msra.mxu0 %v1348
      %1372 = vmatprep.subr.bf16.mxu0 0
      %1373 = vmatpush1.bf16.msra.mxu0 %v1347
      %1374 = vmatprep.subr.bf16.mxu0 0
      %1375 = vmatpush2.bf16.msra.mxu0 0
      %1376 = vmatprep.subr.bf16.mxu0 0
      %1377 = vmatpush2.bf16.msra.mxu0 0
      %1378 = vmatprep.subr.bf16.mxu0 0
      %1379 = vmatpush2.bf16.msra.mxu0 0
      %1380 = vmatprep.subr.bf16.mxu0 0
      %1381 = vmatpush2.bf16.msra.mxu0 0
      %1382 = vmatprep.subr.bf16.mxu0 0
      %1383 = vmatpush2.bf16.msra.mxu0 0
      %1384 = vmatprep.subr.bf16.mxu0 0
      %1385 = vmatpush2.bf16.msra.mxu0 0
      %1386 = vmatprep.subr.bf16.mxu0 0
      %1387 = vmatpush2.bf16.msra.mxu0 0
      %1388 = vmatprep.subr.bf16.mxu0 0
      %1389 = vmatpush2.bf16.msra.mxu0 0
      %1390 = vmatprep.mubr.bf16.mxu0 0
      %1391 = vmatmul.mubr.bf16.gmra.mxu0 %v1356
      %v1392 = vpop.f32.mrf.mxu0
      %v1393 = vadd.f32 %v1329, %v1392
      %v1394 = vpop.f32.mrf.mxu0
      %v1395 = vpop.f32.mrf.mxu0
      %v1396 = vadd.f32 %v1329, %v1395
      %v1397 = vpop.f32.mrf.mxu0
      %1398 = vdwg.mxu0
      %v1399 = vmax.f32 %v1393, 0.0
      %v1400 = vmax.f32 %v1396, 0.0
      %v1401 = vld [vmem:[%s14] sm:$0xff]
      %v1402 = vld [vmem:[%s14 + $0x8] sm:$0xff]
      %v1403 = vld [vmem:[%s14 + $0x10] sm:$0xff]
      %v1404 = vld [vmem:[%s14 + $0x18] sm:$0xff]
      %v1405 = vld [vmem:[%s14 + $0x20] sm:$0xff]
      %v1406 = vld [vmem:[%s14 + $0x28] sm:$0xff]
      %v1407 = vld [vmem:[%s14 + $0x30] sm:$0xff]
      %v1408 = vld [vmem:[%s14 + $0x38] sm:$0xff]
      %v1409 = vld [vmem:[%s14 + $0x40] sm:$0xff]
      %v1410 = vld [vmem:[%s14 + $0x48] sm:$0xff]
      %v1411 = vld [vmem:[%s14 + $0x50] sm:$0xff]
      %v1412 = vld [vmem:[%s14 + $0x58] sm:$0xff]
      %v1413 = vld [vmem:[%s14 + $0x60] sm:$0xff]
      %v1414 = vld [vmem:[%s14 + $0x68] sm:$0xff]
      %v1415 = vld [vmem:[%s14 + $0x70] sm:$0xff]
      %v1416 = vld [vmem:[%s14 + $0x78] sm:$0xff]
      %v1417 = vld [vmem:[%s15] sm:$0x3]
      %v1418 = vpack.c.bf16 %v1400, %v1399
      %v1420 = vlaneseq
      %v1421 = vshrl.u32 %v1420, 7
      %v1422 = vsub.s32 0, %v1421
      %v1423 = vrot.slane %v1417, %v1422
      %v1424 = vlaneseq
      %v1425 = vshrl.u32 %v1424, 7
      %v1426 = vsub.s32 1, %v1425
      %v1427 = vrot.slane %v1417, %v1426
      %v1446 = vunpack.c.l.b16 %v1401
      %v1447 = vunpack.c.h.b16 %v1401
      %v1448 = vunpack.c.l.b16 %v1402
      %v1449 = vunpack.c.h.b16 %v1402
      %v1450 = vunpack.c.l.b16 %v1403
      %v1451 = vunpack.c.h.b16 %v1403
      %v1452 = vunpack.c.l.b16 %v1404
      %v1453 = vunpack.c.h.b16 %v1404
      %v1454 = vunpack.c.l.b16 %v1405
      %v1455 = vunpack.c.h.b16 %v1405
      %v1456 = vunpack.c.l.b16 %v1406
      %v1457 = vunpack.c.h.b16 %v1406
      %v1458 = vunpack.c.l.b16 %v1407
      %v1459 = vunpack.c.h.b16 %v1407
      %v1460 = vunpack.c.l.b16 %v1408
      %v1461 = vunpack.c.h.b16 %v1408
      %v1462 = vunpack.c.l.b16 %v1409
      %v1463 = vunpack.c.h.b16 %v1409
      %v1464 = vunpack.c.l.b16 %v1410
      %v1465 = vunpack.c.h.b16 %v1410
      %v1466 = vunpack.c.l.b16 %v1411
      %v1467 = vunpack.c.h.b16 %v1411
      %v1468 = vunpack.c.l.b16 %v1412
      %v1469 = vunpack.c.h.b16 %v1412
      %v1470 = vunpack.c.l.b16 %v1413
      %v1471 = vunpack.c.h.b16 %v1413
      %v1472 = vunpack.c.l.b16 %v1414
      %v1473 = vunpack.c.h.b16 %v1414
      %v1474 = vunpack.c.l.b16 %v1415
      %v1475 = vunpack.c.h.b16 %v1415
      %v1476 = vunpack.c.l.b16 %v1416
      %v1477 = vunpack.c.h.b16 %v1416
      %v1478 = vpack.c.b16 %v1448, %v1446
      %v1479 = vpack.c.b16 %v1449, %v1447
      %v1480 = vpack.c.b16 %v1452, %v1450
      %v1481 = vpack.c.b16 %v1453, %v1451
      %v1482 = vpack.c.b16 %v1456, %v1454
      %v1483 = vpack.c.b16 %v1457, %v1455
      %v1484 = vpack.c.b16 %v1460, %v1458
      %v1485 = vpack.c.b16 %v1461, %v1459
      %v1486 = vpack.c.b16 %v1464, %v1462
      %v1487 = vpack.c.b16 %v1465, %v1463
      %v1488 = vpack.c.b16 %v1468, %v1466
      %v1489 = vpack.c.b16 %v1469, %v1467
      %v1490 = vpack.c.b16 %v1472, %v1470
      %v1491 = vpack.c.b16 %v1473, %v1471
      %v1492 = vpack.c.b16 %v1476, %v1474
      %v1493 = vpack.c.b16 %v1477, %v1475
      %1510 = vmatprep.subr.bf16.mxu0 %v1493
      %1511 = vmatpush1.bf16.msra.mxu0 %v1492
      %1512 = vmatprep.subr.bf16.mxu0 %v1491
      %1513 = vmatpush1.bf16.msra.mxu0 %v1490
      %1514 = vmatprep.subr.bf16.mxu0 %v1489
      %1515 = vmatpush1.bf16.msra.mxu0 %v1488
      %1516 = vmatprep.subr.bf16.mxu0 %v1487
      %1517 = vmatpush1.bf16.msra.mxu0 %v1486
      %1518 = vmatprep.subr.bf16.mxu0 %v1485
      %1519 = vmatpush1.bf16.msra.mxu0 %v1484
      %1520 = vmatprep.subr.bf16.mxu0 %v1483
      %1521 = vmatpush1.bf16.msra.mxu0 %v1482
      %1522 = vmatprep.subr.bf16.mxu0 %v1481
      %1523 = vmatpush1.bf16.msra.mxu0 %v1480
      %1524 = vmatprep.subr.bf16.mxu0 %v1479
      %1525 = vmatpush1.bf16.msra.mxu0 %v1478
      %1526 = vmatprep.subr.bf16.mxu0 0
      %1527 = vmatpush2.bf16.msra.mxu0 0
      %1528 = vmatprep.subr.bf16.mxu0 0
      %1529 = vmatpush2.bf16.msra.mxu0 0
      %1530 = vmatprep.subr.bf16.mxu0 0
      %1531 = vmatpush2.bf16.msra.mxu0 0
      %1532 = vmatprep.subr.bf16.mxu0 0
      %1533 = vmatpush2.bf16.msra.mxu0 0
      %1534 = vmatprep.subr.bf16.mxu0 0
      %1535 = vmatpush2.bf16.msra.mxu0 0
      %1536 = vmatprep.subr.bf16.mxu0 0
      %1537 = vmatpush2.bf16.msra.mxu0 0
      %1538 = vmatprep.subr.bf16.mxu0 0
      %1539 = vmatpush2.bf16.msra.mxu0 0
      %1540 = vmatprep.subr.bf16.mxu0 0
      %1541 = vmatpush2.bf16.msra.mxu0 0
      %1542 = vmatprep.mubr.bf16.mxu0 0
      %1543 = vmatmul.mubr.bf16.gmra.mxu0 %v1418
      %v1544 = vpop.f32.mrf.mxu0
      %v1545 = vadd.f32 %v1423, %v1544
      %v1546 = vpop.f32.mrf.mxu0
      %v1547 = vadd.f32 %v1427, %v1546
      %v1548 = vpop.f32.mrf.mxu0
      %v1549 = vadd.f32 %v1423, %v1548
      %v1550 = vpop.f32.mrf.mxu0
      %v1551 = vadd.f32 %v1427, %v1550
      %1552 = vdwg.mxu0
      %v1553 = vmax.f32 %v1545, 0.0
      %v1554 = vmax.f32 %v1547, 0.0
      %v1555 = vmax.f32 %v1549, 0.0
      %v1556 = vmax.f32 %v1551, 0.0
      %v1557 = vld [vmem:[%s16] sm:$0xf]
      %v1558 = vld [vmem:[%s16 + $0x4] sm:$0xf]
      %v1559 = vld [vmem:[%s16 + $0x8] sm:$0xf]
      %v1560 = vld [vmem:[%s16 + $0xc] sm:$0xf]
      %v1561 = vld [vmem:[%s16 + $0x10] sm:$0xf]
      %v1562 = vld [vmem:[%s16 + $0x14] sm:$0xf]
      %v1563 = vld [vmem:[%s16 + $0x18] sm:$0xf]
      %v1564 = vld [vmem:[%s16 + $0x1c] sm:$0xf]
      %v1565 = vld [vmem:[%s16 + $0x20] sm:$0xf]
      %v1566 = vld [vmem:[%s16 + $0x24] sm:$0xf]
      %v1567 = vld [vmem:[%s16 + $0x28] sm:$0xf]
      %v1568 = vld [vmem:[%s16 + $0x2c] sm:$0xf]
      %v1569 = vld [vmem:[%s16 + $0x30] sm:$0xf]
      %v1570 = vld [vmem:[%s16 + $0x34] sm:$0xf]
      %v1571 = vld [vmem:[%s16 + $0x38] sm:$0xf]
      %v1572 = vld [vmem:[%s16 + $0x3c] sm:$0xf]
      %v1573 = vld [vmem:[%s16 + $0x40] sm:$0xf]
      %v1574 = vld [vmem:[%s16 + $0x44] sm:$0xf]
      %v1575 = vld [vmem:[%s16 + $0x48] sm:$0xf]
      %v1576 = vld [vmem:[%s16 + $0x4c] sm:$0xf]
      %v1577 = vld [vmem:[%s16 + $0x50] sm:$0xf]
      %v1578 = vld [vmem:[%s16 + $0x54] sm:$0xf]
      %v1579 = vld [vmem:[%s16 + $0x58] sm:$0xf]
      %v1580 = vld [vmem:[%s16 + $0x5c] sm:$0xf]
      %v1581 = vld [vmem:[%s16 + $0x60] sm:$0xf]
      %v1582 = vld [vmem:[%s16 + $0x64] sm:$0xf]
      %v1583 = vld [vmem:[%s16 + $0x68] sm:$0xf]
      %v1584 = vld [vmem:[%s16 + $0x6c] sm:$0xf]
      %v1585 = vld [vmem:[%s16 + $0x70] sm:$0xf]
      %v1586 = vld [vmem:[%s16 + $0x74] sm:$0xf]
      %v1587 = vld [vmem:[%s16 + $0x78] sm:$0xf]
      %v1588 = vld [vmem:[%s16 + $0x7c] sm:$0xf]
      %v1589 = vld [vmem:[%s17] sm:$0x1]
      %v1590 = vpack.c.bf16 %v1555, %v1553
      %v1591 = vpack.c.bf16 %v1556, %v1554
      %v1593 = vlaneseq
      %v1594 = vshrl.u32 %v1593, 7
      %v1595 = vsub.s32 0, %v1594
      %v1596 = vrot.slane %v1589, %v1595
      %v1630 = vunpack.c.l.b16 %v1557
      %v1631 = vunpack.c.l.b16 %v1558
      %v1632 = vunpack.c.l.b16 %v1559
      %v1633 = vunpack.c.l.b16 %v1560
      %v1634 = vunpack.c.l.b16 %v1561
      %v1635 = vunpack.c.l.b16 %v1562
      %v1636 = vunpack.c.l.b16 %v1563
      %v1637 = vunpack.c.l.b16 %v1564
      %v1638 = vunpack.c.l.b16 %v1565
      %v1639 = vunpack.c.l.b16 %v1566
      %v1640 = vunpack.c.l.b16 %v1567
      %v1641 = vunpack.c.l.b16 %v1568
      %v1642 = vunpack.c.l.b16 %v1569
      %v1643 = vunpack.c.l.b16 %v1570
      %v1644 = vunpack.c.l.b16 %v1571
      %v1645 = vunpack.c.l.b16 %v1572
      %v1646 = vunpack.c.l.b16 %v1573
      %v1647 = vunpack.c.l.b16 %v1574
      %v1648 = vunpack.c.l.b16 %v1575
      %v1649 = vunpack.c.l.b16 %v1576
      %v1650 = vunpack.c.l.b16 %v1577
      %v1651 = vunpack.c.l.b16 %v1578
      %v1652 = vunpack.c.l.b16 %v1579
      %v1653 = vunpack.c.l.b16 %v1580
      %v1654 = vunpack.c.l.b16 %v1581
      %v1655 = vunpack.c.l.b16 %v1582
      %v1656 = vunpack.c.l.b16 %v1583
      %v1657 = vunpack.c.l.b16 %v1584
      %v1658 = vunpack.c.l.b16 %v1585
      %v1659 = vunpack.c.l.b16 %v1586
      %v1660 = vunpack.c.l.b16 %v1587
      %v1661 = vunpack.c.l.b16 %v1588
      %v1662 = vpack.c.b16 %v1631, %v1630
      %v1663 = vpack.c.b16 %v1633, %v1632
      %v1664 = vpack.c.b16 %v1635, %v1634
      %v1665 = vpack.c.b16 %v1637, %v1636
      %v1666 = vpack.c.b16 %v1639, %v1638
      %v1667 = vpack.c.b16 %v1641, %v1640
      %v1668 = vpack.c.b16 %v1643, %v1642
      %v1669 = vpack.c.b16 %v1645, %v1644
      %v1670 = vpack.c.b16 %v1647, %v1646
      %v1671 = vpack.c.b16 %v1649, %v1648
      %v1672 = vpack.c.b16 %v1651, %v1650
      %v1673 = vpack.c.b16 %v1653, %v1652
      %v1674 = vpack.c.b16 %v1655, %v1654
      %v1675 = vpack.c.b16 %v1657, %v1656
      %v1676 = vpack.c.b16 %v1659, %v1658
      %v1677 = vpack.c.b16 %v1661, %v1660
      %1694 = vmatprep.subr.bf16.mxu0 0
      %1695 = vmatpush1.bf16.msra.mxu0 %v1669
      %1696 = vmatprep.subr.bf16.mxu0 0
      %1697 = vmatpush1.bf16.msra.mxu0 %v1668
      %1698 = vmatprep.subr.bf16.mxu0 0
      %1699 = vmatpush1.bf16.msra.mxu0 %v1667
      %1700 = vmatprep.subr.bf16.mxu0 0
      %1701 = vmatpush1.bf16.msra.mxu0 %v1666
      %1702 = vmatprep.subr.bf16.mxu0 0
      %1703 = vmatpush1.bf16.msra.mxu0 %v1665
      %1704 = vmatprep.subr.bf16.mxu0 0
      %1705 = vmatpush1.bf16.msra.mxu0 %v1664
      %1706 = vmatprep.subr.bf16.mxu0 0
      %1707 = vmatpush1.bf16.msra.mxu0 %v1663
      %1708 = vmatprep.subr.bf16.mxu0 0
      %1709 = vmatpush1.bf16.msra.mxu0 %v1662
      %1710 = vmatprep.subr.bf16.mxu0 0
      %1711 = vmatpush2.bf16.msra.mxu0 %v1677
      %1712 = vmatprep.subr.bf16.mxu0 0
      %1713 = vmatpush2.bf16.msra.mxu0 %v1676
      %1714 = vmatprep.subr.bf16.mxu0 0
      %1715 = vmatpush2.bf16.msra.mxu0 %v1675
      %1716 = vmatprep.subr.bf16.mxu0 0
      %1717 = vmatpush2.bf16.msra.mxu0 %v1674
      %1718 = vmatprep.subr.bf16.mxu0 0
      %1719 = vmatpush2.bf16.msra.mxu0 %v1673
      %1720 = vmatprep.subr.bf16.mxu0 0
      %1721 = vmatpush2.bf16.msra.mxu0 %v1672
      %1722 = vmatprep.subr.bf16.mxu0 0
      %1723 = vmatpush2.bf16.msra.mxu0 %v1671
      %1724 = vmatprep.subr.bf16.mxu0 0
      %1725 = vmatpush2.bf16.msra.mxu0 %v1670
      %1726 = vmatprep.mubr.bf16.mxu0 %v1591
      %1727 = vmatmul.mubr.bf16.gmra.mxu0 %v1590
      %v1728 = vpop.f32.mrf.mxu0
      %v1729 = vadd.f32 %v1596, %v1728
      %v1730 = vpop.f32.mrf.mxu0
      %v1731 = vpop.f32.mrf.mxu0
      %v1732 = vadd.f32 %v1596, %v1731
      %v1733 = vpop.f32.mrf.mxu0
      %1734 = vdwg.mxu0
      %v1735 = vmul.f32 %v1729, %v707
      %v1736 = vmul.f32 %v1732, %v708
      %v1737 = vsel %vm735, %v1735, 0.0
      %v1738 = vsel %vm735, %v1736, 0.0
      %v1739 = vadd.f32 %v1737, %v1738
      %v1740 = vrot.slane %v1739, 4
      %v1741 = vadd.f32 %v1739, %v1740
      %v1742 = vrot.slane %v1741, 2
      %v1743 = vadd.f32 %v1741, %v1742
      %v1744 = vrot.slane %v1743, 1
      %v1745 = vadd.f32 %v1743, %v1744
      %v1746 = vsel %vm735, %v1745, 0.0
      %1747 = vadd.xlane.f32.xlu0 %v1746
      %v1748 = vpop.xlane.xlu0 %1747
      %v1749 = vmul.f32 %v1748, 0.0625
      %v1750 = vmul.f32 %v1255, %v1749
      %v1751 = vmul.f32 %v1258, %v1749
      %v1752 = vadd.f32 %v1750, 0.0
      %v1753 = vadd.f32 %v1751, 0.0
      %1756 = vrot.lane.b32.xlu0 %v707, 32
      %v1757 = vpop.permute.xlu0 %1756
      %1758 = vrot.lane.b32.xlu0 %v708, 32
      %v1759 = vpop.permute.xlu0 %1758
      %v1762 = vmul.f32 %v1729, %v1757
      %v1763 = vmul.f32 %v1732, %v1759
      %vm1764 = vcmask 523520
      %v1765 = vsel %vm1764, %v1762, 0.0
      %v1766 = vsel %vm1764, %v1763, 0.0
      %v1767 = vadd.f32 %v1765, %v1766
      %v1768 = vrot.slane %v1767, 4
      %v1769 = vadd.f32 %v1767, %v1768
      %v1770 = vrot.slane %v1769, 2
      %v1771 = vadd.f32 %v1769, %v1770
      %v1772 = vrot.slane %v1771, 1
      %v1773 = vadd.f32 %v1771, %v1772
      %1775 = vrot.lane.b32.xlu0 %v1773, 96
      %v1776 = vpop.permute.xlu0 %1775
      %v1778 = vsel %vm735, %v1776, 0.0
      %1779 = vadd.xlane.f32.xlu0 %v1778
      %v1780 = vpop.xlane.xlu0 %1779
      %v1781 = vmul.f32 %v1780, 0.0625
      %v1782 = vmul.f32 %v1255, %v1781
      %v1783 = vmul.f32 %v1258, %v1781
      %1786 = vrot.lane.b32.xlu0 %v1782, 96
      %v1787 = vpop.permute.xlu0 %1786
      %1788 = vrot.lane.b32.xlu0 %v1783, 96
      %v1789 = vpop.permute.xlu0 %1788
      %v1792 = vadd.f32 %v1752, %v1787
      %v1793 = vadd.f32 %v1753, %v1789
      %1794 = vrot.lane.b32.xlu0 %v707, 64
      %v1795 = vpop.permute.xlu0 %1794
      %1796 = vrot.lane.b32.xlu0 %v708, 64
      %v1797 = vpop.permute.xlu0 %1796
      %v1800 = vmul.f32 %v1729, %v1795
      %v1801 = vmul.f32 %v1732, %v1797
      %vm1802 = vcmask 785920
      %v1803 = vsel %vm1802, %v1800, 0.0
      %v1804 = vsel %vm1802, %v1801, 0.0
      %v1805 = vadd.f32 %v1803, %v1804
      %v1806 = vrot.slane %v1805, 4
      %v1807 = vadd.f32 %v1805, %v1806
      %v1808 = vrot.slane %v1807, 2
      %v1809 = vadd.f32 %v1807, %v1808
      %v1810 = vrot.slane %v1809, 1
      %v1811 = vadd.f32 %v1809, %v1810
      %1813 = vrot.lane.b32.xlu0 %v1811, 64
      %v1814 = vpop.permute.xlu0 %1813
      %v1816 = vsel %vm735, %v1814, 0.0
      %1817 = vadd.xlane.f32.xlu0 %v1816
      %v1818 = vpop.xlane.xlu0 %1817
      %v1819 = vmul.f32 %v1818, 0.0625
      %v1820 = vmul.f32 %v1255, %v1819
      %v1821 = vmul.f32 %v1258, %v1819
      %1824 = vrot.lane.b32.xlu0 %v1820, 64
      %v1825 = vpop.permute.xlu0 %1824
      %1826 = vrot.lane.b32.xlu0 %v1821, 64
      %v1827 = vpop.permute.xlu0 %1826
      %v1830 = vadd.f32 %v1792, %v1825
      %v1831 = vadd.f32 %v1793, %v1827
      %1832 = vrot.lane.b32.xlu0 %v707, 96
      %v1833 = vpop.permute.xlu0 %1832
      %1834 = vrot.lane.b32.xlu0 %v708, 96
      %v1835 = vpop.permute.xlu0 %1834
      %v1838 = vmul.f32 %v1729, %v1833
      %v1839 = vmul.f32 %v1732, %v1835
      %vm1840 = vcmask 1048320
      %v1841 = vsel %vm1840, %v1838, 0.0
      %v1842 = vsel %vm1840, %v1839, 0.0
      %v1843 = vadd.f32 %v1841, %v1842
      %v1844 = vrot.slane %v1843, 4
      %v1845 = vadd.f32 %v1843, %v1844
      %v1846 = vrot.slane %v1845, 2
      %v1847 = vadd.f32 %v1845, %v1846
      %v1848 = vrot.slane %v1847, 1
      %v1849 = vadd.f32 %v1847, %v1848
      %1851 = vrot.lane.b32.xlu0 %v1849, 32
      %v1852 = vpop.permute.xlu0 %1851
      %v1854 = vsel %vm735, %v1852, 0.0
      %1855 = vadd.xlane.f32.xlu0 %v1854
      %v1856 = vpop.xlane.xlu0 %1855
      %v1857 = vmul.f32 %v1856, 0.0625
      %v1858 = vmul.f32 %v1255, %v1857
      %v1859 = vmul.f32 %v1258, %v1857
      %1862 = vrot.lane.b32.xlu0 %v1858, 32
      %v1863 = vpop.permute.xlu0 %1862
      %1864 = vrot.lane.b32.xlu0 %v1859, 32
      %v1865 = vpop.permute.xlu0 %1864
      %v1868 = vadd.f32 %v1830, %v1863
      %v1869 = vadd.f32 %v1831, %v1865
      %v1870 = vadd.f32 %v774, %v1868
      %v1871 = vadd.f32 %v777, %v1869
      %v1872 = vsel %vm735, %v1870, 0.0
      %1873 = vadd.xlane.f32.xlu0 %v1872
      %v1874 = vpop.xlane.xlu0 %1873
      %v1875 = vsel %vm735, %v1871, 0.0
      %1876 = vadd.xlane.f32.xlu0 %v1875
      %v1877 = vpop.xlane.xlu0 %1876
      %v1878 = vrcp.pop 32.0
      %v1879 = vmul.f32 %v1874, %v1878
      %v1880 = vmul.f32 %v1877, %v1878
      %v1881 = vsub.f32 %v1870, %v1879
      %v1882 = vsub.f32 %v1871, %v1880
      %v1883 = vmul.f32 %v1881, %v1881
      %v1884 = vmul.f32 %v1882, %v1882
      %v1885 = vsel %vm735, %v1883, 0.0
      %1886 = vadd.xlane.f32.xlu0 %v1885
      %v1887 = vpop.xlane.xlu0 %1886
      %v1888 = vsel %vm735, %v1884, 0.0
      %1889 = vadd.xlane.f32.xlu0 %v1888
      %v1890 = vpop.xlane.xlu0 %1889
      %v1891 = vmul.f32 %v1887, %v1878
      %v1892 = vmul.f32 %v1890, %v1878
      %v1893 = vadd.f32 %v1891, 1e-05
      %v1894 = vadd.f32 %v1892, 1e-05
      %v1895 = vrsqrt.pop %v1893
      %v1896 = vrsqrt.pop %v1894
      %v1897 = vmul.f32 %v1881, %v1895
      %v1898 = vmul.f32 %v1882, %v1896
      %v1900 = vlaneseq
      %v1901 = vshrl.u32 %v1900, 7
      %v1902 = vsub.s32 0, %v1901
      %v1903 = vrot.slane %v714, %v1902
      %v1905 = vmul.f32 %v1897, %v1903
      %v1906 = vmul.f32 %v1898, %v1903
      %v1908 = vlaneseq
      %v1909 = vshrl.u32 %v1908, 7
      %v1910 = vsub.s32 0, %v1909
      %v1911 = vrot.slane %v715, %v1910
      %v1913 = vadd.f32 %v1905, %v1911
      %v1914 = vadd.f32 %v1906, %v1911
      %v1915 = vmax.f32 %v1913, 0.0
      %v1916 = vmax.f32 %v1914, 0.0
      %1917 = vst.msk [vmem:[%s703] sm:$0xff] %vm735, %v1915
      %1918 = vst.msk [vmem:[%s703 + $0x8] sm:$0xff] %vm735, %v1916
      %p1919 = scmp.lt.s32.totalorder %s33, 1
      %s1920 = scalar_select %p1919, %s33, 1
      %s1921 = smul.addr %s1920, 2
      %s1922 = smul.addr %s1921, 8
      %s1923 = scalar_lea.vmem %s22, %s1922
      // Predicated region
      $region109: #{lno1d_forward.5} parent=107 // pred_check
        %p1924 = pneg %p523
      $region110: #{lno1d_forward.5} parent=107 // pred_check_branch
        %1926 = sbr.rel (%p1924) target = $region112
      $region111: #{lno1d_forward.5} parent=107 // pred_region
        _
      $region112: #{lno1d_forward.5} parent=107 // pred_fallthru
        _
    $region108: #{lno1d_forward.5} parent=5 // pred_fallthru
      _
    %p1927 = scmp.le.s32.totalorder 2, %s28
    // Predicated region
    $region113: #{lno1d_forward.5} parent=5 // pred_check
      %p1928 = pneg %p1927
    $region114: #{lno1d_forward.5} parent=5 // pred_check_branch
      %1930 = sbr.rel (%p1928) target = $region116
    $region115: #{lno1d_forward.5} parent=5 // pred_region
      %s1931 = ssub.s32 %s28, 2
      // Predicated region
      $region117: #{lno1d_forward.5} parent=115 // pred_check
        %p1932 = pneg %p529
      $region118: #{lno1d_forward.5} parent=115 // pred_check_branch
        %1934 = sbr.rel (%p1932) target = $region120
      $region119: #{lno1d_forward.5} parent=115 // pred_region
        %p1935 = scmp.lt.s32.totalorder %s34, 1
        %s1936 = scalar_select %p1935, %s34, 1
        %s1937 = smul.addr %s1936, 2
        %s1938 = smul.addr %s1937, 8
        %s1939 = scalar_lea.vmem %s22, %s1938
      $region120: #{lno1d_forward.5} parent=115 // pred_fallthru
        _
    $region116: #{lno1d_forward.5} parent=5 // pred_fallthru
      _
  $region6: #{lno1d_forward.5} parent=0 // loop_footer
    %s32 = sadd.s32 1, %s28
  $region7: #{lno1d_forward.5} parent=0 // loop_footer_branch
    %27 = sbr.rel target = $region3
  $region8: #{lno1d_forward.5} parent=0 // loop_exit
    _

// kernel: lno1d_forward.7
$region0: #{lno1d_forward.7}
  #allocation0 [shape = 'u32[]', space=smem, size = 0x4, offset = 0x4, fixed_abs, tag = 'smem constant byte address 0x4 - core index']
  #allocation1 [shape = 'u32[144,128]{1,0:T(1,128)}', space=vmem, size = 0x12000, scoped, tag = 'internal scratch']
  #allocation2 [shape = 'f32[1,1]{1,0:T(1,128)S(1)}', space=vmem, size = 0x200, scoped, tag = 'scoped memory for lno1d_forward.7']
  %s0 = inlined_call_operand.vmem [shape: f32[2,16,2], index: 0, kind: input, shape index: {}]
  %s1 = inlined_call_operand.vmem [shape: f32[2,16,32], index: 1, kind: input, shape index: {}]
  %s2 = inlined_call_operand.vmem [shape: bf16[2,64], index: 2, kind: input, shape index: {}]
  %s3 = inlined_call_operand.vmem [shape: f32[1,64], index: 3, kind: input, shape index: {}]
  %s4 = inlined_call_operand.vmem [shape: bf16[64,128], index: 4, kind: input, shape index: {}]
  %s5 = inlined_call_operand.vmem [shape: f32[1,128], index: 5, kind: input, shape index: {}]
  %s6 = inlined_call_operand.vmem [shape: bf16[128,256], index: 6, kind: input, shape index: {}]
  %s7 = inlined_call_operand.vmem [shape: f32[1,256], index: 7, kind: input, shape index: {}]
  %s8 = inlined_call_operand.vmem [shape: bf16[256,128], index: 8, kind: input, shape index: {}]
  %s9 = inlined_call_operand.vmem [shape: f32[1,128], index: 9, kind: input, shape index: {}]
  %s10 = inlined_call_operand.vmem [shape: bf16[2,64], index: 10, kind: input, shape index: {}]
  %s11 = inlined_call_operand.vmem [shape: f32[1,64], index: 11, kind: input, shape index: {}]
  %s12 = inlined_call_operand.vmem [shape: bf16[64,128], index: 12, kind: input, shape index: {}]
  %s13 = inlined_call_operand.vmem [shape: f32[1,128], index: 13, kind: input, shape index: {}]
  %s14 = inlined_call_operand.vmem [shape: bf16[128,256], index: 14, kind: input, shape index: {}]
  %s15 = inlined_call_operand.vmem [shape: f32[1,256], index: 15, kind: input, shape index: {}]
  %s16 = inlined_call_operand.vmem [shape: bf16[256,128], index: 16, kind: input, shape index: {}]
  %s17 = inlined_call_operand.vmem [shape: f32[1,128], index: 17, kind: input, shape index: {}]
  %s18 = inlined_call_operand.vmem [shape: bf16[32,32], index: 18, kind: input, shape index: {}]
  %s19 = inlined_call_operand.vmem [shape: f32[1,32], index: 19, kind: input, shape index: {}]
  %s20 = inlined_call_operand.vmem [shape: f32[1,32], index: 20, kind: input, shape index: {}]
  %s21 = inlined_call_operand.vmem [shape: f32[1,32], index: 21, kind: input, shape index: {}]
  %s22 = inlined_call_operand.vmem [shape: bf16[32,64], index: 22, kind: input, shape index: {}]
  %s23 = inlined_call_operand.vmem [shape: f32[1,64], index: 23, kind: input, shape index: {}]
  %s24 = inlined_call_operand.vmem [shape: bf16[64,1], index: 24, kind: input, shape index: {}]
  %s25 = inlined_call_operand.<no memory space> [shape: f32[1,1], index: 25, kind: input, shape index: {}]
  %s26 = inlined_call_operand.vmem [shape: f32[2,16,1], index: 26, kind: output, shape index: {}]
  %s27 = sld [smem:[#allocation0]]
  $region137: #{lno1d_forward.7} parent=0
    _
  %s29 = ssub.s32 1, %s27
  %s30 = scalar_select 0, %s29, %s27
  %v31 = vstv %s25
  %32 = vst [vmem:[#allocation2] sm:$0x1] %v31
  loop: start=0, step=1, limit=4
  $region2: #{lno1d_forward.7} parent=0 // loop_pre_header
    _
  $region3: #{lno1d_forward.7} parent=0 // loop_header
    %s34 = sphi 0, %s38
    %p35 = scmp.ge.s32.totalorder %s34, 4
    %s44 = sphi 0, %s46
    %s47 = sphi 0, %s44
    %s48 = sphi 0, %s47
    %s64 = sphi 0, %s48
    %s70 = sphi 0, %s72
    %s73 = sphi 0, %s70
    %s74 = sphi 0, %s73
    %s90 = sphi 0, %s74
    %s94 = sphi 0, %s94
    %s96 = sphi 0, %s94
    %s97 = sphi 0, %s96
    %s111 = sphi 0, %s97
    %s115 = sphi 0, %s115
    %s117 = sphi 0, %s115
    %s118 = sphi 0, %s117
    %s132 = sphi 0, %s118
    %s136 = sphi 0, %s136
    %s138 = sphi 0, %s136
    %s139 = sphi 0, %s138
    %s153 = sphi 0, %s139
    %s157 = sphi 0, %s157
    %s159 = sphi 0, %s157
    %s160 = sphi 0, %s159
    %s174 = sphi 0, %s160
    %s178 = sphi 0, %s178
    %s180 = sphi 0, %s178
    %s181 = sphi 0, %s180
    %s195 = sphi 0, %s181
    %s199 = sphi 0, %s199
    %s201 = sphi 0, %s199
    %s202 = sphi 0, %s201
    %s216 = sphi 0, %s202
    %s220 = sphi 0, %s220
    %s222 = sphi 0, %s220
    %s223 = sphi 0, %s222
    %s237 = sphi 0, %s223
    %s241 = sphi 0, %s241
    %s243 = sphi 0, %s241
    %s244 = sphi 0, %s243
    %s258 = sphi 0, %s244
    %s262 = sphi 0, %s262
    %s264 = sphi 0, %s262
    %s265 = sphi 0, %s264
    %s279 = sphi 0, %s265
    %s283 = sphi 0, %s283
    %s285 = sphi 0, %s283
    %s286 = sphi 0, %s285
    %s300 = sphi 0, %s286
    %s304 = sphi 0, %s304
    %s306 = sphi 0, %s304
    %s307 = sphi 0, %s306
    %s321 = sphi 0, %s307
    %s325 = sphi 0, %s325
    %s327 = sphi 0, %s325
    %s328 = sphi 0, %s327
    %s342 = sphi 0, %s328
    %s346 = sphi 0, %s346
    %s348 = sphi 0, %s346
    %s349 = sphi 0, %s348
    %s363 = sphi 0, %s349
    %s367 = sphi 0, %s367
    %s369 = sphi 0, %s367
    %s370 = sphi 0, %s369
    %s384 = sphi 0, %s370
    %s388 = sphi 0, %s388
    %s390 = sphi 0, %s388
    %s391 = sphi 0, %s390
    %s405 = sphi 0, %s391
    %s409 = sphi 0, %s409
    %s411 = sphi 0, %s409
    %s412 = sphi 0, %s411
    %s426 = sphi 0, %s412
    %s430 = sphi 0, %s430
    %s432 = sphi 0, %s430
    %s433 = sphi 0, %s432
    %s447 = sphi 0, %s433
    %s451 = sphi 0, %s451
    %s453 = sphi 0, %s451
    %s454 = sphi 0, %s453
    %s468 = sphi 0, %s454
    %s472 = sphi 0, %s472
    %s474 = sphi 0, %s472
    %s475 = sphi 0, %s474
    %s489 = sphi 0, %s475
    %s493 = sphi 0, %s493
    %s495 = sphi 0, %s493
    %s496 = sphi 0, %s495
    %s510 = sphi 0, %s496
    %s514 = sphi 0, %s514
    %s516 = sphi 0, %s514
    %s517 = sphi 0, %s516
    %s531 = sphi 0, %s517
    %s535 = sphi 0, %s535
    %s537 = sphi 0, %s535
    %s538 = sphi 0, %s537
    %s552 = sphi 0, %s538
    %s556 = sphi 0, %s556
    %s558 = sphi 0, %s556
    %s559 = sphi 0, %s558
    %s573 = sphi 0, %s559
    %s577 = sphi 0, %s577
    %s579 = sphi 0, %s577
    %s580 = sphi 0, %s579
    %s594 = sphi 0, %s580
    %s600 = sphi 0, %s602
    %s603 = sphi 0, %s600
    %s604 = sphi 0, %s603
    %s620 = sphi 0, %s604
  $region4: #{lno1d_forward.7} parent=0 // loop_header_branch
    %37 = sbr.rel (%p35) target = $region8
  $region5: #{lno1d_forward.7} parent=0 // loop_body
    %s39 = ssub.s32 %s34, 1
    %s40 = ssub.s32 %s34, 2
    %s41 = sadd.s32 %s34, 1
    %s42 = ssub.s32 %s34, %s41
    %p43 = scmp.eq.s32.totalorder %s42, 0
    %s45 = sadd.s32 %s44, 1
    %s46 = scalar_select %p43, %s44, %s45
    %p49 = pneg %p43
    %p50 = scmp.eq.s32.totalorder %s34, 1
    %p51 = por %p49, %p50
    %p52 = scmp.ne.s32.totalorder %s44, %s47
    %p53 = scmp.eq.s32.totalorder %s34, 0
    %p54 = por %p52, %p53
    %p55 = scmp.ne.s32.totalorder %s44, %s47
    %p56 = scmp.eq.s32.totalorder %s39, 1
    %p57 = por %p55, %p56
    %p58 = scmp.ne.s32.totalorder %s47, %s48
    %p59 = scmp.eq.s32.totalorder %s39, 0
    %p60 = por %p58, %p59
    %p61 = scmp.ne.s32.totalorder %s47, %s48
    %p62 = scmp.eq.s32.totalorder %s40, 1
    %p63 = por %p61, %p62
    %p65 = scmp.ne.s32.totalorder %s48, %s64
    %p66 = scmp.eq.s32.totalorder %s40, 0
    %p67 = por %p65, %p66
    %s68 = ssub.s32 %s34, %s41
    %p69 = scmp.eq.s32.totalorder %s68, 0
    %s71 = sadd.s32 %s70, 1
    %s72 = scalar_select %p69, %s70, %s71
    %p75 = pneg %p69
    %p76 = scmp.eq.s32.totalorder %s34, 1
    %p77 = por %p75, %p76
    %p78 = scmp.ne.s32.totalorder %s70, %s73
    %p79 = scmp.eq.s32.totalorder %s34, 0
    %p80 = por %p78, %p79
    %p81 = scmp.ne.s32.totalorder %s70, %s73
    %p82 = scmp.eq.s32.totalorder %s39, 1
    %p83 = por %p81, %p82
    %p84 = scmp.ne.s32.totalorder %s73, %s74
    %p85 = scmp.eq.s32.totalorder %s39, 0
    %p86 = por %p84, %p85
    %p87 = scmp.ne.s32.totalorder %s73, %s74
    %p88 = scmp.eq.s32.totalorder %s40, 1
    %p89 = por %p87, %p88
    %p91 = scmp.ne.s32.totalorder %s74, %s90
    %p92 = scmp.eq.s32.totalorder %s40, 0
    %p93 = por %p91, %p92
    %s95 = sadd.s32 %s94, 1
    %p98 = scmp.eq.s32.totalorder %s34, 1
    %p99 = scmp.ne.s32.totalorder %s94, %s96
    %p100 = scmp.eq.s32.totalorder %s34, 0
    %p101 = por %p99, %p100
    %p102 = scmp.ne.s32.totalorder %s94, %s96
    %p103 = scmp.eq.s32.totalorder %s39, 1
    %p104 = por %p102, %p103
    %p105 = scmp.ne.s32.totalorder %s96, %s97
    %p106 = scmp.eq.s32.totalorder %s39, 0
    %p107 = por %p105, %p106
    %p108 = scmp.ne.s32.totalorder %s96, %s97
    %p109 = scmp.eq.s32.totalorder %s40, 1
    %p110 = por %p108, %p109
    %p112 = scmp.ne.s32.totalorder %s97, %s111
    %p113 = scmp.eq.s32.totalorder %s40, 0
    %p114 = por %p112, %p113
    %s116 = sadd.s32 %s115, 1
    %p119 = scmp.eq.s32.totalorder %s34, 1
    %p120 = scmp.ne.s32.totalorder %s115, %s117
    %p121 = scmp.eq.s32.totalorder %s34, 0
    %p122 = por %p120, %p121
    %p123 = scmp.ne.s32.totalorder %s115, %s117
    %p124 = scmp.eq.s32.totalorder %s39, 1
    %p125 = por %p123, %p124
    %p126 = scmp.ne.s32.totalorder %s117, %s118
    %p127 = scmp.eq.s32.totalorder %s39, 0
    %p128 = por %p126, %p127
    %p129 = scmp.ne.s32.totalorder %s117, %s118
    %p130 = scmp.eq.s32.totalorder %s40, 1
    %p131 = por %p129, %p130
    %p133 = scmp.ne.s32.totalorder %s118, %s132
    %p134 = scmp.eq.s32.totalorder %s40, 0
    %p135 = por %p133, %p134
    %s137 = sadd.s32 %s136, 1
    %p140 = scmp.eq.s32.totalorder %s34, 1
    %p141 = scmp.ne.s32.totalorder %s136, %s138
    %p142 = scmp.eq.s32.totalorder %s34, 0
    %p143 = por %p141, %p142
    %p144 = scmp.ne.s32.totalorder %s136, %s138
    %p145 = scmp.eq.s32.totalorder %s39, 1
    %p146 = por %p144, %p145
    %p147 = scmp.ne.s32.totalorder %s138, %s139
    %p148 = scmp.eq.s32.totalorder %s39, 0
    %p149 = por %p147, %p148
    %p150 = scmp.ne.s32.totalorder %s138, %s139
    %p151 = scmp.eq.s32.totalorder %s40, 1
    %p152 = por %p150, %p151
    %p154 = scmp.ne.s32.totalorder %s139, %s153
    %p155 = scmp.eq.s32.totalorder %s40, 0
    %p156 = por %p154, %p155
    %s158 = sadd.s32 %s157, 1
    %p161 = scmp.eq.s32.totalorder %s34, 1
    %p162 = scmp.ne.s32.totalorder %s157, %s159
    %p163 = scmp.eq.s32.totalorder %s34, 0
    %p164 = por %p162, %p163
    %p165 = scmp.ne.s32.totalorder %s157, %s159
    %p166 = scmp.eq.s32.totalorder %s39, 1
    %p167 = por %p165, %p166
    %p168 = scmp.ne.s32.totalorder %s159, %s160
    %p169 = scmp.eq.s32.totalorder %s39, 0
    %p170 = por %p168, %p169
    %p171 = scmp.ne.s32.totalorder %s159, %s160
    %p172 = scmp.eq.s32.totalorder %s40, 1
    %p173 = por %p171, %p172
    %p175 = scmp.ne.s32.totalorder %s160, %s174
    %p176 = scmp.eq.s32.totalorder %s40, 0
    %p177 = por %p175, %p176
    %s179 = sadd.s32 %s178, 1
    %p182 = scmp.eq.s32.totalorder %s34, 1
    %p183 = scmp.ne.s32.totalorder %s178, %s180
    %p184 = scmp.eq.s32.totalorder %s34, 0
    %p185 = por %p183, %p184
    %p186 = scmp.ne.s32.totalorder %s178, %s180
    %p187 = scmp.eq.s32.totalorder %s39, 1
    %p188 = por %p186, %p187
    %p189 = scmp.ne.s32.totalorder %s180, %s181
    %p190 = scmp.eq.s32.totalorder %s39, 0
    %p191 = por %p189, %p190
    %p192 = scmp.ne.s32.totalorder %s180, %s181
    %p193 = scmp.eq.s32.totalorder %s40, 1
    %p194 = por %p192, %p193
    %p196 = scmp.ne.s32.totalorder %s181, %s195
    %p197 = scmp.eq.s32.totalorder %s40, 0
    %p198 = por %p196, %p197
    %s200 = sadd.s32 %s199, 1
    %p203 = scmp.eq.s32.totalorder %s34, 1
    %p204 = scmp.ne.s32.totalorder %s199, %s201
    %p205 = scmp.eq.s32.totalorder %s34, 0
    %p206 = por %p204, %p205
    %p207 = scmp.ne.s32.totalorder %s199, %s201
    %p208 = scmp.eq.s32.totalorder %s39, 1
    %p209 = por %p207, %p208
    %p210 = scmp.ne.s32.totalorder %s201, %s202
    %p211 = scmp.eq.s32.totalorder %s39, 0
    %p212 = por %p210, %p211
    %p213 = scmp.ne.s32.totalorder %s201, %s202
    %p214 = scmp.eq.s32.totalorder %s40, 1
    %p215 = por %p213, %p214
    %p217 = scmp.ne.s32.totalorder %s202, %s216
    %p218 = scmp.eq.s32.totalorder %s40, 0
    %p219 = por %p217, %p218
    %s221 = sadd.s32 %s220, 1
    %p224 = scmp.eq.s32.totalorder %s34, 1
    %p225 = scmp.ne.s32.totalorder %s220, %s222
    %p226 = scmp.eq.s32.totalorder %s34, 0
    %p227 = por %p225, %p226
    %p228 = scmp.ne.s32.totalorder %s220, %s222
    %p229 = scmp.eq.s32.totalorder %s39, 1
    %p230 = por %p228, %p229
    %p231 = scmp.ne.s32.totalorder %s222, %s223
    %p232 = scmp.eq.s32.totalorder %s39, 0
    %p233 = por %p231, %p232
    %p234 = scmp.ne.s32.totalorder %s222, %s223
    %p235 = scmp.eq.s32.totalorder %s40, 1
    %p236 = por %p234, %p235
    %p238 = scmp.ne.s32.totalorder %s223, %s237
    %p239 = scmp.eq.s32.totalorder %s40, 0
    %p240 = por %p238, %p239
    %s242 = sadd.s32 %s241, 1
    %p245 = scmp.eq.s32.totalorder %s34, 1
    %p246 = scmp.ne.s32.totalorder %s241, %s243
    %p247 = scmp.eq.s32.totalorder %s34, 0
    %p248 = por %p246, %p247
    %p249 = scmp.ne.s32.totalorder %s241, %s243
    %p250 = scmp.eq.s32.totalorder %s39, 1
    %p251 = por %p249, %p250
    %p252 = scmp.ne.s32.totalorder %s243, %s244
    %p253 = scmp.eq.s32.totalorder %s39, 0
    %p254 = por %p252, %p253
    %p255 = scmp.ne.s32.totalorder %s243, %s244
    %p256 = scmp.eq.s32.totalorder %s40, 1
    %p257 = por %p255, %p256
    %p259 = scmp.ne.s32.totalorder %s244, %s258
    %p260 = scmp.eq.s32.totalorder %s40, 0
    %p261 = por %p259, %p260
    %s263 = sadd.s32 %s262, 1
    %p266 = scmp.eq.s32.totalorder %s34, 1
    %p267 = scmp.ne.s32.totalorder %s262, %s264
    %p268 = scmp.eq.s32.totalorder %s34, 0
    %p269 = por %p267, %p268
    %p270 = scmp.ne.s32.totalorder %s262, %s264
    %p271 = scmp.eq.s32.totalorder %s39, 1
    %p272 = por %p270, %p271
    %p273 = scmp.ne.s32.totalorder %s264, %s265
    %p274 = scmp.eq.s32.totalorder %s39, 0
    %p275 = por %p273, %p274
    %p276 = scmp.ne.s32.totalorder %s264, %s265
    %p277 = scmp.eq.s32.totalorder %s40, 1
    %p278 = por %p276, %p277
    %p280 = scmp.ne.s32.totalorder %s265, %s279
    %p281 = scmp.eq.s32.totalorder %s40, 0
    %p282 = por %p280, %p281
    %s284 = sadd.s32 %s283, 1
    %p287 = scmp.eq.s32.totalorder %s34, 1
    %p288 = scmp.ne.s32.totalorder %s283, %s285
    %p289 = scmp.eq.s32.totalorder %s34, 0
    %p290 = por %p288, %p289
    %p291 = scmp.ne.s32.totalorder %s283, %s285
    %p292 = scmp.eq.s32.totalorder %s39, 1
    %p293 = por %p291, %p292
    %p294 = scmp.ne.s32.totalorder %s285, %s286
    %p295 = scmp.eq.s32.totalorder %s39, 0
    %p296 = por %p294, %p295
    %p297 = scmp.ne.s32.totalorder %s285, %s286
    %p298 = scmp.eq.s32.totalorder %s40, 1
    %p299 = por %p297, %p298
    %p301 = scmp.ne.s32.totalorder %s286, %s300
    %p302 = scmp.eq.s32.totalorder %s40, 0
    %p303 = por %p301, %p302
    %s305 = sadd.s32 %s304, 1
    %p308 = scmp.eq.s32.totalorder %s34, 1
    %p309 = scmp.ne.s32.totalorder %s304, %s306
    %p310 = scmp.eq.s32.totalorder %s34, 0
    %p311 = por %p309, %p310
    %p312 = scmp.ne.s32.totalorder %s304, %s306
    %p313 = scmp.eq.s32.totalorder %s39, 1
    %p314 = por %p312, %p313
    %p315 = scmp.ne.s32.totalorder %s306, %s307
    %p316 = scmp.eq.s32.totalorder %s39, 0
    %p317 = por %p315, %p316
    %p318 = scmp.ne.s32.totalorder %s306, %s307
    %p319 = scmp.eq.s32.totalorder %s40, 1
    %p320 = por %p318, %p319
    %p322 = scmp.ne.s32.totalorder %s307, %s321
    %p323 = scmp.eq.s32.totalorder %s40, 0
    %p324 = por %p322, %p323
    %s326 = sadd.s32 %s325, 1
    %p329 = scmp.eq.s32.totalorder %s34, 1
    %p330 = scmp.ne.s32.totalorder %s325, %s327
    %p331 = scmp.eq.s32.totalorder %s34, 0
    %p332 = por %p330, %p331
    %p333 = scmp.ne.s32.totalorder %s325, %s327
    %p334 = scmp.eq.s32.totalorder %s39, 1
    %p335 = por %p333, %p334
    %p336 = scmp.ne.s32.totalorder %s327, %s328
    %p337 = scmp.eq.s32.totalorder %s39, 0
    %p338 = por %p336, %p337
    %p339 = scmp.ne.s32.totalorder %s327, %s328
    %p340 = scmp.eq.s32.totalorder %s40, 1
    %p341 = por %p339, %p340
    %p343 = scmp.ne.s32.totalorder %s328, %s342
    %p344 = scmp.eq.s32.totalorder %s40, 0
    %p345 = por %p343, %p344
    %s347 = sadd.s32 %s346, 1
    %p350 = scmp.eq.s32.totalorder %s34, 1
    %p351 = scmp.ne.s32.totalorder %s346, %s348
    %p352 = scmp.eq.s32.totalorder %s34, 0
    %p353 = por %p351, %p352
    %p354 = scmp.ne.s32.totalorder %s346, %s348
    %p355 = scmp.eq.s32.totalorder %s39, 1
    %p356 = por %p354, %p355
    %p357 = scmp.ne.s32.totalorder %s348, %s349
    %p358 = scmp.eq.s32.totalorder %s39, 0
    %p359 = por %p357, %p358
    %p360 = scmp.ne.s32.totalorder %s348, %s349
    %p361 = scmp.eq.s32.totalorder %s40, 1
    %p362 = por %p360, %p361
    %p364 = scmp.ne.s32.totalorder %s349, %s363
    %p365 = scmp.eq.s32.totalorder %s40, 0
    %p366 = por %p364, %p365
    %s368 = sadd.s32 %s367, 1
    %p371 = scmp.eq.s32.totalorder %s34, 1
    %p372 = scmp.ne.s32.totalorder %s367, %s369
    %p373 = scmp.eq.s32.totalorder %s34, 0
    %p374 = por %p372, %p373
    %p375 = scmp.ne.s32.totalorder %s367, %s369
    %p376 = scmp.eq.s32.totalorder %s39, 1
    %p377 = por %p375, %p376
    %p378 = scmp.ne.s32.totalorder %s369, %s370
    %p379 = scmp.eq.s32.totalorder %s39, 0
    %p380 = por %p378, %p379
    %p381 = scmp.ne.s32.totalorder %s369, %s370
    %p382 = scmp.eq.s32.totalorder %s40, 1
    %p383 = por %p381, %p382
    %p385 = scmp.ne.s32.totalorder %s370, %s384
    %p386 = scmp.eq.s32.totalorder %s40, 0
    %p387 = por %p385, %p386
    %s389 = sadd.s32 %s388, 1
    %p392 = scmp.eq.s32.totalorder %s34, 1
    %p393 = scmp.ne.s32.totalorder %s388, %s390
    %p394 = scmp.eq.s32.totalorder %s34, 0
    %p395 = por %p393, %p394
    %p396 = scmp.ne.s32.totalorder %s388, %s390
    %p397 = scmp.eq.s32.totalorder %s39, 1
    %p398 = por %p396, %p397
    %p399 = scmp.ne.s32.totalorder %s390, %s391
    %p400 = scmp.eq.s32.totalorder %s39, 0
    %p401 = por %p399, %p400
    %p402 = scmp.ne.s32.totalorder %s390, %s391
    %p403 = scmp.eq.s32.totalorder %s40, 1
    %p404 = por %p402, %p403
    %p406 = scmp.ne.s32.totalorder %s391, %s405
    %p407 = scmp.eq.s32.totalorder %s40, 0
    %p408 = por %p406, %p407
    %s410 = sadd.s32 %s409, 1
    %p413 = scmp.eq.s32.totalorder %s34, 1
    %p414 = scmp.ne.s32.totalorder %s409, %s411
    %p415 = scmp.eq.s32.totalorder %s34, 0
    %p416 = por %p414, %p415
    %p417 = scmp.ne.s32.totalorder %s409, %s411
    %p418 = scmp.eq.s32.totalorder %s39, 1
    %p419 = por %p417, %p418
    %p420 = scmp.ne.s32.totalorder %s411, %s412
    %p421 = scmp.eq.s32.totalorder %s39, 0
    %p422 = por %p420, %p421
    %p423 = scmp.ne.s32.totalorder %s411, %s412
    %p424 = scmp.eq.s32.totalorder %s40, 1
    %p425 = por %p423, %p424
    %p427 = scmp.ne.s32.totalorder %s412, %s426
    %p428 = scmp.eq.s32.totalorder %s40, 0
    %p429 = por %p427, %p428
    %s431 = sadd.s32 %s430, 1
    %p434 = scmp.eq.s32.totalorder %s34, 1
    %p435 = scmp.ne.s32.totalorder %s430, %s432
    %p436 = scmp.eq.s32.totalorder %s34, 0
    %p437 = por %p435, %p436
    %p438 = scmp.ne.s32.totalorder %s430, %s432
    %p439 = scmp.eq.s32.totalorder %s39, 1
    %p440 = por %p438, %p439
    %p441 = scmp.ne.s32.totalorder %s432, %s433
    %p442 = scmp.eq.s32.totalorder %s39, 0
    %p443 = por %p441, %p442
    %p444 = scmp.ne.s32.totalorder %s432, %s433
    %p445 = scmp.eq.s32.totalorder %s40, 1
    %p446 = por %p444, %p445
    %p448 = scmp.ne.s32.totalorder %s433, %s447
    %p449 = scmp.eq.s32.totalorder %s40, 0
    %p450 = por %p448, %p449
    %s452 = sadd.s32 %s451, 1
    %p455 = scmp.eq.s32.totalorder %s34, 1
    %p456 = scmp.ne.s32.totalorder %s451, %s453
    %p457 = scmp.eq.s32.totalorder %s34, 0
    %p458 = por %p456, %p457
    %p459 = scmp.ne.s32.totalorder %s451, %s453
    %p460 = scmp.eq.s32.totalorder %s39, 1
    %p461 = por %p459, %p460
    %p462 = scmp.ne.s32.totalorder %s453, %s454
    %p463 = scmp.eq.s32.totalorder %s39, 0
    %p464 = por %p462, %p463
    %p465 = scmp.ne.s32.totalorder %s453, %s454
    %p466 = scmp.eq.s32.totalorder %s40, 1
    %p467 = por %p465, %p466
    %p469 = scmp.ne.s32.totalorder %s454, %s468
    %p470 = scmp.eq.s32.totalorder %s40, 0
    %p471 = por %p469, %p470
    %s473 = sadd.s32 %s472, 1
    %p476 = scmp.eq.s32.totalorder %s34, 1
    %p477 = scmp.ne.s32.totalorder %s472, %s474
    %p478 = scmp.eq.s32.totalorder %s34, 0
    %p479 = por %p477, %p478
    %p480 = scmp.ne.s32.totalorder %s472, %s474
    %p481 = scmp.eq.s32.totalorder %s39, 1
    %p482 = por %p480, %p481
    %p483 = scmp.ne.s32.totalorder %s474, %s475
    %p484 = scmp.eq.s32.totalorder %s39, 0
    %p485 = por %p483, %p484
    %p486 = scmp.ne.s32.totalorder %s474, %s475
    %p487 = scmp.eq.s32.totalorder %s40, 1
    %p488 = por %p486, %p487
    %p490 = scmp.ne.s32.totalorder %s475, %s489
    %p491 = scmp.eq.s32.totalorder %s40, 0
    %p492 = por %p490, %p491
    %s494 = sadd.s32 %s493, 1
    %p497 = scmp.eq.s32.totalorder %s34, 1
    %p498 = scmp.ne.s32.totalorder %s493, %s495
    %p499 = scmp.eq.s32.totalorder %s34, 0
    %p500 = por %p498, %p499
    %p501 = scmp.ne.s32.totalorder %s493, %s495
    %p502 = scmp.eq.s32.totalorder %s39, 1
    %p503 = por %p501, %p502
    %p504 = scmp.ne.s32.totalorder %s495, %s496
    %p505 = scmp.eq.s32.totalorder %s39, 0
    %p506 = por %p504, %p505
    %p507 = scmp.ne.s32.totalorder %s495, %s496
    %p508 = scmp.eq.s32.totalorder %s40, 1
    %p509 = por %p507, %p508
    %p511 = scmp.ne.s32.totalorder %s496, %s510
    %p512 = scmp.eq.s32.totalorder %s40, 0
    %p513 = por %p511, %p512
    %s515 = sadd.s32 %s514, 1
    %p518 = scmp.eq.s32.totalorder %s34, 1
    %p519 = scmp.ne.s32.totalorder %s514, %s516
    %p520 = scmp.eq.s32.totalorder %s34, 0
    %p521 = por %p519, %p520
    %p522 = scmp.ne.s32.totalorder %s514, %s516
    %p523 = scmp.eq.s32.totalorder %s39, 1
    %p524 = por %p522, %p523
    %p525 = scmp.ne.s32.totalorder %s516, %s517
    %p526 = scmp.eq.s32.totalorder %s39, 0
    %p527 = por %p525, %p526
    %p528 = scmp.ne.s32.totalorder %s516, %s517
    %p529 = scmp.eq.s32.totalorder %s40, 1
    %p530 = por %p528, %p529
    %p532 = scmp.ne.s32.totalorder %s517, %s531
    %p533 = scmp.eq.s32.totalorder %s40, 0
    %p534 = por %p532, %p533
    %s536 = sadd.s32 %s535, 1
    %p539 = scmp.eq.s32.totalorder %s34, 1
    %p540 = scmp.ne.s32.totalorder %s535, %s537
    %p541 = scmp.eq.s32.totalorder %s34, 0
    %p542 = por %p540, %p541
    %p543 = scmp.ne.s32.totalorder %s535, %s537
    %p544 = scmp.eq.s32.totalorder %s39, 1
    %p545 = por %p543, %p544
    %p546 = scmp.ne.s32.totalorder %s537, %s538
    %p547 = scmp.eq.s32.totalorder %s39, 0
    %p548 = por %p546, %p547
    %p549 = scmp.ne.s32.totalorder %s537, %s538
    %p550 = scmp.eq.s32.totalorder %s40, 1
    %p551 = por %p549, %p550
    %p553 = scmp.ne.s32.totalorder %s538, %s552
    %p554 = scmp.eq.s32.totalorder %s40, 0
    %p555 = por %p553, %p554
    %s557 = sadd.s32 %s556, 1
    %p560 = scmp.eq.s32.totalorder %s34, 1
    %p561 = scmp.ne.s32.totalorder %s556, %s558
    %p562 = scmp.eq.s32.totalorder %s34, 0
    %p563 = por %p561, %p562
    %p564 = scmp.ne.s32.totalorder %s556, %s558
    %p565 = scmp.eq.s32.totalorder %s39, 1
    %p566 = por %p564, %p565
    %p567 = scmp.ne.s32.totalorder %s558, %s559
    %p568 = scmp.eq.s32.totalorder %s39, 0
    %p569 = por %p567, %p568
    %p570 = scmp.ne.s32.totalorder %s558, %s559
    %p571 = scmp.eq.s32.totalorder %s40, 1
    %p572 = por %p570, %p571
    %p574 = scmp.ne.s32.totalorder %s559, %s573
    %p575 = scmp.eq.s32.totalorder %s40, 0
    %p576 = por %p574, %p575
    %s578 = sadd.s32 %s577, 1
    %p581 = scmp.eq.s32.totalorder %s34, 1
    %p582 = scmp.ne.s32.totalorder %s577, %s579
    %p583 = scmp.eq.s32.totalorder %s34, 0
    %p584 = por %p582, %p583
    %p585 = scmp.ne.s32.totalorder %s577, %s579
    %p586 = scmp.eq.s32.totalorder %s39, 1
    %p587 = por %p585, %p586
    %p588 = scmp.ne.s32.totalorder %s579, %s580
    %p589 = scmp.eq.s32.totalorder %s39, 0
    %p590 = por %p588, %p589
    %p591 = scmp.ne.s32.totalorder %s579, %s580
    %p592 = scmp.eq.s32.totalorder %s40, 1
    %p593 = por %p591, %p592
    %p595 = scmp.ne.s32.totalorder %s580, %s594
    %p596 = scmp.eq.s32.totalorder %s40, 0
    %p597 = por %p595, %p596
    %s598 = ssub.s32 %s34, %s41
    %p599 = scmp.eq.s32.totalorder %s598, 0
    %s601 = sadd.s32 %s600, 1
    %s602 = scalar_select %p599, %s600, %s601
    %p605 = pneg %p599
    %p606 = scmp.eq.s32.totalorder %s34, 1
    %p607 = por %p605, %p606
    %p608 = scmp.ne.s32.totalorder %s600, %s603
    %p609 = scmp.eq.s32.totalorder %s34, 0
    %p610 = por %p608, %p609
    %p611 = scmp.ne.s32.totalorder %s600, %s603
    %p612 = scmp.eq.s32.totalorder %s39, 1
    %p613 = por %p611, %p612
    %p614 = scmp.ne.s32.totalorder %s603, %s604
    %p615 = scmp.eq.s32.totalorder %s39, 0
    %p616 = por %p614, %p615
    %p617 = scmp.ne.s32.totalorder %s603, %s604
    %p618 = scmp.eq.s32.totalorder %s40, 1
    %p619 = por %p617, %p618
    %p621 = scmp.ne.s32.totalorder %s604, %s620
    %p622 = scmp.eq.s32.totalorder %s40, 0
    %p623 = por %p621, %p622
    %p624 = scmp.le.s32.totalorder 1, %s34
    %p625 = scmp.lt.s32.totalorder %s34, 3
    %p626 = pnand %p624, %p625
    %p627 = pneg %p626
    // Predicated region
    $region9: #{lno1d_forward.7} parent=5 // pred_check
      _
    $region10: #{lno1d_forward.7} parent=5 // pred_check_branch
      %629 = sbr.rel (%p626) target = $region12
    $region11: #{lno1d_forward.7} parent=5 // pred_region
      %s630 = ssub.s32 %s34, 1
      // Predicated region
      $region13: #{lno1d_forward.7} parent=11 // pred_check
        %p631 = pneg %p107
      $region14: #{lno1d_forward.7} parent=11 // pred_check_branch
        %633 = sbr.rel (%p631) target = $region16
      $region15: #{lno1d_forward.7} parent=11 // pred_region
        _
      $region16: #{lno1d_forward.7} parent=11 // pred_fallthru
        _
      // Predicated region
      $region17: #{lno1d_forward.7} parent=11 // pred_check
        %p634 = pneg %p128
      $region18: #{lno1d_forward.7} parent=11 // pred_check_branch
        %636 = sbr.rel (%p634) target = $region20
      $region19: #{lno1d_forward.7} parent=11 // pred_region
        _
      $region20: #{lno1d_forward.7} parent=11 // pred_fallthru
        _
      // Predicated region
      $region21: #{lno1d_forward.7} parent=11 // pred_check
        %p637 = pneg %p149
      $region22: #{lno1d_forward.7} parent=11 // pred_check_branch
        %639 = sbr.rel (%p637) target = $region24
      $region23: #{lno1d_forward.7} parent=11 // pred_region
        _
      $region24: #{lno1d_forward.7} parent=11 // pred_fallthru
        _
      // Predicated region
      $region25: #{lno1d_forward.7} parent=11 // pred_check
        %p640 = pneg %p170
      $region26: #{lno1d_forward.7} parent=11 // pred_check_branch
        %642 = sbr.rel (%p640) target = $region28
      $region27: #{lno1d_forward.7} parent=11 // pred_region
        _
      $region28: #{lno1d_forward.7} parent=11 // pred_fallthru
        _
      // Predicated region
      $region29: #{lno1d_forward.7} parent=11 // pred_check
        %p643 = pneg %p191
      $region30: #{lno1d_forward.7} parent=11 // pred_check_branch
        %645 = sbr.rel (%p643) target = $region32
      $region31: #{lno1d_forward.7} parent=11 // pred_region
        _
      $region32: #{lno1d_forward.7} parent=11 // pred_fallthru
        _
      // Predicated region
      $region33: #{lno1d_forward.7} parent=11 // pred_check
        %p646 = pneg %p212
      $region34: #{lno1d_forward.7} parent=11 // pred_check_branch
        %648 = sbr.rel (%p646) target = $region36
      $region35: #{lno1d_forward.7} parent=11 // pred_region
        _
      $region36: #{lno1d_forward.7} parent=11 // pred_fallthru
        _
      // Predicated region
      $region37: #{lno1d_forward.7} parent=11 // pred_check
        %p649 = pneg %p233
      $region38: #{lno1d_forward.7} parent=11 // pred_check_branch
        %651 = sbr.rel (%p649) target = $region40
      $region39: #{lno1d_forward.7} parent=11 // pred_region
        _
      $region40: #{lno1d_forward.7} parent=11 // pred_fallthru
        _
      // Predicated region
      $region41: #{lno1d_forward.7} parent=11 // pred_check
        %p652 = pneg %p254
      $region42: #{lno1d_forward.7} parent=11 // pred_check_branch
        %654 = sbr.rel (%p652) target = $region44
      $region43: #{lno1d_forward.7} parent=11 // pred_region
        _
      $region44: #{lno1d_forward.7} parent=11 // pred_fallthru
        _
      // Predicated region
      $region45: #{lno1d_forward.7} parent=11 // pred_check
        %p655 = pneg %p275
      $region46: #{lno1d_forward.7} parent=11 // pred_check_branch
        %657 = sbr.rel (%p655) target = $region48
      $region47: #{lno1d_forward.7} parent=11 // pred_region
        _
      $region48: #{lno1d_forward.7} parent=11 // pred_fallthru
        _
      // Predicated region
      $region49: #{lno1d_forward.7} parent=11 // pred_check
        %p658 = pneg %p296
      $region50: #{lno1d_forward.7} parent=11 // pred_check_branch
        %660 = sbr.rel (%p658) target = $region52
      $region51: #{lno1d_forward.7} parent=11 // pred_region
        _
      $region52: #{lno1d_forward.7} parent=11 // pred_fallthru
        _
      // Predicated region
      $region53: #{lno1d_forward.7} parent=11 // pred_check
        %p661 = pneg %p317
      $region54: #{lno1d_forward.7} parent=11 // pred_check_branch
        %663 = sbr.rel (%p661) target = $region56
      $region55: #{lno1d_forward.7} parent=11 // pred_region
        _
      $region56: #{lno1d_forward.7} parent=11 // pred_fallthru
        _
      // Predicated region
      $region57: #{lno1d_forward.7} parent=11 // pred_check
        %p664 = pneg %p338
      $region58: #{lno1d_forward.7} parent=11 // pred_check_branch
        %666 = sbr.rel (%p664) target = $region60
      $region59: #{lno1d_forward.7} parent=11 // pred_region
        _
      $region60: #{lno1d_forward.7} parent=11 // pred_fallthru
        _
      // Predicated region
      $region61: #{lno1d_forward.7} parent=11 // pred_check
        %p667 = pneg %p359
      $region62: #{lno1d_forward.7} parent=11 // pred_check_branch
        %669 = sbr.rel (%p667) target = $region64
      $region63: #{lno1d_forward.7} parent=11 // pred_region
        _
      $region64: #{lno1d_forward.7} parent=11 // pred_fallthru
        _
      // Predicated region
      $region65: #{lno1d_forward.7} parent=11 // pred_check
        %p670 = pneg %p380
      $region66: #{lno1d_forward.7} parent=11 // pred_check_branch
        %672 = sbr.rel (%p670) target = $region68
      $region67: #{lno1d_forward.7} parent=11 // pred_region
        _
      $region68: #{lno1d_forward.7} parent=11 // pred_fallthru
        _
      // Predicated region
      $region69: #{lno1d_forward.7} parent=11 // pred_check
        %p673 = pneg %p401
      $region70: #{lno1d_forward.7} parent=11 // pred_check_branch
        %675 = sbr.rel (%p673) target = $region72
      $region71: #{lno1d_forward.7} parent=11 // pred_region
        _
      $region72: #{lno1d_forward.7} parent=11 // pred_fallthru
        _
      // Predicated region
      $region73: #{lno1d_forward.7} parent=11 // pred_check
        %p676 = pneg %p422
      $region74: #{lno1d_forward.7} parent=11 // pred_check_branch
        %678 = sbr.rel (%p676) target = $region76
      $region75: #{lno1d_forward.7} parent=11 // pred_region
        _
      $region76: #{lno1d_forward.7} parent=11 // pred_fallthru
        _
      // Predicated region
      $region77: #{lno1d_forward.7} parent=11 // pred_check
        %p679 = pneg %p443
      $region78: #{lno1d_forward.7} parent=11 // pred_check_branch
        %681 = sbr.rel (%p679) target = $region80
      $region79: #{lno1d_forward.7} parent=11 // pred_region
        _
      $region80: #{lno1d_forward.7} parent=11 // pred_fallthru
        _
      // Predicated region
      $region81: #{lno1d_forward.7} parent=11 // pred_check
        %p682 = pneg %p464
      $region82: #{lno1d_forward.7} parent=11 // pred_check_branch
        %684 = sbr.rel (%p682) target = $region84
      $region83: #{lno1d_forward.7} parent=11 // pred_region
        _
      $region84: #{lno1d_forward.7} parent=11 // pred_fallthru
        _
      // Predicated region
      $region85: #{lno1d_forward.7} parent=11 // pred_check
        %p685 = pneg %p485
      $region86: #{lno1d_forward.7} parent=11 // pred_check_branch
        %687 = sbr.rel (%p685) target = $region88
      $region87: #{lno1d_forward.7} parent=11 // pred_region
        _
      $region88: #{lno1d_forward.7} parent=11 // pred_fallthru
        _
      // Predicated region
      $region89: #{lno1d_forward.7} parent=11 // pred_check
        %p688 = pneg %p506
      $region90: #{lno1d_forward.7} parent=11 // pred_check_branch
        %690 = sbr.rel (%p688) target = $region92
      $region91: #{lno1d_forward.7} parent=11 // pred_region
        _
      $region92: #{lno1d_forward.7} parent=11 // pred_fallthru
        _
      // Predicated region
      $region93: #{lno1d_forward.7} parent=11 // pred_check
        %p691 = pneg %p527
      $region94: #{lno1d_forward.7} parent=11 // pred_check_branch
        %693 = sbr.rel (%p691) target = $region96
      $region95: #{lno1d_forward.7} parent=11 // pred_region
        _
      $region96: #{lno1d_forward.7} parent=11 // pred_fallthru
        _
      // Predicated region
      $region97: #{lno1d_forward.7} parent=11 // pred_check
        %p694 = pneg %p548
      $region98: #{lno1d_forward.7} parent=11 // pred_check_branch
        %696 = sbr.rel (%p694) target = $region100
      $region99: #{lno1d_forward.7} parent=11 // pred_region
        _
      $region100: #{lno1d_forward.7} parent=11 // pred_fallthru
        _
      // Predicated region
      $region101: #{lno1d_forward.7} parent=11 // pred_check
        %p697 = pneg %p569
      $region102: #{lno1d_forward.7} parent=11 // pred_check_branch
        %699 = sbr.rel (%p697) target = $region104
      $region103: #{lno1d_forward.7} parent=11 // pred_region
        _
      $region104: #{lno1d_forward.7} parent=11 // pred_fallthru
        _
      // Predicated region
      $region105: #{lno1d_forward.7} parent=11 // pred_check
        %p700 = pneg %p590
      $region106: #{lno1d_forward.7} parent=11 // pred_check_branch
        %702 = sbr.rel (%p700) target = $region108
      $region107: #{lno1d_forward.7} parent=11 // pred_region
        _
      $region108: #{lno1d_forward.7} parent=11 // pred_fallthru
        _
    $region12: #{lno1d_forward.7} parent=5 // pred_fallthru
      _
    %p703 = scmp.lt.s32.totalorder %s34, 2
    // Predicated region
    $region109: #{lno1d_forward.7} parent=5 // pred_check
      %p704 = pneg %p703
    $region110: #{lno1d_forward.7} parent=5 // pred_check_branch
      %706 = sbr.rel (%p704) target = $region112
    $region111: #{lno1d_forward.7} parent=5 // pred_region
      // Predicated region
      $region113: #{lno1d_forward.7} parent=111 // pred_check
        %p707 = pneg %p54
      $region114: #{lno1d_forward.7} parent=111 // pred_check_branch
        %709 = sbr.rel (%p707) target = $region116
      $region115: #{lno1d_forward.7} parent=111 // pred_region
        %p710 = scmp.lt.s32.totalorder %s34, 1
        %s711 = scalar_select %p710, %s34, 1
        %s712 = smul.addr %s711, 2
        %s713 = smul.addr %s712, 8
        %s714 = scalar_lea.vmem %s0, %s713
      $region116: #{lno1d_forward.7} parent=111 // pred_fallthru
        _
      // Predicated region
      $region117: #{lno1d_forward.7} parent=111 // pred_check
        %p715 = pneg %p80
      $region118: #{lno1d_forward.7} parent=111 // pred_check_branch
        %717 = sbr.rel (%p715) target = $region120
      $region119: #{lno1d_forward.7} parent=111 // pred_region
        %p718 = scmp.lt.s32.totalorder %s34, 1
        %s719 = scalar_select %p718, %s34, 1
        %s720 = smul.addr %s719, 2
        %s721 = smul.addr %s720, 8
        %s722 = scalar_lea.vmem %s1, %s721
      $region120: #{lno1d_forward.7} parent=111 // pred_fallthru
        _
    $region112: #{lno1d_forward.7} parent=5 // pred_fallthru
      _
    %p723 = scmp.le.s32.totalorder 1, %s34
    %p724 = scmp.lt.s32.totalorder %s34, 3
    %p725 = pnand %p723, %p724
    %p726 = pneg %p725
    // Predicated region
    $region121: #{lno1d_forward.7} parent=5 // pred_check
      _
    $region122: #{lno1d_forward.7} parent=5 // pred_check_branch
      %728 = sbr.rel (%p725) target = $region124
    $region123: #{lno1d_forward.7} parent=5 // pred_region
      %s729 = ssub.s32 %s34, 1
      %p730 = scmp.lt.s32.totalorder %s39, 1
      %s731 = scalar_select %p730, %s39, 1
      %s732 = smul.addr %s731, 2
      %s733 = smul.addr %s732, 8
      %s734 = scalar_lea.vmem %s0, %s733
      %p735 = pneg %p60
      %p736 = pneg %p57
      %p737 = scmp.lt.s32.totalorder %s39, 1
      %s738 = scalar_select %p737, %s39, 1
      %s739 = smul.addr %s738, 2
      %s740 = smul.addr %s739, 8
      %s741 = scalar_lea.vmem %s1, %s740
      %p742 = pneg %p86
      %p743 = pneg %p83
      %p744 = pneg %p107
      %p745 = pneg %p104
      %p746 = pneg %p128
      %p747 = pneg %p125
      %p748 = pneg %p149
      %p749 = pneg %p146
      %p750 = pneg %p170
      %p751 = pneg %p167
      %p752 = pneg %p191
      %p753 = pneg %p188
      %p754 = pneg %p212
      %p755 = pneg %p209
      %p756 = pneg %p233
      %p757 = pneg %p230
      %p758 = pneg %p254
      %p759 = pneg %p251
      %p760 = pneg %p275
      %p761 = pneg %p272
      %p762 = pneg %p296
      %p763 = pneg %p293
      %p764 = pneg %p317
      %p765 = pneg %p314
      %p766 = pneg %p338
      %p767 = pneg %p335
      %p768 = pneg %p359
      %p769 = pneg %p356
      %p770 = pneg %p380
      %p771 = pneg %p377
      %p772 = pneg %p401
      %p773 = pneg %p398
      %p774 = pneg %p422
      %p775 = pneg %p419
      %p776 = pneg %p443
      %p777 = pneg %p440
      %p778 = pneg %p464
      %p779 = pneg %p461
      %p780 = pneg %p485
      %p781 = pneg %p482
      %p782 = pneg %p506
      %p783 = pneg %p503
      %p784 = pneg %p527
      %p785 = pneg %p524
      %p786 = pneg %p548
      %p787 = pneg %p545
      %p788 = pneg %p569
      %p789 = pneg %p566
      %p790 = pneg %p590
      %p791 = pneg %p587
      %p792 = pneg %p616
      %p793 = pneg %p613
      %p794 = scmp.lt.s32.totalorder %s39, 1
      %s795 = scalar_select %p794, %s39, 1
      %s796 = smul.addr %s795, 2
      %s797 = smul.addr %s796, 8
      %s798 = scalar_lea.vmem %s26, %s797
      %p799 = scmp.lt.s32.totalorder %s39, 1
      %s800 = scalar_select %p799, %s39, 1
      %s801 = smul.addr %s800, 2
      %s802 = smul.addr %s801, 8
      %s803 = scalar_lea.vmem %s0, %s802
      %p804 = scmp.lt.s32.totalorder %s39, 1
      %s805 = scalar_select %p804, %s39, 1
      %s806 = smul.addr %s805, 2
      %s807 = smul.addr %s806, 8
      %s808 = scalar_lea.vmem %s1, %s807
      %p809 = scmp.lt.s32.totalorder %s39, 1
      %s810 = scalar_select %p809, %s39, 1
      %s811 = smul.addr %s810, 2
      %s812 = smul.addr %s811, 8
      %s813 = scalar_lea.vmem %s26, %s812
      %v815 = vld [vmem:[%s803] sm:$0xff]
      %v816 = vld [vmem:[%s803 + $0x8] sm:$0xff]
      %v817 = vld [vmem:[%s808] sm:$0xff]
      %v818 = vld [vmem:[%s808 + $0x8] sm:$0xff]
      %v819 = vld [vmem:[%s18] sm:$0xf]
      %v820 = vld [vmem:[%s18 + $0x4] sm:$0xf]
      %v821 = vld [vmem:[%s18 + $0x8] sm:$0xf]
      %v822 = vld [vmem:[%s18 + $0xc] sm:$0xf]
      %v823 = vld [vmem:[%s19] sm:$0x1]
      %v824 = vld [vmem:[%s20] sm:$0x1]
      %v825 = vld [vmem:[%s21] sm:$0x1]
      %v826 = vld [vmem:[%s22] sm:$0xf]
      %v827 = vld [vmem:[%s22 + $0x4] sm:$0xf]
      %v828 = vld [vmem:[%s22 + $0x8] sm:$0xf]
      %v829 = vld [vmem:[%s22 + $0xc] sm:$0xf]
      %v830 = vld [vmem:[%s23] sm:$0x1]
      %v831 = vld [vmem:[%s24] sm:$0xf]
      %v832 = vld [vmem:[%s24 + $0x4] sm:$0xf]
      %v833 = vld [vmem:[%s24 + $0x8] sm:$0xf]
      %v834 = vld [vmem:[%s24 + $0xc] sm:$0xf]
      %v835 = vld [vmem:[%s24 + $0x10] sm:$0xf]
      %v836 = vld [vmem:[%s24 + $0x14] sm:$0xf]
      %v837 = vld [vmem:[%s24 + $0x18] sm:$0xf]
      %v838 = vld [vmem:[%s24 + $0x1c] sm:$0xf]
      %v839 = vld [vmem:[#allocation2] sm:$0x1]
      %v840 = vpack.c.bf16 %v818, %v817
      %v842 = vlaneseq
      %v843 = vshrl.u32 %v842, 7
      %v844 = vsub.s32 0, %v843
      %v845 = vrot.slane %v823, %v844
      %v851 = vunpack.c.l.b16 %v819
      %v852 = vunpack.c.l.b16 %v820
      %v853 = vunpack.c.l.b16 %v821
      %v854 = vunpack.c.l.b16 %v822
      %v855 = vpack.c.b16 %v852, %v851
      %v856 = vpack.c.b16 %v854, %v853
      %vm859 = vcmask 261120
      %v861 = vsel %vm859, %v840, 0
      %863 = vmatprep.subr.bf16.mxu0 0
      %864 = vmatpush1.bf16.msra.mxu0 0
      %865 = vmatprep.subr.bf16.mxu0 0
      %866 = vmatpush1.bf16.msra.mxu0 0
      %867 = vmatprep.subr.bf16.mxu0 0
      %868 = vmatpush1.bf16.msra.mxu0 0
      %869 = vmatprep.subr.bf16.mxu0 0
      %870 = vmatpush1.bf16.msra.mxu0 0
      %871 = vmatprep.subr.bf16.mxu0 0
      %872 = vmatpush1.bf16.msra.mxu0 0
      %873 = vmatprep.subr.bf16.mxu0 0
      %874 = vmatpush1.bf16.msra.mxu0 0
      %875 = vmatprep.subr.bf16.mxu0 0
      %876 = vmatpush1.bf16.msra.mxu0 %v856
      %877 = vmatprep.subr.bf16.mxu0 0
      %878 = vmatpush1.bf16.msra.mxu0 %v855
      %879 = vmatprep.subr.bf16.mxu0 0
      %880 = vmatpush2.bf16.msra.mxu0 0
      %881 = vmatprep.subr.bf16.mxu0 0
      %882 = vmatpush2.bf16.msra.mxu0 0
      %883 = vmatprep.subr.bf16.mxu0 0
      %884 = vmatpush2.bf16.msra.mxu0 0
      %885 = vmatprep.subr.bf16.mxu0 0
      %886 = vmatpush2.bf16.msra.mxu0 0
      %887 = vmatprep.subr.bf16.mxu0 0
      %888 = vmatpush2.bf16.msra.mxu0 0
      %889 = vmatprep.subr.bf16.mxu0 0
      %890 = vmatpush2.bf16.msra.mxu0 0
      %891 = vmatprep.subr.bf16.mxu0 0
      %892 = vmatpush2.bf16.msra.mxu0 0
      %893 = vmatprep.subr.bf16.mxu0 0
      %894 = vmatpush2.bf16.msra.mxu0 0
      %895 = vmatprep.mubr.bf16.mxu0 0
      %896 = vmatmul.mubr.bf16.gmra.mxu0 %v861
      %v897 = vpop.f32.mrf.mxu0
      %v898 = vadd.f32 %v845, %v897
      %v899 = vpop.f32.mrf.mxu0
      %v900 = vpop.f32.mrf.mxu0
      %v901 = vadd.f32 %v845, %v900
      %v902 = vpop.f32.mrf.mxu0
      %903 = vdwg.mxu0
      %v904 = vld [vmem:[%s2] sm:$0x1]
      %v905 = vld [vmem:[%s3] sm:$0x1]
      %v906 = vpack.c.bf16 %v816, %v815
      %v908 = vlaneseq
      %v909 = vshrl.u32 %v908, 7
      %v910 = vsub.s32 0, %v909
      %v911 = vrot.slane %v905, %v910
      %vm913 = vcmask 15360
      %v915 = vsel %vm913, %v906, 0
      %vm917 = vcmask 1040384
      %v919 = vsel %vm917, %v904, 0
      %921 = vmatprep.subr.bf16.mxu0 0
      %922 = vmatpush1.bf16.msra.mxu0 0
      %923 = vmatprep.subr.bf16.mxu0 0
      %924 = vmatpush1.bf16.msra.mxu0 0
      %925 = vmatprep.subr.bf16.mxu0 0
      %926 = vmatpush1.bf16.msra.mxu0 0
      %927 = vmatprep.subr.bf16.mxu0 0
      %928 = vmatpush1.bf16.msra.mxu0 0
      %929 = vmatprep.subr.bf16.mxu0 0
      %930 = vmatpush1.bf16.msra.mxu0 0
      %931 = vmatprep.subr.bf16.mxu0 0
      %932 = vmatpush1.bf16.msra.mxu0 0
      %933 = vmatprep.subr.bf16.mxu0 0
      %934 = vmatpush1.bf16.msra.mxu0 0
      %935 = vmatprep.subr.bf16.mxu0 0
      %936 = vmatpush1.bf16.msra.mxu0 %v919
      %937 = vmatprep.subr.bf16.mxu0 0
      %938 = vmatpush2.bf16.msra.mxu0 0
      %939 = vmatprep.subr.bf16.mxu0 0
      %940 = vmatpush2.bf16.msra.mxu0 0
      %941 = vmatprep.subr.bf16.mxu0 0
      %942 = vmatpush2.bf16.msra.mxu0 0
      %943 = vmatprep.subr.bf16.mxu0 0
      %944 = vmatpush2.bf16.msra.mxu0 0
      %945 = vmatprep.subr.bf16.mxu0 0
      %946 = vmatpush2.bf16.msra.mxu0 0
      %947 = vmatprep.subr.bf16.mxu0 0
      %948 = vmatpush2.bf16.msra.mxu0 0
      %949 = vmatprep.subr.bf16.mxu0 0
      %950 = vmatpush2.bf16.msra.mxu0 0
      %951 = vmatprep.subr.bf16.mxu0 0
      %952 = vmatpush2.bf16.msra.mxu0 0
      %953 = vmatprep.mubr.bf16.mxu0 0
      %954 = vmatmul.mubr.bf16.gmra.mxu0 %v915
      %v955 = vpop.f32.mrf.mxu0
      %v956 = vadd.f32 %v911, %v955
      %v957 = vpop.f32.mrf.mxu0
      %v958 = vpop.f32.mrf.mxu0
      %v959 = vadd.f32 %v911, %v958
      %v960 = vpop.f32.mrf.mxu0
      %961 = vdwg.mxu0
      %v962 = vmax.f32 %v956, 0.0
      %v963 = vmax.f32 %v959, 0.0
      %v964 = vld [vmem:[%s4] sm:$0xf]
      %v965 = vld [vmem:[%s4 + $0x4] sm:$0xf]
      %v966 = vld [vmem:[%s4 + $0x8] sm:$0xf]
      %v967 = vld [vmem:[%s4 + $0xc] sm:$0xf]
      %v968 = vld [vmem:[%s4 + $0x10] sm:$0xf]
      %v969 = vld [vmem:[%s4 + $0x14] sm:$0xf]
      %v970 = vld [vmem:[%s4 + $0x18] sm:$0xf]
      %v971 = vld [vmem:[%s4 + $0x1c] sm:$0xf]
      %v972 = vld [vmem:[%s5] sm:$0x1]
      %v973 = vpack.c.bf16 %v963, %v962
      %v975 = vlaneseq
      %v976 = vshrl.u32 %v975, 7
      %v977 = vsub.s32 0, %v976
      %v978 = vrot.slane %v972, %v977
      %v988 = vunpack.c.l.b16 %v964
      %v989 = vunpack.c.l.b16 %v965
      %v990 = vunpack.c.l.b16 %v966
      %v991 = vunpack.c.l.b16 %v967
      %v992 = vunpack.c.l.b16 %v968
      %v993 = vunpack.c.l.b16 %v969
      %v994 = vunpack.c.l.b16 %v970
      %v995 = vunpack.c.l.b16 %v971
      %v996 = vpack.c.b16 %v989, %v988
      %v997 = vpack.c.b16 %v991, %v990
      %v998 = vpack.c.b16 %v993, %v992
      %v999 = vpack.c.b16 %v995, %v994
      %vm1004 = vcmask 523264
      %v1006 = vsel %vm1004, %v973, 0
      %1008 = vmatprep.subr.bf16.mxu0 0
      %1009 = vmatpush1.bf16.msra.mxu0 0
      %1010 = vmatprep.subr.bf16.mxu0 0
      %1011 = vmatpush1.bf16.msra.mxu0 0
      %1012 = vmatprep.subr.bf16.mxu0 0
      %1013 = vmatpush1.bf16.msra.mxu0 0
      %1014 = vmatprep.subr.bf16.mxu0 0
      %1015 = vmatpush1.bf16.msra.mxu0 0
      %1016 = vmatprep.subr.bf16.mxu0 0
      %1017 = vmatpush1.bf16.msra.mxu0 %v999
      %1018 = vmatprep.subr.bf16.mxu0 0
      %1019 = vmatpush1.bf16.msra.mxu0 %v998
      %1020 = vmatprep.subr.bf16.mxu0 0
      %1021 = vmatpush1.bf16.msra.mxu0 %v997
      %1022 = vmatprep.subr.bf16.mxu0 0
      %1023 = vmatpush1.bf16.msra.mxu0 %v996
      %1024 = vmatprep.subr.bf16.mxu0 0
      %1025 = vmatpush2.bf16.msra.mxu0 0
      %1026 = vmatprep.subr.bf16.mxu0 0
      %1027 = vmatpush2.bf16.msra.mxu0 0
      %1028 = vmatprep.subr.bf16.mxu0 0
      %1029 = vmatpush2.bf16.msra.mxu0 0
      %1030 = vmatprep.subr.bf16.mxu0 0
      %1031 = vmatpush2.bf16.msra.mxu0 0
      %1032 = vmatprep.subr.bf16.mxu0 0
      %1033 = vmatpush2.bf16.msra.mxu0 0
      %1034 = vmatprep.subr.bf16.mxu0 0
      %1035 = vmatpush2.bf16.msra.mxu0 0
      %1036 = vmatprep.subr.bf16.mxu0 0
      %1037 = vmatpush2.bf16.msra.mxu0 0
      %1038 = vmatprep.subr.bf16.mxu0 0
      %1039 = vmatpush2.bf16.msra.mxu0 0
      %1040 = vmatprep.mubr.bf16.mxu0 0
      %1041 = vmatmul.mubr.bf16.gmra.mxu0 %v1006
      %v1042 = vpop.f32.mrf.mxu0
      %v1043 = vadd.f32 %v978, %v1042
      %v1044 = vpop.f32.mrf.mxu0
      %v1045 = vpop.f32.mrf.mxu0
      %v1046 = vadd.f32 %v978, %v1045
      %v1047 = vpop.f32.mrf.mxu0
      %1048 = vdwg.mxu0
      %v1049 = vmax.f32 %v1043, 0.0
      %v1050 = vmax.f32 %v1046, 0.0
      %v1051 = vld [vmem:[%s6] sm:$0xff]
      %v1052 = vld [vmem:[%s6 + $0x8] sm:$0xff]
      %v1053 = vld [vmem:[%s6 + $0x10] sm:$0xff]
      %v1054 = vld [vmem:[%s6 + $0x18] sm:$0xff]
      %v1055 = vld [vmem:[%s6 + $0x20] sm:$0xff]
      %v1056 = vld [vmem:[%s6 + $0x28] sm:$0xff]
      %v1057 = vld [vmem:[%s6 + $0x30] sm:$0xff]
      %v1058 = vld [vmem:[%s6 + $0x38] sm:$0xff]
      %v1059 = vld [vmem:[%s6 + $0x40] sm:$0xff]
      %v1060 = vld [vmem:[%s6 + $0x48] sm:$0xff]
      %v1061 = vld [vmem:[%s6 + $0x50] sm:$0xff]
      %v1062 = vld [vmem:[%s6 + $0x58] sm:$0xff]
      %v1063 = vld [vmem:[%s6 + $0x60] sm:$0xff]
      %v1064 = vld [vmem:[%s6 + $0x68] sm:$0xff]
      %v1065 = vld [vmem:[%s6 + $0x70] sm:$0xff]
      %v1066 = vld [vmem:[%s6 + $0x78] sm:$0xff]
      %v1067 = vld [vmem:[%s7] sm:$0x3]
      %v1068 = vpack.c.bf16 %v1050, %v1049
      %v1070 = vlaneseq
      %v1071 = vshrl.u32 %v1070, 7
      %v1072 = vsub.s32 0, %v1071
      %v1073 = vrot.slane %v1067, %v1072
      %v1074 = vlaneseq
      %v1075 = vshrl.u32 %v1074, 7
      %v1076 = vsub.s32 1, %v1075
      %v1077 = vrot.slane %v1067, %v1076
      %v1096 = vunpack.c.l.b16 %v1051
      %v1097 = vunpack.c.h.b16 %v1051
      %v1098 = vunpack.c.l.b16 %v1052
      %v1099 = vunpack.c.h.b16 %v1052
      %v1100 = vunpack.c.l.b16 %v1053
      %v1101 = vunpack.c.h.b16 %v1053
      %v1102 = vunpack.c.l.b16 %v1054
      %v1103 = vunpack.c.h.b16 %v1054
      %v1104 = vunpack.c.l.b16 %v1055
      %v1105 = vunpack.c.h.b16 %v1055
      %v1106 = vunpack.c.l.b16 %v1056
      %v1107 = vunpack.c.h.b16 %v1056
      %v1108 = vunpack.c.l.b16 %v1057
      %v1109 = vunpack.c.h.b16 %v1057
      %v1110 = vunpack.c.l.b16 %v1058
      %v1111 = vunpack.c.h.b16 %v1058
      %v1112 = vunpack.c.l.b16 %v1059
      %v1113 = vunpack.c.h.b16 %v1059
      %v1114 = vunpack.c.l.b16 %v1060
      %v1115 = vunpack.c.h.b16 %v1060
      %v1116 = vunpack.c.l.b16 %v1061
      %v1117 = vunpack.c.h.b16 %v1061
      %v1118 = vunpack.c.l.b16 %v1062
      %v1119 = vunpack.c.h.b16 %v1062
      %v1120 = vunpack.c.l.b16 %v1063
      %v1121 = vunpack.c.h.b16 %v1063
      %v1122 = vunpack.c.l.b16 %v1064
      %v1123 = vunpack.c.h.b16 %v1064
      %v1124 = vunpack.c.l.b16 %v1065
      %v1125 = vunpack.c.h.b16 %v1065
      %v1126 = vunpack.c.l.b16 %v1066
      %v1127 = vunpack.c.h.b16 %v1066
      %v1128 = vpack.c.b16 %v1098, %v1096
      %v1129 = vpack.c.b16 %v1099, %v1097
      %v1130 = vpack.c.b16 %v1102, %v1100
      %v1131 = vpack.c.b16 %v1103, %v1101
      %v1132 = vpack.c.b16 %v1106, %v1104
      %v1133 = vpack.c.b16 %v1107, %v1105
      %v1134 = vpack.c.b16 %v1110, %v1108
      %v1135 = vpack.c.b16 %v1111, %v1109
      %v1136 = vpack.c.b16 %v1114, %v1112
      %v1137 = vpack.c.b16 %v1115, %v1113
      %v1138 = vpack.c.b16 %v1118, %v1116
      %v1139 = vpack.c.b16 %v1119, %v1117
      %v1140 = vpack.c.b16 %v1122, %v1120
      %v1141 = vpack.c.b16 %v1123, %v1121
      %v1142 = vpack.c.b16 %v1126, %v1124
      %v1143 = vpack.c.b16 %v1127, %v1125
      %1160 = vmatprep.subr.bf16.mxu0 %v1143
      %1161 = vmatpush1.bf16.msra.mxu0 %v1142
      %1162 = vmatprep.subr.bf16.mxu0 %v1141
      %1163 = vmatpush1.bf16.msra.mxu0 %v1140
      %1164 = vmatprep.subr.bf16.mxu0 %v1139
      %1165 = vmatpush1.bf16.msra.mxu0 %v1138
      %1166 = vmatprep.subr.bf16.mxu0 %v1137
      %1167 = vmatpush1.bf16.msra.mxu0 %v1136
      %1168 = vmatprep.subr.bf16.mxu0 %v1135
      %1169 = vmatpush1.bf16.msra.mxu0 %v1134
      %1170 = vmatprep.subr.bf16.mxu0 %v1133
      %1171 = vmatpush1.bf16.msra.mxu0 %v1132
      %1172 = vmatprep.subr.bf16.mxu0 %v1131
      %1173 = vmatpush1.bf16.msra.mxu0 %v1130
      %1174 = vmatprep.subr.bf16.mxu0 %v1129
      %1175 = vmatpush1.bf16.msra.mxu0 %v1128
      %1176 = vmatprep.subr.bf16.mxu0 0
      %1177 = vmatpush2.bf16.msra.mxu0 0
      %1178 = vmatprep.subr.bf16.mxu0 0
      %1179 = vmatpush2.bf16.msra.mxu0 0
      %1180 = vmatprep.subr.bf16.mxu0 0
      %1181 = vmatpush2.bf16.msra.mxu0 0
      %1182 = vmatprep.subr.bf16.mxu0 0
      %1183 = vmatpush2.bf16.msra.mxu0 0
      %1184 = vmatprep.subr.bf16.mxu0 0
      %1185 = vmatpush2.bf16.msra.mxu0 0
      %1186 = vmatprep.subr.bf16.mxu0 0
      %1187 = vmatpush2.bf16.msra.mxu0 0
      %1188 = vmatprep.subr.bf16.mxu0 0
      %1189 = vmatpush2.bf16.msra.mxu0 0
      %1190 = vmatprep.subr.bf16.mxu0 0
      %1191 = vmatpush2.bf16.msra.mxu0 0
      %1192 = vmatprep.mubr.bf16.mxu0 0
      %1193 = vmatmul.mubr.bf16.gmra.mxu0 %v1068
      %v1194 = vpop.f32.mrf.mxu0
      %v1195 = vadd.f32 %v1073, %v1194
      %v1196 = vpop.f32.mrf.mxu0
      %v1197 = vadd.f32 %v1077, %v1196
      %v1198 = vpop.f32.mrf.mxu0
      %v1199 = vadd.f32 %v1073, %v1198
      %v1200 = vpop.f32.mrf.mxu0
      %v1201 = vadd.f32 %v1077, %v1200
      %1202 = vdwg.mxu0
      %v1203 = vmax.f32 %v1195, 0.0
      %v1204 = vmax.f32 %v1197, 0.0
      %v1205 = vmax.f32 %v1199, 0.0
      %v1206 = vmax.f32 %v1201, 0.0
      %v1207 = vld [vmem:[%s8] sm:$0xf]
      %v1208 = vld [vmem:[%s8 + $0x4] sm:$0xf]
      %v1209 = vld [vmem:[%s8 + $0x8] sm:$0xf]
      %v1210 = vld [vmem:[%s8 + $0xc] sm:$0xf]
      %v1211 = vld [vmem:[%s8 + $0x10] sm:$0xf]
      %v1212 = vld [vmem:[%s8 + $0x14] sm:$0xf]
      %v1213 = vld [vmem:[%s8 + $0x18] sm:$0xf]
      %v1214 = vld [vmem:[%s8 + $0x1c] sm:$0xf]
      %v1215 = vld [vmem:[%s8 + $0x20] sm:$0xf]
      %v1216 = vld [vmem:[%s8 + $0x24] sm:$0xf]
      %v1217 = vld [vmem:[%s8 + $0x28] sm:$0xf]
      %v1218 = vld [vmem:[%s8 + $0x2c] sm:$0xf]
      %v1219 = vld [vmem:[%s8 + $0x30] sm:$0xf]
      %v1220 = vld [vmem:[%s8 + $0x34] sm:$0xf]
      %v1221 = vld [vmem:[%s8 + $0x38] sm:$0xf]
      %v1222 = vld [vmem:[%s8 + $0x3c] sm:$0xf]
      %v1223 = vld [vmem:[%s8 + $0x40] sm:$0xf]
      %v1224 = vld [vmem:[%s8 + $0x44] sm:$0xf]
      %v1225 = vld [vmem:[%s8 + $0x48] sm:$0xf]
      %v1226 = vld [vmem:[%s8 + $0x4c] sm:$0xf]
      %v1227 = vld [vmem:[%s8 + $0x50] sm:$0xf]
      %v1228 = vld [vmem:[%s8 + $0x54] sm:$0xf]
      %v1229 = vld [vmem:[%s8 + $0x58] sm:$0xf]
      %v1230 = vld [vmem:[%s8 + $0x5c] sm:$0xf]
      %v1231 = vld [vmem:[%s8 + $0x60] sm:$0xf]
      %v1232 = vld [vmem:[%s8 + $0x64] sm:$0xf]
      %v1233 = vld [vmem:[%s8 + $0x68] sm:$0xf]
      %v1234 = vld [vmem:[%s8 + $0x6c] sm:$0xf]
      %v1235 = vld [vmem:[%s8 + $0x70] sm:$0xf]
      %v1236 = vld [vmem:[%s8 + $0x74] sm:$0xf]
      %v1237 = vld [vmem:[%s8 + $0x78] sm:$0xf]
      %v1238 = vld [vmem:[%s8 + $0x7c] sm:$0xf]
      %v1239 = vld [vmem:[%s9] sm:$0x1]
      %v1240 = vpack.c.bf16 %v1205, %v1203
      %v1241 = vpack.c.bf16 %v1206, %v1204
      %v1243 = vlaneseq
      %v1244 = vshrl.u32 %v1243, 7
      %v1245 = vsub.s32 0, %v1244
      %v1246 = vrot.slane %v1239, %v1245
      %v1280 = vunpack.c.l.b16 %v1207
      %v1281 = vunpack.c.l.b16 %v1208
      %v1282 = vunpack.c.l.b16 %v1209
      %v1283 = vunpack.c.l.b16 %v1210
      %v1284 = vunpack.c.l.b16 %v1211
      %v1285 = vunpack.c.l.b16 %v1212
      %v1286 = vunpack.c.l.b16 %v1213
      %v1287 = vunpack.c.l.b16 %v1214
      %v1288 = vunpack.c.l.b16 %v1215
      %v1289 = vunpack.c.l.b16 %v1216
      %v1290 = vunpack.c.l.b16 %v1217
      %v1291 = vunpack.c.l.b16 %v1218
      %v1292 = vunpack.c.l.b16 %v1219
      %v1293 = vunpack.c.l.b16 %v1220
      %v1294 = vunpack.c.l.b16 %v1221
      %v1295 = vunpack.c.l.b16 %v1222
      %v1296 = vunpack.c.l.b16 %v1223
      %v1297 = vunpack.c.l.b16 %v1224
      %v1298 = vunpack.c.l.b16 %v1225
      %v1299 = vunpack.c.l.b16 %v1226
      %v1300 = vunpack.c.l.b16 %v1227
      %v1301 = vunpack.c.l.b16 %v1228
      %v1302 = vunpack.c.l.b16 %v1229
      %v1303 = vunpack.c.l.b16 %v1230
      %v1304 = vunpack.c.l.b16 %v1231
      %v1305 = vunpack.c.l.b16 %v1232
      %v1306 = vunpack.c.l.b16 %v1233
      %v1307 = vunpack.c.l.b16 %v1234
      %v1308 = vunpack.c.l.b16 %v1235
      %v1309 = vunpack.c.l.b16 %v1236
      %v1310 = vunpack.c.l.b16 %v1237
      %v1311 = vunpack.c.l.b16 %v1238
      %v1312 = vpack.c.b16 %v1281, %v1280
      %v1313 = vpack.c.b16 %v1283, %v1282
      %v1314 = vpack.c.b16 %v1285, %v1284
      %v1315 = vpack.c.b16 %v1287, %v1286
      %v1316 = vpack.c.b16 %v1289, %v1288
      %v1317 = vpack.c.b16 %v1291, %v1290
      %v1318 = vpack.c.b16 %v1293, %v1292
      %v1319 = vpack.c.b16 %v1295, %v1294
      %v1320 = vpack.c.b16 %v1297, %v1296
      %v1321 = vpack.c.b16 %v1299, %v1298
      %v1322 = vpack.c.b16 %v1301, %v1300
      %v1323 = vpack.c.b16 %v1303, %v1302
      %v1324 = vpack.c.b16 %v1305, %v1304
      %v1325 = vpack.c.b16 %v1307, %v1306
      %v1326 = vpack.c.b16 %v1309, %v1308
      %v1327 = vpack.c.b16 %v1311, %v1310
      %1344 = vmatprep.subr.bf16.mxu0 0
      %1345 = vmatpush1.bf16.msra.mxu0 %v1319
      %1346 = vmatprep.subr.bf16.mxu0 0
      %1347 = vmatpush1.bf16.msra.mxu0 %v1318
      %1348 = vmatprep.subr.bf16.mxu0 0
      %1349 = vmatpush1.bf16.msra.mxu0 %v1317
      %1350 = vmatprep.subr.bf16.mxu0 0
      %1351 = vmatpush1.bf16.msra.mxu0 %v1316
      %1352 = vmatprep.subr.bf16.mxu0 0
      %1353 = vmatpush1.bf16.msra.mxu0 %v1315
      %1354 = vmatprep.subr.bf16.mxu0 0
      %1355 = vmatpush1.bf16.msra.mxu0 %v1314
      %1356 = vmatprep.subr.bf16.mxu0 0
      %1357 = vmatpush1.bf16.msra.mxu0 %v1313
      %1358 = vmatprep.subr.bf16.mxu0 0
      %1359 = vmatpush1.bf16.msra.mxu0 %v1312
      %1360 = vmatprep.subr.bf16.mxu0 0
      %1361 = vmatpush2.bf16.msra.mxu0 %v1327
      %1362 = vmatprep.subr.bf16.mxu0 0
      %1363 = vmatpush2.bf16.msra.mxu0 %v1326
      %1364 = vmatprep.subr.bf16.mxu0 0
      %1365 = vmatpush2.bf16.msra.mxu0 %v1325
      %1366 = vmatprep.subr.bf16.mxu0 0
      %1367 = vmatpush2.bf16.msra.mxu0 %v1324
      %1368 = vmatprep.subr.bf16.mxu0 0
      %1369 = vmatpush2.bf16.msra.mxu0 %v1323
      %1370 = vmatprep.subr.bf16.mxu0 0
      %1371 = vmatpush2.bf16.msra.mxu0 %v1322
      %1372 = vmatprep.subr.bf16.mxu0 0
      %1373 = vmatpush2.bf16.msra.mxu0 %v1321
      %1374 = vmatprep.subr.bf16.mxu0 0
      %1375 = vmatpush2.bf16.msra.mxu0 %v1320
      %1376 = vmatprep.mubr.bf16.mxu0 %v1241
      %1377 = vmatmul.mubr.bf16.gmra.mxu0 %v1240
      %v1378 = vpop.f32.mrf.mxu0
      %v1379 = vadd.f32 %v1246, %v1378
      %v1380 = vpop.f32.mrf.mxu0
      %v1381 = vpop.f32.mrf.mxu0
      %v1382 = vadd.f32 %v1246, %v1381
      %v1383 = vpop.f32.mrf.mxu0
      %1384 = vdwg.mxu0
      %v1385 = vld [vmem:[%s10] sm:$0x1]
      %v1386 = vld [vmem:[%s11] sm:$0x1]
      %v1388 = vlaneseq
      %v1389 = vshrl.u32 %v1388, 7
      %v1390 = vsub.s32 0, %v1389
      %v1391 = vrot.slane %v1386, %v1390
      %v1394 = vsel %vm917, %v1385, 0
      %1396 = vmatprep.subr.bf16.mxu0 0
      %1397 = vmatpush1.bf16.msra.mxu0 0
      %1398 = vmatprep.subr.bf16.mxu0 0
      %1399 = vmatpush1.bf16.msra.mxu0 0
      %1400 = vmatprep.subr.bf16.mxu0 0
      %1401 = vmatpush1.bf16.msra.mxu0 0
      %1402 = vmatprep.subr.bf16.mxu0 0
      %1403 = vmatpush1.bf16.msra.mxu0 0
      %1404 = vmatprep.subr.bf16.mxu0 0
      %1405 = vmatpush1.bf16.msra.mxu0 0
      %1406 = vmatprep.subr.bf16.mxu0 0
      %1407 = vmatpush1.bf16.msra.mxu0 0
      %1408 = vmatprep.subr.bf16.mxu0 0
      %1409 = vmatpush1.bf16.msra.mxu0 0
      %1410 = vmatprep.subr.bf16.mxu0 0
      %1411 = vmatpush1.bf16.msra.mxu0 %v1394
      %1412 = vmatprep.subr.bf16.mxu0 0
      %1413 = vmatpush2.bf16.msra.mxu0 0
      %1414 = vmatprep.subr.bf16.mxu0 0
      %1415 = vmatpush2.bf16.msra.mxu0 0
      %1416 = vmatprep.subr.bf16.mxu0 0
      %1417 = vmatpush2.bf16.msra.mxu0 0
      %1418 = vmatprep.subr.bf16.mxu0 0
      %1419 = vmatpush2.bf16.msra.mxu0 0
      %1420 = vmatprep.subr.bf16.mxu0 0
      %1421 = vmatpush2.bf16.msra.mxu0 0
      %1422 = vmatprep.subr.bf16.mxu0 0
      %1423 = vmatpush2.bf16.msra.mxu0 0
      %1424 = vmatprep.subr.bf16.mxu0 0
      %1425 = vmatpush2.bf16.msra.mxu0 0
      %1426 = vmatprep.subr.bf16.mxu0 0
      %1427 = vmatpush2.bf16.msra.mxu0 0
      %1428 = vmatprep.mubr.bf16.mxu0 0
      %1429 = vmatmul.mubr.bf16.gmra.mxu0 %v915
      %v1430 = vpop.f32.mrf.mxu0
      %v1431 = vadd.f32 %v1391, %v1430
      %v1432 = vpop.f32.mrf.mxu0
      %v1433 = vpop.f32.mrf.mxu0
      %v1434 = vadd.f32 %v1391, %v1433
      %v1435 = vpop.f32.mrf.mxu0
      %1436 = vdwg.mxu0
      %v1437 = vmax.f32 %v1431, 0.0
      %v1438 = vmax.f32 %v1434, 0.0
      %v1439 = vld [vmem:[%s12] sm:$0xf]
      %v1440 = vld [vmem:[%s12 + $0x4] sm:$0xf]
      %v1441 = vld [vmem:[%s12 + $0x8] sm:$0xf]
      %v1442 = vld [vmem:[%s12 + $0xc] sm:$0xf]
      %v1443 = vld [vmem:[%s12 + $0x10] sm:$0xf]
      %v1444 = vld [vmem:[%s12 + $0x14] sm:$0xf]
      %v1445 = vld [vmem:[%s12 + $0x18] sm:$0xf]
      %v1446 = vld [vmem:[%s12 + $0x1c] sm:$0xf]
      %v1447 = vld [vmem:[%s13] sm:$0x1]
      %v1448 = vpack.c.bf16 %v1438, %v1437
      %v1450 = vlaneseq
      %v1451 = vshrl.u32 %v1450, 7
      %v1452 = vsub.s32 0, %v1451
      %v1453 = vrot.slane %v1447, %v1452
      %v1463 = vunpack.c.l.b16 %v1439
      %v1464 = vunpack.c.l.b16 %v1440
      %v1465 = vunpack.c.l.b16 %v1441
      %v1466 = vunpack.c.l.b16 %v1442
      %v1467 = vunpack.c.l.b16 %v1443
      %v1468 = vunpack.c.l.b16 %v1444
      %v1469 = vunpack.c.l.b16 %v1445
      %v1470 = vunpack.c.l.b16 %v1446
      %v1471 = vpack.c.b16 %v1464, %v1463
      %v1472 = vpack.c.b16 %v1466, %v1465
      %v1473 = vpack.c.b16 %v1468, %v1467
      %v1474 = vpack.c.b16 %v1470, %v1469
      %v1480 = vsel %vm1004, %v1448, 0
      %1482 = vmatprep.subr.bf16.mxu0 0
      %1483 = vmatpush1.bf16.msra.mxu0 0
      %1484 = vmatprep.subr.bf16.mxu0 0
      %1485 = vmatpush1.bf16.msra.mxu0 0
      %1486 = vmatprep.subr.bf16.mxu0 0
      %1487 = vmatpush1.bf16.msra.mxu0 0
      %1488 = vmatprep.subr.bf16.mxu0 0
      %1489 = vmatpush1.bf16.msra.mxu0 0
      %1490 = vmatprep.subr.bf16.mxu0 0
      %1491 = vmatpush1.bf16.msra.mxu0 %v1474
      %1492 = vmatprep.subr.bf16.mxu0 0
      %1493 = vmatpush1.bf16.msra.mxu0 %v1473
      %1494 = vmatprep.subr.bf16.mxu0 0
      %1495 = vmatpush1.bf16.msra.mxu0 %v1472
      %1496 = vmatprep.subr.bf16.mxu0 0
      %1497 = vmatpush1.bf16.msra.mxu0 %v1471
      %1498 = vmatprep.subr.bf16.mxu0 0
      %1499 = vmatpush2.bf16.msra.mxu0 0
      %1500 = vmatprep.subr.bf16.mxu0 0
      %1501 = vmatpush2.bf16.msra.mxu0 0
      %1502 = vmatprep.subr.bf16.mxu0 0
      %1503 = vmatpush2.bf16.msra.mxu0 0
      %1504 = vmatprep.subr.bf16.mxu0 0
      %1505 = vmatpush2.bf16.msra.mxu0 0
      %1506 = vmatprep.subr.bf16.mxu0 0
      %1507 = vmatpush2.bf16.msra.mxu0 0
      %1508 = vmatprep.subr.bf16.mxu0 0
      %1509 = vmatpush2.bf16.msra.mxu0 0
      %1510 = vmatprep.subr.bf16.mxu0 0
      %1511 = vmatpush2.bf16.msra.mxu0 0
      %1512 = vmatprep.subr.bf16.mxu0 0
      %1513 = vmatpush2.bf16.msra.mxu0 0
      %1514 = vmatprep.mubr.bf16.mxu0 0
      %1515 = vmatmul.mubr.bf16.gmra.mxu0 %v1480
      %v1516 = vpop.f32.mrf.mxu0
      %v1517 = vadd.f32 %v1453, %v1516
      %v1518 = vpop.f32.mrf.mxu0
      %v1519 = vpop.f32.mrf.mxu0
      %v1520 = vadd.f32 %v1453, %v1519
      %v1521 = vpop.f32.mrf.mxu0
      %1522 = vdwg.mxu0
      %v1523 = vmax.f32 %v1517, 0.0
      %v1524 = vmax.f32 %v1520, 0.0
      %v1525 = vld [vmem:[%s14] sm:$0xff]
      %v1526 = vld [vmem:[%s14 + $0x8] sm:$0xff]
      %v1527 = vld [vmem:[%s14 + $0x10] sm:$0xff]
      %v1528 = vld [vmem:[%s14 + $0x18] sm:$0xff]
      %v1529 = vld [vmem:[%s14 + $0x20] sm:$0xff]
      %v1530 = vld [vmem:[%s14 + $0x28] sm:$0xff]
      %v1531 = vld [vmem:[%s14 + $0x30] sm:$0xff]
      %v1532 = vld [vmem:[%s14 + $0x38] sm:$0xff]
      %v1533 = vld [vmem:[%s14 + $0x40] sm:$0xff]
      %v1534 = vld [vmem:[%s14 + $0x48] sm:$0xff]
      %v1535 = vld [vmem:[%s14 + $0x50] sm:$0xff]
      %v1536 = vld [vmem:[%s14 + $0x58] sm:$0xff]
      %v1537 = vld [vmem:[%s14 + $0x60] sm:$0xff]
      %v1538 = vld [vmem:[%s14 + $0x68] sm:$0xff]
      %v1539 = vld [vmem:[%s14 + $0x70] sm:$0xff]
      %v1540 = vld [vmem:[%s14 + $0x78] sm:$0xff]
      %v1541 = vld [vmem:[%s15] sm:$0x3]
      %v1542 = vpack.c.bf16 %v1524, %v1523
      %v1544 = vlaneseq
      %v1545 = vshrl.u32 %v1544, 7
      %v1546 = vsub.s32 0, %v1545
      %v1547 = vrot.slane %v1541, %v1546
      %v1548 = vlaneseq
      %v1549 = vshrl.u32 %v1548, 7
      %v1550 = vsub.s32 1, %v1549
      %v1551 = vrot.slane %v1541, %v1550
      %v1570 = vunpack.c.l.b16 %v1525
      %v1571 = vunpack.c.h.b16 %v1525
      %v1572 = vunpack.c.l.b16 %v1526
      %v1573 = vunpack.c.h.b16 %v1526
      %v1574 = vunpack.c.l.b16 %v1527
      %v1575 = vunpack.c.h.b16 %v1527
      %v1576 = vunpack.c.l.b16 %v1528
      %v1577 = vunpack.c.h.b16 %v1528
      %v1578 = vunpack.c.l.b16 %v1529
      %v1579 = vunpack.c.h.b16 %v1529
      %v1580 = vunpack.c.l.b16 %v1530
      %v1581 = vunpack.c.h.b16 %v1530
      %v1582 = vunpack.c.l.b16 %v1531
      %v1583 = vunpack.c.h.b16 %v1531
      %v1584 = vunpack.c.l.b16 %v1532
      %v1585 = vunpack.c.h.b16 %v1532
      %v1586 = vunpack.c.l.b16 %v1533
      %v1587 = vunpack.c.h.b16 %v1533
      %v1588 = vunpack.c.l.b16 %v1534
      %v1589 = vunpack.c.h.b16 %v1534
      %v1590 = vunpack.c.l.b16 %v1535
      %v1591 = vunpack.c.h.b16 %v1535
      %v1592 = vunpack.c.l.b16 %v1536
      %v1593 = vunpack.c.h.b16 %v1536
      %v1594 = vunpack.c.l.b16 %v1537
      %v1595 = vunpack.c.h.b16 %v1537
      %v1596 = vunpack.c.l.b16 %v1538
      %v1597 = vunpack.c.h.b16 %v1538
      %v1598 = vunpack.c.l.b16 %v1539
      %v1599 = vunpack.c.h.b16 %v1539
      %v1600 = vunpack.c.l.b16 %v1540
      %v1601 = vunpack.c.h.b16 %v1540
      %v1602 = vpack.c.b16 %v1572, %v1570
      %v1603 = vpack.c.b16 %v1573, %v1571
      %v1604 = vpack.c.b16 %v1576, %v1574
      %v1605 = vpack.c.b16 %v1577, %v1575
      %v1606 = vpack.c.b16 %v1580, %v1578
      %v1607 = vpack.c.b16 %v1581, %v1579
      %v1608 = vpack.c.b16 %v1584, %v1582
      %v1609 = vpack.c.b16 %v1585, %v1583
      %v1610 = vpack.c.b16 %v1588, %v1586
      %v1611 = vpack.c.b16 %v1589, %v1587
      %v1612 = vpack.c.b16 %v1592, %v1590
      %v1613 = vpack.c.b16 %v1593, %v1591
      %v1614 = vpack.c.b16 %v1596, %v1594
      %v1615 = vpack.c.b16 %v1597, %v1595
      %v1616 = vpack.c.b16 %v1600, %v1598
      %v1617 = vpack.c.b16 %v1601, %v1599
      %1634 = vmatprep.subr.bf16.mxu0 %v1617
      %1635 = vmatpush1.bf16.msra.mxu0 %v1616
      %1636 = vmatprep.subr.bf16.mxu0 %v1615
      %1637 = vmatpush1.bf16.msra.mxu0 %v1614
      %1638 = vmatprep.subr.bf16.mxu0 %v1613
      %1639 = vmatpush1.bf16.msra.mxu0 %v1612
      %1640 = vmatprep.subr.bf16.mxu0 %v1611
      %1641 = vmatpush1.bf16.msra.mxu0 %v1610
      %1642 = vmatprep.subr.bf16.mxu0 %v1609
      %1643 = vmatpush1.bf16.msra.mxu0 %v1608
      %1644 = vmatprep.subr.bf16.mxu0 %v1607
      %1645 = vmatpush1.bf16.msra.mxu0 %v1606
      %1646 = vmatprep.subr.bf16.mxu0 %v1605
      %1647 = vmatpush1.bf16.msra.mxu0 %v1604
      %1648 = vmatprep.subr.bf16.mxu0 %v1603
      %1649 = vmatpush1.bf16.msra.mxu0 %v1602
      %1650 = vmatprep.subr.bf16.mxu0 0
      %1651 = vmatpush2.bf16.msra.mxu0 0
      %1652 = vmatprep.subr.bf16.mxu0 0
      %1653 = vmatpush2.bf16.msra.mxu0 0
      %1654 = vmatprep.subr.bf16.mxu0 0
      %1655 = vmatpush2.bf16.msra.mxu0 0
      %1656 = vmatprep.subr.bf16.mxu0 0
      %1657 = vmatpush2.bf16.msra.mxu0 0
      %1658 = vmatprep.subr.bf16.mxu0 0
      %1659 = vmatpush2.bf16.msra.mxu0 0
      %1660 = vmatprep.subr.bf16.mxu0 0
      %1661 = vmatpush2.bf16.msra.mxu0 0
      %1662 = vmatprep.subr.bf16.mxu0 0
      %1663 = vmatpush2.bf16.msra.mxu0 0
      %1664 = vmatprep.subr.bf16.mxu0 0
      %1665 = vmatpush2.bf16.msra.mxu0 0
      %1666 = vmatprep.mubr.bf16.mxu0 0
      %1667 = vmatmul.mubr.bf16.gmra.mxu0 %v1542
      %v1668 = vpop.f32.mrf.mxu0
      %v1669 = vadd.f32 %v1547, %v1668
      %v1670 = vpop.f32.mrf.mxu0
      %v1671 = vadd.f32 %v1551, %v1670
      %v1672 = vpop.f32.mrf.mxu0
      %v1673 = vadd.f32 %v1547, %v1672
      %v1674 = vpop.f32.mrf.mxu0
      %v1675 = vadd.f32 %v1551, %v1674
      %1676 = vdwg.mxu0
      %v1677 = vmax.f32 %v1669, 0.0
      %v1678 = vmax.f32 %v1671, 0.0
      %v1679 = vmax.f32 %v1673, 0.0
      %v1680 = vmax.f32 %v1675, 0.0
      %v1681 = vld [vmem:[%s16] sm:$0xf]
      %v1682 = vld [vmem:[%s16 + $0x4] sm:$0xf]
      %v1683 = vld [vmem:[%s16 + $0x8] sm:$0xf]
      %v1684 = vld [vmem:[%s16 + $0xc] sm:$0xf]
      %v1685 = vld [vmem:[%s16 + $0x10] sm:$0xf]
      %v1686 = vld [vmem:[%s16 + $0x14] sm:$0xf]
      %v1687 = vld [vmem:[%s16 + $0x18] sm:$0xf]
      %v1688 = vld [vmem:[%s16 + $0x1c] sm:$0xf]
      %v1689 = vld [vmem:[%s16 + $0x20] sm:$0xf]
      %v1690 = vld [vmem:[%s16 + $0x24] sm:$0xf]
      %v1691 = vld [vmem:[%s16 + $0x28] sm:$0xf]
      %v1692 = vld [vmem:[%s16 + $0x2c] sm:$0xf]
      %v1693 = vld [vmem:[%s16 + $0x30] sm:$0xf]
      %v1694 = vld [vmem:[%s16 + $0x34] sm:$0xf]
      %v1695 = vld [vmem:[%s16 + $0x38] sm:$0xf]
      %v1696 = vld [vmem:[%s16 + $0x3c] sm:$0xf]
      %v1697 = vld [vmem:[%s16 + $0x40] sm:$0xf]
      %v1698 = vld [vmem:[%s16 + $0x44] sm:$0xf]
      %v1699 = vld [vmem:[%s16 + $0x48] sm:$0xf]
      %v1700 = vld [vmem:[%s16 + $0x4c] sm:$0xf]
      %v1701 = vld [vmem:[%s16 + $0x50] sm:$0xf]
      %v1702 = vld [vmem:[%s16 + $0x54] sm:$0xf]
      %v1703 = vld [vmem:[%s16 + $0x58] sm:$0xf]
      %v1704 = vld [vmem:[%s16 + $0x5c] sm:$0xf]
      %v1705 = vld [vmem:[%s16 + $0x60] sm:$0xf]
      %v1706 = vld [vmem:[%s16 + $0x64] sm:$0xf]
      %v1707 = vld [vmem:[%s16 + $0x68] sm:$0xf]
      %v1708 = vld [vmem:[%s16 + $0x6c] sm:$0xf]
      %v1709 = vld [vmem:[%s16 + $0x70] sm:$0xf]
      %v1710 = vld [vmem:[%s16 + $0x74] sm:$0xf]
      %v1711 = vld [vmem:[%s16 + $0x78] sm:$0xf]
      %v1712 = vld [vmem:[%s16 + $0x7c] sm:$0xf]
      %v1713 = vld [vmem:[%s17] sm:$0x1]
      %v1714 = vpack.c.bf16 %v1679, %v1677
      %v1715 = vpack.c.bf16 %v1680, %v1678
      %v1717 = vlaneseq
      %v1718 = vshrl.u32 %v1717, 7
      %v1719 = vsub.s32 0, %v1718
      %v1720 = vrot.slane %v1713, %v1719
      %v1754 = vunpack.c.l.b16 %v1681
      %v1755 = vunpack.c.l.b16 %v1682
      %v1756 = vunpack.c.l.b16 %v1683
      %v1757 = vunpack.c.l.b16 %v1684
      %v1758 = vunpack.c.l.b16 %v1685
      %v1759 = vunpack.c.l.b16 %v1686
      %v1760 = vunpack.c.l.b16 %v1687
      %v1761 = vunpack.c.l.b16 %v1688
      %v1762 = vunpack.c.l.b16 %v1689
      %v1763 = vunpack.c.l.b16 %v1690
      %v1764 = vunpack.c.l.b16 %v1691
      %v1765 = vunpack.c.l.b16 %v1692
      %v1766 = vunpack.c.l.b16 %v1693
      %v1767 = vunpack.c.l.b16 %v1694
      %v1768 = vunpack.c.l.b16 %v1695
      %v1769 = vunpack.c.l.b16 %v1696
      %v1770 = vunpack.c.l.b16 %v1697
      %v1771 = vunpack.c.l.b16 %v1698
      %v1772 = vunpack.c.l.b16 %v1699
      %v1773 = vunpack.c.l.b16 %v1700
      %v1774 = vunpack.c.l.b16 %v1701
      %v1775 = vunpack.c.l.b16 %v1702
      %v1776 = vunpack.c.l.b16 %v1703
      %v1777 = vunpack.c.l.b16 %v1704
      %v1778 = vunpack.c.l.b16 %v1705
      %v1779 = vunpack.c.l.b16 %v1706
      %v1780 = vunpack.c.l.b16 %v1707
      %v1781 = vunpack.c.l.b16 %v1708
      %v1782 = vunpack.c.l.b16 %v1709
      %v1783 = vunpack.c.l.b16 %v1710
      %v1784 = vunpack.c.l.b16 %v1711
      %v1785 = vunpack.c.l.b16 %v1712
      %v1786 = vpack.c.b16 %v1755, %v1754
      %v1787 = vpack.c.b16 %v1757, %v1756
      %v1788 = vpack.c.b16 %v1759, %v1758
      %v1789 = vpack.c.b16 %v1761, %v1760
      %v1790 = vpack.c.b16 %v1763, %v1762
      %v1791 = vpack.c.b16 %v1765, %v1764
      %v1792 = vpack.c.b16 %v1767, %v1766
      %v1793 = vpack.c.b16 %v1769, %v1768
      %v1794 = vpack.c.b16 %v1771, %v1770
      %v1795 = vpack.c.b16 %v1773, %v1772
      %v1796 = vpack.c.b16 %v1775, %v1774
      %v1797 = vpack.c.b16 %v1777, %v1776
      %v1798 = vpack.c.b16 %v1779, %v1778
      %v1799 = vpack.c.b16 %v1781, %v1780
      %v1800 = vpack.c.b16 %v1783, %v1782
      %v1801 = vpack.c.b16 %v1785, %v1784
      %1818 = vmatprep.subr.bf16.mxu0 0
      %1819 = vmatpush1.bf16.msra.mxu0 %v1793
      %1820 = vmatprep.subr.bf16.mxu0 0
      %1821 = vmatpush1.bf16.msra.mxu0 %v1792
      %1822 = vmatprep.subr.bf16.mxu0 0
      %1823 = vmatpush1.bf16.msra.mxu0 %v1791
      %1824 = vmatprep.subr.bf16.mxu0 0
      %1825 = vmatpush1.bf16.msra.mxu0 %v1790
      %1826 = vmatprep.subr.bf16.mxu0 0
      %1827 = vmatpush1.bf16.msra.mxu0 %v1789
      %1828 = vmatprep.subr.bf16.mxu0 0
      %1829 = vmatpush1.bf16.msra.mxu0 %v1788
      %1830 = vmatprep.subr.bf16.mxu0 0
      %1831 = vmatpush1.bf16.msra.mxu0 %v1787
      %1832 = vmatprep.subr.bf16.mxu0 0
      %1833 = vmatpush1.bf16.msra.mxu0 %v1786
      %1834 = vmatprep.subr.bf16.mxu0 0
      %1835 = vmatpush2.bf16.msra.mxu0 %v1801
      %1836 = vmatprep.subr.bf16.mxu0 0
      %1837 = vmatpush2.bf16.msra.mxu0 %v1800
      %1838 = vmatprep.subr.bf16.mxu0 0
      %1839 = vmatpush2.bf16.msra.mxu0 %v1799
      %1840 = vmatprep.subr.bf16.mxu0 0
      %1841 = vmatpush2.bf16.msra.mxu0 %v1798
      %1842 = vmatprep.subr.bf16.mxu0 0
      %1843 = vmatpush2.bf16.msra.mxu0 %v1797
      %1844 = vmatprep.subr.bf16.mxu0 0
      %1845 = vmatpush2.bf16.msra.mxu0 %v1796
      %1846 = vmatprep.subr.bf16.mxu0 0
      %1847 = vmatpush2.bf16.msra.mxu0 %v1795
      %1848 = vmatprep.subr.bf16.mxu0 0
      %1849 = vmatpush2.bf16.msra.mxu0 %v1794
      %1850 = vmatprep.mubr.bf16.mxu0 %v1715
      %1851 = vmatmul.mubr.bf16.gmra.mxu0 %v1714
      %v1852 = vpop.f32.mrf.mxu0
      %v1853 = vadd.f32 %v1720, %v1852
      %v1854 = vpop.f32.mrf.mxu0
      %v1855 = vpop.f32.mrf.mxu0
      %v1856 = vadd.f32 %v1720, %v1855
      %v1857 = vpop.f32.mrf.mxu0
      %1858 = vdwg.mxu0
      %v1859 = vmul.f32 %v1853, %v817
      %v1860 = vmul.f32 %v1856, %v818
      %v1861 = vsel %vm859, %v1859, 0.0
      %v1862 = vsel %vm859, %v1860, 0.0
      %v1863 = vadd.f32 %v1861, %v1862
      %v1864 = vrot.slane %v1863, 4
      %v1865 = vadd.f32 %v1863, %v1864
      %v1866 = vrot.slane %v1865, 2
      %v1867 = vadd.f32 %v1865, %v1866
      %v1868 = vrot.slane %v1867, 1
      %v1869 = vadd.f32 %v1867, %v1868
      %v1870 = vsel %vm859, %v1869, 0.0
      %1871 = vadd.xlane.f32.xlu0 %v1870
      %v1872 = vpop.xlane.xlu0 %1871
      %v1873 = vmul.f32 %v1872, 0.0625
      %v1874 = vmul.f32 %v1379, %v1873
      %v1875 = vmul.f32 %v1382, %v1873
      %v1876 = vadd.f32 %v1874, 0.0
      %v1877 = vadd.f32 %v1875, 0.0
      %1880 = vrot.lane.b32.xlu0 %v817, 32
      %v1881 = vpop.permute.xlu0 %1880
      %1882 = vrot.lane.b32.xlu0 %v818, 32
      %v1883 = vpop.permute.xlu0 %1882
      %v1886 = vmul.f32 %v1853, %v1881
      %v1887 = vmul.f32 %v1856, %v1883
      %vm1888 = vcmask 523520
      %v1889 = vsel %vm1888, %v1886, 0.0
      %v1890 = vsel %vm1888, %v1887, 0.0
      %v1891 = vadd.f32 %v1889, %v1890
      %v1892 = vrot.slane %v1891, 4
      %v1893 = vadd.f32 %v1891, %v1892
      %v1894 = vrot.slane %v1893, 2
      %v1895 = vadd.f32 %v1893, %v1894
      %v1896 = vrot.slane %v1895, 1
      %v1897 = vadd.f32 %v1895, %v1896
      %1899 = vrot.lane.b32.xlu0 %v1897, 96
      %v1900 = vpop.permute.xlu0 %1899
      %v1902 = vsel %vm859, %v1900, 0.0
      %1903 = vadd.xlane.f32.xlu0 %v1902
      %v1904 = vpop.xlane.xlu0 %1903
      %v1905 = vmul.f32 %v1904, 0.0625
      %v1906 = vmul.f32 %v1379, %v1905
      %v1907 = vmul.f32 %v1382, %v1905
      %1910 = vrot.lane.b32.xlu0 %v1906, 96
      %v1911 = vpop.permute.xlu0 %1910
      %1912 = vrot.lane.b32.xlu0 %v1907, 96
      %v1913 = vpop.permute.xlu0 %1912
      %v1916 = vadd.f32 %v1876, %v1911
      %v1917 = vadd.f32 %v1877, %v1913
      %1918 = vrot.lane.b32.xlu0 %v817, 64
      %v1919 = vpop.permute.xlu0 %1918
      %1920 = vrot.lane.b32.xlu0 %v818, 64
      %v1921 = vpop.permute.xlu0 %1920
      %v1924 = vmul.f32 %v1853, %v1919
      %v1925 = vmul.f32 %v1856, %v1921
      %vm1926 = vcmask 785920
      %v1927 = vsel %vm1926, %v1924, 0.0
      %v1928 = vsel %vm1926, %v1925, 0.0
      %v1929 = vadd.f32 %v1927, %v1928
      %v1930 = vrot.slane %v1929, 4
      %v1931 = vadd.f32 %v1929, %v1930
      %v1932 = vrot.slane %v1931, 2
      %v1933 = vadd.f32 %v1931, %v1932
      %v1934 = vrot.slane %v1933, 1
      %v1935 = vadd.f32 %v1933, %v1934
      %1937 = vrot.lane.b32.xlu0 %v1935, 64
      %v1938 = vpop.permute.xlu0 %1937
      %v1940 = vsel %vm859, %v1938, 0.0
      %1941 = vadd.xlane.f32.xlu0 %v1940
      %v1942 = vpop.xlane.xlu0 %1941
      %v1943 = vmul.f32 %v1942, 0.0625
      %v1944 = vmul.f32 %v1379, %v1943
      %v1945 = vmul.f32 %v1382, %v1943
      %1948 = vrot.lane.b32.xlu0 %v1944, 64
      %v1949 = vpop.permute.xlu0 %1948
      %1950 = vrot.lane.b32.xlu0 %v1945, 64
      %v1951 = vpop.permute.xlu0 %1950
      %v1954 = vadd.f32 %v1916, %v1949
      %v1955 = vadd.f32 %v1917, %v1951
      %1956 = vrot.lane.b32.xlu0 %v817, 96
      %v1957 = vpop.permute.xlu0 %1956
      %1958 = vrot.lane.b32.xlu0 %v818, 96
      %v1959 = vpop.permute.xlu0 %1958
      %v1962 = vmul.f32 %v1853, %v1957
      %v1963 = vmul.f32 %v1856, %v1959
      %vm1964 = vcmask 1048320
      %v1965 = vsel %vm1964, %v1962, 0.0
      %v1966 = vsel %vm1964, %v1963, 0.0
      %v1967 = vadd.f32 %v1965, %v1966
      %v1968 = vrot.slane %v1967, 4
      %v1969 = vadd.f32 %v1967, %v1968
      %v1970 = vrot.slane %v1969, 2
      %v1971 = vadd.f32 %v1969, %v1970
      %v1972 = vrot.slane %v1971, 1
      %v1973 = vadd.f32 %v1971, %v1972
      %1975 = vrot.lane.b32.xlu0 %v1973, 32
      %v1976 = vpop.permute.xlu0 %1975
      %v1978 = vsel %vm859, %v1976, 0.0
      %1979 = vadd.xlane.f32.xlu0 %v1978
      %v1980 = vpop.xlane.xlu0 %1979
      %v1981 = vmul.f32 %v1980, 0.0625
      %v1982 = vmul.f32 %v1379, %v1981
      %v1983 = vmul.f32 %v1382, %v1981
      %1986 = vrot.lane.b32.xlu0 %v1982, 32
      %v1987 = vpop.permute.xlu0 %1986
      %1988 = vrot.lane.b32.xlu0 %v1983, 32
      %v1989 = vpop.permute.xlu0 %1988
      %v1992 = vadd.f32 %v1954, %v1987
      %v1993 = vadd.f32 %v1955, %v1989
      %v1994 = vadd.f32 %v898, %v1992
      %v1995 = vadd.f32 %v901, %v1993
      %v1996 = vsel %vm859, %v1994, 0.0
      %1997 = vadd.xlane.f32.xlu0 %v1996
      %v1998 = vpop.xlane.xlu0 %1997
      %v1999 = vsel %vm859, %v1995, 0.0
      %2000 = vadd.xlane.f32.xlu0 %v1999
      %v2001 = vpop.xlane.xlu0 %2000
      %v2002 = vrcp.pop 32.0
      %v2003 = vmul.f32 %v1998, %v2002
      %v2004 = vmul.f32 %v2001, %v2002
      %v2005 = vsub.f32 %v1994, %v2003
      %v2006 = vsub.f32 %v1995, %v2004
      %v2007 = vmul.f32 %v2005, %v2005
      %v2008 = vmul.f32 %v2006, %v2006
      %v2009 = vsel %vm859, %v2007, 0.0
      %2010 = vadd.xlane.f32.xlu0 %v2009
      %v2011 = vpop.xlane.xlu0 %2010
      %v2012 = vsel %vm859, %v2008, 0.0
      %2013 = vadd.xlane.f32.xlu0 %v2012
      %v2014 = vpop.xlane.xlu0 %2013
      %v2015 = vmul.f32 %v2011, %v2002
      %v2016 = vmul.f32 %v2014, %v2002
      %v2017 = vadd.f32 %v2015, 1e-05
      %v2018 = vadd.f32 %v2016, 1e-05
      %v2019 = vrsqrt.pop %v2017
      %v2020 = vrsqrt.pop %v2018
      %v2021 = vmul.f32 %v2005, %v2019
      %v2022 = vmul.f32 %v2006, %v2020
      %v2024 = vlaneseq
      %v2025 = vshrl.u32 %v2024, 7
      %v2026 = vsub.s32 0, %v2025
      %v2027 = vrot.slane %v824, %v2026
      %v2029 = vmul.f32 %v2021, %v2027
      %v2030 = vmul.f32 %v2022, %v2027
      %v2032 = vlaneseq
      %v2033 = vshrl.u32 %v2032, 7
      %v2034 = vsub.s32 0, %v2033
      %v2035 = vrot.slane %v825, %v2034
      %v2037 = vadd.f32 %v2029, %v2035
      %v2038 = vadd.f32 %v2030, %v2035
      %v2039 = vpack.c.bf16 %v2038, %v2037
      %v2041 = vlaneseq
      %v2042 = vshrl.u32 %v2041, 7
      %v2043 = vsub.s32 0, %v2042
      %v2044 = vrot.slane %v830, %v2043
      %v2050 = vunpack.c.l.b16 %v826
      %v2051 = vunpack.c.l.b16 %v827
      %v2052 = vunpack.c.l.b16 %v828
      %v2053 = vunpack.c.l.b16 %v829
      %v2054 = vpack.c.b16 %v2051, %v2050
      %v2055 = vpack.c.b16 %v2053, %v2052
      %v2059 = vsel %vm859, %v2039, 0
      %2061 = vmatprep.subr.bf16.mxu0 0
      %2062 = vmatpush1.bf16.msra.mxu0 0
      %2063 = vmatprep.subr.bf16.mxu0 0
      %2064 = vmatpush1.bf16.msra.mxu0 0
      %2065 = vmatprep.subr.bf16.mxu0 0
      %2066 = vmatpush1.bf16.msra.mxu0 0
      %2067 = vmatprep.subr.bf16.mxu0 0
      %2068 = vmatpush1.bf16.msra.mxu0 0
      %2069 = vmatprep.subr.bf16.mxu0 0
      %2070 = vmatpush1.bf16.msra.mxu0 0
      %2071 = vmatprep.subr.bf16.mxu0 0
      %2072 = vmatpush1.bf16.msra.mxu0 0
      %2073 = vmatprep.subr.bf16.mxu0 0
      %2074 = vmatpush1.bf16.msra.mxu0 %v2055
      %2075 = vmatprep.subr.bf16.mxu0 0
      %2076 = vmatpush1.bf16.msra.mxu0 %v2054
      %2077 = vmatprep.subr.bf16.mxu0 0
      %2078 = vmatpush2.bf16.msra.mxu0 0
      %2079 = vmatprep.subr.bf16.mxu0 0
      %2080 = vmatpush2.bf16.msra.mxu0 0
      %2081 = vmatprep.subr.bf16.mxu0 0
      %2082 = vmatpush2.bf16.msra.mxu0 0
      %2083 = vmatprep.subr.bf16.mxu0 0
      %2084 = vmatpush2.bf16.msra.mxu0 0
      %2085 = vmatprep.subr.bf16.mxu0 0
      %2086 = vmatpush2.bf16.msra.mxu0 0
      %2087 = vmatprep.subr.bf16.mxu0 0
      %2088 = vmatpush2.bf16.msra.mxu0 0
      %2089 = vmatprep.subr.bf16.mxu0 0
      %2090 = vmatpush2.bf16.msra.mxu0 0
      %2091 = vmatprep.subr.bf16.mxu0 0
      %2092 = vmatpush2.bf16.msra.mxu0 0
      %2093 = vmatprep.mubr.bf16.mxu0 0
      %2094 = vmatmul.mubr.bf16.gmra.mxu0 %v2059
      %v2095 = vpop.f32.mrf.mxu0
      %v2096 = vadd.f32 %v2044, %v2095
      %v2097 = vpop.f32.mrf.mxu0
      %v2098 = vpop.f32.mrf.mxu0
      %v2099 = vadd.f32 %v2044, %v2098
      %v2100 = vpop.f32.mrf.mxu0
      %2101 = vdwg.mxu0
      %v2102 = vmax.f32 %v2096, 0.0
      %v2103 = vmax.f32 %v2099, 0.0
      %v2104 = vpack.c.bf16 %v2103, %v2102
      %v2106 = vlaneseq
      %v2107 = vshrl.u32 %v2106, 7
      %v2108 = vsub.s32 0, %v2107
      %v2109 = vrot.slane %v839, %v2108
      %v2119 = vunpack.c.l.b16 %v831
      %v2120 = vunpack.c.l.b16 %v832
      %v2121 = vunpack.c.l.b16 %v833
      %v2122 = vunpack.c.l.b16 %v834
      %v2123 = vunpack.c.l.b16 %v835
      %v2124 = vunpack.c.l.b16 %v836
      %v2125 = vunpack.c.l.b16 %v837
      %v2126 = vunpack.c.l.b16 %v838
      %v2127 = vpack.c.b16 %v2120, %v2119
      %v2128 = vpack.c.b16 %v2122, %v2121
      %v2129 = vpack.c.b16 %v2124, %v2123
      %v2130 = vpack.c.b16 %v2126, %v2125
      %v2136 = vsel %vm1004, %v2104, 0
      %2138 = vmatprep.subr.bf16.mxu0 0
      %2139 = vmatpush1.bf16.msra.mxu0 0
      %2140 = vmatprep.subr.bf16.mxu0 0
      %2141 = vmatpush1.bf16.msra.mxu0 0
      %2142 = vmatprep.subr.bf16.mxu0 0
      %2143 = vmatpush1.bf16.msra.mxu0 0
      %2144 = vmatprep.subr.bf16.mxu0 0
      %2145 = vmatpush1.bf16.msra.mxu0 0
      %2146 = vmatprep.subr.bf16.mxu0 0
      %2147 = vmatpush1.bf16.msra.mxu0 %v2130
      %2148 = vmatprep.subr.bf16.mxu0 0
      %2149 = vmatpush1.bf16.msra.mxu0 %v2129
      %2150 = vmatprep.subr.bf16.mxu0 0
      %2151 = vmatpush1.bf16.msra.mxu0 %v2128
      %2152 = vmatprep.subr.bf16.mxu0 0
      %2153 = vmatpush1.bf16.msra.mxu0 %v2127
      %2154 = vmatprep.subr.bf16.mxu0 0
      %2155 = vmatpush2.bf16.msra.mxu0 0
      %2156 = vmatprep.subr.bf16.mxu0 0
      %2157 = vmatpush2.bf16.msra.mxu0 0
      %2158 = vmatprep.subr.bf16.mxu0 0
      %2159 = vmatpush2.bf16.msra.mxu0 0
      %2160 = vmatprep.subr.bf16.mxu0 0
      %2161 = vmatpush2.bf16.msra.mxu0 0
      %2162 = vmatprep.subr.bf16.mxu0 0
      %2163 = vmatpush2.bf16.msra.mxu0 0
      %2164 = vmatprep.subr.bf16.mxu0 0
      %2165 = vmatpush2.bf16.msra.mxu0 0
      %2166 = vmatprep.subr.bf16.mxu0 0
      %2167 = vmatpush2.bf16.msra.mxu0 0
      %2168 = vmatprep.subr.bf16.mxu0 0
      %2169 = vmatpush2.bf16.msra.mxu0 0
      %2170 = vmatprep.mubr.bf16.mxu0 0
      %2171 = vmatmul.mubr.bf16.gmra.mxu0 %v2136
      %v2172 = vpop.f32.mrf.mxu0
      %v2173 = vadd.f32 %v2109, %v2172
      %v2174 = vpop.f32.mrf.mxu0
      %v2175 = vpop.f32.mrf.mxu0
      %v2176 = vadd.f32 %v2109, %v2175
      %v2177 = vpop.f32.mrf.mxu0
      %2178 = vdwg.mxu0
      %vm2179 = vcmask 7168
      %2180 = vst.msk [vmem:[%s813] sm:$0xff] %vm2179, %v2173
      %2181 = vst.msk [vmem:[%s813 + $0x8] sm:$0xff] %vm2179, %v2176
      %p2182 = scmp.lt.s32.totalorder %s39, 1
      %s2183 = scalar_select %p2182, %s39, 1
      %s2184 = smul.addr %s2183, 2
      %s2185 = smul.addr %s2184, 8
      %s2186 = scalar_lea.vmem %s26, %s2185
      // Predicated region
      $region125: #{lno1d_forward.7} parent=123 // pred_check
        %p2187 = pneg %p613
      $region126: #{lno1d_forward.7} parent=123 // pred_check_branch
        %2189 = sbr.rel (%p2187) target = $region128
      $region127: #{lno1d_forward.7} parent=123 // pred_region
        _
      $region128: #{lno1d_forward.7} parent=123 // pred_fallthru
        _
    $region124: #{lno1d_forward.7} parent=5 // pred_fallthru
      _
    %p2190 = scmp.le.s32.totalorder 2, %s34
    // Predicated region
    $region129: #{lno1d_forward.7} parent=5 // pred_check
      %p2191 = pneg %p2190
    $region130: #{lno1d_forward.7} parent=5 // pred_check_branch
      %2193 = sbr.rel (%p2191) target = $region132
    $region131: #{lno1d_forward.7} parent=5 // pred_region
      %s2194 = ssub.s32 %s34, 2
      // Predicated region
      $region133: #{lno1d_forward.7} parent=131 // pred_check
        %p2195 = pneg %p619
      $region134: #{lno1d_forward.7} parent=131 // pred_check_branch
        %2197 = sbr.rel (%p2195) target = $region136
      $region135: #{lno1d_forward.7} parent=131 // pred_region
        %p2198 = scmp.lt.s32.totalorder %s40, 1
        %s2199 = scalar_select %p2198, %s40, 1
        %s2200 = smul.addr %s2199, 2
        %s2201 = smul.addr %s2200, 8
        %s2202 = scalar_lea.vmem %s26, %s2201
      $region136: #{lno1d_forward.7} parent=131 // pred_fallthru
        _
    $region132: #{lno1d_forward.7} parent=5 // pred_fallthru
      _
  $region6: #{lno1d_forward.7} parent=0 // loop_footer
    %s38 = sadd.s32 1, %s34
  $region7: #{lno1d_forward.7} parent=0 // loop_footer_branch
    %33 = sbr.rel target = $region3
  $region8: #{lno1d_forward.7} parent=0 // loop_exit
    _

</llo_original>
